<compile_context>
chip_gen: v5e
topology: v5e:2x2
jax: 0.10.0
libtpu: 0.0.40
codegen_flags: <defaults>
</compile_context>

<pallas_src>
import functools

import jax
import jax.numpy as jnp
from jax.experimental import pallas as pl
from jax.experimental.pallas import tpu as pltpu

KSIZE = 5
PAD = 2
LANE = 128
N_KSPLIT = 2          # MLP K-reduction split (maps to the 2 TCs on v7x megacore)
MAX_K_TILE = 32768    # preferred lw1 K tile (fewer fixed-overhead grid steps)


def _round_up(x, m):
    return ((x + m - 1) // m) * m


def _vmem_limit(est_bytes):
    # Explicit scoped-VMEM limit: covers v5e's ~16 MiB default while staying
    # well under v7x's 64 MiB physical VMEM.
    return max(32 << 20, min(60 << 20, 2 * est_bytes + (8 << 20)))


# ---------------------------------------------------------------------------
# Conv 5x5 (stride 1, padding 2) + ReLU.
# Grid: (batch, H row-band). The kw tap dimension is folded into the matmul K.
# ---------------------------------------------------------------------------
def conv5x5_relu_kernel(x_ref, w_ref, b_ref, o_ref):
    # x_ref : (1, H+4, W+4, Cin_p)   spatially zero-padded NHWC input (bf16)
    # w_ref : (5, 5*Cin_p, Cout_p)   kw folded into the contraction (bf16)
    # b_ref : (1, Cout_p)            f32
    # o_ref : (1, tile_h, W, Cout_p) bf16 output row band
    tile_h, W, Cout = o_ref.shape[1], o_ref.shape[2], o_ref.shape[3]
    Kdim = w_ref.shape[1]                      # 5 * Cin_p
    row0 = pl.multiple_of(pl.program_id(1) * tile_h, tile_h)
    # Rows [row0, row0 + tile_h + 4) of the padded image feed this output band.
    band = x_ref[0, pl.ds(row0, tile_h + 2 * PAD), :, :]   # (tile_h+4, W+4, Cin)
    acc = None
    for kh in range(KSIZE):
        rows = band[kh:kh + tile_h]                         # (tile_h, W+4, Cin)
        # im2col along kw only; channel order (kw, cin) matches w_ref's K axis.
        # TODO(synk): chip-specific im2col variants (25 per-tap K=Cin matmuls
        # on v5e, pltpu.roll-based aligned shifts on v6e/v7x) not explored.
        patch = jnp.concatenate(
            [rows[:, kw:kw + W, :] for kw in range(KSIZE)], axis=-1)
        contrib = jnp.dot(patch.reshape(tile_h * W, Kdim), w_ref[kh],
                          preferred_element_type=jnp.float32)
        acc = contrib if acc is None else acc + contrib
    out = jnp.maximum(acc + b_ref[...], 0.0)
    o_ref[0] = out.reshape(tile_h, W, Cout).astype(o_ref.dtype)


def conv5x5_relu(x_pad, w, b, tile_h):
    # x_pad: (B, H+4, W+4, Cin_p) bf16, spatially zero-padded NHWC
    B, Hp, Wp, Cin = x_pad.shape
    H, W = Hp - 2 * PAD, Wp - 2 * PAD
    Cout = w.shape[-1]
    assert H % tile_h == 0
    n_bands = H // tile_h
    est = (2 * (Hp * Wp * Cin * 2 + KSIZE * KSIZE * Cin * Cout * 2
                + tile_h * W * Cout * 2)
           + 6 * tile_h * W * Cout * 4              # accumulator / matmul temps
           + 2 * tile_h * W * KSIZE * Cin * 2)      # im2col patch
    return pl.pallas_call(
        conv5x5_relu_kernel,
        out_shape=jax.ShapeDtypeStruct((B, H, W, Cout), jnp.bfloat16),
        grid_spec=pltpu.PrefetchScalarGridSpec(
            num_scalar_prefetch=0,
            grid=(B, n_bands),
            in_specs=[
                pl.BlockSpec((1, Hp, Wp, Cin), lambda b, r: (b, 0, 0, 0)),
                pl.BlockSpec((KSIZE, KSIZE * Cin, Cout),
                             lambda b, r: (0, 0, 0)),
                pl.BlockSpec((1, Cout), lambda b, r: (0, 0)),
            ],
            out_specs=pl.BlockSpec((1, tile_h, W, Cout),
                                   lambda b, r: (b, r, 0, 0)),
        ),
        compiler_params=pltpu.CompilerParams(
            dimension_semantics=("parallel", "parallel"),
            vmem_limit_bytes=_vmem_limit(est)),
    )(x_pad, w, b)


# ---------------------------------------------------------------------------
# MLP head: tanh(x @ W1 + b1) -> dropout(eval: identity) -> tanh(h @ W2 + b2)
# lw1 (huge, HBM-bound) is streamed over a (N_KSPLIT, nk) grid; each split
# produces an f32 partial (B, hidden) that a tiny epilogue kernel combines.
# ---------------------------------------------------------------------------
def _mlp_k_tiling(k_real):
    per_split = -(-k_real // N_KSPLIT)
    nk = max(1, -(-per_split // MAX_K_TILE))
    tk = _round_up(-(-per_split // nk), LANE)
    return tk, nk, N_KSPLIT * nk * tk


def mlp_partial_kernel(x_ref, w1_ref, o_ref):
    # x_ref: (B, tk) bf16, w1_ref: (tk, hidden) bf16, o_ref: (1, B, hidden) f32
    @pl.when(pl.program_id(1) == 0)
    def _():
        o_ref[...] = jnp.zeros_like(o_ref)

    o_ref[...] += jnp.dot(x_ref[...], w1_ref[...],
                          preferred_element_type=jnp.float32)[None]


def mlp_epilogue_kernel(p_ref, b1_ref, w2_ref, b2_ref, o_ref):
    h = jnp.tanh(jnp.sum(p_ref[...], axis=0) + b1_ref[...])
    # TODO(synk): nn.Dropout(0.5) is identity in eval/inference mode;
    # training-mode stochastic dropout (pltpu.prng_*) intentionally omitted.
    o_ref[...] = jnp.tanh(
        jnp.dot(h, w2_ref[...], preferred_element_type=jnp.float32)
        + b2_ref[...])


def mlp_head(x, w1, b1, w2, b2, tk, nk):
    B, k_pad = x.shape
    hidden = w1.shape[1]
    n_out = w2.shape[1]
    assert k_pad == N_KSPLIT * nk * tk and w1.shape[0] == k_pad
    hidden_l = _round_up(hidden, LANE)          # VMEM lane padding of w1 block
    est = 2 * (tk * hidden_l * 2 + B * tk * 2) + 4 * N_KSPLIT * B * hidden_l * 4

    partials = pl.pallas_call(
        mlp_partial_kernel,
        out_shape=jax.ShapeDtypeStruct((N_KSPLIT, B, hidden), jnp.float32),
        grid_spec=pltpu.PrefetchScalarGridSpec(
            num_scalar_prefetch=0,
            grid=(N_KSPLIT, nk),
            in_specs=[
                pl.BlockSpec((B, tk), lambda c, k: (0, c * nk + k)),
                pl.BlockSpec((tk, hidden), lambda c, k: (c * nk + k, 0)),
            ],
            out_specs=pl.BlockSpec((1, B, hidden), lambda c, k: (c, 0, 0)),
        ),
        compiler_params=pltpu.CompilerParams(
            dimension_semantics=("parallel", "arbitrary"),
            vmem_limit_bytes=_vmem_limit(est)),
    )(x, w1)

    return pl.pallas_call(
        mlp_epilogue_kernel,
        out_shape=jax.ShapeDtypeStruct((B, n_out), jnp.float32),
        grid_spec=pltpu.PrefetchScalarGridSpec(
            num_scalar_prefetch=0,
            grid=(1,),
            in_specs=[
                pl.BlockSpec((N_KSPLIT, B, hidden), lambda i: (0, 0, 0)),
                pl.BlockSpec((1, hidden), lambda i: (0, 0)),
                pl.BlockSpec((hidden, n_out), lambda i: (0, 0)),
                pl.BlockSpec((1, n_out), lambda i: (0, 0)),
            ],
            out_specs=pl.BlockSpec((B, n_out), lambda i: (0, 0)),
        ),
    )(partials, b1, w2, b2)


# ---------------------------------------------------------------------------
# Full forward pass.
# ---------------------------------------------------------------------------
def head_hunter_forward(params, x_nchw, *, n_features):
    B, Cin, H, W = x_nchw.shape
    cin_p1 = params["cw1"].shape[1] // KSIZE          # conv1 Cin alignment (8)
    tile_h = 8 if H % 8 == 0 else (4 if H % 4 == 0 else H)
    # NCHW -> NHWC (a pure reshape when Cin == 1), bf16, small channel + halo pad.
    x = jnp.transpose(x_nchw, (0, 2, 3, 1)).astype(jnp.bfloat16)
    x = jnp.pad(x, ((0, 0), (PAD, PAD), (PAD, PAD), (0, cin_p1 - Cin)))
    x = conv5x5_relu(x, params["cw1"], params["cb1"], tile_h)
    # TODO(synk): the two inter-layer halo pads (and a fused 3-conv,
    # VMEM-resident variant) are left to XLA; ~10-15us/image of HBM traffic.
    x = jnp.pad(x, ((0, 0), (PAD, PAD), (PAD, PAD), (0, 0)))
    x = conv5x5_relu(x, params["cw2"], params["cb2"], tile_h)
    x = jnp.pad(x, ((0, 0), (PAD, PAD), (PAD, PAD), (0, 0)))
    x = conv5x5_relu(x, params["cw3"], params["cb3"], tile_h)
    # Drop the zero channel padding before the flatten so the HBM-bound MLP
    # streams only real lw1 rows. lw1 rows were permuted to (h, w, c) order at
    # prep time, so the NHWC flatten multiplies directly (no NCHW transpose).
    k_real = H * W * n_features
    x = x[..., :n_features].reshape(B, k_real)
    tk, nk, k_pad = _mlp_k_tiling(k_real)
    assert params["lw1"].shape[0] == k_pad
    if k_pad > k_real:
        x = jnp.pad(x, ((0, 0), (0, k_pad - k_real)))
    return mlp_head(x, params["lw1"], params["lb1"],
                    params["lw2"], params["lb2"], tk, nk)


# ---------------------------------------------------------------------------
# Parameter construction: PyTorch-layout weights -> kernel layout.
# ---------------------------------------------------------------------------
def init_torch_params(key, n_features, input_chanels, H, W, hidden, n_out):
    ks = jax.random.split(key, 10)

    def u(k, shape, fan_in):
        bound = 1.0 / jnp.sqrt(jnp.float32(fan_in))
        return jax.random.uniform(k, shape, jnp.float32, -bound, bound)

    fc1, fc2 = KSIZE * KSIZE * input_chanels, KSIZE * KSIZE * n_features
    fl1 = H * W * n_features
    return {
        "conv1.weight": u(ks[0], (n_features, input_chanels, KSIZE, KSIZE), fc1),
        "conv1.bias":   u(ks[1], (n_features,), fc1),
        "conv2.weight": u(ks[2], (n_features, n_features, KSIZE, KSIZE), fc2),
        "conv2.bias":   u(ks[3], (n_features,), fc2),
        "conv3.weight": u(ks[4], (n_features, n_features, KSIZE, KSIZE), fc2),
        "conv3.bias":   u(ks[5], (n_features,), fc2),
        "linear1.weight": u(ks[6], (hidden, fl1), fl1),
        "linear1.bias":   u(ks[7], (hidden,), fl1),
        "linear2.weight": u(ks[8], (n_out, hidden), hidden),
        "linear2.bias":   u(ks[9], (n_out,), hidden),
    }


def prepare_params(tp, H, W):
    def prep_conv(w, b, cin_align):
        cout, cin = w.shape[0], w.shape[1]
        cin_p, cout_p = _round_up(cin, cin_align), _round_up(cout, LANE)
        wt = jnp.transpose(w, (2, 3, 1, 0))                  # (KH, KW, Cin, Cout)
        wt = jnp.pad(wt, ((0, 0), (0, 0), (0, cin_p - cin), (0, cout_p - cout)))
        wt = wt.reshape(KSIZE, KSIZE * cin_p, cout_p).astype(jnp.bfloat16)
        bp = jnp.pad(b, (0, cout_p - cout)).reshape(1, cout_p).astype(jnp.float32)
        return wt, bp

    # conv1: Cin=1 padded only to 8 (not 128) -> far less DMA/MXU work.
    cw1, cb1 = prep_conv(tp["conv1.weight"], tp["conv1.bias"], 8)
    cw2, cb2 = prep_conv(tp["conv2.weight"], tp["conv2.bias"], LANE)
    cw3, cb3 = prep_conv(tp["conv3.weight"], tp["conv3.bias"], LANE)

    C = tp["conv3.weight"].shape[0]
    hidden = tp["linear1.weight"].shape[0]
    n_out = tp["linear2.weight"].shape[0]
    k_real = H * W * C
    tk, nk, k_pad = _mlp_k_tiling(k_real)

    # linear1: (hidden, C*H*W) with fan-in in (c, h, w) order -> rows reordered
    # to (h, w, c) so the NHWC flatten of the channel-sliced activation
    # multiplies directly.  No channel/hidden zero-padding (lw1 is streamed
    # from HBM every forward pass -> don't stream zeros); only K is padded up
    # to a multiple of N_KSPLIT * tk (often exactly k_real).
    w1 = tp["linear1.weight"].T.reshape(C, H, W, hidden)
    w1 = jnp.transpose(w1, (1, 2, 0, 3)).reshape(k_real, hidden)
    w1 = jnp.pad(w1, ((0, k_pad - k_real), (0, 0))).astype(jnp.bfloat16)
    b1 = tp["linear1.bias"].reshape(1, hidden).astype(jnp.float32)
    w2 = tp["linear2.weight"].T.astype(jnp.float32)          # (hidden, n_out)
    b2 = tp["linear2.bias"].reshape(1, n_out).astype(jnp.float32)

    return {"cw1": cw1, "cb1": cb1, "cw2": cw2, "cb2": cb2,
            "cw3": cw3, "cb3": cb3,
            "lw1": w1, "lb1": b1, "lw2": w2, "lb2": b2}


# ---------------------------------------------------------------------------
# Pure-JAX f32 reference (for a tolerance check against the bf16 kernels).
# ---------------------------------------------------------------------------
def _reference_forward(tp, x):
    def conv(y, w, b):
        z = jax.lax.conv_general_dilated(
            y, w, window_strides=(1, 1), padding=((PAD, PAD), (PAD, PAD)),
            dimension_numbers=("NCHW", "OIHW", "NCHW"))
        return jax.nn.relu(z + b[None, :, None, None])

    y = conv(x, tp["conv1.weight"], tp["conv1.bias"])
    y = conv(y, tp["conv2.weight"], tp["conv2.bias"])
    y = conv(y, tp["conv3.weight"], tp["conv3.bias"])
    y = y.reshape(x.shape[0], -1)
    y = jnp.tanh(y @ tp["linear1.weight"].T + tp["linear1.bias"])
    return jnp.tanh(y @ tp["linear2.weight"].T + tp["linear2.bias"])


if __name__ == "__main__":
    # Scaled-down shapes consistent with the module (stride-1 / pad-2 convs
    # preserve spatial dims, so linear1 fan-in = H*W*n_features).
    n_features = 8         # stands in for 100
    input_chanels = 1
    hidden, n_out = 32, 3  # stand in for 100, 3
    B, H, W = 2, 16, 16    # stands in for 112x112

    key = jax.random.PRNGKey(0)
    pkey, xkey = jax.random.split(key)
    torch_like = init_torch_params(pkey, n_features, input_chanels, H, W,
                                   hidden, n_out)
    params = prepare_params(torch_like, H, W)
    x = jax.random.normal(xkey, (B, input_chanels, H, W), jnp.float32)

    fwd = jax.jit(functools.partial(head_hunter_forward, n_features=n_features))
    out = jax.block_until_ready(fwd(params, x))
    assert out.shape == (B, n_out), out.shape
    assert bool(jnp.all(jnp.isfinite(out)))

    ref = _reference_forward(torch_like, x)
    err = float(jnp.max(jnp.abs(out - ref)))
    assert err < 1e-2, f"max abs err vs f32 reference: {err}"
    print("KERNEL_OK")
</pallas_src>

<mosaic_0001>
module attributes {stable_mosaic.version = 11 : i64} {
  func.func @conv5x5_relu_kernel(%arg0: i32, %arg1: i32, %arg2: memref<1x20x20x8xbf16, #tpu.memory_space<vmem>>, %arg3: memref<5x40x128xbf16, #tpu.memory_space<vmem>>, %arg4: memref<1x128xf32, #tpu.memory_space<vmem>>, %arg5: memref<1x8x16x128xbf16, #tpu.memory_space<vmem>>) attributes {dimension_semantics = [#tpu.dimension_semantics<parallel>, #tpu.dimension_semantics<parallel>], iteration_bounds = array<i64: 2, 2>, scalar_prefetch = 0 : i64, scratch_operands = 0 : i64, tpu.core_type = #tpu.core_type<tc>, window_params = [{transform_indices = @transform_0, window_bounds = array<i64: 1, 20, 20, 8>}, {pipeline_mode = #tpu.pipeline_mode<synchronous>, transform_indices = @transform_1, window_bounds = array<i64: 5, 40, 128>}, {pipeline_mode = #tpu.pipeline_mode<synchronous>, transform_indices = @transform_2, window_bounds = array<i64: 1, 128>}, {transform_indices = @transform_3, window_bounds = array<i64: 1, 8, 16, 128>}]} {
    %c8_i32 = arith.constant 8 : i32
    %0 = arith.muli %arg1, %c8_i32 : i32
    %1 = tpu.assume_multiple %0, 8 : i32
    %c0 = arith.constant 0 : index
    %2 = arith.index_cast %1 : i32 to index
    %c0_0 = arith.constant 0 : index
    %c0_1 = arith.constant 0 : index
    %3 = vector.load %arg2[%c0, %2, %c0_0, %c0_1] : memref<1x20x20x8xbf16, #tpu.memory_space<vmem>>, vector<1x12x20x8xbf16>
    %4 = vector.shape_cast %3 : vector<1x12x20x8xbf16> to vector<12x20x8xbf16>
    %5 = vector.extract_strided_slice %4 {offsets = [0, 0, 0], sizes = [8, 20, 8], strides = [1, 1, 1]} : vector<12x20x8xbf16> to vector<8x20x8xbf16>
    %6 = vector.extract_strided_slice %5 {offsets = [0, 0, 0], sizes = [8, 16, 8], strides = [1, 1, 1]} : vector<8x20x8xbf16> to vector<8x16x8xbf16>
    %7 = vector.extract_strided_slice %5 {offsets = [0, 1, 0], sizes = [8, 16, 8], strides = [1, 1, 1]} : vector<8x20x8xbf16> to vector<8x16x8xbf16>
    %8 = vector.extract_strided_slice %5 {offsets = [0, 2, 0], sizes = [8, 16, 8], strides = [1, 1, 1]} : vector<8x20x8xbf16> to vector<8x16x8xbf16>
    %9 = vector.extract_strided_slice %5 {offsets = [0, 3, 0], sizes = [8, 16, 8], strides = [1, 1, 1]} : vector<8x20x8xbf16> to vector<8x16x8xbf16>
    %10 = vector.extract_strided_slice %5 {offsets = [0, 4, 0], sizes = [8, 16, 8], strides = [1, 1, 1]} : vector<8x20x8xbf16> to vector<8x16x8xbf16>
    %11 = tpu.concatenate %6, %7, %8, %9, %10 in 2 : vector<8x16x8xbf16>, vector<8x16x8xbf16>, vector<8x16x8xbf16>, vector<8x16x8xbf16>, vector<8x16x8xbf16> -> vector<8x16x40xbf16>
    %12 = vector.shape_cast %11 : vector<8x16x40xbf16> to vector<128x40xbf16>
    %c0_2 = arith.constant 0 : index
    %c0_3 = arith.constant 0 : index
    %c0_4 = arith.constant 0 : index
    %13 = vector.load %arg3[%c0_2, %c0_3, %c0_4] : memref<5x40x128xbf16, #tpu.memory_space<vmem>>, vector<1x40x128xbf16>
    %14 = vector.shape_cast %13 : vector<1x40x128xbf16> to vector<40x128xbf16>
    %cst = arith.constant dense<0.000000e+00> : vector<128x128xf32>
    %15 = tpu.matmul %12, %14, %cst {dimension_numbers = #tpu.dot_dimension_numbers<[1], [0], [0], [1], [0, 0, 1, 1], [], []>} : vector<128x40xbf16>, vector<40x128xbf16>, vector<128x128xf32> -> vector<128x128xf32>
    %16 = vector.extract_strided_slice %4 {offsets = [1, 0, 0], sizes = [8, 20, 8], strides = [1, 1, 1]} : vector<12x20x8xbf16> to vector<8x20x8xbf16>
    %17 = vector.extract_strided_slice %16 {offsets = [0, 0, 0], sizes = [8, 16, 8], strides = [1, 1, 1]} : vector<8x20x8xbf16> to vector<8x16x8xbf16>
    %18 = vector.extract_strided_slice %16 {offsets = [0, 1, 0], sizes = [8, 16, 8], strides = [1, 1, 1]} : vector<8x20x8xbf16> to vector<8x16x8xbf16>
    %19 = vector.extract_strided_slice %16 {offsets = [0, 2, 0], sizes = [8, 16, 8], strides = [1, 1, 1]} : vector<8x20x8xbf16> to vector<8x16x8xbf16>
    %20 = vector.extract_strided_slice %16 {offsets = [0, 3, 0], sizes = [8, 16, 8], strides = [1, 1, 1]} : vector<8x20x8xbf16> to vector<8x16x8xbf16>
    %21 = vector.extract_strided_slice %16 {offsets = [0, 4, 0], sizes = [8, 16, 8], strides = [1, 1, 1]} : vector<8x20x8xbf16> to vector<8x16x8xbf16>
    %22 = tpu.concatenate %17, %18, %19, %20, %21 in 2 : vector<8x16x8xbf16>, vector<8x16x8xbf16>, vector<8x16x8xbf16>, vector<8x16x8xbf16>, vector<8x16x8xbf16> -> vector<8x16x40xbf16>
    %23 = vector.shape_cast %22 : vector<8x16x40xbf16> to vector<128x40xbf16>
    %c1 = arith.constant 1 : index
    %c0_5 = arith.constant 0 : index
    %c0_6 = arith.constant 0 : index
    %24 = vector.load %arg3[%c1, %c0_5, %c0_6] : memref<5x40x128xbf16, #tpu.memory_space<vmem>>, vector<1x40x128xbf16>
    %25 = vector.shape_cast %24 : vector<1x40x128xbf16> to vector<40x128xbf16>
    %cst_7 = arith.constant dense<0.000000e+00> : vector<128x128xf32>
    %26 = tpu.matmul %23, %25, %cst_7 {dimension_numbers = #tpu.dot_dimension_numbers<[1], [0], [0], [1], [0, 0, 1, 1], [], []>} : vector<128x40xbf16>, vector<40x128xbf16>, vector<128x128xf32> -> vector<128x128xf32>
    %27 = arith.addf %15, %26 : vector<128x128xf32>
    %28 = vector.extract_strided_slice %4 {offsets = [2, 0, 0], sizes = [8, 20, 8], strides = [1, 1, 1]} : vector<12x20x8xbf16> to vector<8x20x8xbf16>
    %29 = vector.extract_strided_slice %28 {offsets = [0, 0, 0], sizes = [8, 16, 8], strides = [1, 1, 1]} : vector<8x20x8xbf16> to vector<8x16x8xbf16>
    %30 = vector.extract_strided_slice %28 {offsets = [0, 1, 0], sizes = [8, 16, 8], strides = [1, 1, 1]} : vector<8x20x8xbf16> to vector<8x16x8xbf16>
    %31 = vector.extract_strided_slice %28 {offsets = [0, 2, 0], sizes = [8, 16, 8], strides = [1, 1, 1]} : vector<8x20x8xbf16> to vector<8x16x8xbf16>
    %32 = vector.extract_strided_slice %28 {offsets = [0, 3, 0], sizes = [8, 16, 8], strides = [1, 1, 1]} : vector<8x20x8xbf16> to vector<8x16x8xbf16>
    %33 = vector.extract_strided_slice %28 {offsets = [0, 4, 0], sizes = [8, 16, 8], strides = [1, 1, 1]} : vector<8x20x8xbf16> to vector<8x16x8xbf16>
    %34 = tpu.concatenate %29, %30, %31, %32, %33 in 2 : vector<8x16x8xbf16>, vector<8x16x8xbf16>, vector<8x16x8xbf16>, vector<8x16x8xbf16>, vector<8x16x8xbf16> -> vector<8x16x40xbf16>
    %35 = vector.shape_cast %34 : vector<8x16x40xbf16> to vector<128x40xbf16>
    %c2 = arith.constant 2 : index
    %c0_8 = arith.constant 0 : index
    %c0_9 = arith.constant 0 : index
    %36 = vector.load %arg3[%c2, %c0_8, %c0_9] : memref<5x40x128xbf16, #tpu.memory_space<vmem>>, vector<1x40x128xbf16>
    %37 = vector.shape_cast %36 : vector<1x40x128xbf16> to vector<40x128xbf16>
    %cst_10 = arith.constant dense<0.000000e+00> : vector<128x128xf32>
    %38 = tpu.matmul %35, %37, %cst_10 {dimension_numbers = #tpu.dot_dimension_numbers<[1], [0], [0], [1], [0, 0, 1, 1], [], []>} : vector<128x40xbf16>, vector<40x128xbf16>, vector<128x128xf32> -> vector<128x128xf32>
    %39 = arith.addf %27, %38 : vector<128x128xf32>
    %40 = vector.extract_strided_slice %4 {offsets = [3, 0, 0], sizes = [8, 20, 8], strides = [1, 1, 1]} : vector<12x20x8xbf16> to vector<8x20x8xbf16>
    %41 = vector.extract_strided_slice %40 {offsets = [0, 0, 0], sizes = [8, 16, 8], strides = [1, 1, 1]} : vector<8x20x8xbf16> to vector<8x16x8xbf16>
    %42 = vector.extract_strided_slice %40 {offsets = [0, 1, 0], sizes = [8, 16, 8], strides = [1, 1, 1]} : vector<8x20x8xbf16> to vector<8x16x8xbf16>
    %43 = vector.extract_strided_slice %40 {offsets = [0, 2, 0], sizes = [8, 16, 8], strides = [1, 1, 1]} : vector<8x20x8xbf16> to vector<8x16x8xbf16>
    %44 = vector.extract_strided_slice %40 {offsets = [0, 3, 0], sizes = [8, 16, 8], strides = [1, 1, 1]} : vector<8x20x8xbf16> to vector<8x16x8xbf16>
    %45 = vector.extract_strided_slice %40 {offsets = [0, 4, 0], sizes = [8, 16, 8], strides = [1, 1, 1]} : vector<8x20x8xbf16> to vector<8x16x8xbf16>
    %46 = tpu.concatenate %41, %42, %43, %44, %45 in 2 : vector<8x16x8xbf16>, vector<8x16x8xbf16>, vector<8x16x8xbf16>, vector<8x16x8xbf16>, vector<8x16x8xbf16> -> vector<8x16x40xbf16>
    %47 = vector.shape_cast %46 : vector<8x16x40xbf16> to vector<128x40xbf16>
    %c3 = arith.constant 3 : index
    %c0_11 = arith.constant 0 : index
    %c0_12 = arith.constant 0 : index
    %48 = vector.load %arg3[%c3, %c0_11, %c0_12] : memref<5x40x128xbf16, #tpu.memory_space<vmem>>, vector<1x40x128xbf16>
    %49 = vector.shape_cast %48 : vector<1x40x128xbf16> to vector<40x128xbf16>
    %cst_13 = arith.constant dense<0.000000e+00> : vector<128x128xf32>
    %50 = tpu.matmul %47, %49, %cst_13 {dimension_numbers = #tpu.dot_dimension_numbers<[1], [0], [0], [1], [0, 0, 1, 1], [], []>} : vector<128x40xbf16>, vector<40x128xbf16>, vector<128x128xf32> -> vector<128x128xf32>
    %51 = arith.addf %39, %50 : vector<128x128xf32>
    %52 = vector.extract_strided_slice %4 {offsets = [4, 0, 0], sizes = [8, 20, 8], strides = [1, 1, 1]} : vector<12x20x8xbf16> to vector<8x20x8xbf16>
    %53 = vector.extract_strided_slice %52 {offsets = [0, 0, 0], sizes = [8, 16, 8], strides = [1, 1, 1]} : vector<8x20x8xbf16> to vector<8x16x8xbf16>
    %54 = vector.extract_strided_slice %52 {offsets = [0, 1, 0], sizes = [8, 16, 8], strides = [1, 1, 1]} : vector<8x20x8xbf16> to vector<8x16x8xbf16>
    %55 = vector.extract_strided_slice %52 {offsets = [0, 2, 0], sizes = [8, 16, 8], strides = [1, 1, 1]} : vector<8x20x8xbf16> to vector<8x16x8xbf16>
    %56 = vector.extract_strided_slice %52 {offsets = [0, 3, 0], sizes = [8, 16, 8], strides = [1, 1, 1]} : vector<8x20x8xbf16> to vector<8x16x8xbf16>
    %57 = vector.extract_strided_slice %52 {offsets = [0, 4, 0], sizes = [8, 16, 8], strides = [1, 1, 1]} : vector<8x20x8xbf16> to vector<8x16x8xbf16>
    %58 = tpu.concatenate %53, %54, %55, %56, %57 in 2 : vector<8x16x8xbf16>, vector<8x16x8xbf16>, vector<8x16x8xbf16>, vector<8x16x8xbf16>, vector<8x16x8xbf16> -> vector<8x16x40xbf16>
    %59 = vector.shape_cast %58 : vector<8x16x40xbf16> to vector<128x40xbf16>
    %c4 = arith.constant 4 : index
    %c0_14 = arith.constant 0 : index
    %c0_15 = arith.constant 0 : index
    %60 = vector.load %arg3[%c4, %c0_14, %c0_15] : memref<5x40x128xbf16, #tpu.memory_space<vmem>>, vector<1x40x128xbf16>
    %61 = vector.shape_cast %60 : vector<1x40x128xbf16> to vector<40x128xbf16>
    %cst_16 = arith.constant dense<0.000000e+00> : vector<128x128xf32>
    %62 = tpu.matmul %59, %61, %cst_16 {dimension_numbers = #tpu.dot_dimension_numbers<[1], [0], [0], [1], [0, 0, 1, 1], [], []>} : vector<128x40xbf16>, vector<40x128xbf16>, vector<128x128xf32> -> vector<128x128xf32>
    %63 = arith.addf %51, %62 : vector<128x128xf32>
    %c0_17 = arith.constant 0 : index
    %c0_18 = arith.constant 0 : index
    %64 = vector.load %arg4[%c0_17, %c0_18] : memref<1x128xf32, #tpu.memory_space<vmem>>, vector<1x128xf32>
    %65 = vector.broadcast %64 : vector<1x128xf32> to vector<128x128xf32>
    %66 = arith.addf %63, %65 : vector<128x128xf32>
    %cst_19 = arith.constant 0.000000e+00 : f32
    %67 = vector.broadcast %cst_19 : f32 to vector<128x128xf32>
    %68 = arith.maximumf %66, %67 : vector<128x128xf32>
    %69 = vector.shape_cast %68 : vector<128x128xf32> to vector<8x16x128xf32>
    %70 = arith.truncf %69 : vector<8x16x128xf32> to vector<8x16x128xbf16>
    %c0_20 = arith.constant 0 : index
    %c0_21 = arith.constant 0 : index
    %c0_22 = arith.constant 0 : index
    %c0_23 = arith.constant 0 : index
    %71 = vector.load %arg5[%c0_20, %c0_21, %c0_22, %c0_23] : memref<1x8x16x128xbf16, #tpu.memory_space<vmem>>, vector<1x8x16x128xbf16>
    %72 = vector.shape_cast %71 : vector<1x8x16x128xbf16> to vector<8x16x128xbf16>
    %73 = vector.shape_cast %70 : vector<8x16x128xbf16> to vector<1x8x16x128xbf16>
    tpu.vector_store %arg5[%c0_20, %c0_21, %c0_22, %c0_23], %73 {strides = array<i32>} : memref<1x8x16x128xbf16, #tpu.memory_space<vmem>>, vector<1x8x16x128xbf16>,
    return
  }
  func.func @transform_0(%arg0: i32, %arg1: i32) -> (i32, i32, i32, i32) {
    %c0_i32 = arith.constant 0 : i32
    %c0_i32_0 = arith.constant 0 : i32
    %c0_i32_1 = arith.constant 0 : i32
    %c0_i32_2 = arith.constant 0 : i32
    return %arg0, %c0_i32, %c0_i32_0, %c0_i32_1 : i32, i32, i32, i32
  }
  func.func @transform_1(%arg0: i32, %arg1: i32) -> (i32, i32, i32) {
    %c0_i32 = arith.constant 0 : i32
    %c0_i32_0 = arith.constant 0 : i32
    %c0_i32_1 = arith.constant 0 : i32
    %c0_i32_2 = arith.constant 0 : i32
    return %c0_i32, %c0_i32_0, %c0_i32_1 : i32, i32, i32
  }
  func.func @transform_2(%arg0: i32, %arg1: i32) -> (i32, i32) {
    %c0_i32 = arith.constant 0 : i32
    %c0_i32_0 = arith.constant 0 : i32
    %c0_i32_1 = arith.constant 0 : i32
    return %c0_i32, %c0_i32_0 : i32, i32
  }
  func.func @transform_3(%arg0: i32, %arg1: i32) -> (i32, i32, i32, i32) {
    %c0_i32 = arith.constant 0 : i32
    %c0_i32_0 = arith.constant 0 : i32
    %c0_i32_1 = arith.constant 0 : i32
    return %arg0, %arg1, %c0_i32, %c0_i32_0 : i32, i32, i32, i32
  }
}

module attributes {stable_mosaic.version = 11 : i64} {
  func.func @conv5x5_relu_kernel(%arg0: i32, %arg1: i32, %arg2: memref<1x20x20x128xbf16, #tpu.memory_space<vmem>>, %arg3: memref<5x640x128xbf16, #tpu.memory_space<vmem>>, %arg4: memref<1x128xf32, #tpu.memory_space<vmem>>, %arg5: memref<1x8x16x128xbf16, #tpu.memory_space<vmem>>) attributes {dimension_semantics = [#tpu.dimension_semantics<parallel>, #tpu.dimension_semantics<parallel>], iteration_bounds = array<i64: 2, 2>, scalar_prefetch = 0 : i64, scratch_operands = 0 : i64, tpu.core_type = #tpu.core_type<tc>, window_params = [{transform_indices = @transform_0, window_bounds = array<i64: 1, 20, 20, 128>}, {pipeline_mode = #tpu.pipeline_mode<synchronous>, transform_indices = @transform_1, window_bounds = array<i64: 5, 640, 128>}, {pipeline_mode = #tpu.pipeline_mode<synchronous>, transform_indices = @transform_2, window_bounds = array<i64: 1, 128>}, {transform_indices = @transform_3, window_bounds = array<i64: 1, 8, 16, 128>}]} {
    %c8_i32 = arith.constant 8 : i32
    %0 = arith.muli %arg1, %c8_i32 : i32
    %1 = tpu.assume_multiple %0, 8 : i32
    %c0 = arith.constant 0 : index
    %2 = arith.index_cast %1 : i32 to index
    %c0_0 = arith.constant 0 : index
    %c0_1 = arith.constant 0 : index
    %3 = vector.load %arg2[%c0, %2, %c0_0, %c0_1] : memref<1x20x20x128xbf16, #tpu.memory_space<vmem>>, vector<1x12x20x128xbf16>
    %4 = vector.shape_cast %3 : vector<1x12x20x128xbf16> to vector<12x20x128xbf16>
    %5 = vector.extract_strided_slice %4 {offsets = [0, 0, 0], sizes = [8, 20, 128], strides = [1, 1, 1]} : vector<12x20x128xbf16> to vector<8x20x128xbf16>
    %6 = vector.extract_strided_slice %5 {offsets = [0, 0, 0], sizes = [8, 16, 128], strides = [1, 1, 1]} : vector<8x20x128xbf16> to vector<8x16x128xbf16>
    %7 = vector.extract_strided_slice %5 {offsets = [0, 1, 0], sizes = [8, 16, 128], strides = [1, 1, 1]} : vector<8x20x128xbf16> to vector<8x16x128xbf16>
    %8 = vector.extract_strided_slice %5 {offsets = [0, 2, 0], sizes = [8, 16, 128], strides = [1, 1, 1]} : vector<8x20x128xbf16> to vector<8x16x128xbf16>
    %9 = vector.extract_strided_slice %5 {offsets = [0, 3, 0], sizes = [8, 16, 128], strides = [1, 1, 1]} : vector<8x20x128xbf16> to vector<8x16x128xbf16>
    %10 = vector.extract_strided_slice %5 {offsets = [0, 4, 0], sizes = [8, 16, 128], strides = [1, 1, 1]} : vector<8x20x128xbf16> to vector<8x16x128xbf16>
    %11 = tpu.concatenate %6, %7, %8, %9, %10 in 2 : vector<8x16x128xbf16>, vector<8x16x128xbf16>, vector<8x16x128xbf16>, vector<8x16x128xbf16>, vector<8x16x128xbf16> -> vector<8x16x640xbf16>
    %12 = vector.shape_cast %11 : vector<8x16x640xbf16> to vector<128x640xbf16>
    %c0_2 = arith.constant 0 : index
    %c0_3 = arith.constant 0 : index
    %c0_4 = arith.constant 0 : index
    %13 = vector.load %arg3[%c0_2, %c0_3, %c0_4] : memref<5x640x128xbf16, #tpu.memory_space<vmem>>, vector<1x640x128xbf16>
    %14 = vector.shape_cast %13 : vector<1x640x128xbf16> to vector<640x128xbf16>
    %cst = arith.constant dense<0.000000e+00> : vector<128x128xf32>
    %15 = tpu.matmul %12, %14, %cst {dimension_numbers = #tpu.dot_dimension_numbers<[1], [0], [0], [1], [0, 0, 1, 1], [], []>} : vector<128x640xbf16>, vector<640x128xbf16>, vector<128x128xf32> -> vector<128x128xf32>
    %16 = vector.extract_strided_slice %4 {offsets = [1, 0, 0], sizes = [8, 20, 128], strides = [1, 1, 1]} : vector<12x20x128xbf16> to vector<8x20x128xbf16>
    %17 = vector.extract_strided_slice %16 {offsets = [0, 0, 0], sizes = [8, 16, 128], strides = [1, 1, 1]} : vector<8x20x128xbf16> to vector<8x16x128xbf16>
    %18 = vector.extract_strided_slice %16 {offsets = [0, 1, 0], sizes = [8, 16, 128], strides = [1, 1, 1]} : vector<8x20x128xbf16> to vector<8x16x128xbf16>
    %19 = vector.extract_strided_slice %16 {offsets = [0, 2, 0], sizes = [8, 16, 128], strides = [1, 1, 1]} : vector<8x20x128xbf16> to vector<8x16x128xbf16>
    %20 = vector.extract_strided_slice %16 {offsets = [0, 3, 0], sizes = [8, 16, 128], strides = [1, 1, 1]} : vector<8x20x128xbf16> to vector<8x16x128xbf16>
    %21 = vector.extract_strided_slice %16 {offsets = [0, 4, 0], sizes = [8, 16, 128], strides = [1, 1, 1]} : vector<8x20x128xbf16> to vector<8x16x128xbf16>
    %22 = tpu.concatenate %17, %18, %19, %20, %21 in 2 : vector<8x16x128xbf16>, vector<8x16x128xbf16>, vector<8x16x128xbf16>, vector<8x16x128xbf16>, vector<8x16x128xbf16> -> vector<8x16x640xbf16>
    %23 = vector.shape_cast %22 : vector<8x16x640xbf16> to vector<128x640xbf16>
    %c1 = arith.constant 1 : index
    %c0_5 = arith.constant 0 : index
    %c0_6 = arith.constant 0 : index
    %24 = vector.load %arg3[%c1, %c0_5, %c0_6] : memref<5x640x128xbf16, #tpu.memory_space<vmem>>, vector<1x640x128xbf16>
    %25 = vector.shape_cast %24 : vector<1x640x128xbf16> to vector<640x128xbf16>
    %cst_7 = arith.constant dense<0.000000e+00> : vector<128x128xf32>
    %26 = tpu.matmul %23, %25, %cst_7 {dimension_numbers = #tpu.dot_dimension_numbers<[1], [0], [0], [1], [0, 0, 1, 1], [], []>} : vector<128x640xbf16>, vector<640x128xbf16>, vector<128x128xf32> -> vector<128x128xf32>
    %27 = arith.addf %15, %26 : vector<128x128xf32>
    %28 = vector.extract_strided_slice %4 {offsets = [2, 0, 0], sizes = [8, 20, 128], strides = [1, 1, 1]} : vector<12x20x128xbf16> to vector<8x20x128xbf16>
    %29 = vector.extract_strided_slice %28 {offsets = [0, 0, 0], sizes = [8, 16, 128], strides = [1, 1, 1]} : vector<8x20x128xbf16> to vector<8x16x128xbf16>
    %30 = vector.extract_strided_slice %28 {offsets = [0, 1, 0], sizes = [8, 16, 128], strides = [1, 1, 1]} : vector<8x20x128xbf16> to vector<8x16x128xbf16>
    %31 = vector.extract_strided_slice %28 {offsets = [0, 2, 0], sizes = [8, 16, 128], strides = [1, 1, 1]} : vector<8x20x128xbf16> to vector<8x16x128xbf16>
    %32 = vector.extract_strided_slice %28 {offsets = [0, 3, 0], sizes = [8, 16, 128], strides = [1, 1, 1]} : vector<8x20x128xbf16> to vector<8x16x128xbf16>
    %33 = vector.extract_strided_slice %28 {offsets = [0, 4, 0], sizes = [8, 16, 128], strides = [1, 1, 1]} : vector<8x20x128xbf16> to vector<8x16x128xbf16>
    %34 = tpu.concatenate %29, %30, %31, %32, %33 in 2 : vector<8x16x128xbf16>, vector<8x16x128xbf16>, vector<8x16x128xbf16>, vector<8x16x128xbf16>, vector<8x16x128xbf16> -> vector<8x16x640xbf16>
    %35 = vector.shape_cast %34 : vector<8x16x640xbf16> to vector<128x640xbf16>
    %c2 = arith.constant 2 : index
    %c0_8 = arith.constant 0 : index
    %c0_9 = arith.constant 0 : index
    %36 = vector.load %arg3[%c2, %c0_8, %c0_9] : memref<5x640x128xbf16, #tpu.memory_space<vmem>>, vector<1x640x128xbf16>
    %37 = vector.shape_cast %36 : vector<1x640x128xbf16> to vector<640x128xbf16>
    %cst_10 = arith.constant dense<0.000000e+00> : vector<128x128xf32>
    %38 = tpu.matmul %35, %37, %cst_10 {dimension_numbers = #tpu.dot_dimension_numbers<[1], [0], [0], [1], [0, 0, 1, 1], [], []>} : vector<128x640xbf16>, vector<640x128xbf16>, vector<128x128xf32> -> vector<128x128xf32>
    %39 = arith.addf %27, %38 : vector<128x128xf32>
    %40 = vector.extract_strided_slice %4 {offsets = [3, 0, 0], sizes = [8, 20, 128], strides = [1, 1, 1]} : vector<12x20x128xbf16> to vector<8x20x128xbf16>
    %41 = vector.extract_strided_slice %40 {offsets = [0, 0, 0], sizes = [8, 16, 128], strides = [1, 1, 1]} : vector<8x20x128xbf16> to vector<8x16x128xbf16>
    %42 = vector.extract_strided_slice %40 {offsets = [0, 1, 0], sizes = [8, 16, 128], strides = [1, 1, 1]} : vector<8x20x128xbf16> to vector<8x16x128xbf16>
    %43 = vector.extract_strided_slice %40 {offsets = [0, 2, 0], sizes = [8, 16, 128], strides = [1, 1, 1]} : vector<8x20x128xbf16> to vector<8x16x128xbf16>
    %44 = vector.extract_strided_slice %40 {offsets = [0, 3, 0], sizes = [8, 16, 128], strides = [1, 1, 1]} : vector<8x20x128xbf16> to vector<8x16x128xbf16>
    %45 = vector.extract_strided_slice %40 {offsets = [0, 4, 0], sizes = [8, 16, 128], strides = [1, 1, 1]} : vector<8x20x128xbf16> to vector<8x16x128xbf16>
    %46 = tpu.concatenate %41, %42, %43, %44, %45 in 2 : vector<8x16x128xbf16>, vector<8x16x128xbf16>, vector<8x16x128xbf16>, vector<8x16x128xbf16>, vector<8x16x128xbf16> -> vector<8x16x640xbf16>
    %47 = vector.shape_cast %46 : vector<8x16x640xbf16> to vector<128x640xbf16>
    %c3 = arith.constant 3 : index
    %c0_11 = arith.constant 0 : index
    %c0_12 = arith.constant 0 : index
    %48 = vector.load %arg3[%c3, %c0_11, %c0_12] : memref<5x640x128xbf16, #tpu.memory_space<vmem>>, vector<1x640x128xbf16>
    %49 = vector.shape_cast %48 : vector<1x640x128xbf16> to vector<640x128xbf16>
    %cst_13 = arith.constant dense<0.000000e+00> : vector<128x128xf32>
    %50 = tpu.matmul %47, %49, %cst_13 {dimension_numbers = #tpu.dot_dimension_numbers<[1], [0], [0], [1], [0, 0, 1, 1], [], []>} : vector<128x640xbf16>, vector<640x128xbf16>, vector<128x128xf32> -> vector<128x128xf32>
    %51 = arith.addf %39, %50 : vector<128x128xf32>
    %52 = vector.extract_strided_slice %4 {offsets = [4, 0, 0], sizes = [8, 20, 128], strides = [1, 1, 1]} : vector<12x20x128xbf16> to vector<8x20x128xbf16>
    %53 = vector.extract_strided_slice %52 {offsets = [0, 0, 0], sizes = [8, 16, 128], strides = [1, 1, 1]} : vector<8x20x128xbf16> to vector<8x16x128xbf16>
    %54 = vector.extract_strided_slice %52 {offsets = [0, 1, 0], sizes = [8, 16, 128], strides = [1, 1, 1]} : vector<8x20x128xbf16> to vector<8x16x128xbf16>
    %55 = vector.extract_strided_slice %52 {offsets = [0, 2, 0], sizes = [8, 16, 128], strides = [1, 1, 1]} : vector<8x20x128xbf16> to vector<8x16x128xbf16>
    %56 = vector.extract_strided_slice %52 {offsets = [0, 3, 0], sizes = [8, 16, 128], strides = [1, 1, 1]} : vector<8x20x128xbf16> to vector<8x16x128xbf16>
    %57 = vector.extract_strided_slice %52 {offsets = [0, 4, 0], sizes = [8, 16, 128], strides = [1, 1, 1]} : vector<8x20x128xbf16> to vector<8x16x128xbf16>
    %58 = tpu.concatenate %53, %54, %55, %56, %57 in 2 : vector<8x16x128xbf16>, vector<8x16x128xbf16>, vector<8x16x128xbf16>, vector<8x16x128xbf16>, vector<8x16x128xbf16> -> vector<8x16x640xbf16>
    %59 = vector.shape_cast %58 : vector<8x16x640xbf16> to vector<128x640xbf16>
    %c4 = arith.constant 4 : index
    %c0_14 = arith.constant 0 : index
    %c0_15 = arith.constant 0 : index
    %60 = vector.load %arg3[%c4, %c0_14, %c0_15] : memref<5x640x128xbf16, #tpu.memory_space<vmem>>, vector<1x640x128xbf16>
    %61 = vector.shape_cast %60 : vector<1x640x128xbf16> to vector<640x128xbf16>
    %cst_16 = arith.constant dense<0.000000e+00> : vector<128x128xf32>
    %62 = tpu.matmul %59, %61, %cst_16 {dimension_numbers = #tpu.dot_dimension_numbers<[1], [0], [0], [1], [0, 0, 1, 1], [], []>} : vector<128x640xbf16>, vector<640x128xbf16>, vector<128x128xf32> -> vector<128x128xf32>
    %63 = arith.addf %51, %62 : vector<128x128xf32>
    %c0_17 = arith.constant 0 : index
    %c0_18 = arith.constant 0 : index
    %64 = vector.load %arg4[%c0_17, %c0_18] : memref<1x128xf32, #tpu.memory_space<vmem>>, vector<1x128xf32>
    %65 = vector.broadcast %64 : vector<1x128xf32> to vector<128x128xf32>
    %66 = arith.addf %63, %65 : vector<128x128xf32>
    %cst_19 = arith.constant 0.000000e+00 : f32
    %67 = vector.broadcast %cst_19 : f32 to vector<128x128xf32>
    %68 = arith.maximumf %66, %67 : vector<128x128xf32>
    %69 = vector.shape_cast %68 : vector<128x128xf32> to vector<8x16x128xf32>
    %70 = arith.truncf %69 : vector<8x16x128xf32> to vector<8x16x128xbf16>
    %c0_20 = arith.constant 0 : index
    %c0_21 = arith.constant 0 : index
    %c0_22 = arith.constant 0 : index
    %c0_23 = arith.constant 0 : index
    %71 = vector.load %arg5[%c0_20, %c0_21, %c0_22, %c0_23] : memref<1x8x16x128xbf16, #tpu.memory_space<vmem>>, vector<1x8x16x128xbf16>
    %72 = vector.shape_cast %71 : vector<1x8x16x128xbf16> to vector<8x16x128xbf16>
    %73 = vector.shape_cast %70 : vector<8x16x128xbf16> to vector<1x8x16x128xbf16>
    tpu.vector_store %arg5[%c0_20, %c0_21, %c0_22, %c0_23], %73 {strides = array<i32>} : memref<1x8x16x128xbf16, #tpu.memory_space<vmem>>, vector<1x8x16x128xbf16>,
    return
  }
  func.func @transform_0(%arg0: i32, %arg1: i32) -> (i32, i32, i32, i32) {
    %c0_i32 = arith.constant 0 : i32
    %c0_i32_0 = arith.constant 0 : i32
    %c0_i32_1 = arith.constant 0 : i32
    %c0_i32_2 = arith.constant 0 : i32
    return %arg0, %c0_i32, %c0_i32_0, %c0_i32_1 : i32, i32, i32, i32
  }
  func.func @transform_1(%arg0: i32, %arg1: i32) -> (i32, i32, i32) {
    %c0_i32 = arith.constant 0 : i32
    %c0_i32_0 = arith.constant 0 : i32
    %c0_i32_1 = arith.constant 0 : i32
    %c0_i32_2 = arith.constant 0 : i32
    return %c0_i32, %c0_i32_0, %c0_i32_1 : i32, i32, i32
  }
  func.func @transform_2(%arg0: i32, %arg1: i32) -> (i32, i32) {
    %c0_i32 = arith.constant 0 : i32
    %c0_i32_0 = arith.constant 0 : i32
    %c0_i32_1 = arith.constant 0 : i32
    return %c0_i32, %c0_i32_0 : i32, i32
  }
  func.func @transform_3(%arg0: i32, %arg1: i32) -> (i32, i32, i32, i32) {
    %c0_i32 = arith.constant 0 : i32
    %c0_i32_0 = arith.constant 0 : i32
    %c0_i32_1 = arith.constant 0 : i32
    return %arg0, %arg1, %c0_i32, %c0_i32_0 : i32, i32, i32, i32
  }
}

module attributes {stable_mosaic.version = 11 : i64} {
  func.func @conv5x5_relu_kernel(%arg0: i32, %arg1: i32, %arg2: memref<1x20x20x128xbf16, #tpu.memory_space<vmem>>, %arg3: memref<5x640x128xbf16, #tpu.memory_space<vmem>>, %arg4: memref<1x128xf32, #tpu.memory_space<vmem>>, %arg5: memref<1x8x16x128xbf16, #tpu.memory_space<vmem>>) attributes {dimension_semantics = [#tpu.dimension_semantics<parallel>, #tpu.dimension_semantics<parallel>], iteration_bounds = array<i64: 2, 2>, scalar_prefetch = 0 : i64, scratch_operands = 0 : i64, tpu.core_type = #tpu.core_type<tc>, window_params = [{transform_indices = @transform_0, window_bounds = array<i64: 1, 20, 20, 128>}, {pipeline_mode = #tpu.pipeline_mode<synchronous>, transform_indices = @transform_1, window_bounds = array<i64: 5, 640, 128>}, {pipeline_mode = #tpu.pipeline_mode<synchronous>, transform_indices = @transform_2, window_bounds = array<i64: 1, 128>}, {transform_indices = @transform_3, window_bounds = array<i64: 1, 8, 16, 128>}]} {
    %c8_i32 = arith.constant 8 : i32
    %0 = arith.muli %arg1, %c8_i32 : i32
    %1 = tpu.assume_multiple %0, 8 : i32
    %c0 = arith.constant 0 : index
    %2 = arith.index_cast %1 : i32 to index
    %c0_0 = arith.constant 0 : index
    %c0_1 = arith.constant 0 : index
    %3 = vector.load %arg2[%c0, %2, %c0_0, %c0_1] : memref<1x20x20x128xbf16, #tpu.memory_space<vmem>>, vector<1x12x20x128xbf16>
    %4 = vector.shape_cast %3 : vector<1x12x20x128xbf16> to vector<12x20x128xbf16>
    %5 = vector.extract_strided_slice %4 {offsets = [0, 0, 0], sizes = [8, 20, 128], strides = [1, 1, 1]} : vector<12x20x128xbf16> to vector<8x20x128xbf16>
    %6 = vector.extract_strided_slice %5 {offsets = [0, 0, 0], sizes = [8, 16, 128], strides = [1, 1, 1]} : vector<8x20x128xbf16> to vector<8x16x128xbf16>
    %7 = vector.extract_strided_slice %5 {offsets = [0, 1, 0], sizes = [8, 16, 128], strides = [1, 1, 1]} : vector<8x20x128xbf16> to vector<8x16x128xbf16>
    %8 = vector.extract_strided_slice %5 {offsets = [0, 2, 0], sizes = [8, 16, 128], strides = [1, 1, 1]} : vector<8x20x128xbf16> to vector<8x16x128xbf16>
    %9 = vector.extract_strided_slice %5 {offsets = [0, 3, 0], sizes = [8, 16, 128], strides = [1, 1, 1]} : vector<8x20x128xbf16> to vector<8x16x128xbf16>
    %10 = vector.extract_strided_slice %5 {offsets = [0, 4, 0], sizes = [8, 16, 128], strides = [1, 1, 1]} : vector<8x20x128xbf16> to vector<8x16x128xbf16>
    %11 = tpu.concatenate %6, %7, %8, %9, %10 in 2 : vector<8x16x128xbf16>, vector<8x16x128xbf16>, vector<8x16x128xbf16>, vector<8x16x128xbf16>, vector<8x16x128xbf16> -> vector<8x16x640xbf16>
    %12 = vector.shape_cast %11 : vector<8x16x640xbf16> to vector<128x640xbf16>
    %c0_2 = arith.constant 0 : index
    %c0_3 = arith.constant 0 : index
    %c0_4 = arith.constant 0 : index
    %13 = vector.load %arg3[%c0_2, %c0_3, %c0_4] : memref<5x640x128xbf16, #tpu.memory_space<vmem>>, vector<1x640x128xbf16>
    %14 = vector.shape_cast %13 : vector<1x640x128xbf16> to vector<640x128xbf16>
    %cst = arith.constant dense<0.000000e+00> : vector<128x128xf32>
    %15 = tpu.matmul %12, %14, %cst {dimension_numbers = #tpu.dot_dimension_numbers<[1], [0], [0], [1], [0, 0, 1, 1], [], []>} : vector<128x640xbf16>, vector<640x128xbf16>, vector<128x128xf32> -> vector<128x128xf32>
    %16 = vector.extract_strided_slice %4 {offsets = [1, 0, 0], sizes = [8, 20, 128], strides = [1, 1, 1]} : vector<12x20x128xbf16> to vector<8x20x128xbf16>
    %17 = vector.extract_strided_slice %16 {offsets = [0, 0, 0], sizes = [8, 16, 128], strides = [1, 1, 1]} : vector<8x20x128xbf16> to vector<8x16x128xbf16>
    %18 = vector.extract_strided_slice %16 {offsets = [0, 1, 0], sizes = [8, 16, 128], strides = [1, 1, 1]} : vector<8x20x128xbf16> to vector<8x16x128xbf16>
    %19 = vector.extract_strided_slice %16 {offsets = [0, 2, 0], sizes = [8, 16, 128], strides = [1, 1, 1]} : vector<8x20x128xbf16> to vector<8x16x128xbf16>
    %20 = vector.extract_strided_slice %16 {offsets = [0, 3, 0], sizes = [8, 16, 128], strides = [1, 1, 1]} : vector<8x20x128xbf16> to vector<8x16x128xbf16>
    %21 = vector.extract_strided_slice %16 {offsets = [0, 4, 0], sizes = [8, 16, 128], strides = [1, 1, 1]} : vector<8x20x128xbf16> to vector<8x16x128xbf16>
    %22 = tpu.concatenate %17, %18, %19, %20, %21 in 2 : vector<8x16x128xbf16>, vector<8x16x128xbf16>, vector<8x16x128xbf16>, vector<8x16x128xbf16>, vector<8x16x128xbf16> -> vector<8x16x640xbf16>
    %23 = vector.shape_cast %22 : vector<8x16x640xbf16> to vector<128x640xbf16>
    %c1 = arith.constant 1 : index
    %c0_5 = arith.constant 0 : index
    %c0_6 = arith.constant 0 : index
    %24 = vector.load %arg3[%c1, %c0_5, %c0_6] : memref<5x640x128xbf16, #tpu.memory_space<vmem>>, vector<1x640x128xbf16>
    %25 = vector.shape_cast %24 : vector<1x640x128xbf16> to vector<640x128xbf16>
    %cst_7 = arith.constant dense<0.000000e+00> : vector<128x128xf32>
    %26 = tpu.matmul %23, %25, %cst_7 {dimension_numbers = #tpu.dot_dimension_numbers<[1], [0], [0], [1], [0, 0, 1, 1], [], []>} : vector<128x640xbf16>, vector<640x128xbf16>, vector<128x128xf32> -> vector<128x128xf32>
    %27 = arith.addf %15, %26 : vector<128x128xf32>
    %28 = vector.extract_strided_slice %4 {offsets = [2, 0, 0], sizes = [8, 20, 128], strides = [1, 1, 1]} : vector<12x20x128xbf16> to vector<8x20x128xbf16>
    %29 = vector.extract_strided_slice %28 {offsets = [0, 0, 0], sizes = [8, 16, 128], strides = [1, 1, 1]} : vector<8x20x128xbf16> to vector<8x16x128xbf16>
    %30 = vector.extract_strided_slice %28 {offsets = [0, 1, 0], sizes = [8, 16, 128], strides = [1, 1, 1]} : vector<8x20x128xbf16> to vector<8x16x128xbf16>
    %31 = vector.extract_strided_slice %28 {offsets = [0, 2, 0], sizes = [8, 16, 128], strides = [1, 1, 1]} : vector<8x20x128xbf16> to vector<8x16x128xbf16>
    %32 = vector.extract_strided_slice %28 {offsets = [0, 3, 0], sizes = [8, 16, 128], strides = [1, 1, 1]} : vector<8x20x128xbf16> to vector<8x16x128xbf16>
    %33 = vector.extract_strided_slice %28 {offsets = [0, 4, 0], sizes = [8, 16, 128], strides = [1, 1, 1]} : vector<8x20x128xbf16> to vector<8x16x128xbf16>
    %34 = tpu.concatenate %29, %30, %31, %32, %33 in 2 : vector<8x16x128xbf16>, vector<8x16x128xbf16>, vector<8x16x128xbf16>, vector<8x16x128xbf16>, vector<8x16x128xbf16> -> vector<8x16x640xbf16>
    %35 = vector.shape_cast %34 : vector<8x16x640xbf16> to vector<128x640xbf16>
    %c2 = arith.constant 2 : index
    %c0_8 = arith.constant 0 : index
    %c0_9 = arith.constant 0 : index
    %36 = vector.load %arg3[%c2, %c0_8, %c0_9] : memref<5x640x128xbf16, #tpu.memory_space<vmem>>, vector<1x640x128xbf16>
    %37 = vector.shape_cast %36 : vector<1x640x128xbf16> to vector<640x128xbf16>
    %cst_10 = arith.constant dense<0.000000e+00> : vector<128x128xf32>
    %38 = tpu.matmul %35, %37, %cst_10 {dimension_numbers = #tpu.dot_dimension_numbers<[1], [0], [0], [1], [0, 0, 1, 1], [], []>} : vector<128x640xbf16>, vector<640x128xbf16>, vector<128x128xf32> -> vector<128x128xf32>
    %39 = arith.addf %27, %38 : vector<128x128xf32>
    %40 = vector.extract_strided_slice %4 {offsets = [3, 0, 0], sizes = [8, 20, 128], strides = [1, 1, 1]} : vector<12x20x128xbf16> to vector<8x20x128xbf16>
    %41 = vector.extract_strided_slice %40 {offsets = [0, 0, 0], sizes = [8, 16, 128], strides = [1, 1, 1]} : vector<8x20x128xbf16> to vector<8x16x128xbf16>
    %42 = vector.extract_strided_slice %40 {offsets = [0, 1, 0], sizes = [8, 16, 128], strides = [1, 1, 1]} : vector<8x20x128xbf16> to vector<8x16x128xbf16>
    %43 = vector.extract_strided_slice %40 {offsets = [0, 2, 0], sizes = [8, 16, 128], strides = [1, 1, 1]} : vector<8x20x128xbf16> to vector<8x16x128xbf16>
    %44 = vector.extract_strided_slice %40 {offsets = [0, 3, 0], sizes = [8, 16, 128], strides = [1, 1, 1]} : vector<8x20x128xbf16> to vector<8x16x128xbf16>
    %45 = vector.extract_strided_slice %40 {offsets = [0, 4, 0], sizes = [8, 16, 128], strides = [1, 1, 1]} : vector<8x20x128xbf16> to vector<8x16x128xbf16>
    %46 = tpu.concatenate %41, %42, %43, %44, %45 in 2 : vector<8x16x128xbf16>, vector<8x16x128xbf16>, vector<8x16x128xbf16>, vector<8x16x128xbf16>, vector<8x16x128xbf16> -> vector<8x16x640xbf16>
    %47 = vector.shape_cast %46 : vector<8x16x640xbf16> to vector<128x640xbf16>
    %c3 = arith.constant 3 : index
    %c0_11 = arith.constant 0 : index
    %c0_12 = arith.constant 0 : index
    %48 = vector.load %arg3[%c3, %c0_11, %c0_12] : memref<5x640x128xbf16, #tpu.memory_space<vmem>>, vector<1x640x128xbf16>
    %49 = vector.shape_cast %48 : vector<1x640x128xbf16> to vector<640x128xbf16>
    %cst_13 = arith.constant dense<0.000000e+00> : vector<128x128xf32>
    %50 = tpu.matmul %47, %49, %cst_13 {dimension_numbers = #tpu.dot_dimension_numbers<[1], [0], [0], [1], [0, 0, 1, 1], [], []>} : vector<128x640xbf16>, vector<640x128xbf16>, vector<128x128xf32> -> vector<128x128xf32>
    %51 = arith.addf %39, %50 : vector<128x128xf32>
    %52 = vector.extract_strided_slice %4 {offsets = [4, 0, 0], sizes = [8, 20, 128], strides = [1, 1, 1]} : vector<12x20x128xbf16> to vector<8x20x128xbf16>
    %53 = vector.extract_strided_slice %52 {offsets = [0, 0, 0], sizes = [8, 16, 128], strides = [1, 1, 1]} : vector<8x20x128xbf16> to vector<8x16x128xbf16>
    %54 = vector.extract_strided_slice %52 {offsets = [0, 1, 0], sizes = [8, 16, 128], strides = [1, 1, 1]} : vector<8x20x128xbf16> to vector<8x16x128xbf16>
    %55 = vector.extract_strided_slice %52 {offsets = [0, 2, 0], sizes = [8, 16, 128], strides = [1, 1, 1]} : vector<8x20x128xbf16> to vector<8x16x128xbf16>
    %56 = vector.extract_strided_slice %52 {offsets = [0, 3, 0], sizes = [8, 16, 128], strides = [1, 1, 1]} : vector<8x20x128xbf16> to vector<8x16x128xbf16>
    %57 = vector.extract_strided_slice %52 {offsets = [0, 4, 0], sizes = [8, 16, 128], strides = [1, 1, 1]} : vector<8x20x128xbf16> to vector<8x16x128xbf16>
    %58 = tpu.concatenate %53, %54, %55, %56, %57 in 2 : vector<8x16x128xbf16>, vector<8x16x128xbf16>, vector<8x16x128xbf16>, vector<8x16x128xbf16>, vector<8x16x128xbf16> -> vector<8x16x640xbf16>
    %59 = vector.shape_cast %58 : vector<8x16x640xbf16> to vector<128x640xbf16>
    %c4 = arith.constant 4 : index
    %c0_14 = arith.constant 0 : index
    %c0_15 = arith.constant 0 : index
    %60 = vector.load %arg3[%c4, %c0_14, %c0_15] : memref<5x640x128xbf16, #tpu.memory_space<vmem>>, vector<1x640x128xbf16>
    %61 = vector.shape_cast %60 : vector<1x640x128xbf16> to vector<640x128xbf16>
    %cst_16 = arith.constant dense<0.000000e+00> : vector<128x128xf32>
    %62 = tpu.matmul %59, %61, %cst_16 {dimension_numbers = #tpu.dot_dimension_numbers<[1], [0], [0], [1], [0, 0, 1, 1], [], []>} : vector<128x640xbf16>, vector<640x128xbf16>, vector<128x128xf32> -> vector<128x128xf32>
    %63 = arith.addf %51, %62 : vector<128x128xf32>
    %c0_17 = arith.constant 0 : index
    %c0_18 = arith.constant 0 : index
    %64 = vector.load %arg4[%c0_17, %c0_18] : memref<1x128xf32, #tpu.memory_space<vmem>>, vector<1x128xf32>
    %65 = vector.broadcast %64 : vector<1x128xf32> to vector<128x128xf32>
    %66 = arith.addf %63, %65 : vector<128x128xf32>
    %cst_19 = arith.constant 0.000000e+00 : f32
    %67 = vector.broadcast %cst_19 : f32 to vector<128x128xf32>
    %68 = arith.maximumf %66, %67 : vector<128x128xf32>
    %69 = vector.shape_cast %68 : vector<128x128xf32> to vector<8x16x128xf32>
    %70 = arith.truncf %69 : vector<8x16x128xf32> to vector<8x16x128xbf16>
    %c0_20 = arith.constant 0 : index
    %c0_21 = arith.constant 0 : index
    %c0_22 = arith.constant 0 : index
    %c0_23 = arith.constant 0 : index
    %71 = vector.load %arg5[%c0_20, %c0_21, %c0_22, %c0_23] : memref<1x8x16x128xbf16, #tpu.memory_space<vmem>>, vector<1x8x16x128xbf16>
    %72 = vector.shape_cast %71 : vector<1x8x16x128xbf16> to vector<8x16x128xbf16>
    %73 = vector.shape_cast %70 : vector<8x16x128xbf16> to vector<1x8x16x128xbf16>
    tpu.vector_store %arg5[%c0_20, %c0_21, %c0_22, %c0_23], %73 {strides = array<i32>} : memref<1x8x16x128xbf16, #tpu.memory_space<vmem>>, vector<1x8x16x128xbf16>,
    return
  }
  func.func @transform_0(%arg0: i32, %arg1: i32) -> (i32, i32, i32, i32) {
    %c0_i32 = arith.constant 0 : i32
    %c0_i32_0 = arith.constant 0 : i32
    %c0_i32_1 = arith.constant 0 : i32
    %c0_i32_2 = arith.constant 0 : i32
    return %arg0, %c0_i32, %c0_i32_0, %c0_i32_1 : i32, i32, i32, i32
  }
  func.func @transform_1(%arg0: i32, %arg1: i32) -> (i32, i32, i32) {
    %c0_i32 = arith.constant 0 : i32
    %c0_i32_0 = arith.constant 0 : i32
    %c0_i32_1 = arith.constant 0 : i32
    %c0_i32_2 = arith.constant 0 : i32
    return %c0_i32, %c0_i32_0, %c0_i32_1 : i32, i32, i32
  }
  func.func @transform_2(%arg0: i32, %arg1: i32) -> (i32, i32) {
    %c0_i32 = arith.constant 0 : i32
    %c0_i32_0 = arith.constant 0 : i32
    %c0_i32_1 = arith.constant 0 : i32
    return %c0_i32, %c0_i32_0 : i32, i32
  }
  func.func @transform_3(%arg0: i32, %arg1: i32) -> (i32, i32, i32, i32) {
    %c0_i32 = arith.constant 0 : i32
    %c0_i32_0 = arith.constant 0 : i32
    %c0_i32_1 = arith.constant 0 : i32
    return %arg0, %arg1, %c0_i32, %c0_i32_0 : i32, i32, i32, i32
  }
}

module attributes {stable_mosaic.version = 11 : i64} {
  func.func @mlp_partial_kernel(%arg0: i32, %arg1: i32, %arg2: memref<2x1024xbf16, #tpu.memory_space<vmem>>, %arg3: memref<1024x32xbf16, #tpu.memory_space<vmem>>, %arg4: memref<1x2x32xf32, #tpu.memory_space<vmem>>) attributes {dimension_semantics = [#tpu.dimension_semantics<parallel>, #tpu.dimension_semantics<arbitrary>], iteration_bounds = array<i64: 2, 1>, scalar_prefetch = 0 : i64, scratch_operands = 0 : i64, tpu.core_type = #tpu.core_type<tc>, window_params = [{transform_indices = @transform_0, window_bounds = array<i64: 2, 1024>}, {transform_indices = @transform_1, window_bounds = array<i64: 1024, 32>}, {transform_indices = @transform_2, window_bounds = array<i64: 1, 2, 32>}]} {
    %c0_i32 = arith.constant 0 : i32
    %0 = arith.cmpi eq, %arg1, %c0_i32 : i32
    %1 = arith.extui %0 : i1 to i32
    %c0_i32_0 = arith.constant 0 : i32
    %2 = arith.cmpi ne, %1, %c0_i32_0 : i32
    scf.if %2 {
      %cst_10 = arith.constant 0.000000e+00 : f32
      %10 = vector.broadcast %cst_10 : f32 to vector<1x2x32xf32>
      %c0_11 = arith.constant 0 : index
      %c0_12 = arith.constant 0 : index
      %c0_13 = arith.constant 0 : index
      %11 = vector.load %arg4[%c0_11, %c0_12, %c0_13] : memref<1x2x32xf32, #tpu.memory_space<vmem>>, vector<1x2x32xf32>
      tpu.vector_store %arg4[%c0_11, %c0_12, %c0_13], %10 {strides = array<i32>} : memref<1x2x32xf32, #tpu.memory_space<vmem>>, vector<1x2x32xf32>,
    } else {
    }
    %c0 = arith.constant 0 : index
    %c0_1 = arith.constant 0 : index
    %c0_2 = arith.constant 0 : index
    %3 = vector.load %arg4[%c0, %c0_1, %c0_2] : memref<1x2x32xf32, #tpu.memory_space<vmem>>, vector<1x2x32xf32>
    %c0_3 = arith.constant 0 : index
    %c0_4 = arith.constant 0 : index
    %4 = vector.load %arg2[%c0_3, %c0_4] : memref<2x1024xbf16, #tpu.memory_space<vmem>>, vector<2x1024xbf16>
    %c0_5 = arith.constant 0 : index
    %c0_6 = arith.constant 0 : index
    %5 = vector.load %arg3[%c0_5, %c0_6] : memref<1024x32xbf16, #tpu.memory_space<vmem>>, vector<1024x32xbf16>
    %cst = arith.constant dense<0.000000e+00> : vector<2x32xf32>
    %6 = tpu.matmul %4, %5, %cst {dimension_numbers = #tpu.dot_dimension_numbers<[1], [0], [0], [1], [0, 0, 1, 1], [], []>} : vector<2x1024xbf16>, vector<1024x32xbf16>, vector<2x32xf32> -> vector<2x32xf32>
    %7 = vector.shape_cast %6 : vector<2x32xf32> to vector<1x2x32xf32>
    %8 = arith.addf %3, %7 : vector<1x2x32xf32>
    %c0_7 = arith.constant 0 : index
    %c0_8 = arith.constant 0 : index
    %c0_9 = arith.constant 0 : index
    %9 = vector.load %arg4[%c0_7, %c0_8, %c0_9] : memref<1x2x32xf32, #tpu.memory_space<vmem>>, vector<1x2x32xf32>
    tpu.vector_store %arg4[%c0_7, %c0_8, %c0_9], %8 {strides = array<i32>} : memref<1x2x32xf32, #tpu.memory_space<vmem>>, vector<1x2x32xf32>,
    return
  }
  func.func @transform_0(%arg0: i32, %arg1: i32) -> (i32, i32) {
    %c1_i32 = arith.constant 1 : i32
    %0 = arith.muli %arg0, %c1_i32 : i32
    %1 = arith.addi %0, %arg1 : i32
    %c0_i32 = arith.constant 0 : i32
    %c0_i32_0 = arith.constant 0 : i32
    return %c0_i32, %1 : i32, i32
  }
  func.func @transform_1(%arg0: i32, %arg1: i32) -> (i32, i32) {
    %c1_i32 = arith.constant 1 : i32
    %0 = arith.muli %arg0, %c1_i32 : i32
    %1 = arith.addi %0, %arg1 : i32
    %c0_i32 = arith.constant 0 : i32
    %c0_i32_0 = arith.constant 0 : i32
    return %1, %c0_i32 : i32, i32
  }
  func.func @transform_2(%arg0: i32, %arg1: i32) -> (i32, i32, i32) {
    %c0_i32 = arith.constant 0 : i32
    %c0_i32_0 = arith.constant 0 : i32
    %c0_i32_1 = arith.constant 0 : i32
    return %arg0, %c0_i32, %c0_i32_0 : i32, i32, i32
  }
}

module attributes {stable_mosaic.version = 11 : i64} {
  func.func @mlp_epilogue_kernel(%arg0: i32, %arg1: memref<2x2x32xf32, #tpu.memory_space<vmem>>, %arg2: memref<1x32xf32, #tpu.memory_space<vmem>>, %arg3: memref<32x3xf32, #tpu.memory_space<vmem>>, %arg4: memref<1x3xf32, #tpu.memory_space<vmem>>, %arg5: memref<2x3xf32, #tpu.memory_space<vmem>>) attributes {dimension_semantics = [#tpu.dimension_semantics<arbitrary>], iteration_bounds = array<i64: 1>, scalar_prefetch = 0 : i64, scratch_operands = 0 : i64, tpu.core_type = #tpu.core_type<tc>, window_params = [{pipeline_mode = #tpu.pipeline_mode<synchronous>, transform_indices = @transform_0, window_bounds = array<i64: 2, 2, 32>}, {pipeline_mode = #tpu.pipeline_mode<synchronous>, transform_indices = @transform_1, window_bounds = array<i64: 1, 32>}, {pipeline_mode = #tpu.pipeline_mode<synchronous>, transform_indices = @transform_2, window_bounds = array<i64: 32, 3>}, {pipeline_mode = #tpu.pipeline_mode<synchronous>, transform_indices = @transform_3, window_bounds = array<i64: 1, 3>}, {pipeline_mode = #tpu.pipeline_mode<synchronous>, transform_indices = @transform_4, window_bounds = array<i64: 2, 3>}]} {
    %c0 = arith.constant 0 : index
    %c0_0 = arith.constant 0 : index
    %c0_1 = arith.constant 0 : index
    %0 = vector.load %arg1[%c0, %c0_0, %c0_1] : memref<2x2x32xf32, #tpu.memory_space<vmem>>, vector<2x2x32xf32>
    %cst = arith.constant dense<0.000000e+00> : vector<2x32xf32>
    %1 = vector.multi_reduction <add>, %0, %cst [0] : vector<2x2x32xf32> to vector<2x32xf32>
    %c0_2 = arith.constant 0 : index
    %c0_3 = arith.constant 0 : index
    %2 = vector.load %arg2[%c0_2, %c0_3] : memref<1x32xf32, #tpu.memory_space<vmem>>, vector<1x32xf32>
    %3 = vector.broadcast %2 : vector<1x32xf32> to vector<2x32xf32>
    %4 = arith.addf %1, %3 : vector<2x32xf32>
    %5 = math.tanh %4 : vector<2x32xf32>
    %c0_4 = arith.constant 0 : index
    %c0_5 = arith.constant 0 : index
    %6 = vector.load %arg3[%c0_4, %c0_5] : memref<32x3xf32, #tpu.memory_space<vmem>>, vector<32x3xf32>
    %cst_6 = arith.constant dense<0.000000e+00> : vector<2x3xf32>
    %7 = tpu.matmul %5, %6, %cst_6 {dimension_numbers = #tpu.dot_dimension_numbers<[1], [0], [0], [1], [0, 0, 1, 1], [], []>} : vector<2x32xf32>, vector<32x3xf32>, vector<2x3xf32> -> vector<2x3xf32>
    %c0_7 = arith.constant 0 : index
    %c0_8 = arith.constant 0 : index
    %8 = vector.load %arg4[%c0_7, %c0_8] : memref<1x3xf32, #tpu.memory_space<vmem>>, vector<1x3xf32>
    %9 = vector.broadcast %8 : vector<1x3xf32> to vector<2x3xf32>
    %10 = arith.addf %7, %9 : vector<2x3xf32>
    %11 = math.tanh %10 : vector<2x3xf32>
    %c0_9 = arith.constant 0 : index
    %c0_10 = arith.constant 0 : index
    %12 = vector.load %arg5[%c0_9, %c0_10] : memref<2x3xf32, #tpu.memory_space<vmem>>, vector<2x3xf32>
    tpu.vector_store %arg5[%c0_9, %c0_10], %11 {strides = array<i32>} : memref<2x3xf32, #tpu.memory_space<vmem>>, vector<2x3xf32>,
    return
  }
  func.func @transform_0(%arg0: i32) -> (i32, i32, i32) {
    %c0_i32 = arith.constant 0 : i32
    %c0_i32_0 = arith.constant 0 : i32
    %c0_i32_1 = arith.constant 0 : i32
    %c0_i32_2 = arith.constant 0 : i32
    return %c0_i32, %c0_i32_0, %c0_i32_1 : i32, i32, i32
  }
  func.func @transform_1(%arg0: i32) -> (i32, i32) {
    %c0_i32 = arith.constant 0 : i32
    %c0_i32_0 = arith.constant 0 : i32
    %c0_i32_1 = arith.constant 0 : i32
    return %c0_i32, %c0_i32_0 : i32, i32
  }
  func.func @transform_2(%arg0: i32) -> (i32, i32) {
    %c0_i32 = arith.constant 0 : i32
    %c0_i32_0 = arith.constant 0 : i32
    %c0_i32_1 = arith.constant 0 : i32
    return %c0_i32, %c0_i32_0 : i32, i32
  }
  func.func @transform_3(%arg0: i32) -> (i32, i32) {
    %c0_i32 = arith.constant 0 : i32
    %c0_i32_0 = arith.constant 0 : i32
    %c0_i32_1 = arith.constant 0 : i32
    return %c0_i32, %c0_i32_0 : i32, i32
  }
  func.func @transform_4(%arg0: i32) -> (i32, i32) {
    %c0_i32 = arith.constant 0 : i32
    %c0_i32_0 = arith.constant 0 : i32
    %c0_i32_1 = arith.constant 0 : i32
    return %c0_i32, %c0_i32_0 : i32, i32
  }
}

</mosaic_0001>

<llo_original>
// kernel: head_hunter_forward.5
$region0: #{head_hunter_forward.5}
  #allocation0 [shape = 'u32[]', space=smem, size = 0x4, offset = 0x4, fixed_abs, tag = 'smem constant byte address 0x4 - core index']
  #allocation1 [shape = 'u32[72,128]{1,0:T(1,128)}', space=vmem, size = 0x9000, scoped, tag = 'internal scratch']
  %s0 = inlined_call_operand.vmem [shape: bf16[2,20,20,8], index: 0, kind: input, shape index: {}]
  %s1 = inlined_call_operand.hbm [shape: bf16[5,40,128], index: 1, kind: input, shape index: {}]
  %s2 = inlined_call_operand.hbm [shape: f32[1,128], index: 2, kind: input, shape index: {}]
  %s3 = inlined_call_operand.vmem [shape: bf16[2,16,16,128], index: 3, kind: output, shape index: {}]
  %s4 = sld [smem:[#allocation0]]
  $region53: #{head_hunter_forward.5} parent=0
    _
  %s6 = ssub.s32 1, %s4
  %s7 = scalar_select 0, %s6, %s4
  $region1: #{head_hunter_forward.5} parent=0
    #allocation2 [shape = 'u8[51200]{0}', space=vmem, size = 0xc800, scoped, tag = 'input window, operand 1, single buffered']
    #allocation3 [shape = 's32[2]{0}', space=sflag, size = 0x8, scoped, tag = 'scoped memory for head_hunter_forward.5']
    #allocation4 [shape = 'u8[512]{0}', space=vmem, size = 0x400, scoped, tag = 'input window, operand 2, single buffered']
    #allocation5 [shape = 's32[1]{0}', space=sflag, size = 0x4, scoped, tag = 'scoped memory for head_hunter_forward.5']
    %8 = vsyncpa [#allocation3], 0
    %9 = vsyncpa [#allocation5], 0
    loop: start=0, step=1, limit=6
    $region2: #{head_hunter_forward.5} parent=1 // loop_pre_header
      _
    $region3: #{head_hunter_forward.5} parent=1 // loop_header
      %s11 = sphi 0, %s15
      %p12 = scmp.ge.s32.totalorder %s11, 6
      %s18 = sphi 0, %s30
      %s19 = sphi 0, %s26
      %s20 = sphi 0, %s18
      %s21 = sphi 0, %s19
      %s22 = sphi 0, %s20
      %s23 = sphi 0, %s21
      %s33 = sphi 0, %s35
      %s36 = sphi 0, %s33
      %s37 = sphi 0, %s36
      %s53 = sphi 0, %s37
      %s57 = sphi 0, %s57
      %s59 = sphi 0, %s57
      %s60 = sphi 0, %s59
      %s74 = sphi 0, %s60
      %s78 = sphi 0, %s78
      %s80 = sphi 0, %s78
      %s81 = sphi 0, %s80
      %s95 = sphi 0, %s81
      %s103 = sphi 0, %s105
      %s106 = sphi 0, %s103
      %s107 = sphi 0, %s106
      %s123 = sphi 0, %s107
    $region4: #{head_hunter_forward.5} parent=1 // loop_header_branch
      %14 = sbr.rel (%p12) target = $region8
    $region5: #{head_hunter_forward.5} parent=1 // loop_body
      %s16 = ssub.s32 %s11, 1
      %s17 = ssub.s32 %s11, 2
      %s24 = sadd.s32 1, %s19
      %p25 = scmp.ge.s32.totalorder %s24, 2
      %s26 = scalar_select %p25, 0, %s24
      %s27 = sadd.s32 1, %s18
      %s28 = scalar_select %p25, %s27, %s18
      %p29 = scmp.ge.s32.totalorder %s28, 2
      %s30 = scalar_select %p29, 0, %s28
      %s31 = ssub.s32 %s18, %s30
      %p32 = scmp.eq.s32.totalorder %s31, 0
      %s34 = sadd.s32 %s33, 1
      %s35 = scalar_select %p32, %s33, %s34
      %p38 = pneg %p32
      %p39 = scmp.eq.s32.totalorder %s11, 3
      %p40 = por %p38, %p39
      %p41 = scmp.ne.s32.totalorder %s33, %s36
      %p42 = scmp.eq.s32.totalorder %s11, 0
      %p43 = por %p41, %p42
      %p44 = scmp.ne.s32.totalorder %s33, %s36
      %p45 = scmp.eq.s32.totalorder %s16, 3
      %p46 = por %p44, %p45
      %p47 = scmp.ne.s32.totalorder %s36, %s37
      %p48 = scmp.eq.s32.totalorder %s16, 0
      %p49 = por %p47, %p48
      %p50 = scmp.ne.s32.totalorder %s36, %s37
      %p51 = scmp.eq.s32.totalorder %s17, 3
      %p52 = por %p50, %p51
      %p54 = scmp.ne.s32.totalorder %s37, %s53
      %p55 = scmp.eq.s32.totalorder %s17, 0
      %p56 = por %p54, %p55
      %s58 = sadd.s32 %s57, 1
      %p61 = scmp.eq.s32.totalorder %s11, 3
      %p62 = scmp.ne.s32.totalorder %s57, %s59
      %p63 = scmp.eq.s32.totalorder %s11, 0
      %p64 = por %p62, %p63
      %p65 = scmp.ne.s32.totalorder %s57, %s59
      %p66 = scmp.eq.s32.totalorder %s16, 3
      %p67 = por %p65, %p66
      %p68 = scmp.ne.s32.totalorder %s59, %s60
      %p69 = scmp.eq.s32.totalorder %s16, 0
      %p70 = por %p68, %p69
      %p71 = scmp.ne.s32.totalorder %s59, %s60
      %p72 = scmp.eq.s32.totalorder %s17, 3
      %p73 = por %p71, %p72
      %p75 = scmp.ne.s32.totalorder %s60, %s74
      %p76 = scmp.eq.s32.totalorder %s17, 0
      %p77 = por %p75, %p76
      %s79 = sadd.s32 %s78, 1
      %p82 = scmp.eq.s32.totalorder %s11, 3
      %p83 = scmp.ne.s32.totalorder %s78, %s80
      %p84 = scmp.eq.s32.totalorder %s11, 0
      %p85 = por %p83, %p84
      %p86 = scmp.ne.s32.totalorder %s78, %s80
      %p87 = scmp.eq.s32.totalorder %s16, 3
      %p88 = por %p86, %p87
      %p89 = scmp.ne.s32.totalorder %s80, %s81
      %p90 = scmp.eq.s32.totalorder %s16, 0
      %p91 = por %p89, %p90
      %p92 = scmp.ne.s32.totalorder %s80, %s81
      %p93 = scmp.eq.s32.totalorder %s17, 3
      %p94 = por %p92, %p93
      %p96 = scmp.ne.s32.totalorder %s81, %s95
      %p97 = scmp.eq.s32.totalorder %s17, 0
      %p98 = por %p96, %p97
      %s99 = ssub.s32 %s18, %s30
      %s100 = ssub.s32 %s19, %s26
      %s101 = sor.u32 %s99, %s100
      %p102 = scmp.eq.s32.totalorder %s101, 0
      %s104 = sadd.s32 %s103, 1
      %s105 = scalar_select %p102, %s103, %s104
      %p108 = pneg %p102
      %p109 = scmp.eq.s32.totalorder %s11, 3
      %p110 = por %p108, %p109
      %p111 = scmp.ne.s32.totalorder %s103, %s106
      %p112 = scmp.eq.s32.totalorder %s11, 0
      %p113 = por %p111, %p112
      %p114 = scmp.ne.s32.totalorder %s103, %s106
      %p115 = scmp.eq.s32.totalorder %s16, 3
      %p116 = por %p114, %p115
      %p117 = scmp.ne.s32.totalorder %s106, %s107
      %p118 = scmp.eq.s32.totalorder %s16, 0
      %p119 = por %p117, %p118
      %p120 = scmp.ne.s32.totalorder %s106, %s107
      %p121 = scmp.eq.s32.totalorder %s17, 3
      %p122 = por %p120, %p121
      %p124 = scmp.ne.s32.totalorder %s107, %s123
      %p125 = scmp.eq.s32.totalorder %s17, 0
      %p126 = por %p124, %p125
      %p127 = scmp.le.s32.totalorder 1, %s11
      %p128 = scmp.lt.s32.totalorder %s11, 5
      %p129 = pnand %p127, %p128
      %p130 = pneg %p129
      // Predicated region
      $region9: #{head_hunter_forward.5} parent=5 // pred_check
        _
      $region10: #{head_hunter_forward.5} parent=5 // pred_check_branch
        %132 = sbr.rel (%p129) target = $region12
      $region11: #{head_hunter_forward.5} parent=5 // pred_region
        %s133 = ssub.s32 %s11, 1
        // Predicated region
        $region13: #{head_hunter_forward.5} parent=11 // pred_check
          %p134 = pneg %p70
        $region14: #{head_hunter_forward.5} parent=11 // pred_check_branch
          %136 = sbr.rel (%p134) target = $region16
        $region15: #{head_hunter_forward.5} parent=11 // pred_region
          %138 = vsyncadd [#allocation3], 0
          %s139 = sshll.u32 %s1, 4
          %s140 = int_to_ptr.hbm [resolvable:$true] %s139
          %s141 = sshll.u32 [#allocation2], 4
          %s142 = int_to_ptr.vmem [resolvable:$true] %s141
          %147 = dma.hbm_to_vmem [thread:$0]  %s140, 1600, %s142, [#allocation3], 64, 64, 4
        $region16: #{head_hunter_forward.5} parent=11 // pred_fallthru
          _
        // Predicated region
        $region17: #{head_hunter_forward.5} parent=11 // pred_check
          %p148 = pneg %p91
        $region18: #{head_hunter_forward.5} parent=11 // pred_check_branch
          %150 = sbr.rel (%p148) target = $region20
        $region19: #{head_hunter_forward.5} parent=11 // pred_region
          %152 = vsyncadd [#allocation5], 0
          %s154 = sshll.u32 %s2, 4
          %s155 = int_to_ptr.hbm [resolvable:$true] %s154
          %s156 = sshll.u32 [#allocation4], 4
          %s157 = int_to_ptr.vmem [resolvable:$true] %s156
          %159 = dma.hbm_to_vmem [thread:$0]  %s155, 16, %s157, [#allocation5]
        $region20: #{head_hunter_forward.5} parent=11 // pred_fallthru
          _
      $region12: #{head_hunter_forward.5} parent=5 // pred_fallthru
        _
      %p160 = scmp.lt.s32.totalorder %s11, 4
      // Predicated region
      $region21: #{head_hunter_forward.5} parent=5 // pred_check
        %p161 = pneg %p160
      $region22: #{head_hunter_forward.5} parent=5 // pred_check_branch
        %163 = sbr.rel (%p161) target = $region24
      $region23: #{head_hunter_forward.5} parent=5 // pred_region
        // Predicated region
        $region25: #{head_hunter_forward.5} parent=23 // pred_check
          %p164 = pneg %p43
        $region26: #{head_hunter_forward.5} parent=23 // pred_check_branch
          %166 = sbr.rel (%p164) target = $region28
        $region27: #{head_hunter_forward.5} parent=23 // pred_region
          %p167 = scmp.lt.s32.totalorder %s18, 1
          %s168 = scalar_select %p167, %s18, 1
          %s169 = smul.addr %s168, 60
          %s170 = smul.addr %s169, 4
          %s171 = scalar_lea.vmem %s0, %s170
        $region28: #{head_hunter_forward.5} parent=23 // pred_fallthru
          _
      $region24: #{head_hunter_forward.5} parent=5 // pred_fallthru
        _
      %p172 = scmp.le.s32.totalorder 1, %s11
      %p173 = scmp.lt.s32.totalorder %s11, 5
      %p174 = pnand %p172, %p173
      %p175 = pneg %p174
      // Predicated region
      $region29: #{head_hunter_forward.5} parent=5 // pred_check
        _
      $region30: #{head_hunter_forward.5} parent=5 // pred_check_branch
        %177 = sbr.rel (%p174) target = $region32
      $region31: #{head_hunter_forward.5} parent=5 // pred_region
        %s178 = ssub.s32 %s11, 1
        // Predicated region
        $region33: #{head_hunter_forward.5} parent=31 // pred_check
          %p179 = pneg %p70
        $region34: #{head_hunter_forward.5} parent=31 // pred_check_branch
          %181 = sbr.rel (%p179) target = $region36
        $region35: #{head_hunter_forward.5} parent=31 // pred_region
          %183 = dma.done [#allocation3], 1600
        $region36: #{head_hunter_forward.5} parent=31 // pred_fallthru
          _
        // Predicated region
        $region37: #{head_hunter_forward.5} parent=31 // pred_check
          %p184 = pneg %p91
        $region38: #{head_hunter_forward.5} parent=31 // pred_check_branch
          %186 = sbr.rel (%p184) target = $region40
        $region39: #{head_hunter_forward.5} parent=31 // pred_region
          %188 = dma.done [#allocation5], 16
        $region40: #{head_hunter_forward.5} parent=31 // pred_fallthru
          _
        %p189 = scmp.lt.s32.totalorder %s20, 1
        %s190 = scalar_select %p189, %s20, 1
        %s191 = smul.addr %s190, 60
        %s192 = smul.addr %s191, 4
        %s193 = scalar_lea.vmem %s0, %s192
        %p194 = pneg %p49
        %p195 = pneg %p46
        %p196 = pneg %p70
        %p197 = pneg %p67
        %p198 = pneg %p91
        %p199 = pneg %p88
        %p200 = pneg %p119
        %p201 = pneg %p116
        %s202 = smul.u32 8, %s21
        %p203 = scmp.lt.s32.totalorder %s20, 1
        %s204 = scalar_select %p203, %s20, 1
        %p205 = scmp.lt.s32.totalorder %s202, 15
        %s206 = scalar_select %p205, %s202, 15
        %s207 = smul.addr %s206, 2
        %s208 = smul.addr %s204, 32
        %s209 = sadd.s32 %s207, %s208
        %s210 = smul.addr %s209, 4
        %s211 = scalar_lea.vmem %s3, %s210
        %p212 = scmp.lt.s32.totalorder %s20, 1
        %s213 = scalar_select %p212, %s20, 1
        %s214 = smul.addr %s213, 60
        %s215 = smul.addr %s214, 4
        %s216 = scalar_lea.vmem %s0, %s215
        %s217 = smul.u32 8, %s21
        %p218 = scmp.lt.s32.totalorder %s20, 1
        %s219 = scalar_select %p218, %s20, 1
        %p220 = scmp.lt.s32.totalorder %s217, 15
        %s221 = scalar_select %p220, %s217, 15
        %s222 = smul.addr %s221, 2
        %s223 = smul.addr %s219, 32
        %s224 = sadd.s32 %s222, %s223
        %s225 = smul.addr %s224, 4
        %s226 = scalar_lea.vmem %s3, %s225
        %s227 = smul.u32 8, %s21
        %s229 = smul.u32 %s21, 8
        %s230 = smul.u32 %s229, 3
        %s231 = smul.addr %s230, 4
        %s232 = scalar_lea.vmem %s216, %s231
        %v233 = vld [vmem:[%s232] sm:$0xf]
        %v234 = vld [vmem:[%s232 + $0x4] sm:$0xf]
        %v235 = vld [vmem:[%s232 + $0x8] sm:$0x3]
        %v236 = vld [vmem:[%s232 + $0xc] sm:$0xf]
        %v237 = vld [vmem:[%s232 + $0x10] sm:$0xf]
        %v238 = vld [vmem:[%s232 + $0x14] sm:$0x3]
        %v239 = vld [vmem:[%s232 + $0x18] sm:$0xf]
        %v240 = vld [vmem:[%s232 + $0x1c] sm:$0xf]
        %v241 = vld [vmem:[%s232 + $0x20] sm:$0x3]
        %v242 = vld [vmem:[%s232 + $0x24] sm:$0xf]
        %v243 = vld [vmem:[%s232 + $0x28] sm:$0xf]
        %v244 = vld [vmem:[%s232 + $0x2c] sm:$0x3]
        %v245 = vld [vmem:[%s232 + $0x30] sm:$0xf]
        %v246 = vld [vmem:[%s232 + $0x34] sm:$0xf]
        %v247 = vld [vmem:[%s232 + $0x38] sm:$0x3]
        %v248 = vld [vmem:[%s232 + $0x3c] sm:$0xf]
        %v249 = vld [vmem:[%s232 + $0x40] sm:$0xf]
        %v250 = vld [vmem:[%s232 + $0x44] sm:$0x3]
        %v251 = vld [vmem:[%s232 + $0x48] sm:$0xf]
        %v252 = vld [vmem:[%s232 + $0x4c] sm:$0xf]
        %v253 = vld [vmem:[%s232 + $0x50] sm:$0x3]
        %v254 = vld [vmem:[%s232 + $0x54] sm:$0xf]
        %v255 = vld [vmem:[%s232 + $0x58] sm:$0xf]
        %v256 = vld [vmem:[%s232 + $0x5c] sm:$0x3]
        %v257 = vld [vmem:[%s232 + $0x60] sm:$0xf]
        %v258 = vld [vmem:[%s232 + $0x64] sm:$0xf]
        %v259 = vld [vmem:[%s232 + $0x68] sm:$0x3]
        %v260 = vld [vmem:[%s232 + $0x6c] sm:$0xf]
        %v261 = vld [vmem:[%s232 + $0x70] sm:$0xf]
        %v262 = vld [vmem:[%s232 + $0x74] sm:$0x3]
        %v263 = vld [vmem:[%s232 + $0x78] sm:$0xf]
        %v264 = vld [vmem:[%s232 + $0x7c] sm:$0xf]
        %v265 = vld [vmem:[%s232 + $0x80] sm:$0x3]
        %v266 = vld [vmem:[%s232 + $0x84] sm:$0xf]
        %v267 = vld [vmem:[%s232 + $0x88] sm:$0xf]
        %v268 = vld [vmem:[%s232 + $0x8c] sm:$0x3]
        %v285 = vunpack.c.l.b16 %v233
        %v286 = vunpack.c.l.b16 %v234
        %v287 = vunpack.c.l.b16 %v236
        %v288 = vunpack.c.l.b16 %v237
        %v289 = vunpack.c.l.b16 %v239
        %v290 = vunpack.c.l.b16 %v240
        %v291 = vunpack.c.l.b16 %v242
        %v292 = vunpack.c.l.b16 %v243
        %v293 = vunpack.c.l.b16 %v245
        %v294 = vunpack.c.l.b16 %v246
        %v295 = vunpack.c.l.b16 %v248
        %v296 = vunpack.c.l.b16 %v249
        %v297 = vunpack.c.l.b16 %v251
        %v298 = vunpack.c.l.b16 %v252
        %v299 = vunpack.c.l.b16 %v254
        %v300 = vunpack.c.l.b16 %v255
        %v301 = vpack.c.b16 %v286, %v285
        %v302 = vpack.c.b16 %v288, %v287
        %v303 = vpack.c.b16 %v290, %v289
        %v304 = vpack.c.b16 %v292, %v291
        %v305 = vpack.c.b16 %v294, %v293
        %v306 = vpack.c.b16 %v296, %v295
        %v307 = vpack.c.b16 %v298, %v297
        %v308 = vpack.c.b16 %v300, %v299
        %v317 = vunpack.c.l.b16 %v235
        %v318 = vunpack.c.l.b16 %v238
        %v319 = vunpack.c.l.b16 %v241
        %v320 = vunpack.c.l.b16 %v244
        %v321 = vunpack.c.l.b16 %v247
        %v322 = vunpack.c.l.b16 %v250
        %v323 = vunpack.c.l.b16 %v253
        %v324 = vunpack.c.l.b16 %v256
        %v325 = vpack.c.b16 %v317, %v317
        %v326 = vpack.c.b16 %v318, %v318
        %v327 = vpack.c.b16 %v319, %v319
        %v328 = vpack.c.b16 %v320, %v320
        %v329 = vpack.c.b16 %v321, %v321
        %v330 = vpack.c.b16 %v322, %v322
        %v331 = vpack.c.b16 %v323, %v323
        %v332 = vpack.c.b16 %v324, %v324
        %vm333 = vsmask.f32 7424
        %v335 = vshrl.u32 %v301, 16
        %v337 = vshll.u32 %v301, 16
        %v339 = vrot.slane %v337, 1
        %v340 = vor.u32 %v335, %v339
        %v342 = vshll.u32 %v325, 16
        %v344 = vrot.slane %v342, 1
        %v345 = vsel %vm333, %v340, %v344
        %v347 = vshrl.u32 %v302, 16
        %v349 = vshll.u32 %v302, 16
        %v351 = vrot.slane %v349, 1
        %v352 = vor.u32 %v347, %v351
        %v354 = vshll.u32 %v326, 16
        %v356 = vrot.slane %v354, 1
        %v357 = vsel %vm333, %v352, %v356
        %v359 = vshrl.u32 %v303, 16
        %v361 = vshll.u32 %v303, 16
        %v363 = vrot.slane %v361, 1
        %v364 = vor.u32 %v359, %v363
        %v366 = vshll.u32 %v327, 16
        %v368 = vrot.slane %v366, 1
        %v369 = vsel %vm333, %v364, %v368
        %v371 = vshrl.u32 %v304, 16
        %v373 = vshll.u32 %v304, 16
        %v375 = vrot.slane %v373, 1
        %v376 = vor.u32 %v371, %v375
        %v378 = vshll.u32 %v328, 16
        %v380 = vrot.slane %v378, 1
        %v381 = vsel %vm333, %v376, %v380
        %v383 = vshrl.u32 %v305, 16
        %v385 = vshll.u32 %v305, 16
        %v387 = vrot.slane %v385, 1
        %v388 = vor.u32 %v383, %v387
        %v390 = vshll.u32 %v329, 16
        %v392 = vrot.slane %v390, 1
        %v393 = vsel %vm333, %v388, %v392
        %v395 = vshrl.u32 %v306, 16
        %v397 = vshll.u32 %v306, 16
        %v399 = vrot.slane %v397, 1
        %v400 = vor.u32 %v395, %v399
        %v402 = vshll.u32 %v330, 16
        %v404 = vrot.slane %v402, 1
        %v405 = vsel %vm333, %v400, %v404
        %v407 = vshrl.u32 %v307, 16
        %v409 = vshll.u32 %v307, 16
        %v411 = vrot.slane %v409, 1
        %v412 = vor.u32 %v407, %v411
        %v414 = vshll.u32 %v331, 16
        %v416 = vrot.slane %v414, 1
        %v417 = vsel %vm333, %v412, %v416
        %v419 = vshrl.u32 %v308, 16
        %v421 = vshll.u32 %v308, 16
        %v423 = vrot.slane %v421, 1
        %v424 = vor.u32 %v419, %v423
        %v426 = vshll.u32 %v332, 16
        %v428 = vrot.slane %v426, 1
        %v429 = vsel %vm333, %v424, %v428
        %430 = vrot.lane.b32.xlu0 %v345, 8
        %v431 = vpop.permute.xlu0 %430
        %432 = vrot.lane.b32.xlu0 %v357, 8
        %v433 = vpop.permute.xlu0 %432
        %434 = vrot.lane.b32.xlu0 %v369, 8
        %v435 = vpop.permute.xlu0 %434
        %436 = vrot.lane.b32.xlu0 %v381, 8
        %v437 = vpop.permute.xlu0 %436
        %438 = vrot.lane.b32.xlu0 %v393, 8
        %v439 = vpop.permute.xlu0 %438
        %440 = vrot.lane.b32.xlu0 %v405, 8
        %v441 = vpop.permute.xlu0 %440
        %442 = vrot.lane.b32.xlu0 %v417, 8
        %v443 = vpop.permute.xlu0 %442
        %444 = vrot.lane.b32.xlu0 %v429, 8
        %v445 = vpop.permute.xlu0 %444
        %vm446 = vcmask 1046528
        %v447 = vrot.slane %v301, 1
        %v448 = vrot.slane %v325, 1
        %v449 = vsel %vm446, %v447, %v448
        %v450 = vrot.slane %v302, 1
        %v451 = vrot.slane %v326, 1
        %v452 = vsel %vm446, %v450, %v451
        %v453 = vrot.slane %v303, 1
        %v454 = vrot.slane %v327, 1
        %v455 = vsel %vm446, %v453, %v454
        %v456 = vrot.slane %v304, 1
        %v457 = vrot.slane %v328, 1
        %v458 = vsel %vm446, %v456, %v457
        %v459 = vrot.slane %v305, 1
        %v460 = vrot.slane %v329, 1
        %v461 = vsel %vm446, %v459, %v460
        %v462 = vrot.slane %v306, 1
        %v463 = vrot.slane %v330, 1
        %v464 = vsel %vm446, %v462, %v463
        %v465 = vrot.slane %v307, 1
        %v466 = vrot.slane %v331, 1
        %v467 = vsel %vm446, %v465, %v466
        %v468 = vrot.slane %v308, 1
        %v469 = vrot.slane %v332, 1
        %v470 = vsel %vm446, %v468, %v469
        %471 = vrot.lane.b32.xlu0 %v449, 16
        %v472 = vpop.permute.xlu0 %471
        %473 = vrot.lane.b32.xlu0 %v452, 16
        %v474 = vpop.permute.xlu0 %473
        %475 = vrot.lane.b32.xlu0 %v455, 16
        %v476 = vpop.permute.xlu0 %475
        %477 = vrot.lane.b32.xlu0 %v458, 16
        %v478 = vpop.permute.xlu0 %477
        %479 = vrot.lane.b32.xlu0 %v461, 16
        %v480 = vpop.permute.xlu0 %479
        %481 = vrot.lane.b32.xlu0 %v464, 16
        %v482 = vpop.permute.xlu0 %481
        %483 = vrot.lane.b32.xlu0 %v467, 16
        %v484 = vpop.permute.xlu0 %483
        %485 = vrot.lane.b32.xlu0 %v470, 16
        %v486 = vpop.permute.xlu0 %485
        %vm487 = vsmask.f32 6400
        %v488 = vrot.slane %v335, 1
        %v489 = vrot.slane %v337, 2
        %v490 = vor.u32 %v488, %v489
        %v491 = vshrl.u32 %v325, 16
        %v493 = vrot.slane %v491, 1
        %v494 = vrot.slane %v342, 2
        %v495 = vor.u32 %v493, %v494
        %v496 = vsel %vm487, %v490, %v495
        %v497 = vrot.slane %v347, 1
        %v498 = vrot.slane %v349, 2
        %v499 = vor.u32 %v497, %v498
        %v500 = vshrl.u32 %v326, 16
        %v502 = vrot.slane %v500, 1
        %v503 = vrot.slane %v354, 2
        %v504 = vor.u32 %v502, %v503
        %v505 = vsel %vm487, %v499, %v504
        %v506 = vrot.slane %v359, 1
        %v507 = vrot.slane %v361, 2
        %v508 = vor.u32 %v506, %v507
        %v509 = vshrl.u32 %v327, 16
        %v511 = vrot.slane %v509, 1
        %v512 = vrot.slane %v366, 2
        %v513 = vor.u32 %v511, %v512
        %v514 = vsel %vm487, %v508, %v513
        %v515 = vrot.slane %v371, 1
        %v516 = vrot.slane %v373, 2
        %v517 = vor.u32 %v515, %v516
        %v518 = vshrl.u32 %v328, 16
        %v520 = vrot.slane %v518, 1
        %v521 = vrot.slane %v378, 2
        %v522 = vor.u32 %v520, %v521
        %v523 = vsel %vm487, %v517, %v522
        %v524 = vrot.slane %v383, 1
        %v525 = vrot.slane %v385, 2
        %v526 = vor.u32 %v524, %v525
        %v527 = vshrl.u32 %v329, 16
        %v529 = vrot.slane %v527, 1
        %v530 = vrot.slane %v390, 2
        %v531 = vor.u32 %v529, %v530
        %v532 = vsel %vm487, %v526, %v531
        %v533 = vrot.slane %v395, 1
        %v534 = vrot.slane %v397, 2
        %v535 = vor.u32 %v533, %v534
        %v536 = vshrl.u32 %v330, 16
        %v538 = vrot.slane %v536, 1
        %v539 = vrot.slane %v402, 2
        %v540 = vor.u32 %v538, %v539
        %v541 = vsel %vm487, %v535, %v540
        %v542 = vrot.slane %v407, 1
        %v543 = vrot.slane %v409, 2
        %v544 = vor.u32 %v542, %v543
        %v545 = vshrl.u32 %v331, 16
        %v547 = vrot.slane %v545, 1
        %v548 = vrot.slane %v414, 2
        %v549 = vor.u32 %v547, %v548
        %v550 = vsel %vm487, %v544, %v549
        %v551 = vrot.slane %v419, 1
        %v552 = vrot.slane %v421, 2
        %v553 = vor.u32 %v551, %v552
        %v554 = vshrl.u32 %v332, 16
        %v556 = vrot.slane %v554, 1
        %v557 = vrot.slane %v426, 2
        %v558 = vor.u32 %v556, %v557
        %v559 = vsel %vm487, %v553, %v558
        %560 = vrot.lane.b32.xlu0 %v496, 24
        %v561 = vpop.permute.xlu0 %560
        %562 = vrot.lane.b32.xlu0 %v505, 24
        %v563 = vpop.permute.xlu0 %562
        %564 = vrot.lane.b32.xlu0 %v514, 24
        %v565 = vpop.permute.xlu0 %564
        %566 = vrot.lane.b32.xlu0 %v523, 24
        %v567 = vpop.permute.xlu0 %566
        %568 = vrot.lane.b32.xlu0 %v532, 24
        %v569 = vpop.permute.xlu0 %568
        %570 = vrot.lane.b32.xlu0 %v541, 24
        %v571 = vpop.permute.xlu0 %570
        %572 = vrot.lane.b32.xlu0 %v550, 24
        %v573 = vpop.permute.xlu0 %572
        %574 = vrot.lane.b32.xlu0 %v559, 24
        %v575 = vpop.permute.xlu0 %574
        %vm576 = vcmask 1045504
        %v577 = vrot.slane %v301, 2
        %v578 = vrot.slane %v325, 2
        %v579 = vsel %vm576, %v577, %v578
        %v580 = vrot.slane %v302, 2
        %v581 = vrot.slane %v326, 2
        %v582 = vsel %vm576, %v580, %v581
        %v583 = vrot.slane %v303, 2
        %v584 = vrot.slane %v327, 2
        %v585 = vsel %vm576, %v583, %v584
        %v586 = vrot.slane %v304, 2
        %v587 = vrot.slane %v328, 2
        %v588 = vsel %vm576, %v586, %v587
        %v589 = vrot.slane %v305, 2
        %v590 = vrot.slane %v329, 2
        %v591 = vsel %vm576, %v589, %v590
        %v592 = vrot.slane %v306, 2
        %v593 = vrot.slane %v330, 2
        %v594 = vsel %vm576, %v592, %v593
        %v595 = vrot.slane %v307, 2
        %v596 = vrot.slane %v331, 2
        %v597 = vsel %vm576, %v595, %v596
        %v598 = vrot.slane %v308, 2
        %v599 = vrot.slane %v332, 2
        %v600 = vsel %vm576, %v598, %v599
        %601 = vrot.lane.b32.xlu0 %v579, 32
        %v602 = vpop.permute.xlu0 %601
        %603 = vrot.lane.b32.xlu0 %v582, 32
        %v604 = vpop.permute.xlu0 %603
        %605 = vrot.lane.b32.xlu0 %v585, 32
        %v606 = vpop.permute.xlu0 %605
        %607 = vrot.lane.b32.xlu0 %v588, 32
        %v608 = vpop.permute.xlu0 %607
        %609 = vrot.lane.b32.xlu0 %v591, 32
        %v610 = vpop.permute.xlu0 %609
        %611 = vrot.lane.b32.xlu0 %v594, 32
        %v612 = vpop.permute.xlu0 %611
        %613 = vrot.lane.b32.xlu0 %v597, 32
        %v614 = vpop.permute.xlu0 %613
        %615 = vrot.lane.b32.xlu0 %v600, 32
        %v616 = vpop.permute.xlu0 %615
        %vm617 = vcmask 64512
        %v619 = vsel %vm617, %v301, %v431
        %v621 = vsel %vm617, %v302, %v433
        %v623 = vsel %vm617, %v303, %v435
        %v625 = vsel %vm617, %v304, %v437
        %v627 = vsel %vm617, %v305, %v439
        %v629 = vsel %vm617, %v306, %v441
        %v631 = vsel %vm617, %v307, %v443
        %v633 = vsel %vm617, %v308, %v445
        %vm634 = vcmask 130048
        %v636 = vsel %vm634, %v619, %v472
        %v638 = vsel %vm634, %v621, %v474
        %v640 = vsel %vm634, %v623, %v476
        %v642 = vsel %vm634, %v625, %v478
        %v644 = vsel %vm634, %v627, %v480
        %v646 = vsel %vm634, %v629, %v482
        %v648 = vsel %vm634, %v631, %v484
        %v650 = vsel %vm634, %v633, %v486
        %vm651 = vcmask 195584
        %v653 = vsel %vm651, %v636, %v561
        %v655 = vsel %vm651, %v638, %v563
        %v657 = vsel %vm651, %v640, %v565
        %v659 = vsel %vm651, %v642, %v567
        %v661 = vsel %vm651, %v644, %v569
        %v663 = vsel %vm651, %v646, %v571
        %v665 = vsel %vm651, %v648, %v573
        %v667 = vsel %vm651, %v650, %v575
        %vm668 = vcmask 261120
        %v670 = vsel %vm668, %v653, %v602
        %v672 = vsel %vm668, %v655, %v604
        %v674 = vsel %vm668, %v657, %v606
        %v676 = vsel %vm668, %v659, %v608
        %v678 = vsel %vm668, %v661, %v610
        %v680 = vsel %vm668, %v663, %v612
        %v682 = vsel %vm668, %v665, %v614
        %v684 = vsel %vm668, %v667, %v616
        %v685 = vld [vmem:[#allocation2] sm:$0xf]
        %v686 = vld [vmem:[#allocation2 + $0x4] sm:$0xf]
        %v687 = vld [vmem:[#allocation2 + $0x8] sm:$0xf]
        %v688 = vld [vmem:[#allocation2 + $0xc] sm:$0xf]
        %v689 = vld [vmem:[#allocation2 + $0x10] sm:$0xf]
        %v692 = vunpack.c.l.b16 %v257
        %v693 = vunpack.c.l.b16 %v258
        %v694 = vpack.c.b16 %v693, %v692
        %v696 = vunpack.c.l.b16 %v259
        %v697 = vpack.c.b16 %v696, %v696
        %v699 = vshrl.u32 %v694, 16
        %v701 = vshll.u32 %v694, 16
        %v703 = vrot.slane %v701, 1
        %v704 = vor.u32 %v699, %v703
        %v706 = vshll.u32 %v697, 16
        %v708 = vrot.slane %v706, 1
        %v709 = vsel %vm333, %v704, %v708
        %710 = vrot.lane.b32.xlu0 %v709, 8
        %v711 = vpop.permute.xlu0 %710
        %v712 = vrot.slane %v694, 1
        %v713 = vrot.slane %v697, 1
        %v714 = vsel %vm446, %v712, %v713
        %715 = vrot.lane.b32.xlu0 %v714, 16
        %v716 = vpop.permute.xlu0 %715
        %v717 = vrot.slane %v699, 1
        %v718 = vrot.slane %v701, 2
        %v719 = vor.u32 %v717, %v718
        %v720 = vshrl.u32 %v697, 16
        %v722 = vrot.slane %v720, 1
        %v723 = vrot.slane %v706, 2
        %v724 = vor.u32 %v722, %v723
        %v725 = vsel %vm487, %v719, %v724
        %726 = vrot.lane.b32.xlu0 %v725, 24
        %v727 = vpop.permute.xlu0 %726
        %v728 = vrot.slane %v694, 2
        %v729 = vrot.slane %v697, 2
        %v730 = vsel %vm576, %v728, %v729
        %731 = vrot.lane.b32.xlu0 %v730, 32
        %v732 = vpop.permute.xlu0 %731
        %v734 = vsel %vm617, %v694, %v711
        %v736 = vsel %vm634, %v734, %v716
        %v738 = vsel %vm651, %v736, %v727
        %v740 = vsel %vm668, %v738, %v732
        %s741 = scalar_lea.vmem [#allocation2], 20
        %v742 = vld [vmem:[%s741] sm:$0xf]
        %v743 = vld [vmem:[%s741 + $0x4] sm:$0xf]
        %v744 = vld [vmem:[%s741 + $0x8] sm:$0xf]
        %v745 = vld [vmem:[%s741 + $0xc] sm:$0xf]
        %v746 = vld [vmem:[%s741 + $0x10] sm:$0xf]
        %v752 = vunpack.c.l.b16 %v742
        %v753 = vunpack.c.l.b16 %v743
        %v754 = vunpack.c.l.b16 %v744
        %v755 = vunpack.c.l.b16 %v745
        %v756 = vunpack.c.l.b16 %v746
        %v757 = vpack.c.b16 %v753, %v752
        %v758 = vpack.c.b16 %v755, %v754
        %v759 = vpack.c.b16 %v756, %v756
        %vm762 = vcmask 326656
        %v763 = vsel %vm762, %v672, 0
        %v765 = vsel %vm762, %v674, 0
        %v767 = vsel %vm762, %v676, 0
        %v769 = vsel %vm762, %v678, 0
        %v771 = vsel %vm762, %v680, 0
        %v773 = vsel %vm762, %v682, 0
        %v775 = vsel %vm762, %v684, 0
        %v777 = vsel %vm762, %v740, 0
        %vm779 = vcmask 1043456
        %v781 = vsel %vm779, %v759, 0
        %783 = vmatpush.bf16.msra.mxu0 0
        %784 = vmatpush.bf16.msra.mxu0 0
        %785 = vmatpush.bf16.msra.mxu0 0
        %786 = vmatpush.bf16.msra.mxu0 0
        %787 = vmatpush.bf16.msra.mxu0 0
        %788 = vmatpush.bf16.msra.mxu0 %v781
        %789 = vmatpush.bf16.msra.mxu0 %v758
        %790 = vmatpush.bf16.msra.mxu0 %v757
        %791 = vmatmul.bf16.gmra.mxu0 %v763
        %v792 = vpop.f32.mrf.mxu0
        %v793 = vadd.f32 0.0, %v792
        %v794 = vpop.f32.mrf.mxu0
        %v795 = vadd.f32 0.0, %v794
        %796 = vmatmul.bf16.gmra.mxu0 %v765
        %v797 = vpop.f32.mrf.mxu0
        %v798 = vadd.f32 0.0, %v797
        %v799 = vpop.f32.mrf.mxu0
        %v800 = vadd.f32 0.0, %v799
        %801 = vmatmul.bf16.gmra.mxu0 %v767
        %v802 = vpop.f32.mrf.mxu0
        %v803 = vadd.f32 0.0, %v802
        %v804 = vpop.f32.mrf.mxu0
        %v805 = vadd.f32 0.0, %v804
        %806 = vmatmul.bf16.gmra.mxu0 %v769
        %v807 = vpop.f32.mrf.mxu0
        %v808 = vadd.f32 0.0, %v807
        %v809 = vpop.f32.mrf.mxu0
        %v810 = vadd.f32 0.0, %v809
        %811 = vmatmul.bf16.gmra.mxu0 %v771
        %v812 = vpop.f32.mrf.mxu0
        %v813 = vadd.f32 0.0, %v812
        %v814 = vpop.f32.mrf.mxu0
        %v815 = vadd.f32 0.0, %v814
        %816 = vmatmul.bf16.gmra.mxu0 %v773
        %v817 = vpop.f32.mrf.mxu0
        %v818 = vadd.f32 0.0, %v817
        %v819 = vpop.f32.mrf.mxu0
        %v820 = vadd.f32 0.0, %v819
        %821 = vmatmul.bf16.gmra.mxu0 %v775
        %v822 = vpop.f32.mrf.mxu0
        %v823 = vadd.f32 0.0, %v822
        %v824 = vpop.f32.mrf.mxu0
        %v825 = vadd.f32 0.0, %v824
        %826 = vmatmul.bf16.gmra.mxu0 %v777
        %v827 = vpop.f32.mrf.mxu0
        %v828 = vadd.f32 0.0, %v827
        %v829 = vpop.f32.mrf.mxu0
        %v830 = vadd.f32 0.0, %v829
        %831 = vdwg.mxu0
        %v837 = vunpack.c.l.b16 %v685
        %v838 = vunpack.c.l.b16 %v686
        %v839 = vunpack.c.l.b16 %v687
        %v840 = vunpack.c.l.b16 %v688
        %v841 = vunpack.c.l.b16 %v689
        %v842 = vpack.c.b16 %v838, %v837
        %v843 = vpack.c.b16 %v840, %v839
        %v844 = vpack.c.b16 %v841, %v841
        %v847 = vsel %vm762, %v670, 0
        %v850 = vsel %vm779, %v844, 0
        %852 = vmatpush.bf16.msra.mxu0 0
        %853 = vmatpush.bf16.msra.mxu0 0
        %854 = vmatpush.bf16.msra.mxu0 0
        %855 = vmatpush.bf16.msra.mxu0 0
        %856 = vmatpush.bf16.msra.mxu0 0
        %857 = vmatpush.bf16.msra.mxu0 %v850
        %858 = vmatpush.bf16.msra.mxu0 %v843
        %859 = vmatpush.bf16.msra.mxu0 %v842
        %860 = vmatmul.bf16.gmra.mxu0 %v847
        %v861 = vpop.f32.mrf.mxu0
        %v862 = vadd.f32 %v793, %v861
        %v863 = vpop.f32.mrf.mxu0
        %v864 = vadd.f32 %v795, %v863
        %865 = vmatmul.bf16.gmra.mxu0 %v763
        %v866 = vpop.f32.mrf.mxu0
        %v867 = vadd.f32 %v798, %v866
        %v868 = vpop.f32.mrf.mxu0
        %v869 = vadd.f32 %v800, %v868
        %870 = vmatmul.bf16.gmra.mxu0 %v765
        %v871 = vpop.f32.mrf.mxu0
        %v872 = vadd.f32 %v803, %v871
        %v873 = vpop.f32.mrf.mxu0
        %v874 = vadd.f32 %v805, %v873
        %875 = vmatmul.bf16.gmra.mxu0 %v767
        %v876 = vpop.f32.mrf.mxu0
        %v877 = vadd.f32 %v808, %v876
        %v878 = vpop.f32.mrf.mxu0
        %v879 = vadd.f32 %v810, %v878
        %880 = vmatmul.bf16.gmra.mxu0 %v769
        %v881 = vpop.f32.mrf.mxu0
        %v882 = vadd.f32 %v813, %v881
        %v883 = vpop.f32.mrf.mxu0
        %v884 = vadd.f32 %v815, %v883
        %885 = vmatmul.bf16.gmra.mxu0 %v771
        %v886 = vpop.f32.mrf.mxu0
        %v887 = vadd.f32 %v818, %v886
        %v888 = vpop.f32.mrf.mxu0
        %v889 = vadd.f32 %v820, %v888
        %890 = vmatmul.bf16.gmra.mxu0 %v773
        %v891 = vpop.f32.mrf.mxu0
        %v892 = vadd.f32 %v823, %v891
        %v893 = vpop.f32.mrf.mxu0
        %v894 = vadd.f32 %v825, %v893
        %895 = vmatmul.bf16.gmra.mxu0 %v775
        %v896 = vpop.f32.mrf.mxu0
        %v897 = vadd.f32 %v828, %v896
        %v898 = vpop.f32.mrf.mxu0
        %v899 = vadd.f32 %v830, %v898
        %900 = vdwg.mxu0
        %v903 = vunpack.c.l.b16 %v260
        %v904 = vunpack.c.l.b16 %v261
        %v905 = vpack.c.b16 %v904, %v903
        %v907 = vunpack.c.l.b16 %v262
        %v908 = vpack.c.b16 %v907, %v907
        %v910 = vshrl.u32 %v905, 16
        %v912 = vshll.u32 %v905, 16
        %v914 = vrot.slane %v912, 1
        %v915 = vor.u32 %v910, %v914
        %v917 = vshll.u32 %v908, 16
        %v919 = vrot.slane %v917, 1
        %v920 = vsel %vm333, %v915, %v919
        %921 = vrot.lane.b32.xlu0 %v920, 8
        %v922 = vpop.permute.xlu0 %921
        %v923 = vrot.slane %v905, 1
        %v924 = vrot.slane %v908, 1
        %v925 = vsel %vm446, %v923, %v924
        %926 = vrot.lane.b32.xlu0 %v925, 16
        %v927 = vpop.permute.xlu0 %926
        %v928 = vrot.slane %v910, 1
        %v929 = vrot.slane %v912, 2
        %v930 = vor.u32 %v928, %v929
        %v931 = vshrl.u32 %v908, 16
        %v933 = vrot.slane %v931, 1
        %v934 = vrot.slane %v917, 2
        %v935 = vor.u32 %v933, %v934
        %v936 = vsel %vm487, %v930, %v935
        %937 = vrot.lane.b32.xlu0 %v936, 24
        %v938 = vpop.permute.xlu0 %937
        %v939 = vrot.slane %v905, 2
        %v940 = vrot.slane %v908, 2
        %v941 = vsel %vm576, %v939, %v940
        %942 = vrot.lane.b32.xlu0 %v941, 32
        %v943 = vpop.permute.xlu0 %942
        %v945 = vsel %vm617, %v905, %v922
        %v947 = vsel %vm634, %v945, %v927
        %v949 = vsel %vm651, %v947, %v938
        %v951 = vsel %vm668, %v949, %v943
        %s952 = scalar_lea.vmem [#allocation2], 40
        %v953 = vld [vmem:[%s952] sm:$0xf]
        %v954 = vld [vmem:[%s952 + $0x4] sm:$0xf]
        %v955 = vld [vmem:[%s952 + $0x8] sm:$0xf]
        %v956 = vld [vmem:[%s952 + $0xc] sm:$0xf]
        %v957 = vld [vmem:[%s952 + $0x10] sm:$0xf]
        %v963 = vunpack.c.l.b16 %v953
        %v964 = vunpack.c.l.b16 %v954
        %v965 = vunpack.c.l.b16 %v955
        %v966 = vunpack.c.l.b16 %v956
        %v967 = vunpack.c.l.b16 %v957
        %v968 = vpack.c.b16 %v964, %v963
        %v969 = vpack.c.b16 %v966, %v965
        %v970 = vpack.c.b16 %v967, %v967
        %v973 = vsel %vm762, %v951, 0
        %v976 = vsel %vm779, %v970, 0
        %978 = vmatpush.bf16.msra.mxu0 0
        %979 = vmatpush.bf16.msra.mxu0 0
        %980 = vmatpush.bf16.msra.mxu0 0
        %981 = vmatpush.bf16.msra.mxu0 0
        %982 = vmatpush.bf16.msra.mxu0 0
        %983 = vmatpush.bf16.msra.mxu0 %v976
        %984 = vmatpush.bf16.msra.mxu0 %v969
        %985 = vmatpush.bf16.msra.mxu0 %v968
        %986 = vmatmul.bf16.gmra.mxu0 %v765
        %v987 = vpop.f32.mrf.mxu0
        %v988 = vadd.f32 0.0, %v987
        %v989 = vpop.f32.mrf.mxu0
        %v990 = vadd.f32 0.0, %v989
        %991 = vmatmul.bf16.gmra.mxu0 %v767
        %v992 = vpop.f32.mrf.mxu0
        %v993 = vadd.f32 0.0, %v992
        %v994 = vpop.f32.mrf.mxu0
        %v995 = vadd.f32 0.0, %v994
        %996 = vmatmul.bf16.gmra.mxu0 %v769
        %v997 = vpop.f32.mrf.mxu0
        %v998 = vadd.f32 0.0, %v997
        %v999 = vpop.f32.mrf.mxu0
        %v1000 = vadd.f32 0.0, %v999
        %1001 = vmatmul.bf16.gmra.mxu0 %v771
        %v1002 = vpop.f32.mrf.mxu0
        %v1003 = vadd.f32 0.0, %v1002
        %v1004 = vpop.f32.mrf.mxu0
        %v1005 = vadd.f32 0.0, %v1004
        %1006 = vmatmul.bf16.gmra.mxu0 %v773
        %v1007 = vpop.f32.mrf.mxu0
        %v1008 = vadd.f32 0.0, %v1007
        %v1009 = vpop.f32.mrf.mxu0
        %v1010 = vadd.f32 0.0, %v1009
        %1011 = vmatmul.bf16.gmra.mxu0 %v775
        %v1012 = vpop.f32.mrf.mxu0
        %v1013 = vadd.f32 0.0, %v1012
        %v1014 = vpop.f32.mrf.mxu0
        %v1015 = vadd.f32 0.0, %v1014
        %1016 = vmatmul.bf16.gmra.mxu0 %v777
        %v1017 = vpop.f32.mrf.mxu0
        %v1018 = vadd.f32 0.0, %v1017
        %v1019 = vpop.f32.mrf.mxu0
        %v1020 = vadd.f32 0.0, %v1019
        %1021 = vmatmul.bf16.gmra.mxu0 %v973
        %v1022 = vpop.f32.mrf.mxu0
        %v1023 = vadd.f32 0.0, %v1022
        %v1024 = vpop.f32.mrf.mxu0
        %v1025 = vadd.f32 0.0, %v1024
        %1026 = vdwg.mxu0
        %v1027 = vadd.f32 %v862, %v988
        %v1028 = vadd.f32 %v864, %v990
        %v1029 = vadd.f32 %v867, %v993
        %v1030 = vadd.f32 %v869, %v995
        %v1031 = vadd.f32 %v872, %v998
        %v1032 = vadd.f32 %v874, %v1000
        %v1033 = vadd.f32 %v877, %v1003
        %v1034 = vadd.f32 %v879, %v1005
        %v1035 = vadd.f32 %v882, %v1008
        %v1036 = vadd.f32 %v884, %v1010
        %v1037 = vadd.f32 %v887, %v1013
        %v1038 = vadd.f32 %v889, %v1015
        %v1039 = vadd.f32 %v892, %v1018
        %v1040 = vadd.f32 %v894, %v1020
        %v1041 = vadd.f32 %v897, %v1023
        %v1042 = vadd.f32 %v899, %v1025
        %v1045 = vunpack.c.l.b16 %v263
        %v1046 = vunpack.c.l.b16 %v264
        %v1047 = vpack.c.b16 %v1046, %v1045
        %v1049 = vunpack.c.l.b16 %v265
        %v1050 = vpack.c.b16 %v1049, %v1049
        %v1052 = vshrl.u32 %v1047, 16
        %v1054 = vshll.u32 %v1047, 16
        %v1056 = vrot.slane %v1054, 1
        %v1057 = vor.u32 %v1052, %v1056
        %v1059 = vshll.u32 %v1050, 16
        %v1061 = vrot.slane %v1059, 1
        %v1062 = vsel %vm333, %v1057, %v1061
        %1063 = vrot.lane.b32.xlu0 %v1062, 8
        %v1064 = vpop.permute.xlu0 %1063
        %v1065 = vrot.slane %v1047, 1
        %v1066 = vrot.slane %v1050, 1
        %v1067 = vsel %vm446, %v1065, %v1066
        %1068 = vrot.lane.b32.xlu0 %v1067, 16
        %v1069 = vpop.permute.xlu0 %1068
        %v1070 = vrot.slane %v1052, 1
        %v1071 = vrot.slane %v1054, 2
        %v1072 = vor.u32 %v1070, %v1071
        %v1073 = vshrl.u32 %v1050, 16
        %v1075 = vrot.slane %v1073, 1
        %v1076 = vrot.slane %v1059, 2
        %v1077 = vor.u32 %v1075, %v1076
        %v1078 = vsel %vm487, %v1072, %v1077
        %1079 = vrot.lane.b32.xlu0 %v1078, 24
        %v1080 = vpop.permute.xlu0 %1079
        %v1081 = vrot.slane %v1047, 2
        %v1082 = vrot.slane %v1050, 2
        %v1083 = vsel %vm576, %v1081, %v1082
        %1084 = vrot.lane.b32.xlu0 %v1083, 32
        %v1085 = vpop.permute.xlu0 %1084
        %v1087 = vsel %vm617, %v1047, %v1064
        %v1089 = vsel %vm634, %v1087, %v1069
        %v1091 = vsel %vm651, %v1089, %v1080
        %v1093 = vsel %vm668, %v1091, %v1085
        %s1094 = scalar_lea.vmem [#allocation2], 60
        %v1095 = vld [vmem:[%s1094] sm:$0xf]
        %v1096 = vld [vmem:[%s1094 + $0x4] sm:$0xf]
        %v1097 = vld [vmem:[%s1094 + $0x8] sm:$0xf]
        %v1098 = vld [vmem:[%s1094 + $0xc] sm:$0xf]
        %v1099 = vld [vmem:[%s1094 + $0x10] sm:$0xf]
        %v1105 = vunpack.c.l.b16 %v1095
        %v1106 = vunpack.c.l.b16 %v1096
        %v1107 = vunpack.c.l.b16 %v1097
        %v1108 = vunpack.c.l.b16 %v1098
        %v1109 = vunpack.c.l.b16 %v1099
        %v1110 = vpack.c.b16 %v1106, %v1105
        %v1111 = vpack.c.b16 %v1108, %v1107
        %v1112 = vpack.c.b16 %v1109, %v1109
        %v1115 = vsel %vm762, %v1093, 0
        %v1118 = vsel %vm779, %v1112, 0
        %1120 = vmatpush.bf16.msra.mxu0 0
        %1121 = vmatpush.bf16.msra.mxu0 0
        %1122 = vmatpush.bf16.msra.mxu0 0
        %1123 = vmatpush.bf16.msra.mxu0 0
        %1124 = vmatpush.bf16.msra.mxu0 0
        %1125 = vmatpush.bf16.msra.mxu0 %v1118
        %1126 = vmatpush.bf16.msra.mxu0 %v1111
        %1127 = vmatpush.bf16.msra.mxu0 %v1110
        %1128 = vmatmul.bf16.gmra.mxu0 %v767
        %v1129 = vpop.f32.mrf.mxu0
        %v1130 = vadd.f32 0.0, %v1129
        %v1131 = vpop.f32.mrf.mxu0
        %v1132 = vadd.f32 0.0, %v1131
        %1133 = vmatmul.bf16.gmra.mxu0 %v769
        %v1134 = vpop.f32.mrf.mxu0
        %v1135 = vadd.f32 0.0, %v1134
        %v1136 = vpop.f32.mrf.mxu0
        %v1137 = vadd.f32 0.0, %v1136
        %1138 = vmatmul.bf16.gmra.mxu0 %v771
        %v1139 = vpop.f32.mrf.mxu0
        %v1140 = vadd.f32 0.0, %v1139
        %v1141 = vpop.f32.mrf.mxu0
        %v1142 = vadd.f32 0.0, %v1141
        %1143 = vmatmul.bf16.gmra.mxu0 %v773
        %v1144 = vpop.f32.mrf.mxu0
        %v1145 = vadd.f32 0.0, %v1144
        %v1146 = vpop.f32.mrf.mxu0
        %v1147 = vadd.f32 0.0, %v1146
        %1148 = vmatmul.bf16.gmra.mxu0 %v775
        %v1149 = vpop.f32.mrf.mxu0
        %v1150 = vadd.f32 0.0, %v1149
        %v1151 = vpop.f32.mrf.mxu0
        %v1152 = vadd.f32 0.0, %v1151
        %1153 = vmatmul.bf16.gmra.mxu0 %v777
        %v1154 = vpop.f32.mrf.mxu0
        %v1155 = vadd.f32 0.0, %v1154
        %v1156 = vpop.f32.mrf.mxu0
        %v1157 = vadd.f32 0.0, %v1156
        %1158 = vmatmul.bf16.gmra.mxu0 %v973
        %v1159 = vpop.f32.mrf.mxu0
        %v1160 = vadd.f32 0.0, %v1159
        %v1161 = vpop.f32.mrf.mxu0
        %v1162 = vadd.f32 0.0, %v1161
        %1163 = vmatmul.bf16.gmra.mxu0 %v1115
        %v1164 = vpop.f32.mrf.mxu0
        %v1165 = vadd.f32 0.0, %v1164
        %v1166 = vpop.f32.mrf.mxu0
        %v1167 = vadd.f32 0.0, %v1166
        %1168 = vdwg.mxu0
        %v1169 = vadd.f32 %v1027, %v1130
        %v1170 = vadd.f32 %v1028, %v1132
        %v1171 = vadd.f32 %v1029, %v1135
        %v1172 = vadd.f32 %v1030, %v1137
        %v1173 = vadd.f32 %v1031, %v1140
        %v1174 = vadd.f32 %v1032, %v1142
        %v1175 = vadd.f32 %v1033, %v1145
        %v1176 = vadd.f32 %v1034, %v1147
        %v1177 = vadd.f32 %v1035, %v1150
        %v1178 = vadd.f32 %v1036, %v1152
        %v1179 = vadd.f32 %v1037, %v1155
        %v1180 = vadd.f32 %v1038, %v1157
        %v1181 = vadd.f32 %v1039, %v1160
        %v1182 = vadd.f32 %v1040, %v1162
        %v1183 = vadd.f32 %v1041, %v1165
        %v1184 = vadd.f32 %v1042, %v1167
        %v1187 = vunpack.c.l.b16 %v266
        %v1188 = vunpack.c.l.b16 %v267
        %v1189 = vpack.c.b16 %v1188, %v1187
        %v1191 = vunpack.c.l.b16 %v268
        %v1192 = vpack.c.b16 %v1191, %v1191
        %v1194 = vshrl.u32 %v1189, 16
        %v1196 = vshll.u32 %v1189, 16
        %v1198 = vrot.slane %v1196, 1
        %v1199 = vor.u32 %v1194, %v1198
        %v1201 = vshll.u32 %v1192, 16
        %v1203 = vrot.slane %v1201, 1
        %v1204 = vsel %vm333, %v1199, %v1203
        %1205 = vrot.lane.b32.xlu0 %v1204, 8
        %v1206 = vpop.permute.xlu0 %1205
        %v1207 = vrot.slane %v1189, 1
        %v1208 = vrot.slane %v1192, 1
        %v1209 = vsel %vm446, %v1207, %v1208
        %1210 = vrot.lane.b32.xlu0 %v1209, 16
        %v1211 = vpop.permute.xlu0 %1210
        %v1212 = vrot.slane %v1194, 1
        %v1213 = vrot.slane %v1196, 2
        %v1214 = vor.u32 %v1212, %v1213
        %v1215 = vshrl.u32 %v1192, 16
        %v1217 = vrot.slane %v1215, 1
        %v1218 = vrot.slane %v1201, 2
        %v1219 = vor.u32 %v1217, %v1218
        %v1220 = vsel %vm487, %v1214, %v1219
        %1221 = vrot.lane.b32.xlu0 %v1220, 24
        %v1222 = vpop.permute.xlu0 %1221
        %v1223 = vrot.slane %v1189, 2
        %v1224 = vrot.slane %v1192, 2
        %v1225 = vsel %vm576, %v1223, %v1224
        %1226 = vrot.lane.b32.xlu0 %v1225, 32
        %v1227 = vpop.permute.xlu0 %1226
        %v1229 = vsel %vm617, %v1189, %v1206
        %v1231 = vsel %vm634, %v1229, %v1211
        %v1233 = vsel %vm651, %v1231, %v1222
        %v1235 = vsel %vm668, %v1233, %v1227
        %s1236 = scalar_lea.vmem [#allocation2], 80
        %v1237 = vld [vmem:[%s1236] sm:$0xf]
        %v1238 = vld [vmem:[%s1236 + $0x4] sm:$0xf]
        %v1239 = vld [vmem:[%s1236 + $0x8] sm:$0xf]
        %v1240 = vld [vmem:[%s1236 + $0xc] sm:$0xf]
        %v1241 = vld [vmem:[%s1236 + $0x10] sm:$0xf]
        %v1247 = vunpack.c.l.b16 %v1237
        %v1248 = vunpack.c.l.b16 %v1238
        %v1249 = vunpack.c.l.b16 %v1239
        %v1250 = vunpack.c.l.b16 %v1240
        %v1251 = vunpack.c.l.b16 %v1241
        %v1252 = vpack.c.b16 %v1248, %v1247
        %v1253 = vpack.c.b16 %v1250, %v1249
        %v1254 = vpack.c.b16 %v1251, %v1251
        %v1257 = vsel %vm762, %v1235, 0
        %v1260 = vsel %vm779, %v1254, 0
        %1262 = vmatpush.bf16.msra.mxu0 0
        %1263 = vmatpush.bf16.msra.mxu0 0
        %1264 = vmatpush.bf16.msra.mxu0 0
        %1265 = vmatpush.bf16.msra.mxu0 0
        %1266 = vmatpush.bf16.msra.mxu0 0
        %1267 = vmatpush.bf16.msra.mxu0 %v1260
        %1268 = vmatpush.bf16.msra.mxu0 %v1253
        %1269 = vmatpush.bf16.msra.mxu0 %v1252
        %1270 = vmatmul.bf16.gmra.mxu0 %v769
        %v1271 = vpop.f32.mrf.mxu0
        %v1272 = vadd.f32 0.0, %v1271
        %v1273 = vpop.f32.mrf.mxu0
        %v1274 = vadd.f32 0.0, %v1273
        %1275 = vmatmul.bf16.gmra.mxu0 %v771
        %v1276 = vpop.f32.mrf.mxu0
        %v1277 = vadd.f32 0.0, %v1276
        %v1278 = vpop.f32.mrf.mxu0
        %v1279 = vadd.f32 0.0, %v1278
        %1280 = vmatmul.bf16.gmra.mxu0 %v773
        %v1281 = vpop.f32.mrf.mxu0
        %v1282 = vadd.f32 0.0, %v1281
        %v1283 = vpop.f32.mrf.mxu0
        %v1284 = vadd.f32 0.0, %v1283
        %1285 = vmatmul.bf16.gmra.mxu0 %v775
        %v1286 = vpop.f32.mrf.mxu0
        %v1287 = vadd.f32 0.0, %v1286
        %v1288 = vpop.f32.mrf.mxu0
        %v1289 = vadd.f32 0.0, %v1288
        %1290 = vmatmul.bf16.gmra.mxu0 %v777
        %v1291 = vpop.f32.mrf.mxu0
        %v1292 = vadd.f32 0.0, %v1291
        %v1293 = vpop.f32.mrf.mxu0
        %v1294 = vadd.f32 0.0, %v1293
        %1295 = vmatmul.bf16.gmra.mxu0 %v973
        %v1296 = vpop.f32.mrf.mxu0
        %v1297 = vadd.f32 0.0, %v1296
        %v1298 = vpop.f32.mrf.mxu0
        %v1299 = vadd.f32 0.0, %v1298
        %1300 = vmatmul.bf16.gmra.mxu0 %v1115
        %v1301 = vpop.f32.mrf.mxu0
        %v1302 = vadd.f32 0.0, %v1301
        %v1303 = vpop.f32.mrf.mxu0
        %v1304 = vadd.f32 0.0, %v1303
        %1305 = vmatmul.bf16.gmra.mxu0 %v1257
        %v1306 = vpop.f32.mrf.mxu0
        %v1307 = vadd.f32 0.0, %v1306
        %v1308 = vpop.f32.mrf.mxu0
        %v1309 = vadd.f32 0.0, %v1308
        %1310 = vdwg.mxu0
        %v1311 = vadd.f32 %v1169, %v1272
        %v1312 = vadd.f32 %v1170, %v1274
        %v1313 = vadd.f32 %v1171, %v1277
        %v1314 = vadd.f32 %v1172, %v1279
        %v1315 = vadd.f32 %v1173, %v1282
        %v1316 = vadd.f32 %v1174, %v1284
        %v1317 = vadd.f32 %v1175, %v1287
        %v1318 = vadd.f32 %v1176, %v1289
        %v1319 = vadd.f32 %v1177, %v1292
        %v1320 = vadd.f32 %v1178, %v1294
        %v1321 = vadd.f32 %v1179, %v1297
        %v1322 = vadd.f32 %v1180, %v1299
        %v1323 = vadd.f32 %v1181, %v1302
        %v1324 = vadd.f32 %v1182, %v1304
        %v1325 = vadd.f32 %v1183, %v1307
        %v1326 = vadd.f32 %v1184, %v1309
        %v1327 = vld [vmem:[#allocation4] sm:$0x1]
        %v1329 = vperm.slane %v1327, 0
        %v1331 = vadd.f32 %v1311, %v1329
        %v1332 = vadd.f32 %v1312, %v1329
        %v1333 = vadd.f32 %v1313, %v1329
        %v1334 = vadd.f32 %v1314, %v1329
        %v1335 = vadd.f32 %v1315, %v1329
        %v1336 = vadd.f32 %v1316, %v1329
        %v1337 = vadd.f32 %v1317, %v1329
        %v1338 = vadd.f32 %v1318, %v1329
        %v1339 = vadd.f32 %v1319, %v1329
        %v1340 = vadd.f32 %v1320, %v1329
        %v1341 = vadd.f32 %v1321, %v1329
        %v1342 = vadd.f32 %v1322, %v1329
        %v1343 = vadd.f32 %v1323, %v1329
        %v1344 = vadd.f32 %v1324, %v1329
        %v1345 = vadd.f32 %v1325, %v1329
        %v1346 = vadd.f32 %v1326, %v1329
        %v1347 = vmax.f32 %v1331, 0.0
        %v1348 = vmax.f32 %v1332, 0.0
        %v1349 = vmax.f32 %v1333, 0.0
        %v1350 = vmax.f32 %v1334, 0.0
        %v1351 = vmax.f32 %v1335, 0.0
        %v1352 = vmax.f32 %v1336, 0.0
        %v1353 = vmax.f32 %v1337, 0.0
        %v1354 = vmax.f32 %v1338, 0.0
        %v1355 = vmax.f32 %v1339, 0.0
        %v1356 = vmax.f32 %v1340, 0.0
        %v1357 = vmax.f32 %v1341, 0.0
        %v1358 = vmax.f32 %v1342, 0.0
        %v1359 = vmax.f32 %v1343, 0.0
        %v1360 = vmax.f32 %v1344, 0.0
        %v1361 = vmax.f32 %v1345, 0.0
        %v1362 = vmax.f32 %v1346, 0.0
        %v1363 = vpack.c.bf16 %v1347, %v1347
        %v1364 = vpack.c.bf16 %v1348, %v1348
        %v1365 = vpack.c.bf16 %v1349, %v1349
        %v1366 = vpack.c.bf16 %v1350, %v1350
        %v1367 = vpack.c.bf16 %v1351, %v1351
        %v1368 = vpack.c.bf16 %v1352, %v1352
        %v1369 = vpack.c.bf16 %v1353, %v1353
        %v1370 = vpack.c.bf16 %v1354, %v1354
        %v1371 = vpack.c.bf16 %v1355, %v1355
        %v1372 = vpack.c.bf16 %v1356, %v1356
        %v1373 = vpack.c.bf16 %v1357, %v1357
        %v1374 = vpack.c.bf16 %v1358, %v1358
        %v1375 = vpack.c.bf16 %v1359, %v1359
        %v1376 = vpack.c.bf16 %v1360, %v1360
        %v1377 = vpack.c.bf16 %v1361, %v1361
        %v1378 = vpack.c.bf16 %v1362, %v1362
        %1379 = vst [vmem:[%s226] sm:$0xf] %v1363
        %1380 = vst [vmem:[%s226 + $0x4] sm:$0xf] %v1364
        %1381 = vst [vmem:[%s226 + $0x8] sm:$0xf] %v1365
        %1382 = vst [vmem:[%s226 + $0xc] sm:$0xf] %v1366
        %1383 = vst [vmem:[%s226 + $0x10] sm:$0xf] %v1367
        %1384 = vst [vmem:[%s226 + $0x14] sm:$0xf] %v1368
        %1385 = vst [vmem:[%s226 + $0x18] sm:$0xf] %v1369
        %1386 = vst [vmem:[%s226 + $0x1c] sm:$0xf] %v1370
        %1387 = vst [vmem:[%s226 + $0x20] sm:$0xf] %v1371
        %1388 = vst [vmem:[%s226 + $0x24] sm:$0xf] %v1372
        %1389 = vst [vmem:[%s226 + $0x28] sm:$0xf] %v1373
        %1390 = vst [vmem:[%s226 + $0x2c] sm:$0xf] %v1374
        %1391 = vst [vmem:[%s226 + $0x30] sm:$0xf] %v1375
        %1392 = vst [vmem:[%s226 + $0x34] sm:$0xf] %v1376
        %1393 = vst [vmem:[%s226 + $0x38] sm:$0xf] %v1377
        %1394 = vst [vmem:[%s226 + $0x3c] sm:$0xf] %v1378
        %s1395 = smul.u32 8, %s21
        %p1396 = scmp.lt.s32.totalorder %s20, 1
        %s1397 = scalar_select %p1396, %s20, 1
        %p1398 = scmp.lt.s32.totalorder %s1395, 15
        %s1399 = scalar_select %p1398, %s1395, 15
        %s1400 = smul.addr %s1399, 2
        %s1401 = smul.addr %s1397, 32
        %s1402 = sadd.s32 %s1400, %s1401
        %s1403 = smul.addr %s1402, 4
        %s1404 = scalar_lea.vmem %s3, %s1403
        // Predicated region
        $region41: #{head_hunter_forward.5} parent=31 // pred_check
          %p1405 = pneg %p116
        $region42: #{head_hunter_forward.5} parent=31 // pred_check_branch
          %1407 = sbr.rel (%p1405) target = $region44
        $region43: #{head_hunter_forward.5} parent=31 // pred_region
          %s1408 = smul.u32 8, %s21
        $region44: #{head_hunter_forward.5} parent=31 // pred_fallthru
          _
      $region32: #{head_hunter_forward.5} parent=5 // pred_fallthru
        _
      %p1409 = scmp.le.s32.totalorder 2, %s11
      // Predicated region
      $region45: #{head_hunter_forward.5} parent=5 // pred_check
        %p1410 = pneg %p1409
      $region46: #{head_hunter_forward.5} parent=5 // pred_check_branch
        %1412 = sbr.rel (%p1410) target = $region48
      $region47: #{head_hunter_forward.5} parent=5 // pred_region
        %s1413 = ssub.s32 %s11, 2
        // Predicated region
        $region49: #{head_hunter_forward.5} parent=47 // pred_check
          %p1414 = pneg %p122
        $region50: #{head_hunter_forward.5} parent=47 // pred_check_branch
          %1416 = sbr.rel (%p1414) target = $region52
        $region51: #{head_hunter_forward.5} parent=47 // pred_region
          %s1417 = smul.u32 8, %s23
          %p1418 = scmp.lt.s32.totalorder %s22, 1
          %s1419 = scalar_select %p1418, %s22, 1
          %p1420 = scmp.lt.s32.totalorder %s1417, 15
          %s1421 = scalar_select %p1420, %s1417, 15
          %s1422 = smul.addr %s1421, 2
          %s1423 = smul.addr %s1419, 32
          %s1424 = sadd.s32 %s1422, %s1423
          %s1425 = smul.addr %s1424, 4
          %s1426 = scalar_lea.vmem %s3, %s1425
        $region52: #{head_hunter_forward.5} parent=47 // pred_fallthru
          _
      $region48: #{head_hunter_forward.5} parent=5 // pred_fallthru
        _
    $region6: #{head_hunter_forward.5} parent=1 // loop_footer
      %s15 = sadd.s32 1, %s11
    $region7: #{head_hunter_forward.5} parent=1 // loop_footer_branch
      %10 = sbr.rel target = $region3
    $region8: #{head_hunter_forward.5} parent=1 // loop_exit
      _
    %1427 = vsyncpa [#allocation3], 1
    %s1428 = scalar_lea.sflag [#allocation3], 1
    %1429 = vsyncpa %s1428, 1
    %1430 = vsyncpa [#allocation5], 1

// kernel: head_hunter_forward.8
$region0: #{head_hunter_forward.8}
  #allocation0 [shape = 'u32[]', space=smem, size = 0x4, offset = 0x4, fixed_abs, tag = 'smem constant byte address 0x4 - core index']
  #allocation1 [shape = 'u32[72,128]{1,0:T(1,128)}', space=vmem, size = 0x9000, scoped, tag = 'internal scratch']
  %s0 = inlined_call_operand.vmem [shape: bf16[2,2048], index: 0, kind: input, shape index: {}]
  %s1 = inlined_call_operand.vmem [shape: bf16[2048,32], index: 1, kind: input, shape index: {}]
  %s2 = inlined_call_operand.vmem [shape: f32[2,2,32], index: 2, kind: output, shape index: {}]
  %s3 = sld [smem:[#allocation0]]
  $region45: #{head_hunter_forward.8} parent=0
    _
  %s5 = ssub.s32 1, %s3
  %s6 = scalar_select 0, %s5, %s3
  loop: start=0, step=1, limit=4
  $region2: #{head_hunter_forward.8} parent=0 // loop_pre_header
    _
  $region3: #{head_hunter_forward.8} parent=0 // loop_header
    %s8 = sphi 0, %s12
    %p9 = scmp.ge.s32.totalorder %s8, 4
    %s15 = sphi 0, %s27
    %s16 = sphi 0, %s23
    %s17 = sphi 0, %s15
    %s18 = sphi 0, %s16
    %s19 = sphi 0, %s17
    %s20 = sphi 0, %s18
    %s32 = sphi 0, %s34
    %s35 = sphi 0, %s32
    %s36 = sphi 0, %s35
    %s52 = sphi 0, %s36
    %s60 = sphi 0, %s62
    %s63 = sphi 0, %s60
    %s64 = sphi 0, %s63
    %s80 = sphi 0, %s64
    %s86 = sphi 0, %s88
    %s89 = sphi 0, %s86
    %s90 = sphi 0, %s89
    %s106 = sphi 0, %s90
  $region4: #{head_hunter_forward.8} parent=0 // loop_header_branch
    %11 = sbr.rel (%p9) target = $region8
  $region5: #{head_hunter_forward.8} parent=0 // loop_body
    %s13 = ssub.s32 %s8, 1
    %s14 = ssub.s32 %s8, 2
    %s21 = sadd.s32 1, %s16
    %p22 = scmp.ge.s32.totalorder %s21, 1
    %s23 = scalar_select %p22, 0, %s21
    %s24 = sadd.s32 1, %s15
    %s25 = scalar_select %p22, %s24, %s15
    %p26 = scmp.ge.s32.totalorder %s25, 2
    %s27 = scalar_select %p26, 0, %s25
    %s28 = sadd.s32 %s15, %s16
    %s29 = sadd.s32 %s27, %s23
    %s30 = ssub.s32 %s28, %s29
    %p31 = scmp.eq.s32.totalorder %s30, 0
    %s33 = sadd.s32 %s32, 1
    %s34 = scalar_select %p31, %s32, %s33
    %p37 = pneg %p31
    %p38 = scmp.eq.s32.totalorder %s8, 1
    %p39 = por %p37, %p38
    %p40 = scmp.ne.s32.totalorder %s32, %s35
    %p41 = scmp.eq.s32.totalorder %s8, 0
    %p42 = por %p40, %p41
    %p43 = scmp.ne.s32.totalorder %s32, %s35
    %p44 = scmp.eq.s32.totalorder %s13, 1
    %p45 = por %p43, %p44
    %p46 = scmp.ne.s32.totalorder %s35, %s36
    %p47 = scmp.eq.s32.totalorder %s13, 0
    %p48 = por %p46, %p47
    %p49 = scmp.ne.s32.totalorder %s35, %s36
    %p50 = scmp.eq.s32.totalorder %s14, 1
    %p51 = por %p49, %p50
    %p53 = scmp.ne.s32.totalorder %s36, %s52
    %p54 = scmp.eq.s32.totalorder %s14, 0
    %p55 = por %p53, %p54
    %s56 = sadd.s32 %s15, %s16
    %s57 = sadd.s32 %s27, %s23
    %s58 = ssub.s32 %s56, %s57
    %p59 = scmp.eq.s32.totalorder %s58, 0
    %s61 = sadd.s32 %s60, 1
    %s62 = scalar_select %p59, %s60, %s61
    %p65 = pneg %p59
    %p66 = scmp.eq.s32.totalorder %s8, 1
    %p67 = por %p65, %p66
    %p68 = scmp.ne.s32.totalorder %s60, %s63
    %p69 = scmp.eq.s32.totalorder %s8, 0
    %p70 = por %p68, %p69
    %p71 = scmp.ne.s32.totalorder %s60, %s63
    %p72 = scmp.eq.s32.totalorder %s13, 1
    %p73 = por %p71, %p72
    %p74 = scmp.ne.s32.totalorder %s63, %s64
    %p75 = scmp.eq.s32.totalorder %s13, 0
    %p76 = por %p74, %p75
    %p77 = scmp.ne.s32.totalorder %s63, %s64
    %p78 = scmp.eq.s32.totalorder %s14, 1
    %p79 = por %p77, %p78
    %p81 = scmp.ne.s32.totalorder %s64, %s80
    %p82 = scmp.eq.s32.totalorder %s14, 0
    %p83 = por %p81, %p82
    %s84 = ssub.s32 %s15, %s27
    %p85 = scmp.eq.s32.totalorder %s84, 0
    %s87 = sadd.s32 %s86, 1
    %s88 = scalar_select %p85, %s86, %s87
    %p91 = pneg %p85
    %p92 = scmp.eq.s32.totalorder %s8, 1
    %p93 = por %p91, %p92
    %p94 = scmp.ne.s32.totalorder %s86, %s89
    %p95 = scmp.eq.s32.totalorder %s8, 0
    %p96 = por %p94, %p95
    %p97 = scmp.ne.s32.totalorder %s86, %s89
    %p98 = scmp.eq.s32.totalorder %s13, 1
    %p99 = por %p97, %p98
    %p100 = scmp.ne.s32.totalorder %s89, %s90
    %p101 = scmp.eq.s32.totalorder %s13, 0
    %p102 = por %p100, %p101
    %p103 = scmp.ne.s32.totalorder %s89, %s90
    %p104 = scmp.eq.s32.totalorder %s14, 1
    %p105 = por %p103, %p104
    %p107 = scmp.ne.s32.totalorder %s90, %s106
    %p108 = scmp.eq.s32.totalorder %s14, 0
    %p109 = por %p107, %p108
    %p110 = scmp.le.s32.totalorder 1, %s8
    %p111 = scmp.lt.s32.totalorder %s8, 3
    %p112 = pnand %p110, %p111
    %p113 = pneg %p112
    // Predicated region
    $region9: #{head_hunter_forward.8} parent=5 // pred_check
      _
    $region10: #{head_hunter_forward.8} parent=5 // pred_check_branch
      %115 = sbr.rel (%p112) target = $region12
    $region11: #{head_hunter_forward.8} parent=5 // pred_region
      %s116 = ssub.s32 %s8, 1
    $region12: #{head_hunter_forward.8} parent=5 // pred_fallthru
      _
    %p117 = scmp.lt.s32.totalorder %s8, 2
    // Predicated region
    $region13: #{head_hunter_forward.8} parent=5 // pred_check
      %p118 = pneg %p117
    $region14: #{head_hunter_forward.8} parent=5 // pred_check_branch
      %120 = sbr.rel (%p118) target = $region16
    $region15: #{head_hunter_forward.8} parent=5 // pred_region
      // Predicated region
      $region17: #{head_hunter_forward.8} parent=15 // pred_check
        %p121 = pneg %p42
      $region18: #{head_hunter_forward.8} parent=15 // pred_check_branch
        %123 = sbr.rel (%p121) target = $region20
      $region19: #{head_hunter_forward.8} parent=15 // pred_region
        %s124 = sadd.s32 %s15, %s16
        %s125 = smul.u32 8, %s124
        %p126 = scmp.lt.s32.totalorder %s125, 15
        %s127 = scalar_select %p126, %s125, 15
        %s128 = scalar_lea.vmem %s0, %s127
        %s129 = sadd.s32 %s15, %s16
        %s130 = smul.u32 8, %s129
      $region20: #{head_hunter_forward.8} parent=15 // pred_fallthru
        _
      // Predicated region
      $region21: #{head_hunter_forward.8} parent=15 // pred_check
        %p131 = pneg %p70
      $region22: #{head_hunter_forward.8} parent=15 // pred_check_branch
        %133 = sbr.rel (%p131) target = $region24
      $region23: #{head_hunter_forward.8} parent=15 // pred_region
        %s134 = sadd.s32 %s15, %s16
        %s135 = smul.u32 128, %s134
        %p136 = scmp.lt.s32.totalorder %s135, 255
        %s137 = scalar_select %p136, %s135, 255
        %s138 = smul.addr %s137, 4
        %s139 = scalar_lea.vmem %s1, %s138
        %s140 = sadd.s32 %s15, %s16
        %s141 = smul.u32 128, %s140
      $region24: #{head_hunter_forward.8} parent=15 // pred_fallthru
        _
    $region16: #{head_hunter_forward.8} parent=5 // pred_fallthru
      _
    %p142 = scmp.le.s32.totalorder 1, %s8
    %p143 = scmp.lt.s32.totalorder %s8, 3
    %p144 = pnand %p142, %p143
    %p145 = pneg %p144
    // Predicated region
    $region25: #{head_hunter_forward.8} parent=5 // pred_check
      _
    $region26: #{head_hunter_forward.8} parent=5 // pred_check_branch
      %147 = sbr.rel (%p144) target = $region28
    $region27: #{head_hunter_forward.8} parent=5 // pred_region
      %s148 = ssub.s32 %s8, 1
      %s149 = sadd.s32 %s17, %s18
      %s150 = smul.u32 8, %s149
      %p151 = scmp.lt.s32.totalorder %s150, 15
      %s152 = scalar_select %p151, %s150, 15
      %s153 = scalar_lea.vmem %s0, %s152
      %p154 = pneg %p48
      %p155 = pneg %p45
      %s156 = sadd.s32 %s17, %s18
      %s157 = smul.u32 128, %s156
      %p158 = scmp.lt.s32.totalorder %s157, 255
      %s159 = scalar_select %p158, %s157, 255
      %s160 = smul.addr %s159, 4
      %s161 = scalar_lea.vmem %s1, %s160
      %p162 = pneg %p76
      %p163 = pneg %p73
      %p164 = pneg %p102
      %p165 = pneg %p99
      %p166 = scmp.lt.s32.totalorder %s17, 1
      %s167 = scalar_select %p166, %s17, 1
      %s168 = smul.addr %s167, 2
      %s169 = scalar_lea.vmem %s2, %s168
      %s170 = sadd.s32 %s17, %s18
      %s171 = smul.u32 8, %s170
      %p172 = scmp.lt.s32.totalorder %s171, 15
      %s173 = scalar_select %p172, %s171, 15
      %s174 = scalar_lea.vmem %s0, %s173
      %s175 = sadd.s32 %s17, %s18
      %s176 = smul.u32 8, %s175
      %s177 = sadd.s32 %s17, %s18
      %s178 = smul.u32 128, %s177
      %p179 = scmp.lt.s32.totalorder %s178, 255
      %s180 = scalar_select %p179, %s178, 255
      %s181 = smul.addr %s180, 4
      %s182 = scalar_lea.vmem %s1, %s181
      %s183 = sadd.s32 %s17, %s18
      %s184 = smul.u32 128, %s183
      %p185 = scmp.lt.s32.totalorder %s17, 1
      %s186 = scalar_select %p185, %s17, 1
      %s187 = smul.addr %s186, 2
      %s188 = scalar_lea.vmem %s2, %s187
      %p189 = scmp.eq.s32.totalorder %s18, 0
      // Predicated region
      $region29: #{head_hunter_forward.8} parent=27 // pred_check
        %p190 = pneg %p189
      $region30: #{head_hunter_forward.8} parent=27 // pred_check_branch
        %192 = sbr.rel (%p190) target = $region32
      $region31: #{head_hunter_forward.8} parent=27 // pred_region
        %vm193 = vcmask 254976
        %194 = vst.msk [vmem:[%s188] sm:$0x3] %vm193, 0.0
      $region32: #{head_hunter_forward.8} parent=27 // pred_fallthru
        _
      %v195 = vld [vmem:[%s188] sm:$0x3]
      %v196 = vld [vmem:[%s174] sm:$0xff]
      %v197 = vld [vmem:[%s182] sm:$0xf]
      %v198 = vld [vmem:[%s182 + $0x4] sm:$0xf]
      %v199 = vld [vmem:[%s182 + $0x8] sm:$0xf]
      %v200 = vld [vmem:[%s182 + $0xc] sm:$0xf]
      %v201 = vld [vmem:[%s182 + $0x10] sm:$0xf]
      %v202 = vld [vmem:[%s182 + $0x14] sm:$0xf]
      %v203 = vld [vmem:[%s182 + $0x18] sm:$0xf]
      %v204 = vld [vmem:[%s182 + $0x1c] sm:$0xf]
      %v205 = vld [vmem:[%s182 + $0x20] sm:$0xf]
      %v206 = vld [vmem:[%s182 + $0x24] sm:$0xf]
      %v207 = vld [vmem:[%s182 + $0x28] sm:$0xf]
      %v208 = vld [vmem:[%s182 + $0x2c] sm:$0xf]
      %v209 = vld [vmem:[%s182 + $0x30] sm:$0xf]
      %v210 = vld [vmem:[%s182 + $0x34] sm:$0xf]
      %v211 = vld [vmem:[%s182 + $0x38] sm:$0xf]
      %v212 = vld [vmem:[%s182 + $0x3c] sm:$0xf]
      %v213 = vld [vmem:[%s182 + $0x40] sm:$0xf]
      %v214 = vld [vmem:[%s182 + $0x44] sm:$0xf]
      %v215 = vld [vmem:[%s182 + $0x48] sm:$0xf]
      %v216 = vld [vmem:[%s182 + $0x4c] sm:$0xf]
      %v217 = vld [vmem:[%s182 + $0x50] sm:$0xf]
      %v218 = vld [vmem:[%s182 + $0x54] sm:$0xf]
      %v219 = vld [vmem:[%s182 + $0x58] sm:$0xf]
      %v220 = vld [vmem:[%s182 + $0x5c] sm:$0xf]
      %v221 = vld [vmem:[%s182 + $0x60] sm:$0xf]
      %v222 = vld [vmem:[%s182 + $0x64] sm:$0xf]
      %v223 = vld [vmem:[%s182 + $0x68] sm:$0xf]
      %v224 = vld [vmem:[%s182 + $0x6c] sm:$0xf]
      %v225 = vld [vmem:[%s182 + $0x70] sm:$0xf]
      %v226 = vld [vmem:[%s182 + $0x74] sm:$0xf]
      %v227 = vld [vmem:[%s182 + $0x78] sm:$0xf]
      %v228 = vld [vmem:[%s182 + $0x7c] sm:$0xf]
      %v229 = vld [vmem:[%s182 + $0x80] sm:$0xf]
      %v230 = vld [vmem:[%s182 + $0x84] sm:$0xf]
      %v231 = vld [vmem:[%s182 + $0x88] sm:$0xf]
      %v232 = vld [vmem:[%s182 + $0x8c] sm:$0xf]
      %v233 = vld [vmem:[%s182 + $0x90] sm:$0xf]
      %v234 = vld [vmem:[%s182 + $0x94] sm:$0xf]
      %v235 = vld [vmem:[%s182 + $0x98] sm:$0xf]
      %v236 = vld [vmem:[%s182 + $0x9c] sm:$0xf]
      %v237 = vld [vmem:[%s182 + $0xa0] sm:$0xf]
      %v238 = vld [vmem:[%s182 + $0xa4] sm:$0xf]
      %v239 = vld [vmem:[%s182 + $0xa8] sm:$0xf]
      %v240 = vld [vmem:[%s182 + $0xac] sm:$0xf]
      %v241 = vld [vmem:[%s182 + $0xb0] sm:$0xf]
      %v242 = vld [vmem:[%s182 + $0xb4] sm:$0xf]
      %v243 = vld [vmem:[%s182 + $0xb8] sm:$0xf]
      %v244 = vld [vmem:[%s182 + $0xbc] sm:$0xf]
      %v245 = vld [vmem:[%s182 + $0xc0] sm:$0xf]
      %v246 = vld [vmem:[%s182 + $0xc4] sm:$0xf]
      %v247 = vld [vmem:[%s182 + $0xc8] sm:$0xf]
      %v248 = vld [vmem:[%s182 + $0xcc] sm:$0xf]
      %v249 = vld [vmem:[%s182 + $0xd0] sm:$0xf]
      %v250 = vld [vmem:[%s182 + $0xd4] sm:$0xf]
      %v251 = vld [vmem:[%s182 + $0xd8] sm:$0xf]
      %v252 = vld [vmem:[%s182 + $0xdc] sm:$0xf]
      %v253 = vld [vmem:[%s182 + $0xe0] sm:$0xf]
      %v254 = vld [vmem:[%s182 + $0xe4] sm:$0xf]
      %v255 = vld [vmem:[%s182 + $0xe8] sm:$0xf]
      %v256 = vld [vmem:[%s182 + $0xec] sm:$0xf]
      %v257 = vld [vmem:[%s182 + $0xf0] sm:$0xf]
      %v258 = vld [vmem:[%s182 + $0xf4] sm:$0xf]
      %v259 = vld [vmem:[%s182 + $0xf8] sm:$0xf]
      %v260 = vld [vmem:[%s182 + $0xfc] sm:$0xf]
      %v261 = vld [vmem:[%s182 + $0x100] sm:$0xf]
      %v262 = vld [vmem:[%s182 + $0x104] sm:$0xf]
      %v263 = vld [vmem:[%s182 + $0x108] sm:$0xf]
      %v264 = vld [vmem:[%s182 + $0x10c] sm:$0xf]
      %v265 = vld [vmem:[%s182 + $0x110] sm:$0xf]
      %v266 = vld [vmem:[%s182 + $0x114] sm:$0xf]
      %v267 = vld [vmem:[%s182 + $0x118] sm:$0xf]
      %v268 = vld [vmem:[%s182 + $0x11c] sm:$0xf]
      %v269 = vld [vmem:[%s182 + $0x120] sm:$0xf]
      %v270 = vld [vmem:[%s182 + $0x124] sm:$0xf]
      %v271 = vld [vmem:[%s182 + $0x128] sm:$0xf]
      %v272 = vld [vmem:[%s182 + $0x12c] sm:$0xf]
      %v273 = vld [vmem:[%s182 + $0x130] sm:$0xf]
      %v274 = vld [vmem:[%s182 + $0x134] sm:$0xf]
      %v275 = vld [vmem:[%s182 + $0x138] sm:$0xf]
      %v276 = vld [vmem:[%s182 + $0x13c] sm:$0xf]
      %v277 = vld [vmem:[%s182 + $0x140] sm:$0xf]
      %v278 = vld [vmem:[%s182 + $0x144] sm:$0xf]
      %v279 = vld [vmem:[%s182 + $0x148] sm:$0xf]
      %v280 = vld [vmem:[%s182 + $0x14c] sm:$0xf]
      %v281 = vld [vmem:[%s182 + $0x150] sm:$0xf]
      %v282 = vld [vmem:[%s182 + $0x154] sm:$0xf]
      %v283 = vld [vmem:[%s182 + $0x158] sm:$0xf]
      %v284 = vld [vmem:[%s182 + $0x15c] sm:$0xf]
      %v285 = vld [vmem:[%s182 + $0x160] sm:$0xf]
      %v286 = vld [vmem:[%s182 + $0x164] sm:$0xf]
      %v287 = vld [vmem:[%s182 + $0x168] sm:$0xf]
      %v288 = vld [vmem:[%s182 + $0x16c] sm:$0xf]
      %v289 = vld [vmem:[%s182 + $0x170] sm:$0xf]
      %v290 = vld [vmem:[%s182 + $0x174] sm:$0xf]
      %v291 = vld [vmem:[%s182 + $0x178] sm:$0xf]
      %v292 = vld [vmem:[%s182 + $0x17c] sm:$0xf]
      %v293 = vld [vmem:[%s182 + $0x180] sm:$0xf]
      %v294 = vld [vmem:[%s182 + $0x184] sm:$0xf]
      %v295 = vld [vmem:[%s182 + $0x188] sm:$0xf]
      %v296 = vld [vmem:[%s182 + $0x18c] sm:$0xf]
      %v297 = vld [vmem:[%s182 + $0x190] sm:$0xf]
      %v298 = vld [vmem:[%s182 + $0x194] sm:$0xf]
      %v299 = vld [vmem:[%s182 + $0x198] sm:$0xf]
      %v300 = vld [vmem:[%s182 + $0x19c] sm:$0xf]
      %v301 = vld [vmem:[%s182 + $0x1a0] sm:$0xf]
      %v302 = vld [vmem:[%s182 + $0x1a4] sm:$0xf]
      %v303 = vld [vmem:[%s182 + $0x1a8] sm:$0xf]
      %v304 = vld [vmem:[%s182 + $0x1ac] sm:$0xf]
      %v305 = vld [vmem:[%s182 + $0x1b0] sm:$0xf]
      %v306 = vld [vmem:[%s182 + $0x1b4] sm:$0xf]
      %v307 = vld [vmem:[%s182 + $0x1b8] sm:$0xf]
      %v308 = vld [vmem:[%s182 + $0x1bc] sm:$0xf]
      %v309 = vld [vmem:[%s182 + $0x1c0] sm:$0xf]
      %v310 = vld [vmem:[%s182 + $0x1c4] sm:$0xf]
      %v311 = vld [vmem:[%s182 + $0x1c8] sm:$0xf]
      %v312 = vld [vmem:[%s182 + $0x1cc] sm:$0xf]
      %v313 = vld [vmem:[%s182 + $0x1d0] sm:$0xf]
      %v314 = vld [vmem:[%s182 + $0x1d4] sm:$0xf]
      %v315 = vld [vmem:[%s182 + $0x1d8] sm:$0xf]
      %v316 = vld [vmem:[%s182 + $0x1dc] sm:$0xf]
      %v317 = vld [vmem:[%s182 + $0x1e0] sm:$0xf]
      %v318 = vld [vmem:[%s182 + $0x1e4] sm:$0xf]
      %v319 = vld [vmem:[%s182 + $0x1e8] sm:$0xf]
      %v320 = vld [vmem:[%s182 + $0x1ec] sm:$0xf]
      %v321 = vld [vmem:[%s182 + $0x1f0] sm:$0xf]
      %v322 = vld [vmem:[%s182 + $0x1f4] sm:$0xf]
      %v323 = vld [vmem:[%s182 + $0x1f8] sm:$0xf]
      %v324 = vld [vmem:[%s182 + $0x1fc] sm:$0xf]
      %326 = vst [vmem:[#allocation1] ss:$9 sm:$0xff] %v196
      %v327 = vld [vmem:[#allocation1] sm:$0xff]
      %v328 = vld [vmem:[#allocation1 + $0x9] sm:$0xff]
      %v329 = vld [vmem:[#allocation1 + $0x12] sm:$0xff]
      %v330 = vld [vmem:[#allocation1 + $0x1b] sm:$0xff]
      %v331 = vld [vmem:[#allocation1 + $0x24] sm:$0xff]
      %v332 = vld [vmem:[#allocation1 + $0x2d] sm:$0xff]
      %v333 = vld [vmem:[#allocation1 + $0x36] sm:$0xff]
      %v334 = vld [vmem:[#allocation1 + $0x3f] sm:$0xff]
      %v471 = vunpack.c.l.b16 %v197
      %v472 = vunpack.c.l.b16 %v198
      %v473 = vunpack.c.l.b16 %v199
      %v474 = vunpack.c.l.b16 %v200
      %v475 = vunpack.c.l.b16 %v201
      %v476 = vunpack.c.l.b16 %v202
      %v477 = vunpack.c.l.b16 %v203
      %v478 = vunpack.c.l.b16 %v204
      %v479 = vunpack.c.l.b16 %v205
      %v480 = vunpack.c.l.b16 %v206
      %v481 = vunpack.c.l.b16 %v207
      %v482 = vunpack.c.l.b16 %v208
      %v483 = vunpack.c.l.b16 %v209
      %v484 = vunpack.c.l.b16 %v210
      %v485 = vunpack.c.l.b16 %v211
      %v486 = vunpack.c.l.b16 %v212
      %v487 = vunpack.c.l.b16 %v213
      %v488 = vunpack.c.l.b16 %v214
      %v489 = vunpack.c.l.b16 %v215
      %v490 = vunpack.c.l.b16 %v216
      %v491 = vunpack.c.l.b16 %v217
      %v492 = vunpack.c.l.b16 %v218
      %v493 = vunpack.c.l.b16 %v219
      %v494 = vunpack.c.l.b16 %v220
      %v495 = vunpack.c.l.b16 %v221
      %v496 = vunpack.c.l.b16 %v222
      %v497 = vunpack.c.l.b16 %v223
      %v498 = vunpack.c.l.b16 %v224
      %v499 = vunpack.c.l.b16 %v225
      %v500 = vunpack.c.l.b16 %v226
      %v501 = vunpack.c.l.b16 %v227
      %v502 = vunpack.c.l.b16 %v228
      %v503 = vunpack.c.l.b16 %v229
      %v504 = vunpack.c.l.b16 %v230
      %v505 = vunpack.c.l.b16 %v231
      %v506 = vunpack.c.l.b16 %v232
      %v507 = vunpack.c.l.b16 %v233
      %v508 = vunpack.c.l.b16 %v234
      %v509 = vunpack.c.l.b16 %v235
      %v510 = vunpack.c.l.b16 %v236
      %v511 = vunpack.c.l.b16 %v237
      %v512 = vunpack.c.l.b16 %v238
      %v513 = vunpack.c.l.b16 %v239
      %v514 = vunpack.c.l.b16 %v240
      %v515 = vunpack.c.l.b16 %v241
      %v516 = vunpack.c.l.b16 %v242
      %v517 = vunpack.c.l.b16 %v243
      %v518 = vunpack.c.l.b16 %v244
      %v519 = vunpack.c.l.b16 %v245
      %v520 = vunpack.c.l.b16 %v246
      %v521 = vunpack.c.l.b16 %v247
      %v522 = vunpack.c.l.b16 %v248
      %v523 = vunpack.c.l.b16 %v249
      %v524 = vunpack.c.l.b16 %v250
      %v525 = vunpack.c.l.b16 %v251
      %v526 = vunpack.c.l.b16 %v252
      %v527 = vunpack.c.l.b16 %v253
      %v528 = vunpack.c.l.b16 %v254
      %v529 = vunpack.c.l.b16 %v255
      %v530 = vunpack.c.l.b16 %v256
      %v531 = vunpack.c.l.b16 %v257
      %v532 = vunpack.c.l.b16 %v258
      %v533 = vunpack.c.l.b16 %v259
      %v534 = vunpack.c.l.b16 %v260
      %v535 = vunpack.c.l.b16 %v261
      %v536 = vunpack.c.l.b16 %v262
      %v537 = vunpack.c.l.b16 %v263
      %v538 = vunpack.c.l.b16 %v264
      %v539 = vunpack.c.l.b16 %v265
      %v540 = vunpack.c.l.b16 %v266
      %v541 = vunpack.c.l.b16 %v267
      %v542 = vunpack.c.l.b16 %v268
      %v543 = vunpack.c.l.b16 %v269
      %v544 = vunpack.c.l.b16 %v270
      %v545 = vunpack.c.l.b16 %v271
      %v546 = vunpack.c.l.b16 %v272
      %v547 = vunpack.c.l.b16 %v273
      %v548 = vunpack.c.l.b16 %v274
      %v549 = vunpack.c.l.b16 %v275
      %v550 = vunpack.c.l.b16 %v276
      %v551 = vunpack.c.l.b16 %v277
      %v552 = vunpack.c.l.b16 %v278
      %v553 = vunpack.c.l.b16 %v279
      %v554 = vunpack.c.l.b16 %v280
      %v555 = vunpack.c.l.b16 %v281
      %v556 = vunpack.c.l.b16 %v282
      %v557 = vunpack.c.l.b16 %v283
      %v558 = vunpack.c.l.b16 %v284
      %v559 = vunpack.c.l.b16 %v285
      %v560 = vunpack.c.l.b16 %v286
      %v561 = vunpack.c.l.b16 %v287
      %v562 = vunpack.c.l.b16 %v288
      %v563 = vunpack.c.l.b16 %v289
      %v564 = vunpack.c.l.b16 %v290
      %v565 = vunpack.c.l.b16 %v291
      %v566 = vunpack.c.l.b16 %v292
      %v567 = vunpack.c.l.b16 %v293
      %v568 = vunpack.c.l.b16 %v294
      %v569 = vunpack.c.l.b16 %v295
      %v570 = vunpack.c.l.b16 %v296
      %v571 = vunpack.c.l.b16 %v297
      %v572 = vunpack.c.l.b16 %v298
      %v573 = vunpack.c.l.b16 %v299
      %v574 = vunpack.c.l.b16 %v300
      %v575 = vunpack.c.l.b16 %v301
      %v576 = vunpack.c.l.b16 %v302
      %v577 = vunpack.c.l.b16 %v303
      %v578 = vunpack.c.l.b16 %v304
      %v579 = vunpack.c.l.b16 %v305
      %v580 = vunpack.c.l.b16 %v306
      %v581 = vunpack.c.l.b16 %v307
      %v582 = vunpack.c.l.b16 %v308
      %v583 = vunpack.c.l.b16 %v309
      %v584 = vunpack.c.l.b16 %v310
      %v585 = vunpack.c.l.b16 %v311
      %v586 = vunpack.c.l.b16 %v312
      %v587 = vunpack.c.l.b16 %v313
      %v588 = vunpack.c.l.b16 %v314
      %v589 = vunpack.c.l.b16 %v315
      %v590 = vunpack.c.l.b16 %v316
      %v591 = vunpack.c.l.b16 %v317
      %v592 = vunpack.c.l.b16 %v318
      %v593 = vunpack.c.l.b16 %v319
      %v594 = vunpack.c.l.b16 %v320
      %v595 = vunpack.c.l.b16 %v321
      %v596 = vunpack.c.l.b16 %v322
      %v597 = vunpack.c.l.b16 %v323
      %v598 = vunpack.c.l.b16 %v324
      %v599 = vpack.c.b16 %v472, %v471
      %v600 = vpack.c.b16 %v474, %v473
      %v601 = vpack.c.b16 %v476, %v475
      %v602 = vpack.c.b16 %v478, %v477
      %v603 = vpack.c.b16 %v480, %v479
      %v604 = vpack.c.b16 %v482, %v481
      %v605 = vpack.c.b16 %v484, %v483
      %v606 = vpack.c.b16 %v486, %v485
      %v607 = vpack.c.b16 %v488, %v487
      %v608 = vpack.c.b16 %v490, %v489
      %v609 = vpack.c.b16 %v492, %v491
      %v610 = vpack.c.b16 %v494, %v493
      %v611 = vpack.c.b16 %v496, %v495
      %v612 = vpack.c.b16 %v498, %v497
      %v613 = vpack.c.b16 %v500, %v499
      %v614 = vpack.c.b16 %v502, %v501
      %v615 = vpack.c.b16 %v504, %v503
      %v616 = vpack.c.b16 %v506, %v505
      %v617 = vpack.c.b16 %v508, %v507
      %v618 = vpack.c.b16 %v510, %v509
      %v619 = vpack.c.b16 %v512, %v511
      %v620 = vpack.c.b16 %v514, %v513
      %v621 = vpack.c.b16 %v516, %v515
      %v622 = vpack.c.b16 %v518, %v517
      %v623 = vpack.c.b16 %v520, %v519
      %v624 = vpack.c.b16 %v522, %v521
      %v625 = vpack.c.b16 %v524, %v523
      %v626 = vpack.c.b16 %v526, %v525
      %v627 = vpack.c.b16 %v528, %v527
      %v628 = vpack.c.b16 %v530, %v529
      %v629 = vpack.c.b16 %v532, %v531
      %v630 = vpack.c.b16 %v534, %v533
      %v631 = vpack.c.b16 %v536, %v535
      %v632 = vpack.c.b16 %v538, %v537
      %v633 = vpack.c.b16 %v540, %v539
      %v634 = vpack.c.b16 %v542, %v541
      %v635 = vpack.c.b16 %v544, %v543
      %v636 = vpack.c.b16 %v546, %v545
      %v637 = vpack.c.b16 %v548, %v547
      %v638 = vpack.c.b16 %v550, %v549
      %v639 = vpack.c.b16 %v552, %v551
      %v640 = vpack.c.b16 %v554, %v553
      %v641 = vpack.c.b16 %v556, %v555
      %v642 = vpack.c.b16 %v558, %v557
      %v643 = vpack.c.b16 %v560, %v559
      %v644 = vpack.c.b16 %v562, %v561
      %v645 = vpack.c.b16 %v564, %v563
      %v646 = vpack.c.b16 %v566, %v565
      %v647 = vpack.c.b16 %v568, %v567
      %v648 = vpack.c.b16 %v570, %v569
      %v649 = vpack.c.b16 %v572, %v571
      %v650 = vpack.c.b16 %v574, %v573
      %v651 = vpack.c.b16 %v576, %v575
      %v652 = vpack.c.b16 %v578, %v577
      %v653 = vpack.c.b16 %v580, %v579
      %v654 = vpack.c.b16 %v582, %v581
      %v655 = vpack.c.b16 %v584, %v583
      %v656 = vpack.c.b16 %v586, %v585
      %v657 = vpack.c.b16 %v588, %v587
      %v658 = vpack.c.b16 %v590, %v589
      %v659 = vpack.c.b16 %v592, %v591
      %v660 = vpack.c.b16 %v594, %v593
      %v661 = vpack.c.b16 %v596, %v595
      %v662 = vpack.c.b16 %v598, %v597
      %727 = vmatpush.bf16.msra.mxu0 %v606
      %728 = vmatpush.bf16.msra.mxu0 %v605
      %729 = vmatpush.bf16.msra.mxu0 %v604
      %730 = vmatpush.bf16.msra.mxu0 %v603
      %731 = vmatpush.bf16.msra.mxu0 %v602
      %732 = vmatpush.bf16.msra.mxu0 %v601
      %733 = vmatpush.bf16.msra.mxu0 %v600
      %734 = vmatpush.bf16.msra.mxu0 %v599
      %735 = vmatmul.bf16.gmra.mxu0 %v327
      %v736 = vpop.f32.mrf.mxu0
      %v737 = vadd.f32 0.0, %v736
      %v738 = vpop.f32.mrf.mxu0
      %739 = vdwg.mxu0
      %740 = vmatpush.bf16.msra.mxu0 %v614
      %741 = vmatpush.bf16.msra.mxu0 %v613
      %742 = vmatpush.bf16.msra.mxu0 %v612
      %743 = vmatpush.bf16.msra.mxu0 %v611
      %744 = vmatpush.bf16.msra.mxu0 %v610
      %745 = vmatpush.bf16.msra.mxu0 %v609
      %746 = vmatpush.bf16.msra.mxu0 %v608
      %747 = vmatpush.bf16.msra.mxu0 %v607
      %748 = vmatmul.bf16.gmra.mxu0 %v328
      %v749 = vpop.f32.mrf.mxu0
      %v750 = vadd.f32 %v737, %v749
      %v751 = vpop.f32.mrf.mxu0
      %752 = vdwg.mxu0
      %753 = vmatpush.bf16.msra.mxu0 %v622
      %754 = vmatpush.bf16.msra.mxu0 %v621
      %755 = vmatpush.bf16.msra.mxu0 %v620
      %756 = vmatpush.bf16.msra.mxu0 %v619
      %757 = vmatpush.bf16.msra.mxu0 %v618
      %758 = vmatpush.bf16.msra.mxu0 %v617
      %759 = vmatpush.bf16.msra.mxu0 %v616
      %760 = vmatpush.bf16.msra.mxu0 %v615
      %761 = vmatmul.bf16.gmra.mxu0 %v329
      %v762 = vpop.f32.mrf.mxu0
      %v763 = vadd.f32 %v750, %v762
      %v764 = vpop.f32.mrf.mxu0
      %765 = vdwg.mxu0
      %766 = vmatpush.bf16.msra.mxu0 %v630
      %767 = vmatpush.bf16.msra.mxu0 %v629
      %768 = vmatpush.bf16.msra.mxu0 %v628
      %769 = vmatpush.bf16.msra.mxu0 %v627
      %770 = vmatpush.bf16.msra.mxu0 %v626
      %771 = vmatpush.bf16.msra.mxu0 %v625
      %772 = vmatpush.bf16.msra.mxu0 %v624
      %773 = vmatpush.bf16.msra.mxu0 %v623
      %774 = vmatmul.bf16.gmra.mxu0 %v330
      %v775 = vpop.f32.mrf.mxu0
      %v776 = vadd.f32 %v763, %v775
      %v777 = vpop.f32.mrf.mxu0
      %778 = vdwg.mxu0
      %779 = vmatpush.bf16.msra.mxu0 %v638
      %780 = vmatpush.bf16.msra.mxu0 %v637
      %781 = vmatpush.bf16.msra.mxu0 %v636
      %782 = vmatpush.bf16.msra.mxu0 %v635
      %783 = vmatpush.bf16.msra.mxu0 %v634
      %784 = vmatpush.bf16.msra.mxu0 %v633
      %785 = vmatpush.bf16.msra.mxu0 %v632
      %786 = vmatpush.bf16.msra.mxu0 %v631
      %787 = vmatmul.bf16.gmra.mxu0 %v331
      %v788 = vpop.f32.mrf.mxu0
      %v789 = vadd.f32 %v776, %v788
      %v790 = vpop.f32.mrf.mxu0
      %791 = vdwg.mxu0
      %792 = vmatpush.bf16.msra.mxu0 %v646
      %793 = vmatpush.bf16.msra.mxu0 %v645
      %794 = vmatpush.bf16.msra.mxu0 %v644
      %795 = vmatpush.bf16.msra.mxu0 %v643
      %796 = vmatpush.bf16.msra.mxu0 %v642
      %797 = vmatpush.bf16.msra.mxu0 %v641
      %798 = vmatpush.bf16.msra.mxu0 %v640
      %799 = vmatpush.bf16.msra.mxu0 %v639
      %800 = vmatmul.bf16.gmra.mxu0 %v332
      %v801 = vpop.f32.mrf.mxu0
      %v802 = vadd.f32 %v789, %v801
      %v803 = vpop.f32.mrf.mxu0
      %804 = vdwg.mxu0
      %805 = vmatpush.bf16.msra.mxu0 %v654
      %806 = vmatpush.bf16.msra.mxu0 %v653
      %807 = vmatpush.bf16.msra.mxu0 %v652
      %808 = vmatpush.bf16.msra.mxu0 %v651
      %809 = vmatpush.bf16.msra.mxu0 %v650
      %810 = vmatpush.bf16.msra.mxu0 %v649
      %811 = vmatpush.bf16.msra.mxu0 %v648
      %812 = vmatpush.bf16.msra.mxu0 %v647
      %813 = vmatmul.bf16.gmra.mxu0 %v333
      %v814 = vpop.f32.mrf.mxu0
      %v815 = vadd.f32 %v802, %v814
      %v816 = vpop.f32.mrf.mxu0
      %817 = vdwg.mxu0
      %818 = vmatpush.bf16.msra.mxu0 %v662
      %819 = vmatpush.bf16.msra.mxu0 %v661
      %820 = vmatpush.bf16.msra.mxu0 %v660
      %821 = vmatpush.bf16.msra.mxu0 %v659
      %822 = vmatpush.bf16.msra.mxu0 %v658
      %823 = vmatpush.bf16.msra.mxu0 %v657
      %824 = vmatpush.bf16.msra.mxu0 %v656
      %825 = vmatpush.bf16.msra.mxu0 %v655
      %826 = vmatmul.bf16.gmra.mxu0 %v334
      %v827 = vpop.f32.mrf.mxu0
      %v828 = vadd.f32 %v815, %v827
      %v829 = vpop.f32.mrf.mxu0
      %830 = vdwg.mxu0
      %v831 = vadd.f32 %v195, %v828
      %vm832 = vcmask 254976
      %833 = vst.msk [vmem:[%s188] sm:$0x3] %vm832, %v831
      %p834 = scmp.lt.s32.totalorder %s17, 1
      %s835 = scalar_select %p834, %s17, 1
      %s836 = smul.addr %s835, 2
      %s837 = scalar_lea.vmem %s2, %s836
      // Predicated region
      $region33: #{head_hunter_forward.8} parent=27 // pred_check
        %p838 = pneg %p99
      $region34: #{head_hunter_forward.8} parent=27 // pred_check_branch
        %840 = sbr.rel (%p838) target = $region36
      $region35: #{head_hunter_forward.8} parent=27 // pred_region
        _
      $region36: #{head_hunter_forward.8} parent=27 // pred_fallthru
        _
    $region28: #{head_hunter_forward.8} parent=5 // pred_fallthru
      _
    %p841 = scmp.le.s32.totalorder 2, %s8
    // Predicated region
    $region37: #{head_hunter_forward.8} parent=5 // pred_check
      %p842 = pneg %p841
    $region38: #{head_hunter_forward.8} parent=5 // pred_check_branch
      %844 = sbr.rel (%p842) target = $region40
    $region39: #{head_hunter_forward.8} parent=5 // pred_region
      %s845 = ssub.s32 %s8, 2
      // Predicated region
      $region41: #{head_hunter_forward.8} parent=39 // pred_check
        %p846 = pneg %p105
      $region42: #{head_hunter_forward.8} parent=39 // pred_check_branch
        %848 = sbr.rel (%p846) target = $region44
      $region43: #{head_hunter_forward.8} parent=39 // pred_region
        %p849 = scmp.lt.s32.totalorder %s19, 1
        %s850 = scalar_select %p849, %s19, 1
        %s851 = smul.addr %s850, 2
        %s852 = scalar_lea.vmem %s2, %s851
      $region44: #{head_hunter_forward.8} parent=39 // pred_fallthru
        _
    $region40: #{head_hunter_forward.8} parent=5 // pred_fallthru
      _
  $region6: #{head_hunter_forward.8} parent=0 // loop_footer
    %s12 = sadd.s32 1, %s8
  $region7: #{head_hunter_forward.8} parent=0 // loop_footer_branch
    %7 = sbr.rel target = $region3
  $region8: #{head_hunter_forward.8} parent=0 // loop_exit
    _

// kernel: head_hunter_forward.7
$region0: #{head_hunter_forward.7}
  #allocation0 [shape = 'u32[]', space=smem, size = 0x4, offset = 0x4, fixed_abs, tag = 'smem constant byte address 0x4 - core index']
  #allocation1 [shape = 'u32[72,128]{1,0:T(1,128)}', space=vmem, size = 0x9000, scoped, tag = 'internal scratch']
  %s0 = inlined_call_operand.vmem [shape: bf16[2,20,20,128], index: 0, kind: input, shape index: {}]
  %s1 = inlined_call_operand.hbm [shape: bf16[5,640,128], index: 1, kind: input, shape index: {}]
  %s2 = inlined_call_operand.vmem [shape: f32[1,128], index: 2, kind: input, shape index: {}]
  %s3 = inlined_call_operand.vmem [shape: bf16[2,16,16,128], index: 3, kind: output, shape index: {}]
  %s4 = sld [smem:[#allocation0]]
  $region49: #{head_hunter_forward.7} parent=0
    _
  %s6 = ssub.s32 1, %s4
  %s7 = scalar_select 0, %s6, %s4
  $region1: #{head_hunter_forward.7} parent=0
    #allocation2 [shape = 'u8[819200]{0}', space=vmem, size = 0xc8000, scoped, tag = 'input window, operand 1, single buffered']
    #allocation3 [shape = 's32[2]{0}', space=sflag, size = 0x8, scoped, tag = 'scoped memory for head_hunter_forward.7']
    %8 = vsyncpa [#allocation3], 0
    loop: start=0, step=1, limit=6
    $region2: #{head_hunter_forward.7} parent=1 // loop_pre_header
      _
    $region3: #{head_hunter_forward.7} parent=1 // loop_header
      %s10 = sphi 0, %s14
      %p11 = scmp.ge.s32.totalorder %s10, 6
      %s17 = sphi 0, %s29
      %s18 = sphi 0, %s25
      %s19 = sphi 0, %s17
      %s20 = sphi 0, %s18
      %s21 = sphi 0, %s19
      %s22 = sphi 0, %s20
      %s32 = sphi 0, %s34
      %s35 = sphi 0, %s32
      %s36 = sphi 0, %s35
      %s52 = sphi 0, %s36
      %s56 = sphi 0, %s56
      %s58 = sphi 0, %s56
      %s59 = sphi 0, %s58
      %s73 = sphi 0, %s59
      %s77 = sphi 0, %s77
      %s79 = sphi 0, %s77
      %s80 = sphi 0, %s79
      %s94 = sphi 0, %s80
      %s102 = sphi 0, %s104
      %s105 = sphi 0, %s102
      %s106 = sphi 0, %s105
      %s122 = sphi 0, %s106
    $region4: #{head_hunter_forward.7} parent=1 // loop_header_branch
      %13 = sbr.rel (%p11) target = $region8
    $region5: #{head_hunter_forward.7} parent=1 // loop_body
      %s15 = ssub.s32 %s10, 1
      %s16 = ssub.s32 %s10, 2
      %s23 = sadd.s32 1, %s18
      %p24 = scmp.ge.s32.totalorder %s23, 2
      %s25 = scalar_select %p24, 0, %s23
      %s26 = sadd.s32 1, %s17
      %s27 = scalar_select %p24, %s26, %s17
      %p28 = scmp.ge.s32.totalorder %s27, 2
      %s29 = scalar_select %p28, 0, %s27
      %s30 = ssub.s32 %s17, %s29
      %p31 = scmp.eq.s32.totalorder %s30, 0
      %s33 = sadd.s32 %s32, 1
      %s34 = scalar_select %p31, %s32, %s33
      %p37 = pneg %p31
      %p38 = scmp.eq.s32.totalorder %s10, 3
      %p39 = por %p37, %p38
      %p40 = scmp.ne.s32.totalorder %s32, %s35
      %p41 = scmp.eq.s32.totalorder %s10, 0
      %p42 = por %p40, %p41
      %p43 = scmp.ne.s32.totalorder %s32, %s35
      %p44 = scmp.eq.s32.totalorder %s15, 3
      %p45 = por %p43, %p44
      %p46 = scmp.ne.s32.totalorder %s35, %s36
      %p47 = scmp.eq.s32.totalorder %s15, 0
      %p48 = por %p46, %p47
      %p49 = scmp.ne.s32.totalorder %s35, %s36
      %p50 = scmp.eq.s32.totalorder %s16, 3
      %p51 = por %p49, %p50
      %p53 = scmp.ne.s32.totalorder %s36, %s52
      %p54 = scmp.eq.s32.totalorder %s16, 0
      %p55 = por %p53, %p54
      %s57 = sadd.s32 %s56, 1
      %p60 = scmp.eq.s32.totalorder %s10, 3
      %p61 = scmp.ne.s32.totalorder %s56, %s58
      %p62 = scmp.eq.s32.totalorder %s10, 0
      %p63 = por %p61, %p62
      %p64 = scmp.ne.s32.totalorder %s56, %s58
      %p65 = scmp.eq.s32.totalorder %s15, 3
      %p66 = por %p64, %p65
      %p67 = scmp.ne.s32.totalorder %s58, %s59
      %p68 = scmp.eq.s32.totalorder %s15, 0
      %p69 = por %p67, %p68
      %p70 = scmp.ne.s32.totalorder %s58, %s59
      %p71 = scmp.eq.s32.totalorder %s16, 3
      %p72 = por %p70, %p71
      %p74 = scmp.ne.s32.totalorder %s59, %s73
      %p75 = scmp.eq.s32.totalorder %s16, 0
      %p76 = por %p74, %p75
      %s78 = sadd.s32 %s77, 1
      %p81 = scmp.eq.s32.totalorder %s10, 3
      %p82 = scmp.ne.s32.totalorder %s77, %s79
      %p83 = scmp.eq.s32.totalorder %s10, 0
      %p84 = por %p82, %p83
      %p85 = scmp.ne.s32.totalorder %s77, %s79
      %p86 = scmp.eq.s32.totalorder %s15, 3
      %p87 = por %p85, %p86
      %p88 = scmp.ne.s32.totalorder %s79, %s80
      %p89 = scmp.eq.s32.totalorder %s15, 0
      %p90 = por %p88, %p89
      %p91 = scmp.ne.s32.totalorder %s79, %s80
      %p92 = scmp.eq.s32.totalorder %s16, 3
      %p93 = por %p91, %p92
      %p95 = scmp.ne.s32.totalorder %s80, %s94
      %p96 = scmp.eq.s32.totalorder %s16, 0
      %p97 = por %p95, %p96
      %s98 = ssub.s32 %s17, %s29
      %s99 = ssub.s32 %s18, %s25
      %s100 = sor.u32 %s98, %s99
      %p101 = scmp.eq.s32.totalorder %s100, 0
      %s103 = sadd.s32 %s102, 1
      %s104 = scalar_select %p101, %s102, %s103
      %p107 = pneg %p101
      %p108 = scmp.eq.s32.totalorder %s10, 3
      %p109 = por %p107, %p108
      %p110 = scmp.ne.s32.totalorder %s102, %s105
      %p111 = scmp.eq.s32.totalorder %s10, 0
      %p112 = por %p110, %p111
      %p113 = scmp.ne.s32.totalorder %s102, %s105
      %p114 = scmp.eq.s32.totalorder %s15, 3
      %p115 = por %p113, %p114
      %p116 = scmp.ne.s32.totalorder %s105, %s106
      %p117 = scmp.eq.s32.totalorder %s15, 0
      %p118 = por %p116, %p117
      %p119 = scmp.ne.s32.totalorder %s105, %s106
      %p120 = scmp.eq.s32.totalorder %s16, 3
      %p121 = por %p119, %p120
      %p123 = scmp.ne.s32.totalorder %s106, %s122
      %p124 = scmp.eq.s32.totalorder %s16, 0
      %p125 = por %p123, %p124
      %p126 = scmp.le.s32.totalorder 1, %s10
      %p127 = scmp.lt.s32.totalorder %s10, 5
      %p128 = pnand %p126, %p127
      %p129 = pneg %p128
      // Predicated region
      $region9: #{head_hunter_forward.7} parent=5 // pred_check
        _
      $region10: #{head_hunter_forward.7} parent=5 // pred_check_branch
        %131 = sbr.rel (%p128) target = $region12
      $region11: #{head_hunter_forward.7} parent=5 // pred_region
        %s132 = ssub.s32 %s10, 1
        // Predicated region
        $region13: #{head_hunter_forward.7} parent=11 // pred_check
          %p133 = pneg %p69
        $region14: #{head_hunter_forward.7} parent=11 // pred_check_branch
          %135 = sbr.rel (%p133) target = $region16
        $region15: #{head_hunter_forward.7} parent=11 // pred_region
          %137 = vsyncadd [#allocation3], 0
          %s138 = sshll.u32 %s1, 4
          %s139 = int_to_ptr.hbm [resolvable:$true] %s138
          %s140 = sshll.u32 [#allocation2], 4
          %s141 = int_to_ptr.vmem [resolvable:$true] %s140
          %146 = dma.hbm_to_vmem [thread:$0]  %s139, 25600, %s141, [#allocation3], 64, 64, 4
        $region16: #{head_hunter_forward.7} parent=11 // pred_fallthru
          _
        // Predicated region
        $region17: #{head_hunter_forward.7} parent=11 // pred_check
          %p147 = pneg %p90
        $region18: #{head_hunter_forward.7} parent=11 // pred_check_branch
          %149 = sbr.rel (%p147) target = $region20
        $region19: #{head_hunter_forward.7} parent=11 // pred_region
          _
        $region20: #{head_hunter_forward.7} parent=11 // pred_fallthru
          _
      $region12: #{head_hunter_forward.7} parent=5 // pred_fallthru
        _
      %p150 = scmp.lt.s32.totalorder %s10, 4
      // Predicated region
      $region21: #{head_hunter_forward.7} parent=5 // pred_check
        %p151 = pneg %p150
      $region22: #{head_hunter_forward.7} parent=5 // pred_check_branch
        %153 = sbr.rel (%p151) target = $region24
      $region23: #{head_hunter_forward.7} parent=5 // pred_region
        // Predicated region
        $region25: #{head_hunter_forward.7} parent=23 // pred_check
          %p154 = pneg %p42
        $region26: #{head_hunter_forward.7} parent=23 // pred_check_branch
          %156 = sbr.rel (%p154) target = $region28
        $region27: #{head_hunter_forward.7} parent=23 // pred_region
          %p157 = scmp.lt.s32.totalorder %s17, 1
          %s158 = scalar_select %p157, %s17, 1
          %s159 = smul.addr %s158, 60
          %s160 = smul.addr %s159, 4
          %s161 = scalar_lea.vmem %s0, %s160
        $region28: #{head_hunter_forward.7} parent=23 // pred_fallthru
          _
      $region24: #{head_hunter_forward.7} parent=5 // pred_fallthru
        _
      %p162 = scmp.le.s32.totalorder 1, %s10
      %p163 = scmp.lt.s32.totalorder %s10, 5
      %p164 = pnand %p162, %p163
      %p165 = pneg %p164
      // Predicated region
      $region29: #{head_hunter_forward.7} parent=5 // pred_check
        _
      $region30: #{head_hunter_forward.7} parent=5 // pred_check_branch
        %167 = sbr.rel (%p164) target = $region32
      $region31: #{head_hunter_forward.7} parent=5 // pred_region
        %s168 = ssub.s32 %s10, 1
        // Predicated region
        $region33: #{head_hunter_forward.7} parent=31 // pred_check
          %p169 = pneg %p69
        $region34: #{head_hunter_forward.7} parent=31 // pred_check_branch
          %171 = sbr.rel (%p169) target = $region36
        $region35: #{head_hunter_forward.7} parent=31 // pred_region
          %173 = dma.done [#allocation3], 25600
        $region36: #{head_hunter_forward.7} parent=31 // pred_fallthru
          _
        %p174 = scmp.lt.s32.totalorder %s19, 1
        %s175 = scalar_select %p174, %s19, 1
        %s176 = smul.addr %s175, 60
        %s177 = smul.addr %s176, 4
        %s178 = scalar_lea.vmem %s0, %s177
        %p179 = pneg %p48
        %p180 = pneg %p45
        %p181 = pneg %p69
        %p182 = pneg %p66
        %p183 = pneg %p90
        %p184 = pneg %p87
        %p185 = pneg %p118
        %p186 = pneg %p115
        %s187 = smul.u32 8, %s20
        %p188 = scmp.lt.s32.totalorder %s19, 1
        %s189 = scalar_select %p188, %s19, 1
        %p190 = scmp.lt.s32.totalorder %s187, 15
        %s191 = scalar_select %p190, %s187, 15
        %s192 = smul.addr %s191, 2
        %s193 = smul.addr %s189, 32
        %s194 = sadd.s32 %s192, %s193
        %s195 = smul.addr %s194, 4
        %s196 = scalar_lea.vmem %s3, %s195
        %p197 = scmp.lt.s32.totalorder %s19, 1
        %s198 = scalar_select %p197, %s19, 1
        %s199 = smul.addr %s198, 60
        %s200 = smul.addr %s199, 4
        %s201 = scalar_lea.vmem %s0, %s200
        %s202 = smul.u32 8, %s20
        %p203 = scmp.lt.s32.totalorder %s19, 1
        %s204 = scalar_select %p203, %s19, 1
        %p205 = scmp.lt.s32.totalorder %s202, 15
        %s206 = scalar_select %p205, %s202, 15
        %s207 = smul.addr %s206, 2
        %s208 = smul.addr %s204, 32
        %s209 = sadd.s32 %s207, %s208
        %s210 = smul.addr %s209, 4
        %s211 = scalar_lea.vmem %s3, %s210
        %s212 = smul.u32 8, %s20
        %s213 = smul.u32 %s20, 8
        %s214 = smul.u32 %s213, 3
        %s215 = smul.addr %s214, 4
        %s216 = scalar_lea.vmem %s201, %s215
        %v217 = vld [vmem:[%s216] sm:$0xf]
        %v218 = vld [vmem:[%s216 + $0x4] sm:$0xf]
        %v219 = vld [vmem:[%s216 + $0x8] sm:$0x3]
        %v220 = vld [vmem:[%s216 + $0xc] sm:$0xf]
        %v221 = vld [vmem:[%s216 + $0x10] sm:$0xf]
        %v222 = vld [vmem:[%s216 + $0x14] sm:$0x3]
        %v223 = vld [vmem:[%s216 + $0x18] sm:$0xf]
        %v224 = vld [vmem:[%s216 + $0x1c] sm:$0xf]
        %v225 = vld [vmem:[%s216 + $0x20] sm:$0x3]
        %v226 = vld [vmem:[%s216 + $0x24] sm:$0xf]
        %v227 = vld [vmem:[%s216 + $0x28] sm:$0xf]
        %v228 = vld [vmem:[%s216 + $0x2c] sm:$0x3]
        %v229 = vld [vmem:[%s216 + $0x30] sm:$0xf]
        %v230 = vld [vmem:[%s216 + $0x34] sm:$0xf]
        %v231 = vld [vmem:[%s216 + $0x38] sm:$0x3]
        %v232 = vld [vmem:[%s216 + $0x3c] sm:$0xf]
        %v233 = vld [vmem:[%s216 + $0x40] sm:$0xf]
        %v234 = vld [vmem:[%s216 + $0x44] sm:$0x3]
        %v235 = vld [vmem:[%s216 + $0x48] sm:$0xf]
        %v236 = vld [vmem:[%s216 + $0x4c] sm:$0xf]
        %v237 = vld [vmem:[%s216 + $0x50] sm:$0x3]
        %v238 = vld [vmem:[%s216 + $0x54] sm:$0xf]
        %v239 = vld [vmem:[%s216 + $0x58] sm:$0xf]
        %v240 = vld [vmem:[%s216 + $0x5c] sm:$0x3]
        %v241 = vld [vmem:[%s216 + $0x60] sm:$0xf]
        %v242 = vld [vmem:[%s216 + $0x64] sm:$0xf]
        %v243 = vld [vmem:[%s216 + $0x68] sm:$0x3]
        %v244 = vld [vmem:[%s216 + $0x6c] sm:$0xf]
        %v245 = vld [vmem:[%s216 + $0x70] sm:$0xf]
        %v246 = vld [vmem:[%s216 + $0x74] sm:$0x3]
        %v247 = vld [vmem:[%s216 + $0x78] sm:$0xf]
        %v248 = vld [vmem:[%s216 + $0x7c] sm:$0xf]
        %v249 = vld [vmem:[%s216 + $0x80] sm:$0x3]
        %v250 = vld [vmem:[%s216 + $0x84] sm:$0xf]
        %v251 = vld [vmem:[%s216 + $0x88] sm:$0xf]
        %v252 = vld [vmem:[%s216 + $0x8c] sm:$0x3]
        %v269 = vunpack.c.l.b16 %v217
        %v270 = vunpack.c.l.b16 %v218
        %v271 = vunpack.c.l.b16 %v220
        %v272 = vunpack.c.l.b16 %v221
        %v273 = vunpack.c.l.b16 %v223
        %v274 = vunpack.c.l.b16 %v224
        %v275 = vunpack.c.l.b16 %v226
        %v276 = vunpack.c.l.b16 %v227
        %v277 = vunpack.c.l.b16 %v229
        %v278 = vunpack.c.l.b16 %v230
        %v279 = vunpack.c.l.b16 %v232
        %v280 = vunpack.c.l.b16 %v233
        %v281 = vunpack.c.l.b16 %v235
        %v282 = vunpack.c.l.b16 %v236
        %v283 = vunpack.c.l.b16 %v238
        %v284 = vunpack.c.l.b16 %v239
        %v285 = vpack.c.b16 %v270, %v269
        %v286 = vpack.c.b16 %v272, %v271
        %v287 = vpack.c.b16 %v274, %v273
        %v288 = vpack.c.b16 %v276, %v275
        %v289 = vpack.c.b16 %v278, %v277
        %v290 = vpack.c.b16 %v280, %v279
        %v291 = vpack.c.b16 %v282, %v281
        %v292 = vpack.c.b16 %v284, %v283
        %v309 = vunpack.c.l.b16 %v219
        %v310 = vunpack.c.l.b16 %v222
        %v311 = vunpack.c.l.b16 %v225
        %v312 = vunpack.c.l.b16 %v228
        %v313 = vunpack.c.l.b16 %v231
        %v314 = vunpack.c.l.b16 %v234
        %v315 = vunpack.c.l.b16 %v237
        %v316 = vunpack.c.l.b16 %v240
        %v317 = vpack.c.b16 %v309, %v309
        %v318 = vpack.c.b16 %v310, %v310
        %v319 = vpack.c.b16 %v311, %v311
        %v320 = vpack.c.b16 %v312, %v312
        %v321 = vpack.c.b16 %v313, %v313
        %v322 = vpack.c.b16 %v314, %v314
        %v323 = vpack.c.b16 %v315, %v315
        %v324 = vpack.c.b16 %v316, %v316
        %vm325 = vsmask.f32 7424
        %v327 = vshrl.u32 %v285, 16
        %v329 = vshll.u32 %v285, 16
        %v331 = vrot.slane %v329, 1
        %v332 = vor.u32 %v327, %v331
        %v334 = vshll.u32 %v317, 16
        %v336 = vrot.slane %v334, 1
        %v337 = vsel %vm325, %v332, %v336
        %v339 = vshrl.u32 %v286, 16
        %v341 = vshll.u32 %v286, 16
        %v343 = vrot.slane %v341, 1
        %v344 = vor.u32 %v339, %v343
        %v346 = vshll.u32 %v318, 16
        %v348 = vrot.slane %v346, 1
        %v349 = vsel %vm325, %v344, %v348
        %v351 = vshrl.u32 %v287, 16
        %v353 = vshll.u32 %v287, 16
        %v355 = vrot.slane %v353, 1
        %v356 = vor.u32 %v351, %v355
        %v358 = vshll.u32 %v319, 16
        %v360 = vrot.slane %v358, 1
        %v361 = vsel %vm325, %v356, %v360
        %v363 = vshrl.u32 %v288, 16
        %v365 = vshll.u32 %v288, 16
        %v367 = vrot.slane %v365, 1
        %v368 = vor.u32 %v363, %v367
        %v370 = vshll.u32 %v320, 16
        %v372 = vrot.slane %v370, 1
        %v373 = vsel %vm325, %v368, %v372
        %v375 = vshrl.u32 %v289, 16
        %v377 = vshll.u32 %v289, 16
        %v379 = vrot.slane %v377, 1
        %v380 = vor.u32 %v375, %v379
        %v382 = vshll.u32 %v321, 16
        %v384 = vrot.slane %v382, 1
        %v385 = vsel %vm325, %v380, %v384
        %v387 = vshrl.u32 %v290, 16
        %v389 = vshll.u32 %v290, 16
        %v391 = vrot.slane %v389, 1
        %v392 = vor.u32 %v387, %v391
        %v394 = vshll.u32 %v322, 16
        %v396 = vrot.slane %v394, 1
        %v397 = vsel %vm325, %v392, %v396
        %v399 = vshrl.u32 %v291, 16
        %v401 = vshll.u32 %v291, 16
        %v403 = vrot.slane %v401, 1
        %v404 = vor.u32 %v399, %v403
        %v406 = vshll.u32 %v323, 16
        %v408 = vrot.slane %v406, 1
        %v409 = vsel %vm325, %v404, %v408
        %v411 = vshrl.u32 %v292, 16
        %v413 = vshll.u32 %v292, 16
        %v415 = vrot.slane %v413, 1
        %v416 = vor.u32 %v411, %v415
        %v418 = vshll.u32 %v324, 16
        %v420 = vrot.slane %v418, 1
        %v421 = vsel %vm325, %v416, %v420
        %vm430 = vcmask 1046528
        %v431 = vrot.slane %v285, 1
        %v432 = vrot.slane %v317, 1
        %v433 = vsel %vm430, %v431, %v432
        %v434 = vrot.slane %v286, 1
        %v435 = vrot.slane %v318, 1
        %v436 = vsel %vm430, %v434, %v435
        %v437 = vrot.slane %v287, 1
        %v438 = vrot.slane %v319, 1
        %v439 = vsel %vm430, %v437, %v438
        %v440 = vrot.slane %v288, 1
        %v441 = vrot.slane %v320, 1
        %v442 = vsel %vm430, %v440, %v441
        %v443 = vrot.slane %v289, 1
        %v444 = vrot.slane %v321, 1
        %v445 = vsel %vm430, %v443, %v444
        %v446 = vrot.slane %v290, 1
        %v447 = vrot.slane %v322, 1
        %v448 = vsel %vm430, %v446, %v447
        %v449 = vrot.slane %v291, 1
        %v450 = vrot.slane %v323, 1
        %v451 = vsel %vm430, %v449, %v450
        %v452 = vrot.slane %v292, 1
        %v453 = vrot.slane %v324, 1
        %v454 = vsel %vm430, %v452, %v453
        %vm463 = vsmask.f32 6400
        %v464 = vrot.slane %v327, 1
        %v465 = vrot.slane %v329, 2
        %v466 = vor.u32 %v464, %v465
        %v467 = vshrl.u32 %v317, 16
        %v469 = vrot.slane %v467, 1
        %v470 = vrot.slane %v334, 2
        %v471 = vor.u32 %v469, %v470
        %v472 = vsel %vm463, %v466, %v471
        %v473 = vrot.slane %v339, 1
        %v474 = vrot.slane %v341, 2
        %v475 = vor.u32 %v473, %v474
        %v476 = vshrl.u32 %v318, 16
        %v478 = vrot.slane %v476, 1
        %v479 = vrot.slane %v346, 2
        %v480 = vor.u32 %v478, %v479
        %v481 = vsel %vm463, %v475, %v480
        %v482 = vrot.slane %v351, 1
        %v483 = vrot.slane %v353, 2
        %v484 = vor.u32 %v482, %v483
        %v485 = vshrl.u32 %v319, 16
        %v487 = vrot.slane %v485, 1
        %v488 = vrot.slane %v358, 2
        %v489 = vor.u32 %v487, %v488
        %v490 = vsel %vm463, %v484, %v489
        %v491 = vrot.slane %v363, 1
        %v492 = vrot.slane %v365, 2
        %v493 = vor.u32 %v491, %v492
        %v494 = vshrl.u32 %v320, 16
        %v496 = vrot.slane %v494, 1
        %v497 = vrot.slane %v370, 2
        %v498 = vor.u32 %v496, %v497
        %v499 = vsel %vm463, %v493, %v498
        %v500 = vrot.slane %v375, 1
        %v501 = vrot.slane %v377, 2
        %v502 = vor.u32 %v500, %v501
        %v503 = vshrl.u32 %v321, 16
        %v505 = vrot.slane %v503, 1
        %v506 = vrot.slane %v382, 2
        %v507 = vor.u32 %v505, %v506
        %v508 = vsel %vm463, %v502, %v507
        %v509 = vrot.slane %v387, 1
        %v510 = vrot.slane %v389, 2
        %v511 = vor.u32 %v509, %v510
        %v512 = vshrl.u32 %v322, 16
        %v514 = vrot.slane %v512, 1
        %v515 = vrot.slane %v394, 2
        %v516 = vor.u32 %v514, %v515
        %v517 = vsel %vm463, %v511, %v516
        %v518 = vrot.slane %v399, 1
        %v519 = vrot.slane %v401, 2
        %v520 = vor.u32 %v518, %v519
        %v521 = vshrl.u32 %v323, 16
        %v523 = vrot.slane %v521, 1
        %v524 = vrot.slane %v406, 2
        %v525 = vor.u32 %v523, %v524
        %v526 = vsel %vm463, %v520, %v525
        %v527 = vrot.slane %v411, 1
        %v528 = vrot.slane %v413, 2
        %v529 = vor.u32 %v527, %v528
        %v530 = vshrl.u32 %v324, 16
        %v532 = vrot.slane %v530, 1
        %v533 = vrot.slane %v418, 2
        %v534 = vor.u32 %v532, %v533
        %v535 = vsel %vm463, %v529, %v534
        %vm544 = vcmask 1045504
        %v545 = vrot.slane %v285, 2
        %v546 = vrot.slane %v317, 2
        %v547 = vsel %vm544, %v545, %v546
        %v548 = vrot.slane %v286, 2
        %v549 = vrot.slane %v318, 2
        %v550 = vsel %vm544, %v548, %v549
        %v551 = vrot.slane %v287, 2
        %v552 = vrot.slane %v319, 2
        %v553 = vsel %vm544, %v551, %v552
        %v554 = vrot.slane %v288, 2
        %v555 = vrot.slane %v320, 2
        %v556 = vsel %vm544, %v554, %v555
        %v557 = vrot.slane %v289, 2
        %v558 = vrot.slane %v321, 2
        %v559 = vsel %vm544, %v557, %v558
        %v560 = vrot.slane %v290, 2
        %v561 = vrot.slane %v322, 2
        %v562 = vsel %vm544, %v560, %v561
        %v563 = vrot.slane %v291, 2
        %v564 = vrot.slane %v323, 2
        %v565 = vsel %vm544, %v563, %v564
        %v566 = vrot.slane %v292, 2
        %v567 = vrot.slane %v324, 2
        %v568 = vsel %vm544, %v566, %v567
        %v577 = vld [vmem:[#allocation2] sm:$0xf]
        %v578 = vld [vmem:[#allocation2 + $0x4] sm:$0xf]
        %v579 = vld [vmem:[#allocation2 + $0x8] sm:$0xf]
        %v580 = vld [vmem:[#allocation2 + $0xc] sm:$0xf]
        %v581 = vld [vmem:[#allocation2 + $0x10] sm:$0xf]
        %v582 = vld [vmem:[#allocation2 + $0x14] sm:$0xf]
        %v583 = vld [vmem:[#allocation2 + $0x18] sm:$0xf]
        %v584 = vld [vmem:[#allocation2 + $0x1c] sm:$0xf]
        %v585 = vld [vmem:[#allocation2 + $0x20] sm:$0xf]
        %v586 = vld [vmem:[#allocation2 + $0x24] sm:$0xf]
        %v587 = vld [vmem:[#allocation2 + $0x28] sm:$0xf]
        %v588 = vld [vmem:[#allocation2 + $0x2c] sm:$0xf]
        %v589 = vld [vmem:[#allocation2 + $0x30] sm:$0xf]
        %v590 = vld [vmem:[#allocation2 + $0x34] sm:$0xf]
        %v591 = vld [vmem:[#allocation2 + $0x38] sm:$0xf]
        %v592 = vld [vmem:[#allocation2 + $0x3c] sm:$0xf]
        %v593 = vld [vmem:[#allocation2 + $0x40] sm:$0xf]
        %v594 = vld [vmem:[#allocation2 + $0x44] sm:$0xf]
        %v595 = vld [vmem:[#allocation2 + $0x48] sm:$0xf]
        %v596 = vld [vmem:[#allocation2 + $0x4c] sm:$0xf]
        %v597 = vld [vmem:[#allocation2 + $0x50] sm:$0xf]
        %v598 = vld [vmem:[#allocation2 + $0x54] sm:$0xf]
        %v599 = vld [vmem:[#allocation2 + $0x58] sm:$0xf]
        %v600 = vld [vmem:[#allocation2 + $0x5c] sm:$0xf]
        %v601 = vld [vmem:[#allocation2 + $0x60] sm:$0xf]
        %v602 = vld [vmem:[#allocation2 + $0x64] sm:$0xf]
        %v603 = vld [vmem:[#allocation2 + $0x68] sm:$0xf]
        %v604 = vld [vmem:[#allocation2 + $0x6c] sm:$0xf]
        %v605 = vld [vmem:[#allocation2 + $0x70] sm:$0xf]
        %v606 = vld [vmem:[#allocation2 + $0x74] sm:$0xf]
        %v607 = vld [vmem:[#allocation2 + $0x78] sm:$0xf]
        %v608 = vld [vmem:[#allocation2 + $0x7c] sm:$0xf]
        %v609 = vld [vmem:[#allocation2 + $0x80] sm:$0xf]
        %v610 = vld [vmem:[#allocation2 + $0x84] sm:$0xf]
        %v611 = vld [vmem:[#allocation2 + $0x88] sm:$0xf]
        %v612 = vld [vmem:[#allocation2 + $0x8c] sm:$0xf]
        %v613 = vld [vmem:[#allocation2 + $0x90] sm:$0xf]
        %v614 = vld [vmem:[#allocation2 + $0x94] sm:$0xf]
        %v615 = vld [vmem:[#allocation2 + $0x98] sm:$0xf]
        %v616 = vld [vmem:[#allocation2 + $0x9c] sm:$0xf]
        %v617 = vld [vmem:[#allocation2 + $0xa0] sm:$0xf]
        %v618 = vld [vmem:[#allocation2 + $0xa4] sm:$0xf]
        %v619 = vld [vmem:[#allocation2 + $0xa8] sm:$0xf]
        %v620 = vld [vmem:[#allocation2 + $0xac] sm:$0xf]
        %v621 = vld [vmem:[#allocation2 + $0xb0] sm:$0xf]
        %v622 = vld [vmem:[#allocation2 + $0xb4] sm:$0xf]
        %v623 = vld [vmem:[#allocation2 + $0xb8] sm:$0xf]
        %v624 = vld [vmem:[#allocation2 + $0xbc] sm:$0xf]
        %v625 = vld [vmem:[#allocation2 + $0xc0] sm:$0xf]
        %v626 = vld [vmem:[#allocation2 + $0xc4] sm:$0xf]
        %v627 = vld [vmem:[#allocation2 + $0xc8] sm:$0xf]
        %v628 = vld [vmem:[#allocation2 + $0xcc] sm:$0xf]
        %v629 = vld [vmem:[#allocation2 + $0xd0] sm:$0xf]
        %v630 = vld [vmem:[#allocation2 + $0xd4] sm:$0xf]
        %v631 = vld [vmem:[#allocation2 + $0xd8] sm:$0xf]
        %v632 = vld [vmem:[#allocation2 + $0xdc] sm:$0xf]
        %v633 = vld [vmem:[#allocation2 + $0xe0] sm:$0xf]
        %v634 = vld [vmem:[#allocation2 + $0xe4] sm:$0xf]
        %v635 = vld [vmem:[#allocation2 + $0xe8] sm:$0xf]
        %v636 = vld [vmem:[#allocation2 + $0xec] sm:$0xf]
        %v637 = vld [vmem:[#allocation2 + $0xf0] sm:$0xf]
        %v638 = vld [vmem:[#allocation2 + $0xf4] sm:$0xf]
        %v639 = vld [vmem:[#allocation2 + $0xf8] sm:$0xf]
        %v640 = vld [vmem:[#allocation2 + $0xfc] sm:$0xf]
        %v641 = vld [vmem:[#allocation2 + $0x100] sm:$0xf]
        %v642 = vld [vmem:[#allocation2 + $0x104] sm:$0xf]
        %v643 = vld [vmem:[#allocation2 + $0x108] sm:$0xf]
        %v644 = vld [vmem:[#allocation2 + $0x10c] sm:$0xf]
        %v645 = vld [vmem:[#allocation2 + $0x110] sm:$0xf]
        %v646 = vld [vmem:[#allocation2 + $0x114] sm:$0xf]
        %v647 = vld [vmem:[#allocation2 + $0x118] sm:$0xf]
        %v648 = vld [vmem:[#allocation2 + $0x11c] sm:$0xf]
        %v649 = vld [vmem:[#allocation2 + $0x120] sm:$0xf]
        %v650 = vld [vmem:[#allocation2 + $0x124] sm:$0xf]
        %v651 = vld [vmem:[#allocation2 + $0x128] sm:$0xf]
        %v652 = vld [vmem:[#allocation2 + $0x12c] sm:$0xf]
        %v653 = vld [vmem:[#allocation2 + $0x130] sm:$0xf]
        %v654 = vld [vmem:[#allocation2 + $0x134] sm:$0xf]
        %v655 = vld [vmem:[#allocation2 + $0x138] sm:$0xf]
        %v656 = vld [vmem:[#allocation2 + $0x13c] sm:$0xf]
        %v659 = vunpack.c.l.b16 %v241
        %v660 = vunpack.c.l.b16 %v242
        %v661 = vpack.c.b16 %v660, %v659
        %v664 = vunpack.c.l.b16 %v243
        %v665 = vpack.c.b16 %v664, %v664
        %v667 = vshrl.u32 %v661, 16
        %v669 = vshll.u32 %v661, 16
        %v671 = vrot.slane %v669, 1
        %v672 = vor.u32 %v667, %v671
        %v674 = vshll.u32 %v665, 16
        %v676 = vrot.slane %v674, 1
        %v677 = vsel %vm325, %v672, %v676
        %v679 = vrot.slane %v661, 1
        %v680 = vrot.slane %v665, 1
        %v681 = vsel %vm430, %v679, %v680
        %v683 = vrot.slane %v667, 1
        %v684 = vrot.slane %v669, 2
        %v685 = vor.u32 %v683, %v684
        %v686 = vshrl.u32 %v665, 16
        %v688 = vrot.slane %v686, 1
        %v689 = vrot.slane %v674, 2
        %v690 = vor.u32 %v688, %v689
        %v691 = vsel %vm463, %v685, %v690
        %v693 = vrot.slane %v661, 2
        %v694 = vrot.slane %v665, 2
        %v695 = vsel %vm544, %v693, %v694
        %s697 = scalar_lea.vmem [#allocation2], 320
        %v698 = vld [vmem:[%s697] sm:$0xf]
        %v699 = vld [vmem:[%s697 + $0x4] sm:$0xf]
        %v700 = vld [vmem:[%s697 + $0x8] sm:$0xf]
        %v701 = vld [vmem:[%s697 + $0xc] sm:$0xf]
        %v702 = vld [vmem:[%s697 + $0x10] sm:$0xf]
        %v703 = vld [vmem:[%s697 + $0x14] sm:$0xf]
        %v704 = vld [vmem:[%s697 + $0x18] sm:$0xf]
        %v705 = vld [vmem:[%s697 + $0x1c] sm:$0xf]
        %v706 = vld [vmem:[%s697 + $0x20] sm:$0xf]
        %v707 = vld [vmem:[%s697 + $0x24] sm:$0xf]
        %v708 = vld [vmem:[%s697 + $0x28] sm:$0xf]
        %v709 = vld [vmem:[%s697 + $0x2c] sm:$0xf]
        %v710 = vld [vmem:[%s697 + $0x30] sm:$0xf]
        %v711 = vld [vmem:[%s697 + $0x34] sm:$0xf]
        %v712 = vld [vmem:[%s697 + $0x38] sm:$0xf]
        %v713 = vld [vmem:[%s697 + $0x3c] sm:$0xf]
        %v714 = vld [vmem:[%s697 + $0x40] sm:$0xf]
        %v715 = vld [vmem:[%s697 + $0x44] sm:$0xf]
        %v716 = vld [vmem:[%s697 + $0x48] sm:$0xf]
        %v717 = vld [vmem:[%s697 + $0x4c] sm:$0xf]
        %v718 = vld [vmem:[%s697 + $0x50] sm:$0xf]
        %v719 = vld [vmem:[%s697 + $0x54] sm:$0xf]
        %v720 = vld [vmem:[%s697 + $0x58] sm:$0xf]
        %v721 = vld [vmem:[%s697 + $0x5c] sm:$0xf]
        %v722 = vld [vmem:[%s697 + $0x60] sm:$0xf]
        %v723 = vld [vmem:[%s697 + $0x64] sm:$0xf]
        %v724 = vld [vmem:[%s697 + $0x68] sm:$0xf]
        %v725 = vld [vmem:[%s697 + $0x6c] sm:$0xf]
        %v726 = vld [vmem:[%s697 + $0x70] sm:$0xf]
        %v727 = vld [vmem:[%s697 + $0x74] sm:$0xf]
        %v728 = vld [vmem:[%s697 + $0x78] sm:$0xf]
        %v729 = vld [vmem:[%s697 + $0x7c] sm:$0xf]
        %v730 = vld [vmem:[%s697 + $0x80] sm:$0xf]
        %v731 = vld [vmem:[%s697 + $0x84] sm:$0xf]
        %v732 = vld [vmem:[%s697 + $0x88] sm:$0xf]
        %v733 = vld [vmem:[%s697 + $0x8c] sm:$0xf]
        %v734 = vld [vmem:[%s697 + $0x90] sm:$0xf]
        %v735 = vld [vmem:[%s697 + $0x94] sm:$0xf]
        %v736 = vld [vmem:[%s697 + $0x98] sm:$0xf]
        %v737 = vld [vmem:[%s697 + $0x9c] sm:$0xf]
        %v738 = vld [vmem:[%s697 + $0xa0] sm:$0xf]
        %v739 = vld [vmem:[%s697 + $0xa4] sm:$0xf]
        %v740 = vld [vmem:[%s697 + $0xa8] sm:$0xf]
        %v741 = vld [vmem:[%s697 + $0xac] sm:$0xf]
        %v742 = vld [vmem:[%s697 + $0xb0] sm:$0xf]
        %v743 = vld [vmem:[%s697 + $0xb4] sm:$0xf]
        %v744 = vld [vmem:[%s697 + $0xb8] sm:$0xf]
        %v745 = vld [vmem:[%s697 + $0xbc] sm:$0xf]
        %v746 = vld [vmem:[%s697 + $0xc0] sm:$0xf]
        %v747 = vld [vmem:[%s697 + $0xc4] sm:$0xf]
        %v748 = vld [vmem:[%s697 + $0xc8] sm:$0xf]
        %v749 = vld [vmem:[%s697 + $0xcc] sm:$0xf]
        %v750 = vld [vmem:[%s697 + $0xd0] sm:$0xf]
        %v751 = vld [vmem:[%s697 + $0xd4] sm:$0xf]
        %v752 = vld [vmem:[%s697 + $0xd8] sm:$0xf]
        %v753 = vld [vmem:[%s697 + $0xdc] sm:$0xf]
        %v754 = vld [vmem:[%s697 + $0xe0] sm:$0xf]
        %v755 = vld [vmem:[%s697 + $0xe4] sm:$0xf]
        %v756 = vld [vmem:[%s697 + $0xe8] sm:$0xf]
        %v757 = vld [vmem:[%s697 + $0xec] sm:$0xf]
        %v758 = vld [vmem:[%s697 + $0xf0] sm:$0xf]
        %v759 = vld [vmem:[%s697 + $0xf4] sm:$0xf]
        %v760 = vld [vmem:[%s697 + $0xf8] sm:$0xf]
        %v761 = vld [vmem:[%s697 + $0xfc] sm:$0xf]
        %v762 = vld [vmem:[%s697 + $0x100] sm:$0xf]
        %v763 = vld [vmem:[%s697 + $0x104] sm:$0xf]
        %v764 = vld [vmem:[%s697 + $0x108] sm:$0xf]
        %v765 = vld [vmem:[%s697 + $0x10c] sm:$0xf]
        %v766 = vld [vmem:[%s697 + $0x110] sm:$0xf]
        %v767 = vld [vmem:[%s697 + $0x114] sm:$0xf]
        %v768 = vld [vmem:[%s697 + $0x118] sm:$0xf]
        %v769 = vld [vmem:[%s697 + $0x11c] sm:$0xf]
        %v770 = vld [vmem:[%s697 + $0x120] sm:$0xf]
        %v771 = vld [vmem:[%s697 + $0x124] sm:$0xf]
        %v772 = vld [vmem:[%s697 + $0x128] sm:$0xf]
        %v773 = vld [vmem:[%s697 + $0x12c] sm:$0xf]
        %v774 = vld [vmem:[%s697 + $0x130] sm:$0xf]
        %v775 = vld [vmem:[%s697 + $0x134] sm:$0xf]
        %v776 = vld [vmem:[%s697 + $0x138] sm:$0xf]
        %v777 = vld [vmem:[%s697 + $0x13c] sm:$0xf]
        %v858 = vunpack.c.l.b16 %v698
        %v859 = vunpack.c.l.b16 %v699
        %v860 = vunpack.c.l.b16 %v700
        %v861 = vunpack.c.l.b16 %v701
        %v862 = vunpack.c.l.b16 %v702
        %v863 = vunpack.c.l.b16 %v703
        %v864 = vunpack.c.l.b16 %v704
        %v865 = vunpack.c.l.b16 %v705
        %v866 = vunpack.c.l.b16 %v706
        %v867 = vunpack.c.l.b16 %v707
        %v868 = vunpack.c.l.b16 %v708
        %v869 = vunpack.c.l.b16 %v709
        %v870 = vunpack.c.l.b16 %v710
        %v871 = vunpack.c.l.b16 %v711
        %v872 = vunpack.c.l.b16 %v712
        %v873 = vunpack.c.l.b16 %v713
        %v874 = vunpack.c.l.b16 %v714
        %v875 = vunpack.c.l.b16 %v715
        %v876 = vunpack.c.l.b16 %v716
        %v877 = vunpack.c.l.b16 %v717
        %v878 = vunpack.c.l.b16 %v718
        %v879 = vunpack.c.l.b16 %v719
        %v880 = vunpack.c.l.b16 %v720
        %v881 = vunpack.c.l.b16 %v721
        %v882 = vunpack.c.l.b16 %v722
        %v883 = vunpack.c.l.b16 %v723
        %v884 = vunpack.c.l.b16 %v724
        %v885 = vunpack.c.l.b16 %v725
        %v886 = vunpack.c.l.b16 %v726
        %v887 = vunpack.c.l.b16 %v727
        %v888 = vunpack.c.l.b16 %v728
        %v889 = vunpack.c.l.b16 %v729
        %v890 = vunpack.c.l.b16 %v730
        %v891 = vunpack.c.l.b16 %v731
        %v892 = vunpack.c.l.b16 %v732
        %v893 = vunpack.c.l.b16 %v733
        %v894 = vunpack.c.l.b16 %v734
        %v895 = vunpack.c.l.b16 %v735
        %v896 = vunpack.c.l.b16 %v736
        %v897 = vunpack.c.l.b16 %v737
        %v898 = vunpack.c.l.b16 %v738
        %v899 = vunpack.c.l.b16 %v739
        %v900 = vunpack.c.l.b16 %v740
        %v901 = vunpack.c.l.b16 %v741
        %v902 = vunpack.c.l.b16 %v742
        %v903 = vunpack.c.l.b16 %v743
        %v904 = vunpack.c.l.b16 %v744
        %v905 = vunpack.c.l.b16 %v745
        %v906 = vunpack.c.l.b16 %v746
        %v907 = vunpack.c.l.b16 %v747
        %v908 = vunpack.c.l.b16 %v748
        %v909 = vunpack.c.l.b16 %v749
        %v910 = vunpack.c.l.b16 %v750
        %v911 = vunpack.c.l.b16 %v751
        %v912 = vunpack.c.l.b16 %v752
        %v913 = vunpack.c.l.b16 %v753
        %v914 = vunpack.c.l.b16 %v754
        %v915 = vunpack.c.l.b16 %v755
        %v916 = vunpack.c.l.b16 %v756
        %v917 = vunpack.c.l.b16 %v757
        %v918 = vunpack.c.l.b16 %v758
        %v919 = vunpack.c.l.b16 %v759
        %v920 = vunpack.c.l.b16 %v760
        %v921 = vunpack.c.l.b16 %v761
        %v922 = vunpack.c.l.b16 %v762
        %v923 = vunpack.c.l.b16 %v763
        %v924 = vunpack.c.l.b16 %v764
        %v925 = vunpack.c.l.b16 %v765
        %v926 = vunpack.c.l.b16 %v766
        %v927 = vunpack.c.l.b16 %v767
        %v928 = vunpack.c.l.b16 %v768
        %v929 = vunpack.c.l.b16 %v769
        %v930 = vunpack.c.l.b16 %v770
        %v931 = vunpack.c.l.b16 %v771
        %v932 = vunpack.c.l.b16 %v772
        %v933 = vunpack.c.l.b16 %v773
        %v934 = vunpack.c.l.b16 %v774
        %v935 = vunpack.c.l.b16 %v775
        %v936 = vunpack.c.l.b16 %v776
        %v937 = vunpack.c.l.b16 %v777
        %v938 = vpack.c.b16 %v859, %v858
        %v939 = vpack.c.b16 %v861, %v860
        %v940 = vpack.c.b16 %v863, %v862
        %v941 = vpack.c.b16 %v865, %v864
        %v942 = vpack.c.b16 %v867, %v866
        %v943 = vpack.c.b16 %v869, %v868
        %v944 = vpack.c.b16 %v871, %v870
        %v945 = vpack.c.b16 %v873, %v872
        %v946 = vpack.c.b16 %v875, %v874
        %v947 = vpack.c.b16 %v877, %v876
        %v948 = vpack.c.b16 %v879, %v878
        %v949 = vpack.c.b16 %v881, %v880
        %v950 = vpack.c.b16 %v883, %v882
        %v951 = vpack.c.b16 %v885, %v884
        %v952 = vpack.c.b16 %v887, %v886
        %v953 = vpack.c.b16 %v889, %v888
        %v954 = vpack.c.b16 %v891, %v890
        %v955 = vpack.c.b16 %v893, %v892
        %v956 = vpack.c.b16 %v895, %v894
        %v957 = vpack.c.b16 %v897, %v896
        %v958 = vpack.c.b16 %v899, %v898
        %v959 = vpack.c.b16 %v901, %v900
        %v960 = vpack.c.b16 %v903, %v902
        %v961 = vpack.c.b16 %v905, %v904
        %v962 = vpack.c.b16 %v907, %v906
        %v963 = vpack.c.b16 %v909, %v908
        %v964 = vpack.c.b16 %v911, %v910
        %v965 = vpack.c.b16 %v913, %v912
        %v966 = vpack.c.b16 %v915, %v914
        %v967 = vpack.c.b16 %v917, %v916
        %v968 = vpack.c.b16 %v919, %v918
        %v969 = vpack.c.b16 %v921, %v920
        %v970 = vpack.c.b16 %v923, %v922
        %v971 = vpack.c.b16 %v925, %v924
        %v972 = vpack.c.b16 %v927, %v926
        %v973 = vpack.c.b16 %v929, %v928
        %v974 = vpack.c.b16 %v931, %v930
        %v975 = vpack.c.b16 %v933, %v932
        %v976 = vpack.c.b16 %v935, %v934
        %v977 = vpack.c.b16 %v937, %v936
        %1018 = vmatpush.bf16.msra.mxu0 %v945
        %1019 = vmatpush.bf16.msra.mxu0 %v944
        %1020 = vmatpush.bf16.msra.mxu0 %v943
        %1021 = vmatpush.bf16.msra.mxu0 %v942
        %1022 = vmatpush.bf16.msra.mxu0 %v941
        %1023 = vmatpush.bf16.msra.mxu0 %v940
        %1024 = vmatpush.bf16.msra.mxu0 %v939
        %1025 = vmatpush.bf16.msra.mxu0 %v938
        %1026 = vmatmul.bf16.gmra.mxu0 %v286
        %v1027 = vpop.f32.mrf.mxu0
        %v1028 = vadd.f32 0.0, %v1027
        %v1029 = vpop.f32.mrf.mxu0
        %v1030 = vadd.f32 0.0, %v1029
        %1031 = vmatmul.bf16.gmra.mxu0 %v287
        %v1032 = vpop.f32.mrf.mxu0
        %v1033 = vadd.f32 0.0, %v1032
        %v1034 = vpop.f32.mrf.mxu0
        %v1035 = vadd.f32 0.0, %v1034
        %1036 = vmatmul.bf16.gmra.mxu0 %v288
        %v1037 = vpop.f32.mrf.mxu0
        %v1038 = vadd.f32 0.0, %v1037
        %v1039 = vpop.f32.mrf.mxu0
        %v1040 = vadd.f32 0.0, %v1039
        %1041 = vmatmul.bf16.gmra.mxu0 %v289
        %v1042 = vpop.f32.mrf.mxu0
        %v1043 = vadd.f32 0.0, %v1042
        %v1044 = vpop.f32.mrf.mxu0
        %v1045 = vadd.f32 0.0, %v1044
        %1046 = vmatmul.bf16.gmra.mxu0 %v290
        %v1047 = vpop.f32.mrf.mxu0
        %v1048 = vadd.f32 0.0, %v1047
        %v1049 = vpop.f32.mrf.mxu0
        %v1050 = vadd.f32 0.0, %v1049
        %1051 = vmatmul.bf16.gmra.mxu0 %v291
        %v1052 = vpop.f32.mrf.mxu0
        %v1053 = vadd.f32 0.0, %v1052
        %v1054 = vpop.f32.mrf.mxu0
        %v1055 = vadd.f32 0.0, %v1054
        %1056 = vmatmul.bf16.gmra.mxu0 %v292
        %v1057 = vpop.f32.mrf.mxu0
        %v1058 = vadd.f32 0.0, %v1057
        %v1059 = vpop.f32.mrf.mxu0
        %v1060 = vadd.f32 0.0, %v1059
        %1061 = vmatmul.bf16.gmra.mxu0 %v661
        %v1062 = vpop.f32.mrf.mxu0
        %v1063 = vadd.f32 0.0, %v1062
        %v1064 = vpop.f32.mrf.mxu0
        %v1065 = vadd.f32 0.0, %v1064
        %1066 = vdwg.mxu0
        %1067 = vmatpush.bf16.msra.mxu0 %v953
        %1068 = vmatpush.bf16.msra.mxu0 %v952
        %1069 = vmatpush.bf16.msra.mxu0 %v951
        %1070 = vmatpush.bf16.msra.mxu0 %v950
        %1071 = vmatpush.bf16.msra.mxu0 %v949
        %1072 = vmatpush.bf16.msra.mxu0 %v948
        %1073 = vmatpush.bf16.msra.mxu0 %v947
        %1074 = vmatpush.bf16.msra.mxu0 %v946
        %1075 = vmatmul.bf16.gmra.mxu0 %v349
        %v1076 = vpop.f32.mrf.mxu0
        %v1077 = vadd.f32 %v1028, %v1076
        %v1078 = vpop.f32.mrf.mxu0
        %v1079 = vadd.f32 %v1030, %v1078
        %1080 = vmatmul.bf16.gmra.mxu0 %v361
        %v1081 = vpop.f32.mrf.mxu0
        %v1082 = vadd.f32 %v1033, %v1081
        %v1083 = vpop.f32.mrf.mxu0
        %v1084 = vadd.f32 %v1035, %v1083
        %1085 = vmatmul.bf16.gmra.mxu0 %v373
        %v1086 = vpop.f32.mrf.mxu0
        %v1087 = vadd.f32 %v1038, %v1086
        %v1088 = vpop.f32.mrf.mxu0
        %v1089 = vadd.f32 %v1040, %v1088
        %1090 = vmatmul.bf16.gmra.mxu0 %v385
        %v1091 = vpop.f32.mrf.mxu0
        %v1092 = vadd.f32 %v1043, %v1091
        %v1093 = vpop.f32.mrf.mxu0
        %v1094 = vadd.f32 %v1045, %v1093
        %1095 = vmatmul.bf16.gmra.mxu0 %v397
        %v1096 = vpop.f32.mrf.mxu0
        %v1097 = vadd.f32 %v1048, %v1096
        %v1098 = vpop.f32.mrf.mxu0
        %v1099 = vadd.f32 %v1050, %v1098
        %1100 = vmatmul.bf16.gmra.mxu0 %v409
        %v1101 = vpop.f32.mrf.mxu0
        %v1102 = vadd.f32 %v1053, %v1101
        %v1103 = vpop.f32.mrf.mxu0
        %v1104 = vadd.f32 %v1055, %v1103
        %1105 = vmatmul.bf16.gmra.mxu0 %v421
        %v1106 = vpop.f32.mrf.mxu0
        %v1107 = vadd.f32 %v1058, %v1106
        %v1108 = vpop.f32.mrf.mxu0
        %v1109 = vadd.f32 %v1060, %v1108
        %1110 = vmatmul.bf16.gmra.mxu0 %v677
        %v1111 = vpop.f32.mrf.mxu0
        %v1112 = vadd.f32 %v1063, %v1111
        %v1113 = vpop.f32.mrf.mxu0
        %v1114 = vadd.f32 %v1065, %v1113
        %1115 = vdwg.mxu0
        %1116 = vmatpush.bf16.msra.mxu0 %v961
        %1117 = vmatpush.bf16.msra.mxu0 %v960
        %1118 = vmatpush.bf16.msra.mxu0 %v959
        %1119 = vmatpush.bf16.msra.mxu0 %v958
        %1120 = vmatpush.bf16.msra.mxu0 %v957
        %1121 = vmatpush.bf16.msra.mxu0 %v956
        %1122 = vmatpush.bf16.msra.mxu0 %v955
        %1123 = vmatpush.bf16.msra.mxu0 %v954
        %1124 = vmatmul.bf16.gmra.mxu0 %v436
        %v1125 = vpop.f32.mrf.mxu0
        %v1126 = vadd.f32 %v1077, %v1125
        %v1127 = vpop.f32.mrf.mxu0
        %v1128 = vadd.f32 %v1079, %v1127
        %1129 = vmatmul.bf16.gmra.mxu0 %v439
        %v1130 = vpop.f32.mrf.mxu0
        %v1131 = vadd.f32 %v1082, %v1130
        %v1132 = vpop.f32.mrf.mxu0
        %v1133 = vadd.f32 %v1084, %v1132
        %1134 = vmatmul.bf16.gmra.mxu0 %v442
        %v1135 = vpop.f32.mrf.mxu0
        %v1136 = vadd.f32 %v1087, %v1135
        %v1137 = vpop.f32.mrf.mxu0
        %v1138 = vadd.f32 %v1089, %v1137
        %1139 = vmatmul.bf16.gmra.mxu0 %v445
        %v1140 = vpop.f32.mrf.mxu0
        %v1141 = vadd.f32 %v1092, %v1140
        %v1142 = vpop.f32.mrf.mxu0
        %v1143 = vadd.f32 %v1094, %v1142
        %1144 = vmatmul.bf16.gmra.mxu0 %v448
        %v1145 = vpop.f32.mrf.mxu0
        %v1146 = vadd.f32 %v1097, %v1145
        %v1147 = vpop.f32.mrf.mxu0
        %v1148 = vadd.f32 %v1099, %v1147
        %1149 = vmatmul.bf16.gmra.mxu0 %v451
        %v1150 = vpop.f32.mrf.mxu0
        %v1151 = vadd.f32 %v1102, %v1150
        %v1152 = vpop.f32.mrf.mxu0
        %v1153 = vadd.f32 %v1104, %v1152
        %1154 = vmatmul.bf16.gmra.mxu0 %v454
        %v1155 = vpop.f32.mrf.mxu0
        %v1156 = vadd.f32 %v1107, %v1155
        %v1157 = vpop.f32.mrf.mxu0
        %v1158 = vadd.f32 %v1109, %v1157
        %1159 = vmatmul.bf16.gmra.mxu0 %v681
        %v1160 = vpop.f32.mrf.mxu0
        %v1161 = vadd.f32 %v1112, %v1160
        %v1162 = vpop.f32.mrf.mxu0
        %v1163 = vadd.f32 %v1114, %v1162
        %1164 = vdwg.mxu0
        %1165 = vmatpush.bf16.msra.mxu0 %v969
        %1166 = vmatpush.bf16.msra.mxu0 %v968
        %1167 = vmatpush.bf16.msra.mxu0 %v967
        %1168 = vmatpush.bf16.msra.mxu0 %v966
        %1169 = vmatpush.bf16.msra.mxu0 %v965
        %1170 = vmatpush.bf16.msra.mxu0 %v964
        %1171 = vmatpush.bf16.msra.mxu0 %v963
        %1172 = vmatpush.bf16.msra.mxu0 %v962
        %1173 = vmatmul.bf16.gmra.mxu0 %v481
        %v1174 = vpop.f32.mrf.mxu0
        %v1175 = vadd.f32 %v1126, %v1174
        %v1176 = vpop.f32.mrf.mxu0
        %v1177 = vadd.f32 %v1128, %v1176
        %1178 = vmatmul.bf16.gmra.mxu0 %v490
        %v1179 = vpop.f32.mrf.mxu0
        %v1180 = vadd.f32 %v1131, %v1179
        %v1181 = vpop.f32.mrf.mxu0
        %v1182 = vadd.f32 %v1133, %v1181
        %1183 = vmatmul.bf16.gmra.mxu0 %v499
        %v1184 = vpop.f32.mrf.mxu0
        %v1185 = vadd.f32 %v1136, %v1184
        %v1186 = vpop.f32.mrf.mxu0
        %v1187 = vadd.f32 %v1138, %v1186
        %1188 = vmatmul.bf16.gmra.mxu0 %v508
        %v1189 = vpop.f32.mrf.mxu0
        %v1190 = vadd.f32 %v1141, %v1189
        %v1191 = vpop.f32.mrf.mxu0
        %v1192 = vadd.f32 %v1143, %v1191
        %1193 = vmatmul.bf16.gmra.mxu0 %v517
        %v1194 = vpop.f32.mrf.mxu0
        %v1195 = vadd.f32 %v1146, %v1194
        %v1196 = vpop.f32.mrf.mxu0
        %v1197 = vadd.f32 %v1148, %v1196
        %1198 = vmatmul.bf16.gmra.mxu0 %v526
        %v1199 = vpop.f32.mrf.mxu0
        %v1200 = vadd.f32 %v1151, %v1199
        %v1201 = vpop.f32.mrf.mxu0
        %v1202 = vadd.f32 %v1153, %v1201
        %1203 = vmatmul.bf16.gmra.mxu0 %v535
        %v1204 = vpop.f32.mrf.mxu0
        %v1205 = vadd.f32 %v1156, %v1204
        %v1206 = vpop.f32.mrf.mxu0
        %v1207 = vadd.f32 %v1158, %v1206
        %1208 = vmatmul.bf16.gmra.mxu0 %v691
        %v1209 = vpop.f32.mrf.mxu0
        %v1210 = vadd.f32 %v1161, %v1209
        %v1211 = vpop.f32.mrf.mxu0
        %v1212 = vadd.f32 %v1163, %v1211
        %1213 = vdwg.mxu0
        %1214 = vmatpush.bf16.msra.mxu0 %v977
        %1215 = vmatpush.bf16.msra.mxu0 %v976
        %1216 = vmatpush.bf16.msra.mxu0 %v975
        %1217 = vmatpush.bf16.msra.mxu0 %v974
        %1218 = vmatpush.bf16.msra.mxu0 %v973
        %1219 = vmatpush.bf16.msra.mxu0 %v972
        %1220 = vmatpush.bf16.msra.mxu0 %v971
        %1221 = vmatpush.bf16.msra.mxu0 %v970
        %1222 = vmatmul.bf16.gmra.mxu0 %v550
        %v1223 = vpop.f32.mrf.mxu0
        %v1224 = vadd.f32 %v1175, %v1223
        %v1225 = vpop.f32.mrf.mxu0
        %v1226 = vadd.f32 %v1177, %v1225
        %1227 = vmatmul.bf16.gmra.mxu0 %v553
        %v1228 = vpop.f32.mrf.mxu0
        %v1229 = vadd.f32 %v1180, %v1228
        %v1230 = vpop.f32.mrf.mxu0
        %v1231 = vadd.f32 %v1182, %v1230
        %1232 = vmatmul.bf16.gmra.mxu0 %v556
        %v1233 = vpop.f32.mrf.mxu0
        %v1234 = vadd.f32 %v1185, %v1233
        %v1235 = vpop.f32.mrf.mxu0
        %v1236 = vadd.f32 %v1187, %v1235
        %1237 = vmatmul.bf16.gmra.mxu0 %v559
        %v1238 = vpop.f32.mrf.mxu0
        %v1239 = vadd.f32 %v1190, %v1238
        %v1240 = vpop.f32.mrf.mxu0
        %v1241 = vadd.f32 %v1192, %v1240
        %1242 = vmatmul.bf16.gmra.mxu0 %v562
        %v1243 = vpop.f32.mrf.mxu0
        %v1244 = vadd.f32 %v1195, %v1243
        %v1245 = vpop.f32.mrf.mxu0
        %v1246 = vadd.f32 %v1197, %v1245
        %1247 = vmatmul.bf16.gmra.mxu0 %v565
        %v1248 = vpop.f32.mrf.mxu0
        %v1249 = vadd.f32 %v1200, %v1248
        %v1250 = vpop.f32.mrf.mxu0
        %v1251 = vadd.f32 %v1202, %v1250
        %1252 = vmatmul.bf16.gmra.mxu0 %v568
        %v1253 = vpop.f32.mrf.mxu0
        %v1254 = vadd.f32 %v1205, %v1253
        %v1255 = vpop.f32.mrf.mxu0
        %v1256 = vadd.f32 %v1207, %v1255
        %1257 = vmatmul.bf16.gmra.mxu0 %v695
        %v1258 = vpop.f32.mrf.mxu0
        %v1259 = vadd.f32 %v1210, %v1258
        %v1260 = vpop.f32.mrf.mxu0
        %v1261 = vadd.f32 %v1212, %v1260
        %1262 = vdwg.mxu0
        %v1343 = vunpack.c.l.b16 %v577
        %v1344 = vunpack.c.l.b16 %v578
        %v1345 = vunpack.c.l.b16 %v579
        %v1346 = vunpack.c.l.b16 %v580
        %v1347 = vunpack.c.l.b16 %v581
        %v1348 = vunpack.c.l.b16 %v582
        %v1349 = vunpack.c.l.b16 %v583
        %v1350 = vunpack.c.l.b16 %v584
        %v1351 = vunpack.c.l.b16 %v585
        %v1352 = vunpack.c.l.b16 %v586
        %v1353 = vunpack.c.l.b16 %v587
        %v1354 = vunpack.c.l.b16 %v588
        %v1355 = vunpack.c.l.b16 %v589
        %v1356 = vunpack.c.l.b16 %v590
        %v1357 = vunpack.c.l.b16 %v591
        %v1358 = vunpack.c.l.b16 %v592
        %v1359 = vunpack.c.l.b16 %v593
        %v1360 = vunpack.c.l.b16 %v594
        %v1361 = vunpack.c.l.b16 %v595
        %v1362 = vunpack.c.l.b16 %v596
        %v1363 = vunpack.c.l.b16 %v597
        %v1364 = vunpack.c.l.b16 %v598
        %v1365 = vunpack.c.l.b16 %v599
        %v1366 = vunpack.c.l.b16 %v600
        %v1367 = vunpack.c.l.b16 %v601
        %v1368 = vunpack.c.l.b16 %v602
        %v1369 = vunpack.c.l.b16 %v603
        %v1370 = vunpack.c.l.b16 %v604
        %v1371 = vunpack.c.l.b16 %v605
        %v1372 = vunpack.c.l.b16 %v606
        %v1373 = vunpack.c.l.b16 %v607
        %v1374 = vunpack.c.l.b16 %v608
        %v1375 = vunpack.c.l.b16 %v609
        %v1376 = vunpack.c.l.b16 %v610
        %v1377 = vunpack.c.l.b16 %v611
        %v1378 = vunpack.c.l.b16 %v612
        %v1379 = vunpack.c.l.b16 %v613
        %v1380 = vunpack.c.l.b16 %v614
        %v1381 = vunpack.c.l.b16 %v615
        %v1382 = vunpack.c.l.b16 %v616
        %v1383 = vunpack.c.l.b16 %v617
        %v1384 = vunpack.c.l.b16 %v618
        %v1385 = vunpack.c.l.b16 %v619
        %v1386 = vunpack.c.l.b16 %v620
        %v1387 = vunpack.c.l.b16 %v621
        %v1388 = vunpack.c.l.b16 %v622
        %v1389 = vunpack.c.l.b16 %v623
        %v1390 = vunpack.c.l.b16 %v624
        %v1391 = vunpack.c.l.b16 %v625
        %v1392 = vunpack.c.l.b16 %v626
        %v1393 = vunpack.c.l.b16 %v627
        %v1394 = vunpack.c.l.b16 %v628
        %v1395 = vunpack.c.l.b16 %v629
        %v1396 = vunpack.c.l.b16 %v630
        %v1397 = vunpack.c.l.b16 %v631
        %v1398 = vunpack.c.l.b16 %v632
        %v1399 = vunpack.c.l.b16 %v633
        %v1400 = vunpack.c.l.b16 %v634
        %v1401 = vunpack.c.l.b16 %v635
        %v1402 = vunpack.c.l.b16 %v636
        %v1403 = vunpack.c.l.b16 %v637
        %v1404 = vunpack.c.l.b16 %v638
        %v1405 = vunpack.c.l.b16 %v639
        %v1406 = vunpack.c.l.b16 %v640
        %v1407 = vunpack.c.l.b16 %v641
        %v1408 = vunpack.c.l.b16 %v642
        %v1409 = vunpack.c.l.b16 %v643
        %v1410 = vunpack.c.l.b16 %v644
        %v1411 = vunpack.c.l.b16 %v645
        %v1412 = vunpack.c.l.b16 %v646
        %v1413 = vunpack.c.l.b16 %v647
        %v1414 = vunpack.c.l.b16 %v648
        %v1415 = vunpack.c.l.b16 %v649
        %v1416 = vunpack.c.l.b16 %v650
        %v1417 = vunpack.c.l.b16 %v651
        %v1418 = vunpack.c.l.b16 %v652
        %v1419 = vunpack.c.l.b16 %v653
        %v1420 = vunpack.c.l.b16 %v654
        %v1421 = vunpack.c.l.b16 %v655
        %v1422 = vunpack.c.l.b16 %v656
        %v1423 = vpack.c.b16 %v1344, %v1343
        %v1424 = vpack.c.b16 %v1346, %v1345
        %v1425 = vpack.c.b16 %v1348, %v1347
        %v1426 = vpack.c.b16 %v1350, %v1349
        %v1427 = vpack.c.b16 %v1352, %v1351
        %v1428 = vpack.c.b16 %v1354, %v1353
        %v1429 = vpack.c.b16 %v1356, %v1355
        %v1430 = vpack.c.b16 %v1358, %v1357
        %v1431 = vpack.c.b16 %v1360, %v1359
        %v1432 = vpack.c.b16 %v1362, %v1361
        %v1433 = vpack.c.b16 %v1364, %v1363
        %v1434 = vpack.c.b16 %v1366, %v1365
        %v1435 = vpack.c.b16 %v1368, %v1367
        %v1436 = vpack.c.b16 %v1370, %v1369
        %v1437 = vpack.c.b16 %v1372, %v1371
        %v1438 = vpack.c.b16 %v1374, %v1373
        %v1439 = vpack.c.b16 %v1376, %v1375
        %v1440 = vpack.c.b16 %v1378, %v1377
        %v1441 = vpack.c.b16 %v1380, %v1379
        %v1442 = vpack.c.b16 %v1382, %v1381
        %v1443 = vpack.c.b16 %v1384, %v1383
        %v1444 = vpack.c.b16 %v1386, %v1385
        %v1445 = vpack.c.b16 %v1388, %v1387
        %v1446 = vpack.c.b16 %v1390, %v1389
        %v1447 = vpack.c.b16 %v1392, %v1391
        %v1448 = vpack.c.b16 %v1394, %v1393
        %v1449 = vpack.c.b16 %v1396, %v1395
        %v1450 = vpack.c.b16 %v1398, %v1397
        %v1451 = vpack.c.b16 %v1400, %v1399
        %v1452 = vpack.c.b16 %v1402, %v1401
        %v1453 = vpack.c.b16 %v1404, %v1403
        %v1454 = vpack.c.b16 %v1406, %v1405
        %v1455 = vpack.c.b16 %v1408, %v1407
        %v1456 = vpack.c.b16 %v1410, %v1409
        %v1457 = vpack.c.b16 %v1412, %v1411
        %v1458 = vpack.c.b16 %v1414, %v1413
        %v1459 = vpack.c.b16 %v1416, %v1415
        %v1460 = vpack.c.b16 %v1418, %v1417
        %v1461 = vpack.c.b16 %v1420, %v1419
        %v1462 = vpack.c.b16 %v1422, %v1421
        %1503 = vmatpush.bf16.msra.mxu0 %v1430
        %1504 = vmatpush.bf16.msra.mxu0 %v1429
        %1505 = vmatpush.bf16.msra.mxu0 %v1428
        %1506 = vmatpush.bf16.msra.mxu0 %v1427
        %1507 = vmatpush.bf16.msra.mxu0 %v1426
        %1508 = vmatpush.bf16.msra.mxu0 %v1425
        %1509 = vmatpush.bf16.msra.mxu0 %v1424
        %1510 = vmatpush.bf16.msra.mxu0 %v1423
        %1511 = vmatmul.bf16.gmra.mxu0 %v285
        %v1512 = vpop.f32.mrf.mxu0
        %v1513 = vadd.f32 %v1224, %v1512
        %v1514 = vpop.f32.mrf.mxu0
        %v1515 = vadd.f32 %v1226, %v1514
        %1516 = vmatmul.bf16.gmra.mxu0 %v286
        %v1517 = vpop.f32.mrf.mxu0
        %v1518 = vadd.f32 %v1229, %v1517
        %v1519 = vpop.f32.mrf.mxu0
        %v1520 = vadd.f32 %v1231, %v1519
        %1521 = vmatmul.bf16.gmra.mxu0 %v287
        %v1522 = vpop.f32.mrf.mxu0
        %v1523 = vadd.f32 %v1234, %v1522
        %v1524 = vpop.f32.mrf.mxu0
        %v1525 = vadd.f32 %v1236, %v1524
        %1526 = vmatmul.bf16.gmra.mxu0 %v288
        %v1527 = vpop.f32.mrf.mxu0
        %v1528 = vadd.f32 %v1239, %v1527
        %v1529 = vpop.f32.mrf.mxu0
        %v1530 = vadd.f32 %v1241, %v1529
        %1531 = vmatmul.bf16.gmra.mxu0 %v289
        %v1532 = vpop.f32.mrf.mxu0
        %v1533 = vadd.f32 %v1244, %v1532
        %v1534 = vpop.f32.mrf.mxu0
        %v1535 = vadd.f32 %v1246, %v1534
        %1536 = vmatmul.bf16.gmra.mxu0 %v290
        %v1537 = vpop.f32.mrf.mxu0
        %v1538 = vadd.f32 %v1249, %v1537
        %v1539 = vpop.f32.mrf.mxu0
        %v1540 = vadd.f32 %v1251, %v1539
        %1541 = vmatmul.bf16.gmra.mxu0 %v291
        %v1542 = vpop.f32.mrf.mxu0
        %v1543 = vadd.f32 %v1254, %v1542
        %v1544 = vpop.f32.mrf.mxu0
        %v1545 = vadd.f32 %v1256, %v1544
        %1546 = vmatmul.bf16.gmra.mxu0 %v292
        %v1547 = vpop.f32.mrf.mxu0
        %v1548 = vadd.f32 %v1259, %v1547
        %v1549 = vpop.f32.mrf.mxu0
        %v1550 = vadd.f32 %v1261, %v1549
        %1551 = vdwg.mxu0
        %1552 = vmatpush.bf16.msra.mxu0 %v1438
        %1553 = vmatpush.bf16.msra.mxu0 %v1437
        %1554 = vmatpush.bf16.msra.mxu0 %v1436
        %1555 = vmatpush.bf16.msra.mxu0 %v1435
        %1556 = vmatpush.bf16.msra.mxu0 %v1434
        %1557 = vmatpush.bf16.msra.mxu0 %v1433
        %1558 = vmatpush.bf16.msra.mxu0 %v1432
        %1559 = vmatpush.bf16.msra.mxu0 %v1431
        %1560 = vmatmul.bf16.gmra.mxu0 %v337
        %v1561 = vpop.f32.mrf.mxu0
        %v1562 = vadd.f32 %v1513, %v1561
        %v1563 = vpop.f32.mrf.mxu0
        %v1564 = vadd.f32 %v1515, %v1563
        %1565 = vmatmul.bf16.gmra.mxu0 %v349
        %v1566 = vpop.f32.mrf.mxu0
        %v1567 = vadd.f32 %v1518, %v1566
        %v1568 = vpop.f32.mrf.mxu0
        %v1569 = vadd.f32 %v1520, %v1568
        %1570 = vmatmul.bf16.gmra.mxu0 %v361
        %v1571 = vpop.f32.mrf.mxu0
        %v1572 = vadd.f32 %v1523, %v1571
        %v1573 = vpop.f32.mrf.mxu0
        %v1574 = vadd.f32 %v1525, %v1573
        %1575 = vmatmul.bf16.gmra.mxu0 %v373
        %v1576 = vpop.f32.mrf.mxu0
        %v1577 = vadd.f32 %v1528, %v1576
        %v1578 = vpop.f32.mrf.mxu0
        %v1579 = vadd.f32 %v1530, %v1578
        %1580 = vmatmul.bf16.gmra.mxu0 %v385
        %v1581 = vpop.f32.mrf.mxu0
        %v1582 = vadd.f32 %v1533, %v1581
        %v1583 = vpop.f32.mrf.mxu0
        %v1584 = vadd.f32 %v1535, %v1583
        %1585 = vmatmul.bf16.gmra.mxu0 %v397
        %v1586 = vpop.f32.mrf.mxu0
        %v1587 = vadd.f32 %v1538, %v1586
        %v1588 = vpop.f32.mrf.mxu0
        %v1589 = vadd.f32 %v1540, %v1588
        %1590 = vmatmul.bf16.gmra.mxu0 %v409
        %v1591 = vpop.f32.mrf.mxu0
        %v1592 = vadd.f32 %v1543, %v1591
        %v1593 = vpop.f32.mrf.mxu0
        %v1594 = vadd.f32 %v1545, %v1593
        %1595 = vmatmul.bf16.gmra.mxu0 %v421
        %v1596 = vpop.f32.mrf.mxu0
        %v1597 = vadd.f32 %v1548, %v1596
        %v1598 = vpop.f32.mrf.mxu0
        %v1599 = vadd.f32 %v1550, %v1598
        %1600 = vdwg.mxu0
        %1601 = vmatpush.bf16.msra.mxu0 %v1446
        %1602 = vmatpush.bf16.msra.mxu0 %v1445
        %1603 = vmatpush.bf16.msra.mxu0 %v1444
        %1604 = vmatpush.bf16.msra.mxu0 %v1443
        %1605 = vmatpush.bf16.msra.mxu0 %v1442
        %1606 = vmatpush.bf16.msra.mxu0 %v1441
        %1607 = vmatpush.bf16.msra.mxu0 %v1440
        %1608 = vmatpush.bf16.msra.mxu0 %v1439
        %1609 = vmatmul.bf16.gmra.mxu0 %v433
        %v1610 = vpop.f32.mrf.mxu0
        %v1611 = vadd.f32 %v1562, %v1610
        %v1612 = vpop.f32.mrf.mxu0
        %v1613 = vadd.f32 %v1564, %v1612
        %1614 = vmatmul.bf16.gmra.mxu0 %v436
        %v1615 = vpop.f32.mrf.mxu0
        %v1616 = vadd.f32 %v1567, %v1615
        %v1617 = vpop.f32.mrf.mxu0
        %v1618 = vadd.f32 %v1569, %v1617
        %1619 = vmatmul.bf16.gmra.mxu0 %v439
        %v1620 = vpop.f32.mrf.mxu0
        %v1621 = vadd.f32 %v1572, %v1620
        %v1622 = vpop.f32.mrf.mxu0
        %v1623 = vadd.f32 %v1574, %v1622
        %1624 = vmatmul.bf16.gmra.mxu0 %v442
        %v1625 = vpop.f32.mrf.mxu0
        %v1626 = vadd.f32 %v1577, %v1625
        %v1627 = vpop.f32.mrf.mxu0
        %v1628 = vadd.f32 %v1579, %v1627
        %1629 = vmatmul.bf16.gmra.mxu0 %v445
        %v1630 = vpop.f32.mrf.mxu0
        %v1631 = vadd.f32 %v1582, %v1630
        %v1632 = vpop.f32.mrf.mxu0
        %v1633 = vadd.f32 %v1584, %v1632
        %1634 = vmatmul.bf16.gmra.mxu0 %v448
        %v1635 = vpop.f32.mrf.mxu0
        %v1636 = vadd.f32 %v1587, %v1635
        %v1637 = vpop.f32.mrf.mxu0
        %v1638 = vadd.f32 %v1589, %v1637
        %1639 = vmatmul.bf16.gmra.mxu0 %v451
        %v1640 = vpop.f32.mrf.mxu0
        %v1641 = vadd.f32 %v1592, %v1640
        %v1642 = vpop.f32.mrf.mxu0
        %v1643 = vadd.f32 %v1594, %v1642
        %1644 = vmatmul.bf16.gmra.mxu0 %v454
        %v1645 = vpop.f32.mrf.mxu0
        %v1646 = vadd.f32 %v1597, %v1645
        %v1647 = vpop.f32.mrf.mxu0
        %v1648 = vadd.f32 %v1599, %v1647
        %1649 = vdwg.mxu0
        %1650 = vmatpush.bf16.msra.mxu0 %v1454
        %1651 = vmatpush.bf16.msra.mxu0 %v1453
        %1652 = vmatpush.bf16.msra.mxu0 %v1452
        %1653 = vmatpush.bf16.msra.mxu0 %v1451
        %1654 = vmatpush.bf16.msra.mxu0 %v1450
        %1655 = vmatpush.bf16.msra.mxu0 %v1449
        %1656 = vmatpush.bf16.msra.mxu0 %v1448
        %1657 = vmatpush.bf16.msra.mxu0 %v1447
        %1658 = vmatmul.bf16.gmra.mxu0 %v472
        %v1659 = vpop.f32.mrf.mxu0
        %v1660 = vadd.f32 %v1611, %v1659
        %v1661 = vpop.f32.mrf.mxu0
        %v1662 = vadd.f32 %v1613, %v1661
        %1663 = vmatmul.bf16.gmra.mxu0 %v481
        %v1664 = vpop.f32.mrf.mxu0
        %v1665 = vadd.f32 %v1616, %v1664
        %v1666 = vpop.f32.mrf.mxu0
        %v1667 = vadd.f32 %v1618, %v1666
        %1668 = vmatmul.bf16.gmra.mxu0 %v490
        %v1669 = vpop.f32.mrf.mxu0
        %v1670 = vadd.f32 %v1621, %v1669
        %v1671 = vpop.f32.mrf.mxu0
        %v1672 = vadd.f32 %v1623, %v1671
        %1673 = vmatmul.bf16.gmra.mxu0 %v499
        %v1674 = vpop.f32.mrf.mxu0
        %v1675 = vadd.f32 %v1626, %v1674
        %v1676 = vpop.f32.mrf.mxu0
        %v1677 = vadd.f32 %v1628, %v1676
        %1678 = vmatmul.bf16.gmra.mxu0 %v508
        %v1679 = vpop.f32.mrf.mxu0
        %v1680 = vadd.f32 %v1631, %v1679
        %v1681 = vpop.f32.mrf.mxu0
        %v1682 = vadd.f32 %v1633, %v1681
        %1683 = vmatmul.bf16.gmra.mxu0 %v517
        %v1684 = vpop.f32.mrf.mxu0
        %v1685 = vadd.f32 %v1636, %v1684
        %v1686 = vpop.f32.mrf.mxu0
        %v1687 = vadd.f32 %v1638, %v1686
        %1688 = vmatmul.bf16.gmra.mxu0 %v526
        %v1689 = vpop.f32.mrf.mxu0
        %v1690 = vadd.f32 %v1641, %v1689
        %v1691 = vpop.f32.mrf.mxu0
        %v1692 = vadd.f32 %v1643, %v1691
        %1693 = vmatmul.bf16.gmra.mxu0 %v535
        %v1694 = vpop.f32.mrf.mxu0
        %v1695 = vadd.f32 %v1646, %v1694
        %v1696 = vpop.f32.mrf.mxu0
        %v1697 = vadd.f32 %v1648, %v1696
        %1698 = vdwg.mxu0
        %1699 = vmatpush.bf16.msra.mxu0 %v1462
        %1700 = vmatpush.bf16.msra.mxu0 %v1461
        %1701 = vmatpush.bf16.msra.mxu0 %v1460
        %1702 = vmatpush.bf16.msra.mxu0 %v1459
        %1703 = vmatpush.bf16.msra.mxu0 %v1458
        %1704 = vmatpush.bf16.msra.mxu0 %v1457
        %1705 = vmatpush.bf16.msra.mxu0 %v1456
        %1706 = vmatpush.bf16.msra.mxu0 %v1455
        %1707 = vmatmul.bf16.gmra.mxu0 %v547
        %v1708 = vpop.f32.mrf.mxu0
        %v1709 = vadd.f32 %v1660, %v1708
        %v1710 = vpop.f32.mrf.mxu0
        %v1711 = vadd.f32 %v1662, %v1710
        %1712 = vmatmul.bf16.gmra.mxu0 %v550
        %v1713 = vpop.f32.mrf.mxu0
        %v1714 = vadd.f32 %v1665, %v1713
        %v1715 = vpop.f32.mrf.mxu0
        %v1716 = vadd.f32 %v1667, %v1715
        %1717 = vmatmul.bf16.gmra.mxu0 %v553
        %v1718 = vpop.f32.mrf.mxu0
        %v1719 = vadd.f32 %v1670, %v1718
        %v1720 = vpop.f32.mrf.mxu0
        %v1721 = vadd.f32 %v1672, %v1720
        %1722 = vmatmul.bf16.gmra.mxu0 %v556
        %v1723 = vpop.f32.mrf.mxu0
        %v1724 = vadd.f32 %v1675, %v1723
        %v1725 = vpop.f32.mrf.mxu0
        %v1726 = vadd.f32 %v1677, %v1725
        %1727 = vmatmul.bf16.gmra.mxu0 %v559
        %v1728 = vpop.f32.mrf.mxu0
        %v1729 = vadd.f32 %v1680, %v1728
        %v1730 = vpop.f32.mrf.mxu0
        %v1731 = vadd.f32 %v1682, %v1730
        %1732 = vmatmul.bf16.gmra.mxu0 %v562
        %v1733 = vpop.f32.mrf.mxu0
        %v1734 = vadd.f32 %v1685, %v1733
        %v1735 = vpop.f32.mrf.mxu0
        %v1736 = vadd.f32 %v1687, %v1735
        %1737 = vmatmul.bf16.gmra.mxu0 %v565
        %v1738 = vpop.f32.mrf.mxu0
        %v1739 = vadd.f32 %v1690, %v1738
        %v1740 = vpop.f32.mrf.mxu0
        %v1741 = vadd.f32 %v1692, %v1740
        %1742 = vmatmul.bf16.gmra.mxu0 %v568
        %v1743 = vpop.f32.mrf.mxu0
        %v1744 = vadd.f32 %v1695, %v1743
        %v1745 = vpop.f32.mrf.mxu0
        %v1746 = vadd.f32 %v1697, %v1745
        %1747 = vdwg.mxu0
        %v1750 = vunpack.c.l.b16 %v244
        %v1751 = vunpack.c.l.b16 %v245
        %v1752 = vpack.c.b16 %v1751, %v1750
        %v1755 = vunpack.c.l.b16 %v246
        %v1756 = vpack.c.b16 %v1755, %v1755
        %v1758 = vshrl.u32 %v1752, 16
        %v1760 = vshll.u32 %v1752, 16
        %v1762 = vrot.slane %v1760, 1
        %v1763 = vor.u32 %v1758, %v1762
        %v1765 = vshll.u32 %v1756, 16
        %v1767 = vrot.slane %v1765, 1
        %v1768 = vsel %vm325, %v1763, %v1767
        %v1770 = vrot.slane %v1752, 1
        %v1771 = vrot.slane %v1756, 1
        %v1772 = vsel %vm430, %v1770, %v1771
        %v1774 = vrot.slane %v1758, 1
        %v1775 = vrot.slane %v1760, 2
        %v1776 = vor.u32 %v1774, %v1775
        %v1777 = vshrl.u32 %v1756, 16
        %v1779 = vrot.slane %v1777, 1
        %v1780 = vrot.slane %v1765, 2
        %v1781 = vor.u32 %v1779, %v1780
        %v1782 = vsel %vm463, %v1776, %v1781
        %v1784 = vrot.slane %v1752, 2
        %v1785 = vrot.slane %v1756, 2
        %v1786 = vsel %vm544, %v1784, %v1785
        %s1788 = scalar_lea.vmem [#allocation2], 640
        %v1789 = vld [vmem:[%s1788] sm:$0xf]
        %v1790 = vld [vmem:[%s1788 + $0x4] sm:$0xf]
        %v1791 = vld [vmem:[%s1788 + $0x8] sm:$0xf]
        %v1792 = vld [vmem:[%s1788 + $0xc] sm:$0xf]
        %v1793 = vld [vmem:[%s1788 + $0x10] sm:$0xf]
        %v1794 = vld [vmem:[%s1788 + $0x14] sm:$0xf]
        %v1795 = vld [vmem:[%s1788 + $0x18] sm:$0xf]
        %v1796 = vld [vmem:[%s1788 + $0x1c] sm:$0xf]
        %v1797 = vld [vmem:[%s1788 + $0x20] sm:$0xf]
        %v1798 = vld [vmem:[%s1788 + $0x24] sm:$0xf]
        %v1799 = vld [vmem:[%s1788 + $0x28] sm:$0xf]
        %v1800 = vld [vmem:[%s1788 + $0x2c] sm:$0xf]
        %v1801 = vld [vmem:[%s1788 + $0x30] sm:$0xf]
        %v1802 = vld [vmem:[%s1788 + $0x34] sm:$0xf]
        %v1803 = vld [vmem:[%s1788 + $0x38] sm:$0xf]
        %v1804 = vld [vmem:[%s1788 + $0x3c] sm:$0xf]
        %v1805 = vld [vmem:[%s1788 + $0x40] sm:$0xf]
        %v1806 = vld [vmem:[%s1788 + $0x44] sm:$0xf]
        %v1807 = vld [vmem:[%s1788 + $0x48] sm:$0xf]
        %v1808 = vld [vmem:[%s1788 + $0x4c] sm:$0xf]
        %v1809 = vld [vmem:[%s1788 + $0x50] sm:$0xf]
        %v1810 = vld [vmem:[%s1788 + $0x54] sm:$0xf]
        %v1811 = vld [vmem:[%s1788 + $0x58] sm:$0xf]
        %v1812 = vld [vmem:[%s1788 + $0x5c] sm:$0xf]
        %v1813 = vld [vmem:[%s1788 + $0x60] sm:$0xf]
        %v1814 = vld [vmem:[%s1788 + $0x64] sm:$0xf]
        %v1815 = vld [vmem:[%s1788 + $0x68] sm:$0xf]
        %v1816 = vld [vmem:[%s1788 + $0x6c] sm:$0xf]
        %v1817 = vld [vmem:[%s1788 + $0x70] sm:$0xf]
        %v1818 = vld [vmem:[%s1788 + $0x74] sm:$0xf]
        %v1819 = vld [vmem:[%s1788 + $0x78] sm:$0xf]
        %v1820 = vld [vmem:[%s1788 + $0x7c] sm:$0xf]
        %v1821 = vld [vmem:[%s1788 + $0x80] sm:$0xf]
        %v1822 = vld [vmem:[%s1788 + $0x84] sm:$0xf]
        %v1823 = vld [vmem:[%s1788 + $0x88] sm:$0xf]
        %v1824 = vld [vmem:[%s1788 + $0x8c] sm:$0xf]
        %v1825 = vld [vmem:[%s1788 + $0x90] sm:$0xf]
        %v1826 = vld [vmem:[%s1788 + $0x94] sm:$0xf]
        %v1827 = vld [vmem:[%s1788 + $0x98] sm:$0xf]
        %v1828 = vld [vmem:[%s1788 + $0x9c] sm:$0xf]
        %v1829 = vld [vmem:[%s1788 + $0xa0] sm:$0xf]
        %v1830 = vld [vmem:[%s1788 + $0xa4] sm:$0xf]
        %v1831 = vld [vmem:[%s1788 + $0xa8] sm:$0xf]
        %v1832 = vld [vmem:[%s1788 + $0xac] sm:$0xf]
        %v1833 = vld [vmem:[%s1788 + $0xb0] sm:$0xf]
        %v1834 = vld [vmem:[%s1788 + $0xb4] sm:$0xf]
        %v1835 = vld [vmem:[%s1788 + $0xb8] sm:$0xf]
        %v1836 = vld [vmem:[%s1788 + $0xbc] sm:$0xf]
        %v1837 = vld [vmem:[%s1788 + $0xc0] sm:$0xf]
        %v1838 = vld [vmem:[%s1788 + $0xc4] sm:$0xf]
        %v1839 = vld [vmem:[%s1788 + $0xc8] sm:$0xf]
        %v1840 = vld [vmem:[%s1788 + $0xcc] sm:$0xf]
        %v1841 = vld [vmem:[%s1788 + $0xd0] sm:$0xf]
        %v1842 = vld [vmem:[%s1788 + $0xd4] sm:$0xf]
        %v1843 = vld [vmem:[%s1788 + $0xd8] sm:$0xf]
        %v1844 = vld [vmem:[%s1788 + $0xdc] sm:$0xf]
        %v1845 = vld [vmem:[%s1788 + $0xe0] sm:$0xf]
        %v1846 = vld [vmem:[%s1788 + $0xe4] sm:$0xf]
        %v1847 = vld [vmem:[%s1788 + $0xe8] sm:$0xf]
        %v1848 = vld [vmem:[%s1788 + $0xec] sm:$0xf]
        %v1849 = vld [vmem:[%s1788 + $0xf0] sm:$0xf]
        %v1850 = vld [vmem:[%s1788 + $0xf4] sm:$0xf]
        %v1851 = vld [vmem:[%s1788 + $0xf8] sm:$0xf]
        %v1852 = vld [vmem:[%s1788 + $0xfc] sm:$0xf]
        %v1853 = vld [vmem:[%s1788 + $0x100] sm:$0xf]
        %v1854 = vld [vmem:[%s1788 + $0x104] sm:$0xf]
        %v1855 = vld [vmem:[%s1788 + $0x108] sm:$0xf]
        %v1856 = vld [vmem:[%s1788 + $0x10c] sm:$0xf]
        %v1857 = vld [vmem:[%s1788 + $0x110] sm:$0xf]
        %v1858 = vld [vmem:[%s1788 + $0x114] sm:$0xf]
        %v1859 = vld [vmem:[%s1788 + $0x118] sm:$0xf]
        %v1860 = vld [vmem:[%s1788 + $0x11c] sm:$0xf]
        %v1861 = vld [vmem:[%s1788 + $0x120] sm:$0xf]
        %v1862 = vld [vmem:[%s1788 + $0x124] sm:$0xf]
        %v1863 = vld [vmem:[%s1788 + $0x128] sm:$0xf]
        %v1864 = vld [vmem:[%s1788 + $0x12c] sm:$0xf]
        %v1865 = vld [vmem:[%s1788 + $0x130] sm:$0xf]
        %v1866 = vld [vmem:[%s1788 + $0x134] sm:$0xf]
        %v1867 = vld [vmem:[%s1788 + $0x138] sm:$0xf]
        %v1868 = vld [vmem:[%s1788 + $0x13c] sm:$0xf]
        %v1949 = vunpack.c.l.b16 %v1789
        %v1950 = vunpack.c.l.b16 %v1790
        %v1951 = vunpack.c.l.b16 %v1791
        %v1952 = vunpack.c.l.b16 %v1792
        %v1953 = vunpack.c.l.b16 %v1793
        %v1954 = vunpack.c.l.b16 %v1794
        %v1955 = vunpack.c.l.b16 %v1795
        %v1956 = vunpack.c.l.b16 %v1796
        %v1957 = vunpack.c.l.b16 %v1797
        %v1958 = vunpack.c.l.b16 %v1798
        %v1959 = vunpack.c.l.b16 %v1799
        %v1960 = vunpack.c.l.b16 %v1800
        %v1961 = vunpack.c.l.b16 %v1801
        %v1962 = vunpack.c.l.b16 %v1802
        %v1963 = vunpack.c.l.b16 %v1803
        %v1964 = vunpack.c.l.b16 %v1804
        %v1965 = vunpack.c.l.b16 %v1805
        %v1966 = vunpack.c.l.b16 %v1806
        %v1967 = vunpack.c.l.b16 %v1807
        %v1968 = vunpack.c.l.b16 %v1808
        %v1969 = vunpack.c.l.b16 %v1809
        %v1970 = vunpack.c.l.b16 %v1810
        %v1971 = vunpack.c.l.b16 %v1811
        %v1972 = vunpack.c.l.b16 %v1812
        %v1973 = vunpack.c.l.b16 %v1813
        %v1974 = vunpack.c.l.b16 %v1814
        %v1975 = vunpack.c.l.b16 %v1815
        %v1976 = vunpack.c.l.b16 %v1816
        %v1977 = vunpack.c.l.b16 %v1817
        %v1978 = vunpack.c.l.b16 %v1818
        %v1979 = vunpack.c.l.b16 %v1819
        %v1980 = vunpack.c.l.b16 %v1820
        %v1981 = vunpack.c.l.b16 %v1821
        %v1982 = vunpack.c.l.b16 %v1822
        %v1983 = vunpack.c.l.b16 %v1823
        %v1984 = vunpack.c.l.b16 %v1824
        %v1985 = vunpack.c.l.b16 %v1825
        %v1986 = vunpack.c.l.b16 %v1826
        %v1987 = vunpack.c.l.b16 %v1827
        %v1988 = vunpack.c.l.b16 %v1828
        %v1989 = vunpack.c.l.b16 %v1829
        %v1990 = vunpack.c.l.b16 %v1830
        %v1991 = vunpack.c.l.b16 %v1831
        %v1992 = vunpack.c.l.b16 %v1832
        %v1993 = vunpack.c.l.b16 %v1833
        %v1994 = vunpack.c.l.b16 %v1834
        %v1995 = vunpack.c.l.b16 %v1835
        %v1996 = vunpack.c.l.b16 %v1836
        %v1997 = vunpack.c.l.b16 %v1837
        %v1998 = vunpack.c.l.b16 %v1838
        %v1999 = vunpack.c.l.b16 %v1839
        %v2000 = vunpack.c.l.b16 %v1840
        %v2001 = vunpack.c.l.b16 %v1841
        %v2002 = vunpack.c.l.b16 %v1842
        %v2003 = vunpack.c.l.b16 %v1843
        %v2004 = vunpack.c.l.b16 %v1844
        %v2005 = vunpack.c.l.b16 %v1845
        %v2006 = vunpack.c.l.b16 %v1846
        %v2007 = vunpack.c.l.b16 %v1847
        %v2008 = vunpack.c.l.b16 %v1848
        %v2009 = vunpack.c.l.b16 %v1849
        %v2010 = vunpack.c.l.b16 %v1850
        %v2011 = vunpack.c.l.b16 %v1851
        %v2012 = vunpack.c.l.b16 %v1852
        %v2013 = vunpack.c.l.b16 %v1853
        %v2014 = vunpack.c.l.b16 %v1854
        %v2015 = vunpack.c.l.b16 %v1855
        %v2016 = vunpack.c.l.b16 %v1856
        %v2017 = vunpack.c.l.b16 %v1857
        %v2018 = vunpack.c.l.b16 %v1858
        %v2019 = vunpack.c.l.b16 %v1859
        %v2020 = vunpack.c.l.b16 %v1860
        %v2021 = vunpack.c.l.b16 %v1861
        %v2022 = vunpack.c.l.b16 %v1862
        %v2023 = vunpack.c.l.b16 %v1863
        %v2024 = vunpack.c.l.b16 %v1864
        %v2025 = vunpack.c.l.b16 %v1865
        %v2026 = vunpack.c.l.b16 %v1866
        %v2027 = vunpack.c.l.b16 %v1867
        %v2028 = vunpack.c.l.b16 %v1868
        %v2029 = vpack.c.b16 %v1950, %v1949
        %v2030 = vpack.c.b16 %v1952, %v1951
        %v2031 = vpack.c.b16 %v1954, %v1953
        %v2032 = vpack.c.b16 %v1956, %v1955
        %v2033 = vpack.c.b16 %v1958, %v1957
        %v2034 = vpack.c.b16 %v1960, %v1959
        %v2035 = vpack.c.b16 %v1962, %v1961
        %v2036 = vpack.c.b16 %v1964, %v1963
        %v2037 = vpack.c.b16 %v1966, %v1965
        %v2038 = vpack.c.b16 %v1968, %v1967
        %v2039 = vpack.c.b16 %v1970, %v1969
        %v2040 = vpack.c.b16 %v1972, %v1971
        %v2041 = vpack.c.b16 %v1974, %v1973
        %v2042 = vpack.c.b16 %v1976, %v1975
        %v2043 = vpack.c.b16 %v1978, %v1977
        %v2044 = vpack.c.b16 %v1980, %v1979
        %v2045 = vpack.c.b16 %v1982, %v1981
        %v2046 = vpack.c.b16 %v1984, %v1983
        %v2047 = vpack.c.b16 %v1986, %v1985
        %v2048 = vpack.c.b16 %v1988, %v1987
        %v2049 = vpack.c.b16 %v1990, %v1989
        %v2050 = vpack.c.b16 %v1992, %v1991
        %v2051 = vpack.c.b16 %v1994, %v1993
        %v2052 = vpack.c.b16 %v1996, %v1995
        %v2053 = vpack.c.b16 %v1998, %v1997
        %v2054 = vpack.c.b16 %v2000, %v1999
        %v2055 = vpack.c.b16 %v2002, %v2001
        %v2056 = vpack.c.b16 %v2004, %v2003
        %v2057 = vpack.c.b16 %v2006, %v2005
        %v2058 = vpack.c.b16 %v2008, %v2007
        %v2059 = vpack.c.b16 %v2010, %v2009
        %v2060 = vpack.c.b16 %v2012, %v2011
        %v2061 = vpack.c.b16 %v2014, %v2013
        %v2062 = vpack.c.b16 %v2016, %v2015
        %v2063 = vpack.c.b16 %v2018, %v2017
        %v2064 = vpack.c.b16 %v2020, %v2019
        %v2065 = vpack.c.b16 %v2022, %v2021
        %v2066 = vpack.c.b16 %v2024, %v2023
        %v2067 = vpack.c.b16 %v2026, %v2025
        %v2068 = vpack.c.b16 %v2028, %v2027
        %2109 = vmatpush.bf16.msra.mxu0 %v2036
        %2110 = vmatpush.bf16.msra.mxu0 %v2035
        %2111 = vmatpush.bf16.msra.mxu0 %v2034
        %2112 = vmatpush.bf16.msra.mxu0 %v2033
        %2113 = vmatpush.bf16.msra.mxu0 %v2032
        %2114 = vmatpush.bf16.msra.mxu0 %v2031
        %2115 = vmatpush.bf16.msra.mxu0 %v2030
        %2116 = vmatpush.bf16.msra.mxu0 %v2029
        %2117 = vmatmul.bf16.gmra.mxu0 %v287
        %v2118 = vpop.f32.mrf.mxu0
        %v2119 = vadd.f32 0.0, %v2118
        %v2120 = vpop.f32.mrf.mxu0
        %v2121 = vadd.f32 0.0, %v2120
        %2122 = vmatmul.bf16.gmra.mxu0 %v288
        %v2123 = vpop.f32.mrf.mxu0
        %v2124 = vadd.f32 0.0, %v2123
        %v2125 = vpop.f32.mrf.mxu0
        %v2126 = vadd.f32 0.0, %v2125
        %2127 = vmatmul.bf16.gmra.mxu0 %v289
        %v2128 = vpop.f32.mrf.mxu0
        %v2129 = vadd.f32 0.0, %v2128
        %v2130 = vpop.f32.mrf.mxu0
        %v2131 = vadd.f32 0.0, %v2130
        %2132 = vmatmul.bf16.gmra.mxu0 %v290
        %v2133 = vpop.f32.mrf.mxu0
        %v2134 = vadd.f32 0.0, %v2133
        %v2135 = vpop.f32.mrf.mxu0
        %v2136 = vadd.f32 0.0, %v2135
        %2137 = vmatmul.bf16.gmra.mxu0 %v291
        %v2138 = vpop.f32.mrf.mxu0
        %v2139 = vadd.f32 0.0, %v2138
        %v2140 = vpop.f32.mrf.mxu0
        %v2141 = vadd.f32 0.0, %v2140
        %2142 = vmatmul.bf16.gmra.mxu0 %v292
        %v2143 = vpop.f32.mrf.mxu0
        %v2144 = vadd.f32 0.0, %v2143
        %v2145 = vpop.f32.mrf.mxu0
        %v2146 = vadd.f32 0.0, %v2145
        %2147 = vmatmul.bf16.gmra.mxu0 %v661
        %v2148 = vpop.f32.mrf.mxu0
        %v2149 = vadd.f32 0.0, %v2148
        %v2150 = vpop.f32.mrf.mxu0
        %v2151 = vadd.f32 0.0, %v2150
        %2152 = vmatmul.bf16.gmra.mxu0 %v1752
        %v2153 = vpop.f32.mrf.mxu0
        %v2154 = vadd.f32 0.0, %v2153
        %v2155 = vpop.f32.mrf.mxu0
        %v2156 = vadd.f32 0.0, %v2155
        %2157 = vdwg.mxu0
        %2158 = vmatpush.bf16.msra.mxu0 %v2044
        %2159 = vmatpush.bf16.msra.mxu0 %v2043
        %2160 = vmatpush.bf16.msra.mxu0 %v2042
        %2161 = vmatpush.bf16.msra.mxu0 %v2041
        %2162 = vmatpush.bf16.msra.mxu0 %v2040
        %2163 = vmatpush.bf16.msra.mxu0 %v2039
        %2164 = vmatpush.bf16.msra.mxu0 %v2038
        %2165 = vmatpush.bf16.msra.mxu0 %v2037
        %2166 = vmatmul.bf16.gmra.mxu0 %v361
        %v2167 = vpop.f32.mrf.mxu0
        %v2168 = vadd.f32 %v2119, %v2167
        %v2169 = vpop.f32.mrf.mxu0
        %v2170 = vadd.f32 %v2121, %v2169
        %2171 = vmatmul.bf16.gmra.mxu0 %v373
        %v2172 = vpop.f32.mrf.mxu0
        %v2173 = vadd.f32 %v2124, %v2172
        %v2174 = vpop.f32.mrf.mxu0
        %v2175 = vadd.f32 %v2126, %v2174
        %2176 = vmatmul.bf16.gmra.mxu0 %v385
        %v2177 = vpop.f32.mrf.mxu0
        %v2178 = vadd.f32 %v2129, %v2177
        %v2179 = vpop.f32.mrf.mxu0
        %v2180 = vadd.f32 %v2131, %v2179
        %2181 = vmatmul.bf16.gmra.mxu0 %v397
        %v2182 = vpop.f32.mrf.mxu0
        %v2183 = vadd.f32 %v2134, %v2182
        %v2184 = vpop.f32.mrf.mxu0
        %v2185 = vadd.f32 %v2136, %v2184
        %2186 = vmatmul.bf16.gmra.mxu0 %v409
        %v2187 = vpop.f32.mrf.mxu0
        %v2188 = vadd.f32 %v2139, %v2187
        %v2189 = vpop.f32.mrf.mxu0
        %v2190 = vadd.f32 %v2141, %v2189
        %2191 = vmatmul.bf16.gmra.mxu0 %v421
        %v2192 = vpop.f32.mrf.mxu0
        %v2193 = vadd.f32 %v2144, %v2192
        %v2194 = vpop.f32.mrf.mxu0
        %v2195 = vadd.f32 %v2146, %v2194
        %2196 = vmatmul.bf16.gmra.mxu0 %v677
        %v2197 = vpop.f32.mrf.mxu0
        %v2198 = vadd.f32 %v2149, %v2197
        %v2199 = vpop.f32.mrf.mxu0
        %v2200 = vadd.f32 %v2151, %v2199
        %2201 = vmatmul.bf16.gmra.mxu0 %v1768
        %v2202 = vpop.f32.mrf.mxu0
        %v2203 = vadd.f32 %v2154, %v2202
        %v2204 = vpop.f32.mrf.mxu0
        %v2205 = vadd.f32 %v2156, %v2204
        %2206 = vdwg.mxu0
        %2207 = vmatpush.bf16.msra.mxu0 %v2052
        %2208 = vmatpush.bf16.msra.mxu0 %v2051
        %2209 = vmatpush.bf16.msra.mxu0 %v2050
        %2210 = vmatpush.bf16.msra.mxu0 %v2049
        %2211 = vmatpush.bf16.msra.mxu0 %v2048
        %2212 = vmatpush.bf16.msra.mxu0 %v2047
        %2213 = vmatpush.bf16.msra.mxu0 %v2046
        %2214 = vmatpush.bf16.msra.mxu0 %v2045
        %2215 = vmatmul.bf16.gmra.mxu0 %v439
        %v2216 = vpop.f32.mrf.mxu0
        %v2217 = vadd.f32 %v2168, %v2216
        %v2218 = vpop.f32.mrf.mxu0
        %v2219 = vadd.f32 %v2170, %v2218
        %2220 = vmatmul.bf16.gmra.mxu0 %v442
        %v2221 = vpop.f32.mrf.mxu0
        %v2222 = vadd.f32 %v2173, %v2221
        %v2223 = vpop.f32.mrf.mxu0
        %v2224 = vadd.f32 %v2175, %v2223
        %2225 = vmatmul.bf16.gmra.mxu0 %v445
        %v2226 = vpop.f32.mrf.mxu0
        %v2227 = vadd.f32 %v2178, %v2226
        %v2228 = vpop.f32.mrf.mxu0
        %v2229 = vadd.f32 %v2180, %v2228
        %2230 = vmatmul.bf16.gmra.mxu0 %v448
        %v2231 = vpop.f32.mrf.mxu0
        %v2232 = vadd.f32 %v2183, %v2231
        %v2233 = vpop.f32.mrf.mxu0
        %v2234 = vadd.f32 %v2185, %v2233
        %2235 = vmatmul.bf16.gmra.mxu0 %v451
        %v2236 = vpop.f32.mrf.mxu0
        %v2237 = vadd.f32 %v2188, %v2236
        %v2238 = vpop.f32.mrf.mxu0
        %v2239 = vadd.f32 %v2190, %v2238
        %2240 = vmatmul.bf16.gmra.mxu0 %v454
        %v2241 = vpop.f32.mrf.mxu0
        %v2242 = vadd.f32 %v2193, %v2241
        %v2243 = vpop.f32.mrf.mxu0
        %v2244 = vadd.f32 %v2195, %v2243
        %2245 = vmatmul.bf16.gmra.mxu0 %v681
        %v2246 = vpop.f32.mrf.mxu0
        %v2247 = vadd.f32 %v2198, %v2246
        %v2248 = vpop.f32.mrf.mxu0
        %v2249 = vadd.f32 %v2200, %v2248
        %2250 = vmatmul.bf16.gmra.mxu0 %v1772
        %v2251 = vpop.f32.mrf.mxu0
        %v2252 = vadd.f32 %v2203, %v2251
        %v2253 = vpop.f32.mrf.mxu0
        %v2254 = vadd.f32 %v2205, %v2253
        %2255 = vdwg.mxu0
        %2256 = vmatpush.bf16.msra.mxu0 %v2060
        %2257 = vmatpush.bf16.msra.mxu0 %v2059
        %2258 = vmatpush.bf16.msra.mxu0 %v2058
        %2259 = vmatpush.bf16.msra.mxu0 %v2057
        %2260 = vmatpush.bf16.msra.mxu0 %v2056
        %2261 = vmatpush.bf16.msra.mxu0 %v2055
        %2262 = vmatpush.bf16.msra.mxu0 %v2054
        %2263 = vmatpush.bf16.msra.mxu0 %v2053
        %2264 = vmatmul.bf16.gmra.mxu0 %v490
        %v2265 = vpop.f32.mrf.mxu0
        %v2266 = vadd.f32 %v2217, %v2265
        %v2267 = vpop.f32.mrf.mxu0
        %v2268 = vadd.f32 %v2219, %v2267
        %2269 = vmatmul.bf16.gmra.mxu0 %v499
        %v2270 = vpop.f32.mrf.mxu0
        %v2271 = vadd.f32 %v2222, %v2270
        %v2272 = vpop.f32.mrf.mxu0
        %v2273 = vadd.f32 %v2224, %v2272
        %2274 = vmatmul.bf16.gmra.mxu0 %v508
        %v2275 = vpop.f32.mrf.mxu0
        %v2276 = vadd.f32 %v2227, %v2275
        %v2277 = vpop.f32.mrf.mxu0
        %v2278 = vadd.f32 %v2229, %v2277
        %2279 = vmatmul.bf16.gmra.mxu0 %v517
        %v2280 = vpop.f32.mrf.mxu0
        %v2281 = vadd.f32 %v2232, %v2280
        %v2282 = vpop.f32.mrf.mxu0
        %v2283 = vadd.f32 %v2234, %v2282
        %2284 = vmatmul.bf16.gmra.mxu0 %v526
        %v2285 = vpop.f32.mrf.mxu0
        %v2286 = vadd.f32 %v2237, %v2285
        %v2287 = vpop.f32.mrf.mxu0
        %v2288 = vadd.f32 %v2239, %v2287
        %2289 = vmatmul.bf16.gmra.mxu0 %v535
        %v2290 = vpop.f32.mrf.mxu0
        %v2291 = vadd.f32 %v2242, %v2290
        %v2292 = vpop.f32.mrf.mxu0
        %v2293 = vadd.f32 %v2244, %v2292
        %2294 = vmatmul.bf16.gmra.mxu0 %v691
        %v2295 = vpop.f32.mrf.mxu0
        %v2296 = vadd.f32 %v2247, %v2295
        %v2297 = vpop.f32.mrf.mxu0
        %v2298 = vadd.f32 %v2249, %v2297
        %2299 = vmatmul.bf16.gmra.mxu0 %v1782
        %v2300 = vpop.f32.mrf.mxu0
        %v2301 = vadd.f32 %v2252, %v2300
        %v2302 = vpop.f32.mrf.mxu0
        %v2303 = vadd.f32 %v2254, %v2302
        %2304 = vdwg.mxu0
        %2305 = vmatpush.bf16.msra.mxu0 %v2068
        %2306 = vmatpush.bf16.msra.mxu0 %v2067
        %2307 = vmatpush.bf16.msra.mxu0 %v2066
        %2308 = vmatpush.bf16.msra.mxu0 %v2065
        %2309 = vmatpush.bf16.msra.mxu0 %v2064
        %2310 = vmatpush.bf16.msra.mxu0 %v2063
        %2311 = vmatpush.bf16.msra.mxu0 %v2062
        %2312 = vmatpush.bf16.msra.mxu0 %v2061
        %2313 = vmatmul.bf16.gmra.mxu0 %v553
        %v2314 = vpop.f32.mrf.mxu0
        %v2315 = vadd.f32 %v2266, %v2314
        %v2316 = vpop.f32.mrf.mxu0
        %v2317 = vadd.f32 %v2268, %v2316
        %2318 = vmatmul.bf16.gmra.mxu0 %v556
        %v2319 = vpop.f32.mrf.mxu0
        %v2320 = vadd.f32 %v2271, %v2319
        %v2321 = vpop.f32.mrf.mxu0
        %v2322 = vadd.f32 %v2273, %v2321
        %2323 = vmatmul.bf16.gmra.mxu0 %v559
        %v2324 = vpop.f32.mrf.mxu0
        %v2325 = vadd.f32 %v2276, %v2324
        %v2326 = vpop.f32.mrf.mxu0
        %v2327 = vadd.f32 %v2278, %v2326
        %2328 = vmatmul.bf16.gmra.mxu0 %v562
        %v2329 = vpop.f32.mrf.mxu0
        %v2330 = vadd.f32 %v2281, %v2329
        %v2331 = vpop.f32.mrf.mxu0
        %v2332 = vadd.f32 %v2283, %v2331
        %2333 = vmatmul.bf16.gmra.mxu0 %v565
        %v2334 = vpop.f32.mrf.mxu0
        %v2335 = vadd.f32 %v2286, %v2334
        %v2336 = vpop.f32.mrf.mxu0
        %v2337 = vadd.f32 %v2288, %v2336
        %2338 = vmatmul.bf16.gmra.mxu0 %v568
        %v2339 = vpop.f32.mrf.mxu0
        %v2340 = vadd.f32 %v2291, %v2339
        %v2341 = vpop.f32.mrf.mxu0
        %v2342 = vadd.f32 %v2293, %v2341
        %2343 = vmatmul.bf16.gmra.mxu0 %v695
        %v2344 = vpop.f32.mrf.mxu0
        %v2345 = vadd.f32 %v2296, %v2344
        %v2346 = vpop.f32.mrf.mxu0
        %v2347 = vadd.f32 %v2298, %v2346
        %2348 = vmatmul.bf16.gmra.mxu0 %v1786
        %v2349 = vpop.f32.mrf.mxu0
        %v2350 = vadd.f32 %v2301, %v2349
        %v2351 = vpop.f32.mrf.mxu0
        %v2352 = vadd.f32 %v2303, %v2351
        %2353 = vdwg.mxu0
        %v2354 = vadd.f32 %v1709, %v2315
        %v2355 = vadd.f32 %v1711, %v2317
        %v2356 = vadd.f32 %v1714, %v2320
        %v2357 = vadd.f32 %v1716, %v2322
        %v2358 = vadd.f32 %v1719, %v2325
        %v2359 = vadd.f32 %v1721, %v2327
        %v2360 = vadd.f32 %v1724, %v2330
        %v2361 = vadd.f32 %v1726, %v2332
        %v2362 = vadd.f32 %v1729, %v2335
        %v2363 = vadd.f32 %v1731, %v2337
        %v2364 = vadd.f32 %v1734, %v2340
        %v2365 = vadd.f32 %v1736, %v2342
        %v2366 = vadd.f32 %v1739, %v2345
        %v2367 = vadd.f32 %v1741, %v2347
        %v2368 = vadd.f32 %v1744, %v2350
        %v2369 = vadd.f32 %v1746, %v2352
        %v2372 = vunpack.c.l.b16 %v247
        %v2373 = vunpack.c.l.b16 %v248
        %v2374 = vpack.c.b16 %v2373, %v2372
        %v2377 = vunpack.c.l.b16 %v249
        %v2378 = vpack.c.b16 %v2377, %v2377
        %v2380 = vshrl.u32 %v2374, 16
        %v2382 = vshll.u32 %v2374, 16
        %v2384 = vrot.slane %v2382, 1
        %v2385 = vor.u32 %v2380, %v2384
        %v2387 = vshll.u32 %v2378, 16
        %v2389 = vrot.slane %v2387, 1
        %v2390 = vsel %vm325, %v2385, %v2389
        %v2392 = vrot.slane %v2374, 1
        %v2393 = vrot.slane %v2378, 1
        %v2394 = vsel %vm430, %v2392, %v2393
        %v2396 = vrot.slane %v2380, 1
        %v2397 = vrot.slane %v2382, 2
        %v2398 = vor.u32 %v2396, %v2397
        %v2399 = vshrl.u32 %v2378, 16
        %v2401 = vrot.slane %v2399, 1
        %v2402 = vrot.slane %v2387, 2
        %v2403 = vor.u32 %v2401, %v2402
        %v2404 = vsel %vm463, %v2398, %v2403
        %v2406 = vrot.slane %v2374, 2
        %v2407 = vrot.slane %v2378, 2
        %v2408 = vsel %vm544, %v2406, %v2407
        %s2410 = scalar_lea.vmem [#allocation2], 960
        %v2411 = vld [vmem:[%s2410] sm:$0xf]
        %v2412 = vld [vmem:[%s2410 + $0x4] sm:$0xf]
        %v2413 = vld [vmem:[%s2410 + $0x8] sm:$0xf]
        %v2414 = vld [vmem:[%s2410 + $0xc] sm:$0xf]
        %v2415 = vld [vmem:[%s2410 + $0x10] sm:$0xf]
        %v2416 = vld [vmem:[%s2410 + $0x14] sm:$0xf]
        %v2417 = vld [vmem:[%s2410 + $0x18] sm:$0xf]
        %v2418 = vld [vmem:[%s2410 + $0x1c] sm:$0xf]
        %v2419 = vld [vmem:[%s2410 + $0x20] sm:$0xf]
        %v2420 = vld [vmem:[%s2410 + $0x24] sm:$0xf]
        %v2421 = vld [vmem:[%s2410 + $0x28] sm:$0xf]
        %v2422 = vld [vmem:[%s2410 + $0x2c] sm:$0xf]
        %v2423 = vld [vmem:[%s2410 + $0x30] sm:$0xf]
        %v2424 = vld [vmem:[%s2410 + $0x34] sm:$0xf]
        %v2425 = vld [vmem:[%s2410 + $0x38] sm:$0xf]
        %v2426 = vld [vmem:[%s2410 + $0x3c] sm:$0xf]
        %v2427 = vld [vmem:[%s2410 + $0x40] sm:$0xf]
        %v2428 = vld [vmem:[%s2410 + $0x44] sm:$0xf]
        %v2429 = vld [vmem:[%s2410 + $0x48] sm:$0xf]
        %v2430 = vld [vmem:[%s2410 + $0x4c] sm:$0xf]
        %v2431 = vld [vmem:[%s2410 + $0x50] sm:$0xf]
        %v2432 = vld [vmem:[%s2410 + $0x54] sm:$0xf]
        %v2433 = vld [vmem:[%s2410 + $0x58] sm:$0xf]
        %v2434 = vld [vmem:[%s2410 + $0x5c] sm:$0xf]
        %v2435 = vld [vmem:[%s2410 + $0x60] sm:$0xf]
        %v2436 = vld [vmem:[%s2410 + $0x64] sm:$0xf]
        %v2437 = vld [vmem:[%s2410 + $0x68] sm:$0xf]
        %v2438 = vld [vmem:[%s2410 + $0x6c] sm:$0xf]
        %v2439 = vld [vmem:[%s2410 + $0x70] sm:$0xf]
        %v2440 = vld [vmem:[%s2410 + $0x74] sm:$0xf]
        %v2441 = vld [vmem:[%s2410 + $0x78] sm:$0xf]
        %v2442 = vld [vmem:[%s2410 + $0x7c] sm:$0xf]
        %v2443 = vld [vmem:[%s2410 + $0x80] sm:$0xf]
        %v2444 = vld [vmem:[%s2410 + $0x84] sm:$0xf]
        %v2445 = vld [vmem:[%s2410 + $0x88] sm:$0xf]
        %v2446 = vld [vmem:[%s2410 + $0x8c] sm:$0xf]
        %v2447 = vld [vmem:[%s2410 + $0x90] sm:$0xf]
        %v2448 = vld [vmem:[%s2410 + $0x94] sm:$0xf]
        %v2449 = vld [vmem:[%s2410 + $0x98] sm:$0xf]
        %v2450 = vld [vmem:[%s2410 + $0x9c] sm:$0xf]
        %v2451 = vld [vmem:[%s2410 + $0xa0] sm:$0xf]
        %v2452 = vld [vmem:[%s2410 + $0xa4] sm:$0xf]
        %v2453 = vld [vmem:[%s2410 + $0xa8] sm:$0xf]
        %v2454 = vld [vmem:[%s2410 + $0xac] sm:$0xf]
        %v2455 = vld [vmem:[%s2410 + $0xb0] sm:$0xf]
        %v2456 = vld [vmem:[%s2410 + $0xb4] sm:$0xf]
        %v2457 = vld [vmem:[%s2410 + $0xb8] sm:$0xf]
        %v2458 = vld [vmem:[%s2410 + $0xbc] sm:$0xf]
        %v2459 = vld [vmem:[%s2410 + $0xc0] sm:$0xf]
        %v2460 = vld [vmem:[%s2410 + $0xc4] sm:$0xf]
        %v2461 = vld [vmem:[%s2410 + $0xc8] sm:$0xf]
        %v2462 = vld [vmem:[%s2410 + $0xcc] sm:$0xf]
        %v2463 = vld [vmem:[%s2410 + $0xd0] sm:$0xf]
        %v2464 = vld [vmem:[%s2410 + $0xd4] sm:$0xf]
        %v2465 = vld [vmem:[%s2410 + $0xd8] sm:$0xf]
        %v2466 = vld [vmem:[%s2410 + $0xdc] sm:$0xf]
        %v2467 = vld [vmem:[%s2410 + $0xe0] sm:$0xf]
        %v2468 = vld [vmem:[%s2410 + $0xe4] sm:$0xf]
        %v2469 = vld [vmem:[%s2410 + $0xe8] sm:$0xf]
        %v2470 = vld [vmem:[%s2410 + $0xec] sm:$0xf]
        %v2471 = vld [vmem:[%s2410 + $0xf0] sm:$0xf]
        %v2472 = vld [vmem:[%s2410 + $0xf4] sm:$0xf]
        %v2473 = vld [vmem:[%s2410 + $0xf8] sm:$0xf]
        %v2474 = vld [vmem:[%s2410 + $0xfc] sm:$0xf]
        %v2475 = vld [vmem:[%s2410 + $0x100] sm:$0xf]
        %v2476 = vld [vmem:[%s2410 + $0x104] sm:$0xf]
        %v2477 = vld [vmem:[%s2410 + $0x108] sm:$0xf]
        %v2478 = vld [vmem:[%s2410 + $0x10c] sm:$0xf]
        %v2479 = vld [vmem:[%s2410 + $0x110] sm:$0xf]
        %v2480 = vld [vmem:[%s2410 + $0x114] sm:$0xf]
        %v2481 = vld [vmem:[%s2410 + $0x118] sm:$0xf]
        %v2482 = vld [vmem:[%s2410 + $0x11c] sm:$0xf]
        %v2483 = vld [vmem:[%s2410 + $0x120] sm:$0xf]
        %v2484 = vld [vmem:[%s2410 + $0x124] sm:$0xf]
        %v2485 = vld [vmem:[%s2410 + $0x128] sm:$0xf]
        %v2486 = vld [vmem:[%s2410 + $0x12c] sm:$0xf]
        %v2487 = vld [vmem:[%s2410 + $0x130] sm:$0xf]
        %v2488 = vld [vmem:[%s2410 + $0x134] sm:$0xf]
        %v2489 = vld [vmem:[%s2410 + $0x138] sm:$0xf]
        %v2490 = vld [vmem:[%s2410 + $0x13c] sm:$0xf]
        %v2571 = vunpack.c.l.b16 %v2411
        %v2572 = vunpack.c.l.b16 %v2412
        %v2573 = vunpack.c.l.b16 %v2413
        %v2574 = vunpack.c.l.b16 %v2414
        %v2575 = vunpack.c.l.b16 %v2415
        %v2576 = vunpack.c.l.b16 %v2416
        %v2577 = vunpack.c.l.b16 %v2417
        %v2578 = vunpack.c.l.b16 %v2418
        %v2579 = vunpack.c.l.b16 %v2419
        %v2580 = vunpack.c.l.b16 %v2420
        %v2581 = vunpack.c.l.b16 %v2421
        %v2582 = vunpack.c.l.b16 %v2422
        %v2583 = vunpack.c.l.b16 %v2423
        %v2584 = vunpack.c.l.b16 %v2424
        %v2585 = vunpack.c.l.b16 %v2425
        %v2586 = vunpack.c.l.b16 %v2426
        %v2587 = vunpack.c.l.b16 %v2427
        %v2588 = vunpack.c.l.b16 %v2428
        %v2589 = vunpack.c.l.b16 %v2429
        %v2590 = vunpack.c.l.b16 %v2430
        %v2591 = vunpack.c.l.b16 %v2431
        %v2592 = vunpack.c.l.b16 %v2432
        %v2593 = vunpack.c.l.b16 %v2433
        %v2594 = vunpack.c.l.b16 %v2434
        %v2595 = vunpack.c.l.b16 %v2435
        %v2596 = vunpack.c.l.b16 %v2436
        %v2597 = vunpack.c.l.b16 %v2437
        %v2598 = vunpack.c.l.b16 %v2438
        %v2599 = vunpack.c.l.b16 %v2439
        %v2600 = vunpack.c.l.b16 %v2440
        %v2601 = vunpack.c.l.b16 %v2441
        %v2602 = vunpack.c.l.b16 %v2442
        %v2603 = vunpack.c.l.b16 %v2443
        %v2604 = vunpack.c.l.b16 %v2444
        %v2605 = vunpack.c.l.b16 %v2445
        %v2606 = vunpack.c.l.b16 %v2446
        %v2607 = vunpack.c.l.b16 %v2447
        %v2608 = vunpack.c.l.b16 %v2448
        %v2609 = vunpack.c.l.b16 %v2449
        %v2610 = vunpack.c.l.b16 %v2450
        %v2611 = vunpack.c.l.b16 %v2451
        %v2612 = vunpack.c.l.b16 %v2452
        %v2613 = vunpack.c.l.b16 %v2453
        %v2614 = vunpack.c.l.b16 %v2454
        %v2615 = vunpack.c.l.b16 %v2455
        %v2616 = vunpack.c.l.b16 %v2456
        %v2617 = vunpack.c.l.b16 %v2457
        %v2618 = vunpack.c.l.b16 %v2458
        %v2619 = vunpack.c.l.b16 %v2459
        %v2620 = vunpack.c.l.b16 %v2460
        %v2621 = vunpack.c.l.b16 %v2461
        %v2622 = vunpack.c.l.b16 %v2462
        %v2623 = vunpack.c.l.b16 %v2463
        %v2624 = vunpack.c.l.b16 %v2464
        %v2625 = vunpack.c.l.b16 %v2465
        %v2626 = vunpack.c.l.b16 %v2466
        %v2627 = vunpack.c.l.b16 %v2467
        %v2628 = vunpack.c.l.b16 %v2468
        %v2629 = vunpack.c.l.b16 %v2469
        %v2630 = vunpack.c.l.b16 %v2470
        %v2631 = vunpack.c.l.b16 %v2471
        %v2632 = vunpack.c.l.b16 %v2472
        %v2633 = vunpack.c.l.b16 %v2473
        %v2634 = vunpack.c.l.b16 %v2474
        %v2635 = vunpack.c.l.b16 %v2475
        %v2636 = vunpack.c.l.b16 %v2476
        %v2637 = vunpack.c.l.b16 %v2477
        %v2638 = vunpack.c.l.b16 %v2478
        %v2639 = vunpack.c.l.b16 %v2479
        %v2640 = vunpack.c.l.b16 %v2480
        %v2641 = vunpack.c.l.b16 %v2481
        %v2642 = vunpack.c.l.b16 %v2482
        %v2643 = vunpack.c.l.b16 %v2483
        %v2644 = vunpack.c.l.b16 %v2484
        %v2645 = vunpack.c.l.b16 %v2485
        %v2646 = vunpack.c.l.b16 %v2486
        %v2647 = vunpack.c.l.b16 %v2487
        %v2648 = vunpack.c.l.b16 %v2488
        %v2649 = vunpack.c.l.b16 %v2489
        %v2650 = vunpack.c.l.b16 %v2490
        %v2651 = vpack.c.b16 %v2572, %v2571
        %v2652 = vpack.c.b16 %v2574, %v2573
        %v2653 = vpack.c.b16 %v2576, %v2575
        %v2654 = vpack.c.b16 %v2578, %v2577
        %v2655 = vpack.c.b16 %v2580, %v2579
        %v2656 = vpack.c.b16 %v2582, %v2581
        %v2657 = vpack.c.b16 %v2584, %v2583
        %v2658 = vpack.c.b16 %v2586, %v2585
        %v2659 = vpack.c.b16 %v2588, %v2587
        %v2660 = vpack.c.b16 %v2590, %v2589
        %v2661 = vpack.c.b16 %v2592, %v2591
        %v2662 = vpack.c.b16 %v2594, %v2593
        %v2663 = vpack.c.b16 %v2596, %v2595
        %v2664 = vpack.c.b16 %v2598, %v2597
        %v2665 = vpack.c.b16 %v2600, %v2599
        %v2666 = vpack.c.b16 %v2602, %v2601
        %v2667 = vpack.c.b16 %v2604, %v2603
        %v2668 = vpack.c.b16 %v2606, %v2605
        %v2669 = vpack.c.b16 %v2608, %v2607
        %v2670 = vpack.c.b16 %v2610, %v2609
        %v2671 = vpack.c.b16 %v2612, %v2611
        %v2672 = vpack.c.b16 %v2614, %v2613
        %v2673 = vpack.c.b16 %v2616, %v2615
        %v2674 = vpack.c.b16 %v2618, %v2617
        %v2675 = vpack.c.b16 %v2620, %v2619
        %v2676 = vpack.c.b16 %v2622, %v2621
        %v2677 = vpack.c.b16 %v2624, %v2623
        %v2678 = vpack.c.b16 %v2626, %v2625
        %v2679 = vpack.c.b16 %v2628, %v2627
        %v2680 = vpack.c.b16 %v2630, %v2629
        %v2681 = vpack.c.b16 %v2632, %v2631
        %v2682 = vpack.c.b16 %v2634, %v2633
        %v2683 = vpack.c.b16 %v2636, %v2635
        %v2684 = vpack.c.b16 %v2638, %v2637
        %v2685 = vpack.c.b16 %v2640, %v2639
        %v2686 = vpack.c.b16 %v2642, %v2641
        %v2687 = vpack.c.b16 %v2644, %v2643
        %v2688 = vpack.c.b16 %v2646, %v2645
        %v2689 = vpack.c.b16 %v2648, %v2647
        %v2690 = vpack.c.b16 %v2650, %v2649
        %2731 = vmatpush.bf16.msra.mxu0 %v2658
        %2732 = vmatpush.bf16.msra.mxu0 %v2657
        %2733 = vmatpush.bf16.msra.mxu0 %v2656
        %2734 = vmatpush.bf16.msra.mxu0 %v2655
        %2735 = vmatpush.bf16.msra.mxu0 %v2654
        %2736 = vmatpush.bf16.msra.mxu0 %v2653
        %2737 = vmatpush.bf16.msra.mxu0 %v2652
        %2738 = vmatpush.bf16.msra.mxu0 %v2651
        %2739 = vmatmul.bf16.gmra.mxu0 %v288
        %v2740 = vpop.f32.mrf.mxu0
        %v2741 = vadd.f32 0.0, %v2740
        %v2742 = vpop.f32.mrf.mxu0
        %v2743 = vadd.f32 0.0, %v2742
        %2744 = vmatmul.bf16.gmra.mxu0 %v289
        %v2745 = vpop.f32.mrf.mxu0
        %v2746 = vadd.f32 0.0, %v2745
        %v2747 = vpop.f32.mrf.mxu0
        %v2748 = vadd.f32 0.0, %v2747
        %2749 = vmatmul.bf16.gmra.mxu0 %v290
        %v2750 = vpop.f32.mrf.mxu0
        %v2751 = vadd.f32 0.0, %v2750
        %v2752 = vpop.f32.mrf.mxu0
        %v2753 = vadd.f32 0.0, %v2752
        %2754 = vmatmul.bf16.gmra.mxu0 %v291
        %v2755 = vpop.f32.mrf.mxu0
        %v2756 = vadd.f32 0.0, %v2755
        %v2757 = vpop.f32.mrf.mxu0
        %v2758 = vadd.f32 0.0, %v2757
        %2759 = vmatmul.bf16.gmra.mxu0 %v292
        %v2760 = vpop.f32.mrf.mxu0
        %v2761 = vadd.f32 0.0, %v2760
        %v2762 = vpop.f32.mrf.mxu0
        %v2763 = vadd.f32 0.0, %v2762
        %2764 = vmatmul.bf16.gmra.mxu0 %v661
        %v2765 = vpop.f32.mrf.mxu0
        %v2766 = vadd.f32 0.0, %v2765
        %v2767 = vpop.f32.mrf.mxu0
        %v2768 = vadd.f32 0.0, %v2767
        %2769 = vmatmul.bf16.gmra.mxu0 %v1752
        %v2770 = vpop.f32.mrf.mxu0
        %v2771 = vadd.f32 0.0, %v2770
        %v2772 = vpop.f32.mrf.mxu0
        %v2773 = vadd.f32 0.0, %v2772
        %2774 = vmatmul.bf16.gmra.mxu0 %v2374
        %v2775 = vpop.f32.mrf.mxu0
        %v2776 = vadd.f32 0.0, %v2775
        %v2777 = vpop.f32.mrf.mxu0
        %v2778 = vadd.f32 0.0, %v2777
        %2779 = vdwg.mxu0
        %2780 = vmatpush.bf16.msra.mxu0 %v2666
        %2781 = vmatpush.bf16.msra.mxu0 %v2665
        %2782 = vmatpush.bf16.msra.mxu0 %v2664
        %2783 = vmatpush.bf16.msra.mxu0 %v2663
        %2784 = vmatpush.bf16.msra.mxu0 %v2662
        %2785 = vmatpush.bf16.msra.mxu0 %v2661
        %2786 = vmatpush.bf16.msra.mxu0 %v2660
        %2787 = vmatpush.bf16.msra.mxu0 %v2659
        %2788 = vmatmul.bf16.gmra.mxu0 %v373
        %v2789 = vpop.f32.mrf.mxu0
        %v2790 = vadd.f32 %v2741, %v2789
        %v2791 = vpop.f32.mrf.mxu0
        %v2792 = vadd.f32 %v2743, %v2791
        %2793 = vmatmul.bf16.gmra.mxu0 %v385
        %v2794 = vpop.f32.mrf.mxu0
        %v2795 = vadd.f32 %v2746, %v2794
        %v2796 = vpop.f32.mrf.mxu0
        %v2797 = vadd.f32 %v2748, %v2796
        %2798 = vmatmul.bf16.gmra.mxu0 %v397
        %v2799 = vpop.f32.mrf.mxu0
        %v2800 = vadd.f32 %v2751, %v2799
        %v2801 = vpop.f32.mrf.mxu0
        %v2802 = vadd.f32 %v2753, %v2801
        %2803 = vmatmul.bf16.gmra.mxu0 %v409
        %v2804 = vpop.f32.mrf.mxu0
        %v2805 = vadd.f32 %v2756, %v2804
        %v2806 = vpop.f32.mrf.mxu0
        %v2807 = vadd.f32 %v2758, %v2806
        %2808 = vmatmul.bf16.gmra.mxu0 %v421
        %v2809 = vpop.f32.mrf.mxu0
        %v2810 = vadd.f32 %v2761, %v2809
        %v2811 = vpop.f32.mrf.mxu0
        %v2812 = vadd.f32 %v2763, %v2811
        %2813 = vmatmul.bf16.gmra.mxu0 %v677
        %v2814 = vpop.f32.mrf.mxu0
        %v2815 = vadd.f32 %v2766, %v2814
        %v2816 = vpop.f32.mrf.mxu0
        %v2817 = vadd.f32 %v2768, %v2816
        %2818 = vmatmul.bf16.gmra.mxu0 %v1768
        %v2819 = vpop.f32.mrf.mxu0
        %v2820 = vadd.f32 %v2771, %v2819
        %v2821 = vpop.f32.mrf.mxu0
        %v2822 = vadd.f32 %v2773, %v2821
        %2823 = vmatmul.bf16.gmra.mxu0 %v2390
        %v2824 = vpop.f32.mrf.mxu0
        %v2825 = vadd.f32 %v2776, %v2824
        %v2826 = vpop.f32.mrf.mxu0
        %v2827 = vadd.f32 %v2778, %v2826
        %2828 = vdwg.mxu0
        %2829 = vmatpush.bf16.msra.mxu0 %v2674
        %2830 = vmatpush.bf16.msra.mxu0 %v2673
        %2831 = vmatpush.bf16.msra.mxu0 %v2672
        %2832 = vmatpush.bf16.msra.mxu0 %v2671
        %2833 = vmatpush.bf16.msra.mxu0 %v2670
        %2834 = vmatpush.bf16.msra.mxu0 %v2669
        %2835 = vmatpush.bf16.msra.mxu0 %v2668
        %2836 = vmatpush.bf16.msra.mxu0 %v2667
        %2837 = vmatmul.bf16.gmra.mxu0 %v442
        %v2838 = vpop.f32.mrf.mxu0
        %v2839 = vadd.f32 %v2790, %v2838
        %v2840 = vpop.f32.mrf.mxu0
        %v2841 = vadd.f32 %v2792, %v2840
        %2842 = vmatmul.bf16.gmra.mxu0 %v445
        %v2843 = vpop.f32.mrf.mxu0
        %v2844 = vadd.f32 %v2795, %v2843
        %v2845 = vpop.f32.mrf.mxu0
        %v2846 = vadd.f32 %v2797, %v2845
        %2847 = vmatmul.bf16.gmra.mxu0 %v448
        %v2848 = vpop.f32.mrf.mxu0
        %v2849 = vadd.f32 %v2800, %v2848
        %v2850 = vpop.f32.mrf.mxu0
        %v2851 = vadd.f32 %v2802, %v2850
        %2852 = vmatmul.bf16.gmra.mxu0 %v451
        %v2853 = vpop.f32.mrf.mxu0
        %v2854 = vadd.f32 %v2805, %v2853
        %v2855 = vpop.f32.mrf.mxu0
        %v2856 = vadd.f32 %v2807, %v2855
        %2857 = vmatmul.bf16.gmra.mxu0 %v454
        %v2858 = vpop.f32.mrf.mxu0
        %v2859 = vadd.f32 %v2810, %v2858
        %v2860 = vpop.f32.mrf.mxu0
        %v2861 = vadd.f32 %v2812, %v2860
        %2862 = vmatmul.bf16.gmra.mxu0 %v681
        %v2863 = vpop.f32.mrf.mxu0
        %v2864 = vadd.f32 %v2815, %v2863
        %v2865 = vpop.f32.mrf.mxu0
        %v2866 = vadd.f32 %v2817, %v2865
        %2867 = vmatmul.bf16.gmra.mxu0 %v1772
        %v2868 = vpop.f32.mrf.mxu0
        %v2869 = vadd.f32 %v2820, %v2868
        %v2870 = vpop.f32.mrf.mxu0
        %v2871 = vadd.f32 %v2822, %v2870
        %2872 = vmatmul.bf16.gmra.mxu0 %v2394
        %v2873 = vpop.f32.mrf.mxu0
        %v2874 = vadd.f32 %v2825, %v2873
        %v2875 = vpop.f32.mrf.mxu0
        %v2876 = vadd.f32 %v2827, %v2875
        %2877 = vdwg.mxu0
        %2878 = vmatpush.bf16.msra.mxu0 %v2682
        %2879 = vmatpush.bf16.msra.mxu0 %v2681
        %2880 = vmatpush.bf16.msra.mxu0 %v2680
        %2881 = vmatpush.bf16.msra.mxu0 %v2679
        %2882 = vmatpush.bf16.msra.mxu0 %v2678
        %2883 = vmatpush.bf16.msra.mxu0 %v2677
        %2884 = vmatpush.bf16.msra.mxu0 %v2676
        %2885 = vmatpush.bf16.msra.mxu0 %v2675
        %2886 = vmatmul.bf16.gmra.mxu0 %v499
        %v2887 = vpop.f32.mrf.mxu0
        %v2888 = vadd.f32 %v2839, %v2887
        %v2889 = vpop.f32.mrf.mxu0
        %v2890 = vadd.f32 %v2841, %v2889
        %2891 = vmatmul.bf16.gmra.mxu0 %v508
        %v2892 = vpop.f32.mrf.mxu0
        %v2893 = vadd.f32 %v2844, %v2892
        %v2894 = vpop.f32.mrf.mxu0
        %v2895 = vadd.f32 %v2846, %v2894
        %2896 = vmatmul.bf16.gmra.mxu0 %v517
        %v2897 = vpop.f32.mrf.mxu0
        %v2898 = vadd.f32 %v2849, %v2897
        %v2899 = vpop.f32.mrf.mxu0
        %v2900 = vadd.f32 %v2851, %v2899
        %2901 = vmatmul.bf16.gmra.mxu0 %v526
        %v2902 = vpop.f32.mrf.mxu0
        %v2903 = vadd.f32 %v2854, %v2902
        %v2904 = vpop.f32.mrf.mxu0
        %v2905 = vadd.f32 %v2856, %v2904
        %2906 = vmatmul.bf16.gmra.mxu0 %v535
        %v2907 = vpop.f32.mrf.mxu0
        %v2908 = vadd.f32 %v2859, %v2907
        %v2909 = vpop.f32.mrf.mxu0
        %v2910 = vadd.f32 %v2861, %v2909
        %2911 = vmatmul.bf16.gmra.mxu0 %v691
        %v2912 = vpop.f32.mrf.mxu0
        %v2913 = vadd.f32 %v2864, %v2912
        %v2914 = vpop.f32.mrf.mxu0
        %v2915 = vadd.f32 %v2866, %v2914
        %2916 = vmatmul.bf16.gmra.mxu0 %v1782
        %v2917 = vpop.f32.mrf.mxu0
        %v2918 = vadd.f32 %v2869, %v2917
        %v2919 = vpop.f32.mrf.mxu0
        %v2920 = vadd.f32 %v2871, %v2919
        %2921 = vmatmul.bf16.gmra.mxu0 %v2404
        %v2922 = vpop.f32.mrf.mxu0
        %v2923 = vadd.f32 %v2874, %v2922
        %v2924 = vpop.f32.mrf.mxu0
        %v2925 = vadd.f32 %v2876, %v2924
        %2926 = vdwg.mxu0
        %2927 = vmatpush.bf16.msra.mxu0 %v2690
        %2928 = vmatpush.bf16.msra.mxu0 %v2689
        %2929 = vmatpush.bf16.msra.mxu0 %v2688
        %2930 = vmatpush.bf16.msra.mxu0 %v2687
        %2931 = vmatpush.bf16.msra.mxu0 %v2686
        %2932 = vmatpush.bf16.msra.mxu0 %v2685
        %2933 = vmatpush.bf16.msra.mxu0 %v2684
        %2934 = vmatpush.bf16.msra.mxu0 %v2683
        %2935 = vmatmul.bf16.gmra.mxu0 %v556
        %v2936 = vpop.f32.mrf.mxu0
        %v2937 = vadd.f32 %v2888, %v2936
        %v2938 = vpop.f32.mrf.mxu0
        %v2939 = vadd.f32 %v2890, %v2938
        %2940 = vmatmul.bf16.gmra.mxu0 %v559
        %v2941 = vpop.f32.mrf.mxu0
        %v2942 = vadd.f32 %v2893, %v2941
        %v2943 = vpop.f32.mrf.mxu0
        %v2944 = vadd.f32 %v2895, %v2943
        %2945 = vmatmul.bf16.gmra.mxu0 %v562
        %v2946 = vpop.f32.mrf.mxu0
        %v2947 = vadd.f32 %v2898, %v2946
        %v2948 = vpop.f32.mrf.mxu0
        %v2949 = vadd.f32 %v2900, %v2948
        %2950 = vmatmul.bf16.gmra.mxu0 %v565
        %v2951 = vpop.f32.mrf.mxu0
        %v2952 = vadd.f32 %v2903, %v2951
        %v2953 = vpop.f32.mrf.mxu0
        %v2954 = vadd.f32 %v2905, %v2953
        %2955 = vmatmul.bf16.gmra.mxu0 %v568
        %v2956 = vpop.f32.mrf.mxu0
        %v2957 = vadd.f32 %v2908, %v2956
        %v2958 = vpop.f32.mrf.mxu0
        %v2959 = vadd.f32 %v2910, %v2958
        %2960 = vmatmul.bf16.gmra.mxu0 %v695
        %v2961 = vpop.f32.mrf.mxu0
        %v2962 = vadd.f32 %v2913, %v2961
        %v2963 = vpop.f32.mrf.mxu0
        %v2964 = vadd.f32 %v2915, %v2963
        %2965 = vmatmul.bf16.gmra.mxu0 %v1786
        %v2966 = vpop.f32.mrf.mxu0
        %v2967 = vadd.f32 %v2918, %v2966
        %v2968 = vpop.f32.mrf.mxu0
        %v2969 = vadd.f32 %v2920, %v2968
        %2970 = vmatmul.bf16.gmra.mxu0 %v2408
        %v2971 = vpop.f32.mrf.mxu0
        %v2972 = vadd.f32 %v2923, %v2971
        %v2973 = vpop.f32.mrf.mxu0
        %v2974 = vadd.f32 %v2925, %v2973
        %2975 = vdwg.mxu0
        %v2976 = vadd.f32 %v2354, %v2937
        %v2977 = vadd.f32 %v2355, %v2939
        %v2978 = vadd.f32 %v2356, %v2942
        %v2979 = vadd.f32 %v2357, %v2944
        %v2980 = vadd.f32 %v2358, %v2947
        %v2981 = vadd.f32 %v2359, %v2949
        %v2982 = vadd.f32 %v2360, %v2952
        %v2983 = vadd.f32 %v2361, %v2954
        %v2984 = vadd.f32 %v2362, %v2957
        %v2985 = vadd.f32 %v2363, %v2959
        %v2986 = vadd.f32 %v2364, %v2962
        %v2987 = vadd.f32 %v2365, %v2964
        %v2988 = vadd.f32 %v2366, %v2967
        %v2989 = vadd.f32 %v2367, %v2969
        %v2990 = vadd.f32 %v2368, %v2972
        %v2991 = vadd.f32 %v2369, %v2974
        %v2994 = vunpack.c.l.b16 %v250
        %v2995 = vunpack.c.l.b16 %v251
        %v2996 = vpack.c.b16 %v2995, %v2994
        %v2999 = vunpack.c.l.b16 %v252
        %v3000 = vpack.c.b16 %v2999, %v2999
        %v3002 = vshrl.u32 %v2996, 16
        %v3004 = vshll.u32 %v2996, 16
        %v3006 = vrot.slane %v3004, 1
        %v3007 = vor.u32 %v3002, %v3006
        %v3009 = vshll.u32 %v3000, 16
        %v3011 = vrot.slane %v3009, 1
        %v3012 = vsel %vm325, %v3007, %v3011
        %v3014 = vrot.slane %v2996, 1
        %v3015 = vrot.slane %v3000, 1
        %v3016 = vsel %vm430, %v3014, %v3015
        %v3018 = vrot.slane %v3002, 1
        %v3019 = vrot.slane %v3004, 2
        %v3020 = vor.u32 %v3018, %v3019
        %v3021 = vshrl.u32 %v3000, 16
        %v3023 = vrot.slane %v3021, 1
        %v3024 = vrot.slane %v3009, 2
        %v3025 = vor.u32 %v3023, %v3024
        %v3026 = vsel %vm463, %v3020, %v3025
        %v3028 = vrot.slane %v2996, 2
        %v3029 = vrot.slane %v3000, 2
        %v3030 = vsel %vm544, %v3028, %v3029
        %s3032 = scalar_lea.vmem [#allocation2], 1280
        %v3033 = vld [vmem:[%s3032] sm:$0xf]
        %v3034 = vld [vmem:[%s3032 + $0x4] sm:$0xf]
        %v3035 = vld [vmem:[%s3032 + $0x8] sm:$0xf]
        %v3036 = vld [vmem:[%s3032 + $0xc] sm:$0xf]
        %v3037 = vld [vmem:[%s3032 + $0x10] sm:$0xf]
        %v3038 = vld [vmem:[%s3032 + $0x14] sm:$0xf]
        %v3039 = vld [vmem:[%s3032 + $0x18] sm:$0xf]
        %v3040 = vld [vmem:[%s3032 + $0x1c] sm:$0xf]
        %v3041 = vld [vmem:[%s3032 + $0x20] sm:$0xf]
        %v3042 = vld [vmem:[%s3032 + $0x24] sm:$0xf]
        %v3043 = vld [vmem:[%s3032 + $0x28] sm:$0xf]
        %v3044 = vld [vmem:[%s3032 + $0x2c] sm:$0xf]
        %v3045 = vld [vmem:[%s3032 + $0x30] sm:$0xf]
        %v3046 = vld [vmem:[%s3032 + $0x34] sm:$0xf]
        %v3047 = vld [vmem:[%s3032 + $0x38] sm:$0xf]
        %v3048 = vld [vmem:[%s3032 + $0x3c] sm:$0xf]
        %v3049 = vld [vmem:[%s3032 + $0x40] sm:$0xf]
        %v3050 = vld [vmem:[%s3032 + $0x44] sm:$0xf]
        %v3051 = vld [vmem:[%s3032 + $0x48] sm:$0xf]
        %v3052 = vld [vmem:[%s3032 + $0x4c] sm:$0xf]
        %v3053 = vld [vmem:[%s3032 + $0x50] sm:$0xf]
        %v3054 = vld [vmem:[%s3032 + $0x54] sm:$0xf]
        %v3055 = vld [vmem:[%s3032 + $0x58] sm:$0xf]
        %v3056 = vld [vmem:[%s3032 + $0x5c] sm:$0xf]
        %v3057 = vld [vmem:[%s3032 + $0x60] sm:$0xf]
        %v3058 = vld [vmem:[%s3032 + $0x64] sm:$0xf]
        %v3059 = vld [vmem:[%s3032 + $0x68] sm:$0xf]
        %v3060 = vld [vmem:[%s3032 + $0x6c] sm:$0xf]
        %v3061 = vld [vmem:[%s3032 + $0x70] sm:$0xf]
        %v3062 = vld [vmem:[%s3032 + $0x74] sm:$0xf]
        %v3063 = vld [vmem:[%s3032 + $0x78] sm:$0xf]
        %v3064 = vld [vmem:[%s3032 + $0x7c] sm:$0xf]
        %v3065 = vld [vmem:[%s3032 + $0x80] sm:$0xf]
        %v3066 = vld [vmem:[%s3032 + $0x84] sm:$0xf]
        %v3067 = vld [vmem:[%s3032 + $0x88] sm:$0xf]
        %v3068 = vld [vmem:[%s3032 + $0x8c] sm:$0xf]
        %v3069 = vld [vmem:[%s3032 + $0x90] sm:$0xf]
        %v3070 = vld [vmem:[%s3032 + $0x94] sm:$0xf]
        %v3071 = vld [vmem:[%s3032 + $0x98] sm:$0xf]
        %v3072 = vld [vmem:[%s3032 + $0x9c] sm:$0xf]
        %v3073 = vld [vmem:[%s3032 + $0xa0] sm:$0xf]
        %v3074 = vld [vmem:[%s3032 + $0xa4] sm:$0xf]
        %v3075 = vld [vmem:[%s3032 + $0xa8] sm:$0xf]
        %v3076 = vld [vmem:[%s3032 + $0xac] sm:$0xf]
        %v3077 = vld [vmem:[%s3032 + $0xb0] sm:$0xf]
        %v3078 = vld [vmem:[%s3032 + $0xb4] sm:$0xf]
        %v3079 = vld [vmem:[%s3032 + $0xb8] sm:$0xf]
        %v3080 = vld [vmem:[%s3032 + $0xbc] sm:$0xf]
        %v3081 = vld [vmem:[%s3032 + $0xc0] sm:$0xf]
        %v3082 = vld [vmem:[%s3032 + $0xc4] sm:$0xf]
        %v3083 = vld [vmem:[%s3032 + $0xc8] sm:$0xf]
        %v3084 = vld [vmem:[%s3032 + $0xcc] sm:$0xf]
        %v3085 = vld [vmem:[%s3032 + $0xd0] sm:$0xf]
        %v3086 = vld [vmem:[%s3032 + $0xd4] sm:$0xf]
        %v3087 = vld [vmem:[%s3032 + $0xd8] sm:$0xf]
        %v3088 = vld [vmem:[%s3032 + $0xdc] sm:$0xf]
        %v3089 = vld [vmem:[%s3032 + $0xe0] sm:$0xf]
        %v3090 = vld [vmem:[%s3032 + $0xe4] sm:$0xf]
        %v3091 = vld [vmem:[%s3032 + $0xe8] sm:$0xf]
        %v3092 = vld [vmem:[%s3032 + $0xec] sm:$0xf]
        %v3093 = vld [vmem:[%s3032 + $0xf0] sm:$0xf]
        %v3094 = vld [vmem:[%s3032 + $0xf4] sm:$0xf]
        %v3095 = vld [vmem:[%s3032 + $0xf8] sm:$0xf]
        %v3096 = vld [vmem:[%s3032 + $0xfc] sm:$0xf]
        %v3097 = vld [vmem:[%s3032 + $0x100] sm:$0xf]
        %v3098 = vld [vmem:[%s3032 + $0x104] sm:$0xf]
        %v3099 = vld [vmem:[%s3032 + $0x108] sm:$0xf]
        %v3100 = vld [vmem:[%s3032 + $0x10c] sm:$0xf]
        %v3101 = vld [vmem:[%s3032 + $0x110] sm:$0xf]
        %v3102 = vld [vmem:[%s3032 + $0x114] sm:$0xf]
        %v3103 = vld [vmem:[%s3032 + $0x118] sm:$0xf]
        %v3104 = vld [vmem:[%s3032 + $0x11c] sm:$0xf]
        %v3105 = vld [vmem:[%s3032 + $0x120] sm:$0xf]
        %v3106 = vld [vmem:[%s3032 + $0x124] sm:$0xf]
        %v3107 = vld [vmem:[%s3032 + $0x128] sm:$0xf]
        %v3108 = vld [vmem:[%s3032 + $0x12c] sm:$0xf]
        %v3109 = vld [vmem:[%s3032 + $0x130] sm:$0xf]
        %v3110 = vld [vmem:[%s3032 + $0x134] sm:$0xf]
        %v3111 = vld [vmem:[%s3032 + $0x138] sm:$0xf]
        %v3112 = vld [vmem:[%s3032 + $0x13c] sm:$0xf]
        %v3193 = vunpack.c.l.b16 %v3033
        %v3194 = vunpack.c.l.b16 %v3034
        %v3195 = vunpack.c.l.b16 %v3035
        %v3196 = vunpack.c.l.b16 %v3036
        %v3197 = vunpack.c.l.b16 %v3037
        %v3198 = vunpack.c.l.b16 %v3038
        %v3199 = vunpack.c.l.b16 %v3039
        %v3200 = vunpack.c.l.b16 %v3040
        %v3201 = vunpack.c.l.b16 %v3041
        %v3202 = vunpack.c.l.b16 %v3042
        %v3203 = vunpack.c.l.b16 %v3043
        %v3204 = vunpack.c.l.b16 %v3044
        %v3205 = vunpack.c.l.b16 %v3045
        %v3206 = vunpack.c.l.b16 %v3046
        %v3207 = vunpack.c.l.b16 %v3047
        %v3208 = vunpack.c.l.b16 %v3048
        %v3209 = vunpack.c.l.b16 %v3049
        %v3210 = vunpack.c.l.b16 %v3050
        %v3211 = vunpack.c.l.b16 %v3051
        %v3212 = vunpack.c.l.b16 %v3052
        %v3213 = vunpack.c.l.b16 %v3053
        %v3214 = vunpack.c.l.b16 %v3054
        %v3215 = vunpack.c.l.b16 %v3055
        %v3216 = vunpack.c.l.b16 %v3056
        %v3217 = vunpack.c.l.b16 %v3057
        %v3218 = vunpack.c.l.b16 %v3058
        %v3219 = vunpack.c.l.b16 %v3059
        %v3220 = vunpack.c.l.b16 %v3060
        %v3221 = vunpack.c.l.b16 %v3061
        %v3222 = vunpack.c.l.b16 %v3062
        %v3223 = vunpack.c.l.b16 %v3063
        %v3224 = vunpack.c.l.b16 %v3064
        %v3225 = vunpack.c.l.b16 %v3065
        %v3226 = vunpack.c.l.b16 %v3066
        %v3227 = vunpack.c.l.b16 %v3067
        %v3228 = vunpack.c.l.b16 %v3068
        %v3229 = vunpack.c.l.b16 %v3069
        %v3230 = vunpack.c.l.b16 %v3070
        %v3231 = vunpack.c.l.b16 %v3071
        %v3232 = vunpack.c.l.b16 %v3072
        %v3233 = vunpack.c.l.b16 %v3073
        %v3234 = vunpack.c.l.b16 %v3074
        %v3235 = vunpack.c.l.b16 %v3075
        %v3236 = vunpack.c.l.b16 %v3076
        %v3237 = vunpack.c.l.b16 %v3077
        %v3238 = vunpack.c.l.b16 %v3078
        %v3239 = vunpack.c.l.b16 %v3079
        %v3240 = vunpack.c.l.b16 %v3080
        %v3241 = vunpack.c.l.b16 %v3081
        %v3242 = vunpack.c.l.b16 %v3082
        %v3243 = vunpack.c.l.b16 %v3083
        %v3244 = vunpack.c.l.b16 %v3084
        %v3245 = vunpack.c.l.b16 %v3085
        %v3246 = vunpack.c.l.b16 %v3086
        %v3247 = vunpack.c.l.b16 %v3087
        %v3248 = vunpack.c.l.b16 %v3088
        %v3249 = vunpack.c.l.b16 %v3089
        %v3250 = vunpack.c.l.b16 %v3090
        %v3251 = vunpack.c.l.b16 %v3091
        %v3252 = vunpack.c.l.b16 %v3092
        %v3253 = vunpack.c.l.b16 %v3093
        %v3254 = vunpack.c.l.b16 %v3094
        %v3255 = vunpack.c.l.b16 %v3095
        %v3256 = vunpack.c.l.b16 %v3096
        %v3257 = vunpack.c.l.b16 %v3097
        %v3258 = vunpack.c.l.b16 %v3098
        %v3259 = vunpack.c.l.b16 %v3099
        %v3260 = vunpack.c.l.b16 %v3100
        %v3261 = vunpack.c.l.b16 %v3101
        %v3262 = vunpack.c.l.b16 %v3102
        %v3263 = vunpack.c.l.b16 %v3103
        %v3264 = vunpack.c.l.b16 %v3104
        %v3265 = vunpack.c.l.b16 %v3105
        %v3266 = vunpack.c.l.b16 %v3106
        %v3267 = vunpack.c.l.b16 %v3107
        %v3268 = vunpack.c.l.b16 %v3108
        %v3269 = vunpack.c.l.b16 %v3109
        %v3270 = vunpack.c.l.b16 %v3110
        %v3271 = vunpack.c.l.b16 %v3111
        %v3272 = vunpack.c.l.b16 %v3112
        %v3273 = vpack.c.b16 %v3194, %v3193
        %v3274 = vpack.c.b16 %v3196, %v3195
        %v3275 = vpack.c.b16 %v3198, %v3197
        %v3276 = vpack.c.b16 %v3200, %v3199
        %v3277 = vpack.c.b16 %v3202, %v3201
        %v3278 = vpack.c.b16 %v3204, %v3203
        %v3279 = vpack.c.b16 %v3206, %v3205
        %v3280 = vpack.c.b16 %v3208, %v3207
        %v3281 = vpack.c.b16 %v3210, %v3209
        %v3282 = vpack.c.b16 %v3212, %v3211
        %v3283 = vpack.c.b16 %v3214, %v3213
        %v3284 = vpack.c.b16 %v3216, %v3215
        %v3285 = vpack.c.b16 %v3218, %v3217
        %v3286 = vpack.c.b16 %v3220, %v3219
        %v3287 = vpack.c.b16 %v3222, %v3221
        %v3288 = vpack.c.b16 %v3224, %v3223
        %v3289 = vpack.c.b16 %v3226, %v3225
        %v3290 = vpack.c.b16 %v3228, %v3227
        %v3291 = vpack.c.b16 %v3230, %v3229
        %v3292 = vpack.c.b16 %v3232, %v3231
        %v3293 = vpack.c.b16 %v3234, %v3233
        %v3294 = vpack.c.b16 %v3236, %v3235
        %v3295 = vpack.c.b16 %v3238, %v3237
        %v3296 = vpack.c.b16 %v3240, %v3239
        %v3297 = vpack.c.b16 %v3242, %v3241
        %v3298 = vpack.c.b16 %v3244, %v3243
        %v3299 = vpack.c.b16 %v3246, %v3245
        %v3300 = vpack.c.b16 %v3248, %v3247
        %v3301 = vpack.c.b16 %v3250, %v3249
        %v3302 = vpack.c.b16 %v3252, %v3251
        %v3303 = vpack.c.b16 %v3254, %v3253
        %v3304 = vpack.c.b16 %v3256, %v3255
        %v3305 = vpack.c.b16 %v3258, %v3257
        %v3306 = vpack.c.b16 %v3260, %v3259
        %v3307 = vpack.c.b16 %v3262, %v3261
        %v3308 = vpack.c.b16 %v3264, %v3263
        %v3309 = vpack.c.b16 %v3266, %v3265
        %v3310 = vpack.c.b16 %v3268, %v3267
        %v3311 = vpack.c.b16 %v3270, %v3269
        %v3312 = vpack.c.b16 %v3272, %v3271
        %3353 = vmatpush.bf16.msra.mxu0 %v3280
        %3354 = vmatpush.bf16.msra.mxu0 %v3279
        %3355 = vmatpush.bf16.msra.mxu0 %v3278
        %3356 = vmatpush.bf16.msra.mxu0 %v3277
        %3357 = vmatpush.bf16.msra.mxu0 %v3276
        %3358 = vmatpush.bf16.msra.mxu0 %v3275
        %3359 = vmatpush.bf16.msra.mxu0 %v3274
        %3360 = vmatpush.bf16.msra.mxu0 %v3273
        %3361 = vmatmul.bf16.gmra.mxu0 %v289
        %v3362 = vpop.f32.mrf.mxu0
        %v3363 = vadd.f32 0.0, %v3362
        %v3364 = vpop.f32.mrf.mxu0
        %v3365 = vadd.f32 0.0, %v3364
        %3366 = vmatmul.bf16.gmra.mxu0 %v290
        %v3367 = vpop.f32.mrf.mxu0
        %v3368 = vadd.f32 0.0, %v3367
        %v3369 = vpop.f32.mrf.mxu0
        %v3370 = vadd.f32 0.0, %v3369
        %3371 = vmatmul.bf16.gmra.mxu0 %v291
        %v3372 = vpop.f32.mrf.mxu0
        %v3373 = vadd.f32 0.0, %v3372
        %v3374 = vpop.f32.mrf.mxu0
        %v3375 = vadd.f32 0.0, %v3374
        %3376 = vmatmul.bf16.gmra.mxu0 %v292
        %v3377 = vpop.f32.mrf.mxu0
        %v3378 = vadd.f32 0.0, %v3377
        %v3379 = vpop.f32.mrf.mxu0
        %v3380 = vadd.f32 0.0, %v3379
        %3381 = vmatmul.bf16.gmra.mxu0 %v661
        %v3382 = vpop.f32.mrf.mxu0
        %v3383 = vadd.f32 0.0, %v3382
        %v3384 = vpop.f32.mrf.mxu0
        %v3385 = vadd.f32 0.0, %v3384
        %3386 = vmatmul.bf16.gmra.mxu0 %v1752
        %v3387 = vpop.f32.mrf.mxu0
        %v3388 = vadd.f32 0.0, %v3387
        %v3389 = vpop.f32.mrf.mxu0
        %v3390 = vadd.f32 0.0, %v3389
        %3391 = vmatmul.bf16.gmra.mxu0 %v2374
        %v3392 = vpop.f32.mrf.mxu0
        %v3393 = vadd.f32 0.0, %v3392
        %v3394 = vpop.f32.mrf.mxu0
        %v3395 = vadd.f32 0.0, %v3394
        %3396 = vmatmul.bf16.gmra.mxu0 %v2996
        %v3397 = vpop.f32.mrf.mxu0
        %v3398 = vadd.f32 0.0, %v3397
        %v3399 = vpop.f32.mrf.mxu0
        %v3400 = vadd.f32 0.0, %v3399
        %3401 = vdwg.mxu0
        %3402 = vmatpush.bf16.msra.mxu0 %v3288
        %3403 = vmatpush.bf16.msra.mxu0 %v3287
        %3404 = vmatpush.bf16.msra.mxu0 %v3286
        %3405 = vmatpush.bf16.msra.mxu0 %v3285
        %3406 = vmatpush.bf16.msra.mxu0 %v3284
        %3407 = vmatpush.bf16.msra.mxu0 %v3283
        %3408 = vmatpush.bf16.msra.mxu0 %v3282
        %3409 = vmatpush.bf16.msra.mxu0 %v3281
        %3410 = vmatmul.bf16.gmra.mxu0 %v385
        %v3411 = vpop.f32.mrf.mxu0
        %v3412 = vadd.f32 %v3363, %v3411
        %v3413 = vpop.f32.mrf.mxu0
        %v3414 = vadd.f32 %v3365, %v3413
        %3415 = vmatmul.bf16.gmra.mxu0 %v397
        %v3416 = vpop.f32.mrf.mxu0
        %v3417 = vadd.f32 %v3368, %v3416
        %v3418 = vpop.f32.mrf.mxu0
        %v3419 = vadd.f32 %v3370, %v3418
        %3420 = vmatmul.bf16.gmra.mxu0 %v409
        %v3421 = vpop.f32.mrf.mxu0
        %v3422 = vadd.f32 %v3373, %v3421
        %v3423 = vpop.f32.mrf.mxu0
        %v3424 = vadd.f32 %v3375, %v3423
        %3425 = vmatmul.bf16.gmra.mxu0 %v421
        %v3426 = vpop.f32.mrf.mxu0
        %v3427 = vadd.f32 %v3378, %v3426
        %v3428 = vpop.f32.mrf.mxu0
        %v3429 = vadd.f32 %v3380, %v3428
        %3430 = vmatmul.bf16.gmra.mxu0 %v677
        %v3431 = vpop.f32.mrf.mxu0
        %v3432 = vadd.f32 %v3383, %v3431
        %v3433 = vpop.f32.mrf.mxu0
        %v3434 = vadd.f32 %v3385, %v3433
        %3435 = vmatmul.bf16.gmra.mxu0 %v1768
        %v3436 = vpop.f32.mrf.mxu0
        %v3437 = vadd.f32 %v3388, %v3436
        %v3438 = vpop.f32.mrf.mxu0
        %v3439 = vadd.f32 %v3390, %v3438
        %3440 = vmatmul.bf16.gmra.mxu0 %v2390
        %v3441 = vpop.f32.mrf.mxu0
        %v3442 = vadd.f32 %v3393, %v3441
        %v3443 = vpop.f32.mrf.mxu0
        %v3444 = vadd.f32 %v3395, %v3443
        %3445 = vmatmul.bf16.gmra.mxu0 %v3012
        %v3446 = vpop.f32.mrf.mxu0
        %v3447 = vadd.f32 %v3398, %v3446
        %v3448 = vpop.f32.mrf.mxu0
        %v3449 = vadd.f32 %v3400, %v3448
        %3450 = vdwg.mxu0
        %3451 = vmatpush.bf16.msra.mxu0 %v3296
        %3452 = vmatpush.bf16.msra.mxu0 %v3295
        %3453 = vmatpush.bf16.msra.mxu0 %v3294
        %3454 = vmatpush.bf16.msra.mxu0 %v3293
        %3455 = vmatpush.bf16.msra.mxu0 %v3292
        %3456 = vmatpush.bf16.msra.mxu0 %v3291
        %3457 = vmatpush.bf16.msra.mxu0 %v3290
        %3458 = vmatpush.bf16.msra.mxu0 %v3289
        %3459 = vmatmul.bf16.gmra.mxu0 %v445
        %v3460 = vpop.f32.mrf.mxu0
        %v3461 = vadd.f32 %v3412, %v3460
        %v3462 = vpop.f32.mrf.mxu0
        %v3463 = vadd.f32 %v3414, %v3462
        %3464 = vmatmul.bf16.gmra.mxu0 %v448
        %v3465 = vpop.f32.mrf.mxu0
        %v3466 = vadd.f32 %v3417, %v3465
        %v3467 = vpop.f32.mrf.mxu0
        %v3468 = vadd.f32 %v3419, %v3467
        %3469 = vmatmul.bf16.gmra.mxu0 %v451
        %v3470 = vpop.f32.mrf.mxu0
        %v3471 = vadd.f32 %v3422, %v3470
        %v3472 = vpop.f32.mrf.mxu0
        %v3473 = vadd.f32 %v3424, %v3472
        %3474 = vmatmul.bf16.gmra.mxu0 %v454
        %v3475 = vpop.f32.mrf.mxu0
        %v3476 = vadd.f32 %v3427, %v3475
        %v3477 = vpop.f32.mrf.mxu0
        %v3478 = vadd.f32 %v3429, %v3477
        %3479 = vmatmul.bf16.gmra.mxu0 %v681
        %v3480 = vpop.f32.mrf.mxu0
        %v3481 = vadd.f32 %v3432, %v3480
        %v3482 = vpop.f32.mrf.mxu0
        %v3483 = vadd.f32 %v3434, %v3482
        %3484 = vmatmul.bf16.gmra.mxu0 %v1772
        %v3485 = vpop.f32.mrf.mxu0
        %v3486 = vadd.f32 %v3437, %v3485
        %v3487 = vpop.f32.mrf.mxu0
        %v3488 = vadd.f32 %v3439, %v3487
        %3489 = vmatmul.bf16.gmra.mxu0 %v2394
        %v3490 = vpop.f32.mrf.mxu0
        %v3491 = vadd.f32 %v3442, %v3490
        %v3492 = vpop.f32.mrf.mxu0
        %v3493 = vadd.f32 %v3444, %v3492
        %3494 = vmatmul.bf16.gmra.mxu0 %v3016
        %v3495 = vpop.f32.mrf.mxu0
        %v3496 = vadd.f32 %v3447, %v3495
        %v3497 = vpop.f32.mrf.mxu0
        %v3498 = vadd.f32 %v3449, %v3497
        %3499 = vdwg.mxu0
        %3500 = vmatpush.bf16.msra.mxu0 %v3304
        %3501 = vmatpush.bf16.msra.mxu0 %v3303
        %3502 = vmatpush.bf16.msra.mxu0 %v3302
        %3503 = vmatpush.bf16.msra.mxu0 %v3301
        %3504 = vmatpush.bf16.msra.mxu0 %v3300
        %3505 = vmatpush.bf16.msra.mxu0 %v3299
        %3506 = vmatpush.bf16.msra.mxu0 %v3298
        %3507 = vmatpush.bf16.msra.mxu0 %v3297
        %3508 = vmatmul.bf16.gmra.mxu0 %v508
        %v3509 = vpop.f32.mrf.mxu0
        %v3510 = vadd.f32 %v3461, %v3509
        %v3511 = vpop.f32.mrf.mxu0
        %v3512 = vadd.f32 %v3463, %v3511
        %3513 = vmatmul.bf16.gmra.mxu0 %v517
        %v3514 = vpop.f32.mrf.mxu0
        %v3515 = vadd.f32 %v3466, %v3514
        %v3516 = vpop.f32.mrf.mxu0
        %v3517 = vadd.f32 %v3468, %v3516
        %3518 = vmatmul.bf16.gmra.mxu0 %v526
        %v3519 = vpop.f32.mrf.mxu0
        %v3520 = vadd.f32 %v3471, %v3519
        %v3521 = vpop.f32.mrf.mxu0
        %v3522 = vadd.f32 %v3473, %v3521
        %3523 = vmatmul.bf16.gmra.mxu0 %v535
        %v3524 = vpop.f32.mrf.mxu0
        %v3525 = vadd.f32 %v3476, %v3524
        %v3526 = vpop.f32.mrf.mxu0
        %v3527 = vadd.f32 %v3478, %v3526
        %3528 = vmatmul.bf16.gmra.mxu0 %v691
        %v3529 = vpop.f32.mrf.mxu0
        %v3530 = vadd.f32 %v3481, %v3529
        %v3531 = vpop.f32.mrf.mxu0
        %v3532 = vadd.f32 %v3483, %v3531
        %3533 = vmatmul.bf16.gmra.mxu0 %v1782
        %v3534 = vpop.f32.mrf.mxu0
        %v3535 = vadd.f32 %v3486, %v3534
        %v3536 = vpop.f32.mrf.mxu0
        %v3537 = vadd.f32 %v3488, %v3536
        %3538 = vmatmul.bf16.gmra.mxu0 %v2404
        %v3539 = vpop.f32.mrf.mxu0
        %v3540 = vadd.f32 %v3491, %v3539
        %v3541 = vpop.f32.mrf.mxu0
        %v3542 = vadd.f32 %v3493, %v3541
        %3543 = vmatmul.bf16.gmra.mxu0 %v3026
        %v3544 = vpop.f32.mrf.mxu0
        %v3545 = vadd.f32 %v3496, %v3544
        %v3546 = vpop.f32.mrf.mxu0
        %v3547 = vadd.f32 %v3498, %v3546
        %3548 = vdwg.mxu0
        %3549 = vmatpush.bf16.msra.mxu0 %v3312
        %3550 = vmatpush.bf16.msra.mxu0 %v3311
        %3551 = vmatpush.bf16.msra.mxu0 %v3310
        %3552 = vmatpush.bf16.msra.mxu0 %v3309
        %3553 = vmatpush.bf16.msra.mxu0 %v3308
        %3554 = vmatpush.bf16.msra.mxu0 %v3307
        %3555 = vmatpush.bf16.msra.mxu0 %v3306
        %3556 = vmatpush.bf16.msra.mxu0 %v3305
        %3557 = vmatmul.bf16.gmra.mxu0 %v559
        %v3558 = vpop.f32.mrf.mxu0
        %v3559 = vadd.f32 %v3510, %v3558
        %v3560 = vpop.f32.mrf.mxu0
        %v3561 = vadd.f32 %v3512, %v3560
        %3562 = vmatmul.bf16.gmra.mxu0 %v562
        %v3563 = vpop.f32.mrf.mxu0
        %v3564 = vadd.f32 %v3515, %v3563
        %v3565 = vpop.f32.mrf.mxu0
        %v3566 = vadd.f32 %v3517, %v3565
        %3567 = vmatmul.bf16.gmra.mxu0 %v565
        %v3568 = vpop.f32.mrf.mxu0
        %v3569 = vadd.f32 %v3520, %v3568
        %v3570 = vpop.f32.mrf.mxu0
        %v3571 = vadd.f32 %v3522, %v3570
        %3572 = vmatmul.bf16.gmra.mxu0 %v568
        %v3573 = vpop.f32.mrf.mxu0
        %v3574 = vadd.f32 %v3525, %v3573
        %v3575 = vpop.f32.mrf.mxu0
        %v3576 = vadd.f32 %v3527, %v3575
        %3577 = vmatmul.bf16.gmra.mxu0 %v695
        %v3578 = vpop.f32.mrf.mxu0
        %v3579 = vadd.f32 %v3530, %v3578
        %v3580 = vpop.f32.mrf.mxu0
        %v3581 = vadd.f32 %v3532, %v3580
        %3582 = vmatmul.bf16.gmra.mxu0 %v1786
        %v3583 = vpop.f32.mrf.mxu0
        %v3584 = vadd.f32 %v3535, %v3583
        %v3585 = vpop.f32.mrf.mxu0
        %v3586 = vadd.f32 %v3537, %v3585
        %3587 = vmatmul.bf16.gmra.mxu0 %v2408
        %v3588 = vpop.f32.mrf.mxu0
        %v3589 = vadd.f32 %v3540, %v3588
        %v3590 = vpop.f32.mrf.mxu0
        %v3591 = vadd.f32 %v3542, %v3590
        %3592 = vmatmul.bf16.gmra.mxu0 %v3030
        %v3593 = vpop.f32.mrf.mxu0
        %v3594 = vadd.f32 %v3545, %v3593
        %v3595 = vpop.f32.mrf.mxu0
        %v3596 = vadd.f32 %v3547, %v3595
        %3597 = vdwg.mxu0
        %v3598 = vadd.f32 %v2976, %v3559
        %v3599 = vadd.f32 %v2977, %v3561
        %v3600 = vadd.f32 %v2978, %v3564
        %v3601 = vadd.f32 %v2979, %v3566
        %v3602 = vadd.f32 %v2980, %v3569
        %v3603 = vadd.f32 %v2981, %v3571
        %v3604 = vadd.f32 %v2982, %v3574
        %v3605 = vadd.f32 %v2983, %v3576
        %v3606 = vadd.f32 %v2984, %v3579
        %v3607 = vadd.f32 %v2985, %v3581
        %v3608 = vadd.f32 %v2986, %v3584
        %v3609 = vadd.f32 %v2987, %v3586
        %v3610 = vadd.f32 %v2988, %v3589
        %v3611 = vadd.f32 %v2989, %v3591
        %v3612 = vadd.f32 %v2990, %v3594
        %v3613 = vadd.f32 %v2991, %v3596
        %v3614 = vld [vmem:[%s2] sm:$0x1]
        %v3616 = vperm.slane %v3614, 0
        %v3618 = vadd.f32 %v3598, %v3616
        %v3619 = vadd.f32 %v3599, %v3616
        %v3620 = vadd.f32 %v3600, %v3616
        %v3621 = vadd.f32 %v3601, %v3616
        %v3622 = vadd.f32 %v3602, %v3616
        %v3623 = vadd.f32 %v3603, %v3616
        %v3624 = vadd.f32 %v3604, %v3616
        %v3625 = vadd.f32 %v3605, %v3616
        %v3626 = vadd.f32 %v3606, %v3616
        %v3627 = vadd.f32 %v3607, %v3616
        %v3628 = vadd.f32 %v3608, %v3616
        %v3629 = vadd.f32 %v3609, %v3616
        %v3630 = vadd.f32 %v3610, %v3616
        %v3631 = vadd.f32 %v3611, %v3616
        %v3632 = vadd.f32 %v3612, %v3616
        %v3633 = vadd.f32 %v3613, %v3616
        %v3634 = vmax.f32 %v3618, 0.0
        %v3635 = vmax.f32 %v3619, 0.0
        %v3636 = vmax.f32 %v3620, 0.0
        %v3637 = vmax.f32 %v3621, 0.0
        %v3638 = vmax.f32 %v3622, 0.0
        %v3639 = vmax.f32 %v3623, 0.0
        %v3640 = vmax.f32 %v3624, 0.0
        %v3641 = vmax.f32 %v3625, 0.0
        %v3642 = vmax.f32 %v3626, 0.0
        %v3643 = vmax.f32 %v3627, 0.0
        %v3644 = vmax.f32 %v3628, 0.0
        %v3645 = vmax.f32 %v3629, 0.0
        %v3646 = vmax.f32 %v3630, 0.0
        %v3647 = vmax.f32 %v3631, 0.0
        %v3648 = vmax.f32 %v3632, 0.0
        %v3649 = vmax.f32 %v3633, 0.0
        %v3650 = vpack.c.bf16 %v3634, %v3634
        %v3651 = vpack.c.bf16 %v3635, %v3635
        %v3652 = vpack.c.bf16 %v3636, %v3636
        %v3653 = vpack.c.bf16 %v3637, %v3637
        %v3654 = vpack.c.bf16 %v3638, %v3638
        %v3655 = vpack.c.bf16 %v3639, %v3639
        %v3656 = vpack.c.bf16 %v3640, %v3640
        %v3657 = vpack.c.bf16 %v3641, %v3641
        %v3658 = vpack.c.bf16 %v3642, %v3642
        %v3659 = vpack.c.bf16 %v3643, %v3643
        %v3660 = vpack.c.bf16 %v3644, %v3644
        %v3661 = vpack.c.bf16 %v3645, %v3645
        %v3662 = vpack.c.bf16 %v3646, %v3646
        %v3663 = vpack.c.bf16 %v3647, %v3647
        %v3664 = vpack.c.bf16 %v3648, %v3648
        %v3665 = vpack.c.bf16 %v3649, %v3649
        %3666 = vst [vmem:[%s211] sm:$0xf] %v3650
        %3667 = vst [vmem:[%s211 + $0x4] sm:$0xf] %v3651
        %3668 = vst [vmem:[%s211 + $0x8] sm:$0xf] %v3652
        %3669 = vst [vmem:[%s211 + $0xc] sm:$0xf] %v3653
        %3670 = vst [vmem:[%s211 + $0x10] sm:$0xf] %v3654
        %3671 = vst [vmem:[%s211 + $0x14] sm:$0xf] %v3655
        %3672 = vst [vmem:[%s211 + $0x18] sm:$0xf] %v3656
        %3673 = vst [vmem:[%s211 + $0x1c] sm:$0xf] %v3657
        %3674 = vst [vmem:[%s211 + $0x20] sm:$0xf] %v3658
        %3675 = vst [vmem:[%s211 + $0x24] sm:$0xf] %v3659
        %3676 = vst [vmem:[%s211 + $0x28] sm:$0xf] %v3660
        %3677 = vst [vmem:[%s211 + $0x2c] sm:$0xf] %v3661
        %3678 = vst [vmem:[%s211 + $0x30] sm:$0xf] %v3662
        %3679 = vst [vmem:[%s211 + $0x34] sm:$0xf] %v3663
        %3680 = vst [vmem:[%s211 + $0x38] sm:$0xf] %v3664
        %3681 = vst [vmem:[%s211 + $0x3c] sm:$0xf] %v3665
        %s3682 = smul.u32 8, %s20
        %p3683 = scmp.lt.s32.totalorder %s19, 1
        %s3684 = scalar_select %p3683, %s19, 1
        %p3685 = scmp.lt.s32.totalorder %s3682, 15
        %s3686 = scalar_select %p3685, %s3682, 15
        %s3687 = smul.addr %s3686, 2
        %s3688 = smul.addr %s3684, 32
        %s3689 = sadd.s32 %s3687, %s3688
        %s3690 = smul.addr %s3689, 4
        %s3691 = scalar_lea.vmem %s3, %s3690
        // Predicated region
        $region37: #{head_hunter_forward.7} parent=31 // pred_check
          %p3692 = pneg %p115
        $region38: #{head_hunter_forward.7} parent=31 // pred_check_branch
          %3694 = sbr.rel (%p3692) target = $region40
        $region39: #{head_hunter_forward.7} parent=31 // pred_region
          %s3695 = smul.u32 8, %s20
        $region40: #{head_hunter_forward.7} parent=31 // pred_fallthru
          _
      $region32: #{head_hunter_forward.7} parent=5 // pred_fallthru
        _
      %p3696 = scmp.le.s32.totalorder 2, %s10
      // Predicated region
      $region41: #{head_hunter_forward.7} parent=5 // pred_check
        %p3697 = pneg %p3696
      $region42: #{head_hunter_forward.7} parent=5 // pred_check_branch
        %3699 = sbr.rel (%p3697) target = $region44
      $region43: #{head_hunter_forward.7} parent=5 // pred_region
        %s3700 = ssub.s32 %s10, 2
        // Predicated region
        $region45: #{head_hunter_forward.7} parent=43 // pred_check
          %p3701 = pneg %p121
        $region46: #{head_hunter_forward.7} parent=43 // pred_check_branch
          %3703 = sbr.rel (%p3701) target = $region48
        $region47: #{head_hunter_forward.7} parent=43 // pred_region
          %s3704 = smul.u32 8, %s22
          %p3705 = scmp.lt.s32.totalorder %s21, 1
          %s3706 = scalar_select %p3705, %s21, 1
          %p3707 = scmp.lt.s32.totalorder %s3704, 15
          %s3708 = scalar_select %p3707, %s3704, 15
          %s3709 = smul.addr %s3708, 2
          %s3710 = smul.addr %s3706, 32
          %s3711 = sadd.s32 %s3709, %s3710
          %s3712 = smul.addr %s3711, 4
          %s3713 = scalar_lea.vmem %s3, %s3712
        $region48: #{head_hunter_forward.7} parent=43 // pred_fallthru
          _
      $region44: #{head_hunter_forward.7} parent=5 // pred_fallthru
        _
    $region6: #{head_hunter_forward.7} parent=1 // loop_footer
      %s14 = sadd.s32 1, %s10
    $region7: #{head_hunter_forward.7} parent=1 // loop_footer_branch
      %9 = sbr.rel target = $region3
    $region8: #{head_hunter_forward.7} parent=1 // loop_exit
      _
    %3714 = vsyncpa [#allocation3], 1
    %s3715 = scalar_lea.sflag [#allocation3], 1
    %3716 = vsyncpa %s3715, 1

// kernel: head_hunter_forward.6
$region0: #{head_hunter_forward.6}
  #allocation0 [shape = 'u32[]', space=smem, size = 0x4, offset = 0x4, fixed_abs, tag = 'smem constant byte address 0x4 - core index']
  #allocation1 [shape = 'u32[72,128]{1,0:T(1,128)}', space=vmem, size = 0x9000, scoped, tag = 'internal scratch']
  %s0 = inlined_call_operand.vmem [shape: bf16[2,20,20,128], index: 0, kind: input, shape index: {}]
  %s1 = inlined_call_operand.vmem [shape: bf16[5,640,128], index: 1, kind: input, shape index: {}]
  %s2 = inlined_call_operand.vmem [shape: f32[1,128], index: 2, kind: input, shape index: {}]
  %s3 = inlined_call_operand.vmem [shape: bf16[2,16,16,128], index: 3, kind: output, shape index: {}]
  %s4 = sld [smem:[#allocation0]]
  $region45: #{head_hunter_forward.6} parent=0
    _
  %s6 = ssub.s32 1, %s4
  %s7 = scalar_select 0, %s6, %s4
  loop: start=0, step=1, limit=6
  $region2: #{head_hunter_forward.6} parent=0 // loop_pre_header
    _
  $region3: #{head_hunter_forward.6} parent=0 // loop_header
    %s9 = sphi 0, %s13
    %p10 = scmp.ge.s32.totalorder %s9, 6
    %s16 = sphi 0, %s28
    %s17 = sphi 0, %s24
    %s18 = sphi 0, %s16
    %s19 = sphi 0, %s17
    %s20 = sphi 0, %s18
    %s21 = sphi 0, %s19
    %s31 = sphi 0, %s33
    %s34 = sphi 0, %s31
    %s35 = sphi 0, %s34
    %s51 = sphi 0, %s35
    %s55 = sphi 0, %s55
    %s57 = sphi 0, %s55
    %s58 = sphi 0, %s57
    %s72 = sphi 0, %s58
    %s76 = sphi 0, %s76
    %s78 = sphi 0, %s76
    %s79 = sphi 0, %s78
    %s93 = sphi 0, %s79
    %s101 = sphi 0, %s103
    %s104 = sphi 0, %s101
    %s105 = sphi 0, %s104
    %s121 = sphi 0, %s105
  $region4: #{head_hunter_forward.6} parent=0 // loop_header_branch
    %12 = sbr.rel (%p10) target = $region8
  $region5: #{head_hunter_forward.6} parent=0 // loop_body
    %s14 = ssub.s32 %s9, 1
    %s15 = ssub.s32 %s9, 2
    %s22 = sadd.s32 1, %s17
    %p23 = scmp.ge.s32.totalorder %s22, 2
    %s24 = scalar_select %p23, 0, %s22
    %s25 = sadd.s32 1, %s16
    %s26 = scalar_select %p23, %s25, %s16
    %p27 = scmp.ge.s32.totalorder %s26, 2
    %s28 = scalar_select %p27, 0, %s26
    %s29 = ssub.s32 %s16, %s28
    %p30 = scmp.eq.s32.totalorder %s29, 0
    %s32 = sadd.s32 %s31, 1
    %s33 = scalar_select %p30, %s31, %s32
    %p36 = pneg %p30
    %p37 = scmp.eq.s32.totalorder %s9, 3
    %p38 = por %p36, %p37
    %p39 = scmp.ne.s32.totalorder %s31, %s34
    %p40 = scmp.eq.s32.totalorder %s9, 0
    %p41 = por %p39, %p40
    %p42 = scmp.ne.s32.totalorder %s31, %s34
    %p43 = scmp.eq.s32.totalorder %s14, 3
    %p44 = por %p42, %p43
    %p45 = scmp.ne.s32.totalorder %s34, %s35
    %p46 = scmp.eq.s32.totalorder %s14, 0
    %p47 = por %p45, %p46
    %p48 = scmp.ne.s32.totalorder %s34, %s35
    %p49 = scmp.eq.s32.totalorder %s15, 3
    %p50 = por %p48, %p49
    %p52 = scmp.ne.s32.totalorder %s35, %s51
    %p53 = scmp.eq.s32.totalorder %s15, 0
    %p54 = por %p52, %p53
    %s56 = sadd.s32 %s55, 1
    %p59 = scmp.eq.s32.totalorder %s9, 3
    %p60 = scmp.ne.s32.totalorder %s55, %s57
    %p61 = scmp.eq.s32.totalorder %s9, 0
    %p62 = por %p60, %p61
    %p63 = scmp.ne.s32.totalorder %s55, %s57
    %p64 = scmp.eq.s32.totalorder %s14, 3
    %p65 = por %p63, %p64
    %p66 = scmp.ne.s32.totalorder %s57, %s58
    %p67 = scmp.eq.s32.totalorder %s14, 0
    %p68 = por %p66, %p67
    %p69 = scmp.ne.s32.totalorder %s57, %s58
    %p70 = scmp.eq.s32.totalorder %s15, 3
    %p71 = por %p69, %p70
    %p73 = scmp.ne.s32.totalorder %s58, %s72
    %p74 = scmp.eq.s32.totalorder %s15, 0
    %p75 = por %p73, %p74
    %s77 = sadd.s32 %s76, 1
    %p80 = scmp.eq.s32.totalorder %s9, 3
    %p81 = scmp.ne.s32.totalorder %s76, %s78
    %p82 = scmp.eq.s32.totalorder %s9, 0
    %p83 = por %p81, %p82
    %p84 = scmp.ne.s32.totalorder %s76, %s78
    %p85 = scmp.eq.s32.totalorder %s14, 3
    %p86 = por %p84, %p85
    %p87 = scmp.ne.s32.totalorder %s78, %s79
    %p88 = scmp.eq.s32.totalorder %s14, 0
    %p89 = por %p87, %p88
    %p90 = scmp.ne.s32.totalorder %s78, %s79
    %p91 = scmp.eq.s32.totalorder %s15, 3
    %p92 = por %p90, %p91
    %p94 = scmp.ne.s32.totalorder %s79, %s93
    %p95 = scmp.eq.s32.totalorder %s15, 0
    %p96 = por %p94, %p95
    %s97 = ssub.s32 %s16, %s28
    %s98 = ssub.s32 %s17, %s24
    %s99 = sor.u32 %s97, %s98
    %p100 = scmp.eq.s32.totalorder %s99, 0
    %s102 = sadd.s32 %s101, 1
    %s103 = scalar_select %p100, %s101, %s102
    %p106 = pneg %p100
    %p107 = scmp.eq.s32.totalorder %s9, 3
    %p108 = por %p106, %p107
    %p109 = scmp.ne.s32.totalorder %s101, %s104
    %p110 = scmp.eq.s32.totalorder %s9, 0
    %p111 = por %p109, %p110
    %p112 = scmp.ne.s32.totalorder %s101, %s104
    %p113 = scmp.eq.s32.totalorder %s14, 3
    %p114 = por %p112, %p113
    %p115 = scmp.ne.s32.totalorder %s104, %s105
    %p116 = scmp.eq.s32.totalorder %s14, 0
    %p117 = por %p115, %p116
    %p118 = scmp.ne.s32.totalorder %s104, %s105
    %p119 = scmp.eq.s32.totalorder %s15, 3
    %p120 = por %p118, %p119
    %p122 = scmp.ne.s32.totalorder %s105, %s121
    %p123 = scmp.eq.s32.totalorder %s15, 0
    %p124 = por %p122, %p123
    %p125 = scmp.le.s32.totalorder 1, %s9
    %p126 = scmp.lt.s32.totalorder %s9, 5
    %p127 = pnand %p125, %p126
    %p128 = pneg %p127
    // Predicated region
    $region9: #{head_hunter_forward.6} parent=5 // pred_check
      _
    $region10: #{head_hunter_forward.6} parent=5 // pred_check_branch
      %130 = sbr.rel (%p127) target = $region12
    $region11: #{head_hunter_forward.6} parent=5 // pred_region
      %s131 = ssub.s32 %s9, 1
      // Predicated region
      $region13: #{head_hunter_forward.6} parent=11 // pred_check
        %p132 = pneg %p68
      $region14: #{head_hunter_forward.6} parent=11 // pred_check_branch
        %134 = sbr.rel (%p132) target = $region16
      $region15: #{head_hunter_forward.6} parent=11 // pred_region
        _
      $region16: #{head_hunter_forward.6} parent=11 // pred_fallthru
        _
      // Predicated region
      $region17: #{head_hunter_forward.6} parent=11 // pred_check
        %p135 = pneg %p89
      $region18: #{head_hunter_forward.6} parent=11 // pred_check_branch
        %137 = sbr.rel (%p135) target = $region20
      $region19: #{head_hunter_forward.6} parent=11 // pred_region
        _
      $region20: #{head_hunter_forward.6} parent=11 // pred_fallthru
        _
    $region12: #{head_hunter_forward.6} parent=5 // pred_fallthru
      _
    %p138 = scmp.lt.s32.totalorder %s9, 4
    // Predicated region
    $region21: #{head_hunter_forward.6} parent=5 // pred_check
      %p139 = pneg %p138
    $region22: #{head_hunter_forward.6} parent=5 // pred_check_branch
      %141 = sbr.rel (%p139) target = $region24
    $region23: #{head_hunter_forward.6} parent=5 // pred_region
      // Predicated region
      $region25: #{head_hunter_forward.6} parent=23 // pred_check
        %p142 = pneg %p41
      $region26: #{head_hunter_forward.6} parent=23 // pred_check_branch
        %144 = sbr.rel (%p142) target = $region28
      $region27: #{head_hunter_forward.6} parent=23 // pred_region
        %p145 = scmp.lt.s32.totalorder %s16, 1
        %s146 = scalar_select %p145, %s16, 1
        %s147 = smul.addr %s146, 60
        %s148 = smul.addr %s147, 4
        %s149 = scalar_lea.vmem %s0, %s148
      $region28: #{head_hunter_forward.6} parent=23 // pred_fallthru
        _
    $region24: #{head_hunter_forward.6} parent=5 // pred_fallthru
      _
    %p150 = scmp.le.s32.totalorder 1, %s9
    %p151 = scmp.lt.s32.totalorder %s9, 5
    %p152 = pnand %p150, %p151
    %p153 = pneg %p152
    // Predicated region
    $region29: #{head_hunter_forward.6} parent=5 // pred_check
      _
    $region30: #{head_hunter_forward.6} parent=5 // pred_check_branch
      %155 = sbr.rel (%p152) target = $region32
    $region31: #{head_hunter_forward.6} parent=5 // pred_region
      %s156 = ssub.s32 %s9, 1
      %p157 = scmp.lt.s32.totalorder %s18, 1
      %s158 = scalar_select %p157, %s18, 1
      %s159 = smul.addr %s158, 60
      %s160 = smul.addr %s159, 4
      %s161 = scalar_lea.vmem %s0, %s160
      %p162 = pneg %p47
      %p163 = pneg %p44
      %p164 = pneg %p68
      %p165 = pneg %p65
      %p166 = pneg %p89
      %p167 = pneg %p86
      %p168 = pneg %p117
      %p169 = pneg %p114
      %s170 = smul.u32 8, %s19
      %p171 = scmp.lt.s32.totalorder %s18, 1
      %s172 = scalar_select %p171, %s18, 1
      %p173 = scmp.lt.s32.totalorder %s170, 15
      %s174 = scalar_select %p173, %s170, 15
      %s175 = smul.addr %s174, 2
      %s176 = smul.addr %s172, 32
      %s177 = sadd.s32 %s175, %s176
      %s178 = smul.addr %s177, 4
      %s179 = scalar_lea.vmem %s3, %s178
      %p180 = scmp.lt.s32.totalorder %s18, 1
      %s181 = scalar_select %p180, %s18, 1
      %s182 = smul.addr %s181, 60
      %s183 = smul.addr %s182, 4
      %s184 = scalar_lea.vmem %s0, %s183
      %s185 = smul.u32 8, %s19
      %p186 = scmp.lt.s32.totalorder %s18, 1
      %s187 = scalar_select %p186, %s18, 1
      %p188 = scmp.lt.s32.totalorder %s185, 15
      %s189 = scalar_select %p188, %s185, 15
      %s190 = smul.addr %s189, 2
      %s191 = smul.addr %s187, 32
      %s192 = sadd.s32 %s190, %s191
      %s193 = smul.addr %s192, 4
      %s194 = scalar_lea.vmem %s3, %s193
      %s195 = smul.u32 8, %s19
      %s196 = smul.u32 %s19, 8
      %s197 = smul.u32 %s196, 3
      %s198 = smul.addr %s197, 4
      %s199 = scalar_lea.vmem %s184, %s198
      %v200 = vld [vmem:[%s199] sm:$0xf]
      %v201 = vld [vmem:[%s199 + $0x4] sm:$0xf]
      %v202 = vld [vmem:[%s199 + $0x8] sm:$0x3]
      %v203 = vld [vmem:[%s199 + $0xc] sm:$0xf]
      %v204 = vld [vmem:[%s199 + $0x10] sm:$0xf]
      %v205 = vld [vmem:[%s199 + $0x14] sm:$0x3]
      %v206 = vld [vmem:[%s199 + $0x18] sm:$0xf]
      %v207 = vld [vmem:[%s199 + $0x1c] sm:$0xf]
      %v208 = vld [vmem:[%s199 + $0x20] sm:$0x3]
      %v209 = vld [vmem:[%s199 + $0x24] sm:$0xf]
      %v210 = vld [vmem:[%s199 + $0x28] sm:$0xf]
      %v211 = vld [vmem:[%s199 + $0x2c] sm:$0x3]
      %v212 = vld [vmem:[%s199 + $0x30] sm:$0xf]
      %v213 = vld [vmem:[%s199 + $0x34] sm:$0xf]
      %v214 = vld [vmem:[%s199 + $0x38] sm:$0x3]
      %v215 = vld [vmem:[%s199 + $0x3c] sm:$0xf]
      %v216 = vld [vmem:[%s199 + $0x40] sm:$0xf]
      %v217 = vld [vmem:[%s199 + $0x44] sm:$0x3]
      %v218 = vld [vmem:[%s199 + $0x48] sm:$0xf]
      %v219 = vld [vmem:[%s199 + $0x4c] sm:$0xf]
      %v220 = vld [vmem:[%s199 + $0x50] sm:$0x3]
      %v221 = vld [vmem:[%s199 + $0x54] sm:$0xf]
      %v222 = vld [vmem:[%s199 + $0x58] sm:$0xf]
      %v223 = vld [vmem:[%s199 + $0x5c] sm:$0x3]
      %v224 = vld [vmem:[%s199 + $0x60] sm:$0xf]
      %v225 = vld [vmem:[%s199 + $0x64] sm:$0xf]
      %v226 = vld [vmem:[%s199 + $0x68] sm:$0x3]
      %v227 = vld [vmem:[%s199 + $0x6c] sm:$0xf]
      %v228 = vld [vmem:[%s199 + $0x70] sm:$0xf]
      %v229 = vld [vmem:[%s199 + $0x74] sm:$0x3]
      %v230 = vld [vmem:[%s199 + $0x78] sm:$0xf]
      %v231 = vld [vmem:[%s199 + $0x7c] sm:$0xf]
      %v232 = vld [vmem:[%s199 + $0x80] sm:$0x3]
      %v233 = vld [vmem:[%s199 + $0x84] sm:$0xf]
      %v234 = vld [vmem:[%s199 + $0x88] sm:$0xf]
      %v235 = vld [vmem:[%s199 + $0x8c] sm:$0x3]
      %v252 = vunpack.c.l.b16 %v200
      %v253 = vunpack.c.l.b16 %v201
      %v254 = vunpack.c.l.b16 %v203
      %v255 = vunpack.c.l.b16 %v204
      %v256 = vunpack.c.l.b16 %v206
      %v257 = vunpack.c.l.b16 %v207
      %v258 = vunpack.c.l.b16 %v209
      %v259 = vunpack.c.l.b16 %v210
      %v260 = vunpack.c.l.b16 %v212
      %v261 = vunpack.c.l.b16 %v213
      %v262 = vunpack.c.l.b16 %v215
      %v263 = vunpack.c.l.b16 %v216
      %v264 = vunpack.c.l.b16 %v218
      %v265 = vunpack.c.l.b16 %v219
      %v266 = vunpack.c.l.b16 %v221
      %v267 = vunpack.c.l.b16 %v222
      %v268 = vpack.c.b16 %v253, %v252
      %v269 = vpack.c.b16 %v255, %v254
      %v270 = vpack.c.b16 %v257, %v256
      %v271 = vpack.c.b16 %v259, %v258
      %v272 = vpack.c.b16 %v261, %v260
      %v273 = vpack.c.b16 %v263, %v262
      %v274 = vpack.c.b16 %v265, %v264
      %v275 = vpack.c.b16 %v267, %v266
      %v292 = vunpack.c.l.b16 %v202
      %v293 = vunpack.c.l.b16 %v205
      %v294 = vunpack.c.l.b16 %v208
      %v295 = vunpack.c.l.b16 %v211
      %v296 = vunpack.c.l.b16 %v214
      %v297 = vunpack.c.l.b16 %v217
      %v298 = vunpack.c.l.b16 %v220
      %v299 = vunpack.c.l.b16 %v223
      %v300 = vpack.c.b16 %v292, %v292
      %v301 = vpack.c.b16 %v293, %v293
      %v302 = vpack.c.b16 %v294, %v294
      %v303 = vpack.c.b16 %v295, %v295
      %v304 = vpack.c.b16 %v296, %v296
      %v305 = vpack.c.b16 %v297, %v297
      %v306 = vpack.c.b16 %v298, %v298
      %v307 = vpack.c.b16 %v299, %v299
      %vm308 = vsmask.f32 7424
      %v310 = vshrl.u32 %v268, 16
      %v312 = vshll.u32 %v268, 16
      %v314 = vrot.slane %v312, 1
      %v315 = vor.u32 %v310, %v314
      %v317 = vshll.u32 %v300, 16
      %v319 = vrot.slane %v317, 1
      %v320 = vsel %vm308, %v315, %v319
      %v322 = vshrl.u32 %v269, 16
      %v324 = vshll.u32 %v269, 16
      %v326 = vrot.slane %v324, 1
      %v327 = vor.u32 %v322, %v326
      %v329 = vshll.u32 %v301, 16
      %v331 = vrot.slane %v329, 1
      %v332 = vsel %vm308, %v327, %v331
      %v334 = vshrl.u32 %v270, 16
      %v336 = vshll.u32 %v270, 16
      %v338 = vrot.slane %v336, 1
      %v339 = vor.u32 %v334, %v338
      %v341 = vshll.u32 %v302, 16
      %v343 = vrot.slane %v341, 1
      %v344 = vsel %vm308, %v339, %v343
      %v346 = vshrl.u32 %v271, 16
      %v348 = vshll.u32 %v271, 16
      %v350 = vrot.slane %v348, 1
      %v351 = vor.u32 %v346, %v350
      %v353 = vshll.u32 %v303, 16
      %v355 = vrot.slane %v353, 1
      %v356 = vsel %vm308, %v351, %v355
      %v358 = vshrl.u32 %v272, 16
      %v360 = vshll.u32 %v272, 16
      %v362 = vrot.slane %v360, 1
      %v363 = vor.u32 %v358, %v362
      %v365 = vshll.u32 %v304, 16
      %v367 = vrot.slane %v365, 1
      %v368 = vsel %vm308, %v363, %v367
      %v370 = vshrl.u32 %v273, 16
      %v372 = vshll.u32 %v273, 16
      %v374 = vrot.slane %v372, 1
      %v375 = vor.u32 %v370, %v374
      %v377 = vshll.u32 %v305, 16
      %v379 = vrot.slane %v377, 1
      %v380 = vsel %vm308, %v375, %v379
      %v382 = vshrl.u32 %v274, 16
      %v384 = vshll.u32 %v274, 16
      %v386 = vrot.slane %v384, 1
      %v387 = vor.u32 %v382, %v386
      %v389 = vshll.u32 %v306, 16
      %v391 = vrot.slane %v389, 1
      %v392 = vsel %vm308, %v387, %v391
      %v394 = vshrl.u32 %v275, 16
      %v396 = vshll.u32 %v275, 16
      %v398 = vrot.slane %v396, 1
      %v399 = vor.u32 %v394, %v398
      %v401 = vshll.u32 %v307, 16
      %v403 = vrot.slane %v401, 1
      %v404 = vsel %vm308, %v399, %v403
      %vm413 = vcmask 1046528
      %v414 = vrot.slane %v268, 1
      %v415 = vrot.slane %v300, 1
      %v416 = vsel %vm413, %v414, %v415
      %v417 = vrot.slane %v269, 1
      %v418 = vrot.slane %v301, 1
      %v419 = vsel %vm413, %v417, %v418
      %v420 = vrot.slane %v270, 1
      %v421 = vrot.slane %v302, 1
      %v422 = vsel %vm413, %v420, %v421
      %v423 = vrot.slane %v271, 1
      %v424 = vrot.slane %v303, 1
      %v425 = vsel %vm413, %v423, %v424
      %v426 = vrot.slane %v272, 1
      %v427 = vrot.slane %v304, 1
      %v428 = vsel %vm413, %v426, %v427
      %v429 = vrot.slane %v273, 1
      %v430 = vrot.slane %v305, 1
      %v431 = vsel %vm413, %v429, %v430
      %v432 = vrot.slane %v274, 1
      %v433 = vrot.slane %v306, 1
      %v434 = vsel %vm413, %v432, %v433
      %v435 = vrot.slane %v275, 1
      %v436 = vrot.slane %v307, 1
      %v437 = vsel %vm413, %v435, %v436
      %vm446 = vsmask.f32 6400
      %v447 = vrot.slane %v310, 1
      %v448 = vrot.slane %v312, 2
      %v449 = vor.u32 %v447, %v448
      %v450 = vshrl.u32 %v300, 16
      %v452 = vrot.slane %v450, 1
      %v453 = vrot.slane %v317, 2
      %v454 = vor.u32 %v452, %v453
      %v455 = vsel %vm446, %v449, %v454
      %v456 = vrot.slane %v322, 1
      %v457 = vrot.slane %v324, 2
      %v458 = vor.u32 %v456, %v457
      %v459 = vshrl.u32 %v301, 16
      %v461 = vrot.slane %v459, 1
      %v462 = vrot.slane %v329, 2
      %v463 = vor.u32 %v461, %v462
      %v464 = vsel %vm446, %v458, %v463
      %v465 = vrot.slane %v334, 1
      %v466 = vrot.slane %v336, 2
      %v467 = vor.u32 %v465, %v466
      %v468 = vshrl.u32 %v302, 16
      %v470 = vrot.slane %v468, 1
      %v471 = vrot.slane %v341, 2
      %v472 = vor.u32 %v470, %v471
      %v473 = vsel %vm446, %v467, %v472
      %v474 = vrot.slane %v346, 1
      %v475 = vrot.slane %v348, 2
      %v476 = vor.u32 %v474, %v475
      %v477 = vshrl.u32 %v303, 16
      %v479 = vrot.slane %v477, 1
      %v480 = vrot.slane %v353, 2
      %v481 = vor.u32 %v479, %v480
      %v482 = vsel %vm446, %v476, %v481
      %v483 = vrot.slane %v358, 1
      %v484 = vrot.slane %v360, 2
      %v485 = vor.u32 %v483, %v484
      %v486 = vshrl.u32 %v304, 16
      %v488 = vrot.slane %v486, 1
      %v489 = vrot.slane %v365, 2
      %v490 = vor.u32 %v488, %v489
      %v491 = vsel %vm446, %v485, %v490
      %v492 = vrot.slane %v370, 1
      %v493 = vrot.slane %v372, 2
      %v494 = vor.u32 %v492, %v493
      %v495 = vshrl.u32 %v305, 16
      %v497 = vrot.slane %v495, 1
      %v498 = vrot.slane %v377, 2
      %v499 = vor.u32 %v497, %v498
      %v500 = vsel %vm446, %v494, %v499
      %v501 = vrot.slane %v382, 1
      %v502 = vrot.slane %v384, 2
      %v503 = vor.u32 %v501, %v502
      %v504 = vshrl.u32 %v306, 16
      %v506 = vrot.slane %v504, 1
      %v507 = vrot.slane %v389, 2
      %v508 = vor.u32 %v506, %v507
      %v509 = vsel %vm446, %v503, %v508
      %v510 = vrot.slane %v394, 1
      %v511 = vrot.slane %v396, 2
      %v512 = vor.u32 %v510, %v511
      %v513 = vshrl.u32 %v307, 16
      %v515 = vrot.slane %v513, 1
      %v516 = vrot.slane %v401, 2
      %v517 = vor.u32 %v515, %v516
      %v518 = vsel %vm446, %v512, %v517
      %vm527 = vcmask 1045504
      %v528 = vrot.slane %v268, 2
      %v529 = vrot.slane %v300, 2
      %v530 = vsel %vm527, %v528, %v529
      %v531 = vrot.slane %v269, 2
      %v532 = vrot.slane %v301, 2
      %v533 = vsel %vm527, %v531, %v532
      %v534 = vrot.slane %v270, 2
      %v535 = vrot.slane %v302, 2
      %v536 = vsel %vm527, %v534, %v535
      %v537 = vrot.slane %v271, 2
      %v538 = vrot.slane %v303, 2
      %v539 = vsel %vm527, %v537, %v538
      %v540 = vrot.slane %v272, 2
      %v541 = vrot.slane %v304, 2
      %v542 = vsel %vm527, %v540, %v541
      %v543 = vrot.slane %v273, 2
      %v544 = vrot.slane %v305, 2
      %v545 = vsel %vm527, %v543, %v544
      %v546 = vrot.slane %v274, 2
      %v547 = vrot.slane %v306, 2
      %v548 = vsel %vm527, %v546, %v547
      %v549 = vrot.slane %v275, 2
      %v550 = vrot.slane %v307, 2
      %v551 = vsel %vm527, %v549, %v550
      %v560 = vld [vmem:[%s1] sm:$0xf]
      %v561 = vld [vmem:[%s1 + $0x4] sm:$0xf]
      %v562 = vld [vmem:[%s1 + $0x8] sm:$0xf]
      %v563 = vld [vmem:[%s1 + $0xc] sm:$0xf]
      %v564 = vld [vmem:[%s1 + $0x10] sm:$0xf]
      %v565 = vld [vmem:[%s1 + $0x14] sm:$0xf]
      %v566 = vld [vmem:[%s1 + $0x18] sm:$0xf]
      %v567 = vld [vmem:[%s1 + $0x1c] sm:$0xf]
      %v568 = vld [vmem:[%s1 + $0x20] sm:$0xf]
      %v569 = vld [vmem:[%s1 + $0x24] sm:$0xf]
      %v570 = vld [vmem:[%s1 + $0x28] sm:$0xf]
      %v571 = vld [vmem:[%s1 + $0x2c] sm:$0xf]
      %v572 = vld [vmem:[%s1 + $0x30] sm:$0xf]
      %v573 = vld [vmem:[%s1 + $0x34] sm:$0xf]
      %v574 = vld [vmem:[%s1 + $0x38] sm:$0xf]
      %v575 = vld [vmem:[%s1 + $0x3c] sm:$0xf]
      %v576 = vld [vmem:[%s1 + $0x40] sm:$0xf]
      %v577 = vld [vmem:[%s1 + $0x44] sm:$0xf]
      %v578 = vld [vmem:[%s1 + $0x48] sm:$0xf]
      %v579 = vld [vmem:[%s1 + $0x4c] sm:$0xf]
      %v580 = vld [vmem:[%s1 + $0x50] sm:$0xf]
      %v581 = vld [vmem:[%s1 + $0x54] sm:$0xf]
      %v582 = vld [vmem:[%s1 + $0x58] sm:$0xf]
      %v583 = vld [vmem:[%s1 + $0x5c] sm:$0xf]
      %v584 = vld [vmem:[%s1 + $0x60] sm:$0xf]
      %v585 = vld [vmem:[%s1 + $0x64] sm:$0xf]
      %v586 = vld [vmem:[%s1 + $0x68] sm:$0xf]
      %v587 = vld [vmem:[%s1 + $0x6c] sm:$0xf]
      %v588 = vld [vmem:[%s1 + $0x70] sm:$0xf]
      %v589 = vld [vmem:[%s1 + $0x74] sm:$0xf]
      %v590 = vld [vmem:[%s1 + $0x78] sm:$0xf]
      %v591 = vld [vmem:[%s1 + $0x7c] sm:$0xf]
      %v592 = vld [vmem:[%s1 + $0x80] sm:$0xf]
      %v593 = vld [vmem:[%s1 + $0x84] sm:$0xf]
      %v594 = vld [vmem:[%s1 + $0x88] sm:$0xf]
      %v595 = vld [vmem:[%s1 + $0x8c] sm:$0xf]
      %v596 = vld [vmem:[%s1 + $0x90] sm:$0xf]
      %v597 = vld [vmem:[%s1 + $0x94] sm:$0xf]
      %v598 = vld [vmem:[%s1 + $0x98] sm:$0xf]
      %v599 = vld [vmem:[%s1 + $0x9c] sm:$0xf]
      %v600 = vld [vmem:[%s1 + $0xa0] sm:$0xf]
      %v601 = vld [vmem:[%s1 + $0xa4] sm:$0xf]
      %v602 = vld [vmem:[%s1 + $0xa8] sm:$0xf]
      %v603 = vld [vmem:[%s1 + $0xac] sm:$0xf]
      %v604 = vld [vmem:[%s1 + $0xb0] sm:$0xf]
      %v605 = vld [vmem:[%s1 + $0xb4] sm:$0xf]
      %v606 = vld [vmem:[%s1 + $0xb8] sm:$0xf]
      %v607 = vld [vmem:[%s1 + $0xbc] sm:$0xf]
      %v608 = vld [vmem:[%s1 + $0xc0] sm:$0xf]
      %v609 = vld [vmem:[%s1 + $0xc4] sm:$0xf]
      %v610 = vld [vmem:[%s1 + $0xc8] sm:$0xf]
      %v611 = vld [vmem:[%s1 + $0xcc] sm:$0xf]
      %v612 = vld [vmem:[%s1 + $0xd0] sm:$0xf]
      %v613 = vld [vmem:[%s1 + $0xd4] sm:$0xf]
      %v614 = vld [vmem:[%s1 + $0xd8] sm:$0xf]
      %v615 = vld [vmem:[%s1 + $0xdc] sm:$0xf]
      %v616 = vld [vmem:[%s1 + $0xe0] sm:$0xf]
      %v617 = vld [vmem:[%s1 + $0xe4] sm:$0xf]
      %v618 = vld [vmem:[%s1 + $0xe8] sm:$0xf]
      %v619 = vld [vmem:[%s1 + $0xec] sm:$0xf]
      %v620 = vld [vmem:[%s1 + $0xf0] sm:$0xf]
      %v621 = vld [vmem:[%s1 + $0xf4] sm:$0xf]
      %v622 = vld [vmem:[%s1 + $0xf8] sm:$0xf]
      %v623 = vld [vmem:[%s1 + $0xfc] sm:$0xf]
      %v624 = vld [vmem:[%s1 + $0x100] sm:$0xf]
      %v625 = vld [vmem:[%s1 + $0x104] sm:$0xf]
      %v626 = vld [vmem:[%s1 + $0x108] sm:$0xf]
      %v627 = vld [vmem:[%s1 + $0x10c] sm:$0xf]
      %v628 = vld [vmem:[%s1 + $0x110] sm:$0xf]
      %v629 = vld [vmem:[%s1 + $0x114] sm:$0xf]
      %v630 = vld [vmem:[%s1 + $0x118] sm:$0xf]
      %v631 = vld [vmem:[%s1 + $0x11c] sm:$0xf]
      %v632 = vld [vmem:[%s1 + $0x120] sm:$0xf]
      %v633 = vld [vmem:[%s1 + $0x124] sm:$0xf]
      %v634 = vld [vmem:[%s1 + $0x128] sm:$0xf]
      %v635 = vld [vmem:[%s1 + $0x12c] sm:$0xf]
      %v636 = vld [vmem:[%s1 + $0x130] sm:$0xf]
      %v637 = vld [vmem:[%s1 + $0x134] sm:$0xf]
      %v638 = vld [vmem:[%s1 + $0x138] sm:$0xf]
      %v639 = vld [vmem:[%s1 + $0x13c] sm:$0xf]
      %v642 = vunpack.c.l.b16 %v224
      %v643 = vunpack.c.l.b16 %v225
      %v644 = vpack.c.b16 %v643, %v642
      %v647 = vunpack.c.l.b16 %v226
      %v648 = vpack.c.b16 %v647, %v647
      %v650 = vshrl.u32 %v644, 16
      %v652 = vshll.u32 %v644, 16
      %v654 = vrot.slane %v652, 1
      %v655 = vor.u32 %v650, %v654
      %v657 = vshll.u32 %v648, 16
      %v659 = vrot.slane %v657, 1
      %v660 = vsel %vm308, %v655, %v659
      %v662 = vrot.slane %v644, 1
      %v663 = vrot.slane %v648, 1
      %v664 = vsel %vm413, %v662, %v663
      %v666 = vrot.slane %v650, 1
      %v667 = vrot.slane %v652, 2
      %v668 = vor.u32 %v666, %v667
      %v669 = vshrl.u32 %v648, 16
      %v671 = vrot.slane %v669, 1
      %v672 = vrot.slane %v657, 2
      %v673 = vor.u32 %v671, %v672
      %v674 = vsel %vm446, %v668, %v673
      %v676 = vrot.slane %v644, 2
      %v677 = vrot.slane %v648, 2
      %v678 = vsel %vm527, %v676, %v677
      %s680 = scalar_lea.vmem %s1, 320
      %v681 = vld [vmem:[%s680] sm:$0xf]
      %v682 = vld [vmem:[%s680 + $0x4] sm:$0xf]
      %v683 = vld [vmem:[%s680 + $0x8] sm:$0xf]
      %v684 = vld [vmem:[%s680 + $0xc] sm:$0xf]
      %v685 = vld [vmem:[%s680 + $0x10] sm:$0xf]
      %v686 = vld [vmem:[%s680 + $0x14] sm:$0xf]
      %v687 = vld [vmem:[%s680 + $0x18] sm:$0xf]
      %v688 = vld [vmem:[%s680 + $0x1c] sm:$0xf]
      %v689 = vld [vmem:[%s680 + $0x20] sm:$0xf]
      %v690 = vld [vmem:[%s680 + $0x24] sm:$0xf]
      %v691 = vld [vmem:[%s680 + $0x28] sm:$0xf]
      %v692 = vld [vmem:[%s680 + $0x2c] sm:$0xf]
      %v693 = vld [vmem:[%s680 + $0x30] sm:$0xf]
      %v694 = vld [vmem:[%s680 + $0x34] sm:$0xf]
      %v695 = vld [vmem:[%s680 + $0x38] sm:$0xf]
      %v696 = vld [vmem:[%s680 + $0x3c] sm:$0xf]
      %v697 = vld [vmem:[%s680 + $0x40] sm:$0xf]
      %v698 = vld [vmem:[%s680 + $0x44] sm:$0xf]
      %v699 = vld [vmem:[%s680 + $0x48] sm:$0xf]
      %v700 = vld [vmem:[%s680 + $0x4c] sm:$0xf]
      %v701 = vld [vmem:[%s680 + $0x50] sm:$0xf]
      %v702 = vld [vmem:[%s680 + $0x54] sm:$0xf]
      %v703 = vld [vmem:[%s680 + $0x58] sm:$0xf]
      %v704 = vld [vmem:[%s680 + $0x5c] sm:$0xf]
      %v705 = vld [vmem:[%s680 + $0x60] sm:$0xf]
      %v706 = vld [vmem:[%s680 + $0x64] sm:$0xf]
      %v707 = vld [vmem:[%s680 + $0x68] sm:$0xf]
      %v708 = vld [vmem:[%s680 + $0x6c] sm:$0xf]
      %v709 = vld [vmem:[%s680 + $0x70] sm:$0xf]
      %v710 = vld [vmem:[%s680 + $0x74] sm:$0xf]
      %v711 = vld [vmem:[%s680 + $0x78] sm:$0xf]
      %v712 = vld [vmem:[%s680 + $0x7c] sm:$0xf]
      %v713 = vld [vmem:[%s680 + $0x80] sm:$0xf]
      %v714 = vld [vmem:[%s680 + $0x84] sm:$0xf]
      %v715 = vld [vmem:[%s680 + $0x88] sm:$0xf]
      %v716 = vld [vmem:[%s680 + $0x8c] sm:$0xf]
      %v717 = vld [vmem:[%s680 + $0x90] sm:$0xf]
      %v718 = vld [vmem:[%s680 + $0x94] sm:$0xf]
      %v719 = vld [vmem:[%s680 + $0x98] sm:$0xf]
      %v720 = vld [vmem:[%s680 + $0x9c] sm:$0xf]
      %v721 = vld [vmem:[%s680 + $0xa0] sm:$0xf]
      %v722 = vld [vmem:[%s680 + $0xa4] sm:$0xf]
      %v723 = vld [vmem:[%s680 + $0xa8] sm:$0xf]
      %v724 = vld [vmem:[%s680 + $0xac] sm:$0xf]
      %v725 = vld [vmem:[%s680 + $0xb0] sm:$0xf]
      %v726 = vld [vmem:[%s680 + $0xb4] sm:$0xf]
      %v727 = vld [vmem:[%s680 + $0xb8] sm:$0xf]
      %v728 = vld [vmem:[%s680 + $0xbc] sm:$0xf]
      %v729 = vld [vmem:[%s680 + $0xc0] sm:$0xf]
      %v730 = vld [vmem:[%s680 + $0xc4] sm:$0xf]
      %v731 = vld [vmem:[%s680 + $0xc8] sm:$0xf]
      %v732 = vld [vmem:[%s680 + $0xcc] sm:$0xf]
      %v733 = vld [vmem:[%s680 + $0xd0] sm:$0xf]
      %v734 = vld [vmem:[%s680 + $0xd4] sm:$0xf]
      %v735 = vld [vmem:[%s680 + $0xd8] sm:$0xf]
      %v736 = vld [vmem:[%s680 + $0xdc] sm:$0xf]
      %v737 = vld [vmem:[%s680 + $0xe0] sm:$0xf]
      %v738 = vld [vmem:[%s680 + $0xe4] sm:$0xf]
      %v739 = vld [vmem:[%s680 + $0xe8] sm:$0xf]
      %v740 = vld [vmem:[%s680 + $0xec] sm:$0xf]
      %v741 = vld [vmem:[%s680 + $0xf0] sm:$0xf]
      %v742 = vld [vmem:[%s680 + $0xf4] sm:$0xf]
      %v743 = vld [vmem:[%s680 + $0xf8] sm:$0xf]
      %v744 = vld [vmem:[%s680 + $0xfc] sm:$0xf]
      %v745 = vld [vmem:[%s680 + $0x100] sm:$0xf]
      %v746 = vld [vmem:[%s680 + $0x104] sm:$0xf]
      %v747 = vld [vmem:[%s680 + $0x108] sm:$0xf]
      %v748 = vld [vmem:[%s680 + $0x10c] sm:$0xf]
      %v749 = vld [vmem:[%s680 + $0x110] sm:$0xf]
      %v750 = vld [vmem:[%s680 + $0x114] sm:$0xf]
      %v751 = vld [vmem:[%s680 + $0x118] sm:$0xf]
      %v752 = vld [vmem:[%s680 + $0x11c] sm:$0xf]
      %v753 = vld [vmem:[%s680 + $0x120] sm:$0xf]
      %v754 = vld [vmem:[%s680 + $0x124] sm:$0xf]
      %v755 = vld [vmem:[%s680 + $0x128] sm:$0xf]
      %v756 = vld [vmem:[%s680 + $0x12c] sm:$0xf]
      %v757 = vld [vmem:[%s680 + $0x130] sm:$0xf]
      %v758 = vld [vmem:[%s680 + $0x134] sm:$0xf]
      %v759 = vld [vmem:[%s680 + $0x138] sm:$0xf]
      %v760 = vld [vmem:[%s680 + $0x13c] sm:$0xf]
      %v841 = vunpack.c.l.b16 %v681
      %v842 = vunpack.c.l.b16 %v682
      %v843 = vunpack.c.l.b16 %v683
      %v844 = vunpack.c.l.b16 %v684
      %v845 = vunpack.c.l.b16 %v685
      %v846 = vunpack.c.l.b16 %v686
      %v847 = vunpack.c.l.b16 %v687
      %v848 = vunpack.c.l.b16 %v688
      %v849 = vunpack.c.l.b16 %v689
      %v850 = vunpack.c.l.b16 %v690
      %v851 = vunpack.c.l.b16 %v691
      %v852 = vunpack.c.l.b16 %v692
      %v853 = vunpack.c.l.b16 %v693
      %v854 = vunpack.c.l.b16 %v694
      %v855 = vunpack.c.l.b16 %v695
      %v856 = vunpack.c.l.b16 %v696
      %v857 = vunpack.c.l.b16 %v697
      %v858 = vunpack.c.l.b16 %v698
      %v859 = vunpack.c.l.b16 %v699
      %v860 = vunpack.c.l.b16 %v700
      %v861 = vunpack.c.l.b16 %v701
      %v862 = vunpack.c.l.b16 %v702
      %v863 = vunpack.c.l.b16 %v703
      %v864 = vunpack.c.l.b16 %v704
      %v865 = vunpack.c.l.b16 %v705
      %v866 = vunpack.c.l.b16 %v706
      %v867 = vunpack.c.l.b16 %v707
      %v868 = vunpack.c.l.b16 %v708
      %v869 = vunpack.c.l.b16 %v709
      %v870 = vunpack.c.l.b16 %v710
      %v871 = vunpack.c.l.b16 %v711
      %v872 = vunpack.c.l.b16 %v712
      %v873 = vunpack.c.l.b16 %v713
      %v874 = vunpack.c.l.b16 %v714
      %v875 = vunpack.c.l.b16 %v715
      %v876 = vunpack.c.l.b16 %v716
      %v877 = vunpack.c.l.b16 %v717
      %v878 = vunpack.c.l.b16 %v718
      %v879 = vunpack.c.l.b16 %v719
      %v880 = vunpack.c.l.b16 %v720
      %v881 = vunpack.c.l.b16 %v721
      %v882 = vunpack.c.l.b16 %v722
      %v883 = vunpack.c.l.b16 %v723
      %v884 = vunpack.c.l.b16 %v724
      %v885 = vunpack.c.l.b16 %v725
      %v886 = vunpack.c.l.b16 %v726
      %v887 = vunpack.c.l.b16 %v727
      %v888 = vunpack.c.l.b16 %v728
      %v889 = vunpack.c.l.b16 %v729
      %v890 = vunpack.c.l.b16 %v730
      %v891 = vunpack.c.l.b16 %v731
      %v892 = vunpack.c.l.b16 %v732
      %v893 = vunpack.c.l.b16 %v733
      %v894 = vunpack.c.l.b16 %v734
      %v895 = vunpack.c.l.b16 %v735
      %v896 = vunpack.c.l.b16 %v736
      %v897 = vunpack.c.l.b16 %v737
      %v898 = vunpack.c.l.b16 %v738
      %v899 = vunpack.c.l.b16 %v739
      %v900 = vunpack.c.l.b16 %v740
      %v901 = vunpack.c.l.b16 %v741
      %v902 = vunpack.c.l.b16 %v742
      %v903 = vunpack.c.l.b16 %v743
      %v904 = vunpack.c.l.b16 %v744
      %v905 = vunpack.c.l.b16 %v745
      %v906 = vunpack.c.l.b16 %v746
      %v907 = vunpack.c.l.b16 %v747
      %v908 = vunpack.c.l.b16 %v748
      %v909 = vunpack.c.l.b16 %v749
      %v910 = vunpack.c.l.b16 %v750
      %v911 = vunpack.c.l.b16 %v751
      %v912 = vunpack.c.l.b16 %v752
      %v913 = vunpack.c.l.b16 %v753
      %v914 = vunpack.c.l.b16 %v754
      %v915 = vunpack.c.l.b16 %v755
      %v916 = vunpack.c.l.b16 %v756
      %v917 = vunpack.c.l.b16 %v757
      %v918 = vunpack.c.l.b16 %v758
      %v919 = vunpack.c.l.b16 %v759
      %v920 = vunpack.c.l.b16 %v760
      %v921 = vpack.c.b16 %v842, %v841
      %v922 = vpack.c.b16 %v844, %v843
      %v923 = vpack.c.b16 %v846, %v845
      %v924 = vpack.c.b16 %v848, %v847
      %v925 = vpack.c.b16 %v850, %v849
      %v926 = vpack.c.b16 %v852, %v851
      %v927 = vpack.c.b16 %v854, %v853
      %v928 = vpack.c.b16 %v856, %v855
      %v929 = vpack.c.b16 %v858, %v857
      %v930 = vpack.c.b16 %v860, %v859
      %v931 = vpack.c.b16 %v862, %v861
      %v932 = vpack.c.b16 %v864, %v863
      %v933 = vpack.c.b16 %v866, %v865
      %v934 = vpack.c.b16 %v868, %v867
      %v935 = vpack.c.b16 %v870, %v869
      %v936 = vpack.c.b16 %v872, %v871
      %v937 = vpack.c.b16 %v874, %v873
      %v938 = vpack.c.b16 %v876, %v875
      %v939 = vpack.c.b16 %v878, %v877
      %v940 = vpack.c.b16 %v880, %v879
      %v941 = vpack.c.b16 %v882, %v881
      %v942 = vpack.c.b16 %v884, %v883
      %v943 = vpack.c.b16 %v886, %v885
      %v944 = vpack.c.b16 %v888, %v887
      %v945 = vpack.c.b16 %v890, %v889
      %v946 = vpack.c.b16 %v892, %v891
      %v947 = vpack.c.b16 %v894, %v893
      %v948 = vpack.c.b16 %v896, %v895
      %v949 = vpack.c.b16 %v898, %v897
      %v950 = vpack.c.b16 %v900, %v899
      %v951 = vpack.c.b16 %v902, %v901
      %v952 = vpack.c.b16 %v904, %v903
      %v953 = vpack.c.b16 %v906, %v905
      %v954 = vpack.c.b16 %v908, %v907
      %v955 = vpack.c.b16 %v910, %v909
      %v956 = vpack.c.b16 %v912, %v911
      %v957 = vpack.c.b16 %v914, %v913
      %v958 = vpack.c.b16 %v916, %v915
      %v959 = vpack.c.b16 %v918, %v917
      %v960 = vpack.c.b16 %v920, %v919
      %1001 = vmatpush.bf16.msra.mxu0 %v928
      %1002 = vmatpush.bf16.msra.mxu0 %v927
      %1003 = vmatpush.bf16.msra.mxu0 %v926
      %1004 = vmatpush.bf16.msra.mxu0 %v925
      %1005 = vmatpush.bf16.msra.mxu0 %v924
      %1006 = vmatpush.bf16.msra.mxu0 %v923
      %1007 = vmatpush.bf16.msra.mxu0 %v922
      %1008 = vmatpush.bf16.msra.mxu0 %v921
      %1009 = vmatmul.bf16.gmra.mxu0 %v269
      %v1010 = vpop.f32.mrf.mxu0
      %v1011 = vadd.f32 0.0, %v1010
      %v1012 = vpop.f32.mrf.mxu0
      %v1013 = vadd.f32 0.0, %v1012
      %1014 = vmatmul.bf16.gmra.mxu0 %v270
      %v1015 = vpop.f32.mrf.mxu0
      %v1016 = vadd.f32 0.0, %v1015
      %v1017 = vpop.f32.mrf.mxu0
      %v1018 = vadd.f32 0.0, %v1017
      %1019 = vmatmul.bf16.gmra.mxu0 %v271
      %v1020 = vpop.f32.mrf.mxu0
      %v1021 = vadd.f32 0.0, %v1020
      %v1022 = vpop.f32.mrf.mxu0
      %v1023 = vadd.f32 0.0, %v1022
      %1024 = vmatmul.bf16.gmra.mxu0 %v272
      %v1025 = vpop.f32.mrf.mxu0
      %v1026 = vadd.f32 0.0, %v1025
      %v1027 = vpop.f32.mrf.mxu0
      %v1028 = vadd.f32 0.0, %v1027
      %1029 = vmatmul.bf16.gmra.mxu0 %v273
      %v1030 = vpop.f32.mrf.mxu0
      %v1031 = vadd.f32 0.0, %v1030
      %v1032 = vpop.f32.mrf.mxu0
      %v1033 = vadd.f32 0.0, %v1032
      %1034 = vmatmul.bf16.gmra.mxu0 %v274
      %v1035 = vpop.f32.mrf.mxu0
      %v1036 = vadd.f32 0.0, %v1035
      %v1037 = vpop.f32.mrf.mxu0
      %v1038 = vadd.f32 0.0, %v1037
      %1039 = vmatmul.bf16.gmra.mxu0 %v275
      %v1040 = vpop.f32.mrf.mxu0
      %v1041 = vadd.f32 0.0, %v1040
      %v1042 = vpop.f32.mrf.mxu0
      %v1043 = vadd.f32 0.0, %v1042
      %1044 = vmatmul.bf16.gmra.mxu0 %v644
      %v1045 = vpop.f32.mrf.mxu0
      %v1046 = vadd.f32 0.0, %v1045
      %v1047 = vpop.f32.mrf.mxu0
      %v1048 = vadd.f32 0.0, %v1047
      %1049 = vdwg.mxu0
      %1050 = vmatpush.bf16.msra.mxu0 %v936
      %1051 = vmatpush.bf16.msra.mxu0 %v935
      %1052 = vmatpush.bf16.msra.mxu0 %v934
      %1053 = vmatpush.bf16.msra.mxu0 %v933
      %1054 = vmatpush.bf16.msra.mxu0 %v932
      %1055 = vmatpush.bf16.msra.mxu0 %v931
      %1056 = vmatpush.bf16.msra.mxu0 %v930
      %1057 = vmatpush.bf16.msra.mxu0 %v929
      %1058 = vmatmul.bf16.gmra.mxu0 %v332
      %v1059 = vpop.f32.mrf.mxu0
      %v1060 = vadd.f32 %v1011, %v1059
      %v1061 = vpop.f32.mrf.mxu0
      %v1062 = vadd.f32 %v1013, %v1061
      %1063 = vmatmul.bf16.gmra.mxu0 %v344
      %v1064 = vpop.f32.mrf.mxu0
      %v1065 = vadd.f32 %v1016, %v1064
      %v1066 = vpop.f32.mrf.mxu0
      %v1067 = vadd.f32 %v1018, %v1066
      %1068 = vmatmul.bf16.gmra.mxu0 %v356
      %v1069 = vpop.f32.mrf.mxu0
      %v1070 = vadd.f32 %v1021, %v1069
      %v1071 = vpop.f32.mrf.mxu0
      %v1072 = vadd.f32 %v1023, %v1071
      %1073 = vmatmul.bf16.gmra.mxu0 %v368
      %v1074 = vpop.f32.mrf.mxu0
      %v1075 = vadd.f32 %v1026, %v1074
      %v1076 = vpop.f32.mrf.mxu0
      %v1077 = vadd.f32 %v1028, %v1076
      %1078 = vmatmul.bf16.gmra.mxu0 %v380
      %v1079 = vpop.f32.mrf.mxu0
      %v1080 = vadd.f32 %v1031, %v1079
      %v1081 = vpop.f32.mrf.mxu0
      %v1082 = vadd.f32 %v1033, %v1081
      %1083 = vmatmul.bf16.gmra.mxu0 %v392
      %v1084 = vpop.f32.mrf.mxu0
      %v1085 = vadd.f32 %v1036, %v1084
      %v1086 = vpop.f32.mrf.mxu0
      %v1087 = vadd.f32 %v1038, %v1086
      %1088 = vmatmul.bf16.gmra.mxu0 %v404
      %v1089 = vpop.f32.mrf.mxu0
      %v1090 = vadd.f32 %v1041, %v1089
      %v1091 = vpop.f32.mrf.mxu0
      %v1092 = vadd.f32 %v1043, %v1091
      %1093 = vmatmul.bf16.gmra.mxu0 %v660
      %v1094 = vpop.f32.mrf.mxu0
      %v1095 = vadd.f32 %v1046, %v1094
      %v1096 = vpop.f32.mrf.mxu0
      %v1097 = vadd.f32 %v1048, %v1096
      %1098 = vdwg.mxu0
      %1099 = vmatpush.bf16.msra.mxu0 %v944
      %1100 = vmatpush.bf16.msra.mxu0 %v943
      %1101 = vmatpush.bf16.msra.mxu0 %v942
      %1102 = vmatpush.bf16.msra.mxu0 %v941
      %1103 = vmatpush.bf16.msra.mxu0 %v940
      %1104 = vmatpush.bf16.msra.mxu0 %v939
      %1105 = vmatpush.bf16.msra.mxu0 %v938
      %1106 = vmatpush.bf16.msra.mxu0 %v937
      %1107 = vmatmul.bf16.gmra.mxu0 %v419
      %v1108 = vpop.f32.mrf.mxu0
      %v1109 = vadd.f32 %v1060, %v1108
      %v1110 = vpop.f32.mrf.mxu0
      %v1111 = vadd.f32 %v1062, %v1110
      %1112 = vmatmul.bf16.gmra.mxu0 %v422
      %v1113 = vpop.f32.mrf.mxu0
      %v1114 = vadd.f32 %v1065, %v1113
      %v1115 = vpop.f32.mrf.mxu0
      %v1116 = vadd.f32 %v1067, %v1115
      %1117 = vmatmul.bf16.gmra.mxu0 %v425
      %v1118 = vpop.f32.mrf.mxu0
      %v1119 = vadd.f32 %v1070, %v1118
      %v1120 = vpop.f32.mrf.mxu0
      %v1121 = vadd.f32 %v1072, %v1120
      %1122 = vmatmul.bf16.gmra.mxu0 %v428
      %v1123 = vpop.f32.mrf.mxu0
      %v1124 = vadd.f32 %v1075, %v1123
      %v1125 = vpop.f32.mrf.mxu0
      %v1126 = vadd.f32 %v1077, %v1125
      %1127 = vmatmul.bf16.gmra.mxu0 %v431
      %v1128 = vpop.f32.mrf.mxu0
      %v1129 = vadd.f32 %v1080, %v1128
      %v1130 = vpop.f32.mrf.mxu0
      %v1131 = vadd.f32 %v1082, %v1130
      %1132 = vmatmul.bf16.gmra.mxu0 %v434
      %v1133 = vpop.f32.mrf.mxu0
      %v1134 = vadd.f32 %v1085, %v1133
      %v1135 = vpop.f32.mrf.mxu0
      %v1136 = vadd.f32 %v1087, %v1135
      %1137 = vmatmul.bf16.gmra.mxu0 %v437
      %v1138 = vpop.f32.mrf.mxu0
      %v1139 = vadd.f32 %v1090, %v1138
      %v1140 = vpop.f32.mrf.mxu0
      %v1141 = vadd.f32 %v1092, %v1140
      %1142 = vmatmul.bf16.gmra.mxu0 %v664
      %v1143 = vpop.f32.mrf.mxu0
      %v1144 = vadd.f32 %v1095, %v1143
      %v1145 = vpop.f32.mrf.mxu0
      %v1146 = vadd.f32 %v1097, %v1145
      %1147 = vdwg.mxu0
      %1148 = vmatpush.bf16.msra.mxu0 %v952
      %1149 = vmatpush.bf16.msra.mxu0 %v951
      %1150 = vmatpush.bf16.msra.mxu0 %v950
      %1151 = vmatpush.bf16.msra.mxu0 %v949
      %1152 = vmatpush.bf16.msra.mxu0 %v948
      %1153 = vmatpush.bf16.msra.mxu0 %v947
      %1154 = vmatpush.bf16.msra.mxu0 %v946
      %1155 = vmatpush.bf16.msra.mxu0 %v945
      %1156 = vmatmul.bf16.gmra.mxu0 %v464
      %v1157 = vpop.f32.mrf.mxu0
      %v1158 = vadd.f32 %v1109, %v1157
      %v1159 = vpop.f32.mrf.mxu0
      %v1160 = vadd.f32 %v1111, %v1159
      %1161 = vmatmul.bf16.gmra.mxu0 %v473
      %v1162 = vpop.f32.mrf.mxu0
      %v1163 = vadd.f32 %v1114, %v1162
      %v1164 = vpop.f32.mrf.mxu0
      %v1165 = vadd.f32 %v1116, %v1164
      %1166 = vmatmul.bf16.gmra.mxu0 %v482
      %v1167 = vpop.f32.mrf.mxu0
      %v1168 = vadd.f32 %v1119, %v1167
      %v1169 = vpop.f32.mrf.mxu0
      %v1170 = vadd.f32 %v1121, %v1169
      %1171 = vmatmul.bf16.gmra.mxu0 %v491
      %v1172 = vpop.f32.mrf.mxu0
      %v1173 = vadd.f32 %v1124, %v1172
      %v1174 = vpop.f32.mrf.mxu0
      %v1175 = vadd.f32 %v1126, %v1174
      %1176 = vmatmul.bf16.gmra.mxu0 %v500
      %v1177 = vpop.f32.mrf.mxu0
      %v1178 = vadd.f32 %v1129, %v1177
      %v1179 = vpop.f32.mrf.mxu0
      %v1180 = vadd.f32 %v1131, %v1179
      %1181 = vmatmul.bf16.gmra.mxu0 %v509
      %v1182 = vpop.f32.mrf.mxu0
      %v1183 = vadd.f32 %v1134, %v1182
      %v1184 = vpop.f32.mrf.mxu0
      %v1185 = vadd.f32 %v1136, %v1184
      %1186 = vmatmul.bf16.gmra.mxu0 %v518
      %v1187 = vpop.f32.mrf.mxu0
      %v1188 = vadd.f32 %v1139, %v1187
      %v1189 = vpop.f32.mrf.mxu0
      %v1190 = vadd.f32 %v1141, %v1189
      %1191 = vmatmul.bf16.gmra.mxu0 %v674
      %v1192 = vpop.f32.mrf.mxu0
      %v1193 = vadd.f32 %v1144, %v1192
      %v1194 = vpop.f32.mrf.mxu0
      %v1195 = vadd.f32 %v1146, %v1194
      %1196 = vdwg.mxu0
      %1197 = vmatpush.bf16.msra.mxu0 %v960
      %1198 = vmatpush.bf16.msra.mxu0 %v959
      %1199 = vmatpush.bf16.msra.mxu0 %v958
      %1200 = vmatpush.bf16.msra.mxu0 %v957
      %1201 = vmatpush.bf16.msra.mxu0 %v956
      %1202 = vmatpush.bf16.msra.mxu0 %v955
      %1203 = vmatpush.bf16.msra.mxu0 %v954
      %1204 = vmatpush.bf16.msra.mxu0 %v953
      %1205 = vmatmul.bf16.gmra.mxu0 %v533
      %v1206 = vpop.f32.mrf.mxu0
      %v1207 = vadd.f32 %v1158, %v1206
      %v1208 = vpop.f32.mrf.mxu0
      %v1209 = vadd.f32 %v1160, %v1208
      %1210 = vmatmul.bf16.gmra.mxu0 %v536
      %v1211 = vpop.f32.mrf.mxu0
      %v1212 = vadd.f32 %v1163, %v1211
      %v1213 = vpop.f32.mrf.mxu0
      %v1214 = vadd.f32 %v1165, %v1213
      %1215 = vmatmul.bf16.gmra.mxu0 %v539
      %v1216 = vpop.f32.mrf.mxu0
      %v1217 = vadd.f32 %v1168, %v1216
      %v1218 = vpop.f32.mrf.mxu0
      %v1219 = vadd.f32 %v1170, %v1218
      %1220 = vmatmul.bf16.gmra.mxu0 %v542
      %v1221 = vpop.f32.mrf.mxu0
      %v1222 = vadd.f32 %v1173, %v1221
      %v1223 = vpop.f32.mrf.mxu0
      %v1224 = vadd.f32 %v1175, %v1223
      %1225 = vmatmul.bf16.gmra.mxu0 %v545
      %v1226 = vpop.f32.mrf.mxu0
      %v1227 = vadd.f32 %v1178, %v1226
      %v1228 = vpop.f32.mrf.mxu0
      %v1229 = vadd.f32 %v1180, %v1228
      %1230 = vmatmul.bf16.gmra.mxu0 %v548
      %v1231 = vpop.f32.mrf.mxu0
      %v1232 = vadd.f32 %v1183, %v1231
      %v1233 = vpop.f32.mrf.mxu0
      %v1234 = vadd.f32 %v1185, %v1233
      %1235 = vmatmul.bf16.gmra.mxu0 %v551
      %v1236 = vpop.f32.mrf.mxu0
      %v1237 = vadd.f32 %v1188, %v1236
      %v1238 = vpop.f32.mrf.mxu0
      %v1239 = vadd.f32 %v1190, %v1238
      %1240 = vmatmul.bf16.gmra.mxu0 %v678
      %v1241 = vpop.f32.mrf.mxu0
      %v1242 = vadd.f32 %v1193, %v1241
      %v1243 = vpop.f32.mrf.mxu0
      %v1244 = vadd.f32 %v1195, %v1243
      %1245 = vdwg.mxu0
      %v1326 = vunpack.c.l.b16 %v560
      %v1327 = vunpack.c.l.b16 %v561
      %v1328 = vunpack.c.l.b16 %v562
      %v1329 = vunpack.c.l.b16 %v563
      %v1330 = vunpack.c.l.b16 %v564
      %v1331 = vunpack.c.l.b16 %v565
      %v1332 = vunpack.c.l.b16 %v566
      %v1333 = vunpack.c.l.b16 %v567
      %v1334 = vunpack.c.l.b16 %v568
      %v1335 = vunpack.c.l.b16 %v569
      %v1336 = vunpack.c.l.b16 %v570
      %v1337 = vunpack.c.l.b16 %v571
      %v1338 = vunpack.c.l.b16 %v572
      %v1339 = vunpack.c.l.b16 %v573
      %v1340 = vunpack.c.l.b16 %v574
      %v1341 = vunpack.c.l.b16 %v575
      %v1342 = vunpack.c.l.b16 %v576
      %v1343 = vunpack.c.l.b16 %v577
      %v1344 = vunpack.c.l.b16 %v578
      %v1345 = vunpack.c.l.b16 %v579
      %v1346 = vunpack.c.l.b16 %v580
      %v1347 = vunpack.c.l.b16 %v581
      %v1348 = vunpack.c.l.b16 %v582
      %v1349 = vunpack.c.l.b16 %v583
      %v1350 = vunpack.c.l.b16 %v584
      %v1351 = vunpack.c.l.b16 %v585
      %v1352 = vunpack.c.l.b16 %v586
      %v1353 = vunpack.c.l.b16 %v587
      %v1354 = vunpack.c.l.b16 %v588
      %v1355 = vunpack.c.l.b16 %v589
      %v1356 = vunpack.c.l.b16 %v590
      %v1357 = vunpack.c.l.b16 %v591
      %v1358 = vunpack.c.l.b16 %v592
      %v1359 = vunpack.c.l.b16 %v593
      %v1360 = vunpack.c.l.b16 %v594
      %v1361 = vunpack.c.l.b16 %v595
      %v1362 = vunpack.c.l.b16 %v596
      %v1363 = vunpack.c.l.b16 %v597
      %v1364 = vunpack.c.l.b16 %v598
      %v1365 = vunpack.c.l.b16 %v599
      %v1366 = vunpack.c.l.b16 %v600
      %v1367 = vunpack.c.l.b16 %v601
      %v1368 = vunpack.c.l.b16 %v602
      %v1369 = vunpack.c.l.b16 %v603
      %v1370 = vunpack.c.l.b16 %v604
      %v1371 = vunpack.c.l.b16 %v605
      %v1372 = vunpack.c.l.b16 %v606
      %v1373 = vunpack.c.l.b16 %v607
      %v1374 = vunpack.c.l.b16 %v608
      %v1375 = vunpack.c.l.b16 %v609
      %v1376 = vunpack.c.l.b16 %v610
      %v1377 = vunpack.c.l.b16 %v611
      %v1378 = vunpack.c.l.b16 %v612
      %v1379 = vunpack.c.l.b16 %v613
      %v1380 = vunpack.c.l.b16 %v614
      %v1381 = vunpack.c.l.b16 %v615
      %v1382 = vunpack.c.l.b16 %v616
      %v1383 = vunpack.c.l.b16 %v617
      %v1384 = vunpack.c.l.b16 %v618
      %v1385 = vunpack.c.l.b16 %v619
      %v1386 = vunpack.c.l.b16 %v620
      %v1387 = vunpack.c.l.b16 %v621
      %v1388 = vunpack.c.l.b16 %v622
      %v1389 = vunpack.c.l.b16 %v623
      %v1390 = vunpack.c.l.b16 %v624
      %v1391 = vunpack.c.l.b16 %v625
      %v1392 = vunpack.c.l.b16 %v626
      %v1393 = vunpack.c.l.b16 %v627
      %v1394 = vunpack.c.l.b16 %v628
      %v1395 = vunpack.c.l.b16 %v629
      %v1396 = vunpack.c.l.b16 %v630
      %v1397 = vunpack.c.l.b16 %v631
      %v1398 = vunpack.c.l.b16 %v632
      %v1399 = vunpack.c.l.b16 %v633
      %v1400 = vunpack.c.l.b16 %v634
      %v1401 = vunpack.c.l.b16 %v635
      %v1402 = vunpack.c.l.b16 %v636
      %v1403 = vunpack.c.l.b16 %v637
      %v1404 = vunpack.c.l.b16 %v638
      %v1405 = vunpack.c.l.b16 %v639
      %v1406 = vpack.c.b16 %v1327, %v1326
      %v1407 = vpack.c.b16 %v1329, %v1328
      %v1408 = vpack.c.b16 %v1331, %v1330
      %v1409 = vpack.c.b16 %v1333, %v1332
      %v1410 = vpack.c.b16 %v1335, %v1334
      %v1411 = vpack.c.b16 %v1337, %v1336
      %v1412 = vpack.c.b16 %v1339, %v1338
      %v1413 = vpack.c.b16 %v1341, %v1340
      %v1414 = vpack.c.b16 %v1343, %v1342
      %v1415 = vpack.c.b16 %v1345, %v1344
      %v1416 = vpack.c.b16 %v1347, %v1346
      %v1417 = vpack.c.b16 %v1349, %v1348
      %v1418 = vpack.c.b16 %v1351, %v1350
      %v1419 = vpack.c.b16 %v1353, %v1352
      %v1420 = vpack.c.b16 %v1355, %v1354
      %v1421 = vpack.c.b16 %v1357, %v1356
      %v1422 = vpack.c.b16 %v1359, %v1358
      %v1423 = vpack.c.b16 %v1361, %v1360
      %v1424 = vpack.c.b16 %v1363, %v1362
      %v1425 = vpack.c.b16 %v1365, %v1364
      %v1426 = vpack.c.b16 %v1367, %v1366
      %v1427 = vpack.c.b16 %v1369, %v1368
      %v1428 = vpack.c.b16 %v1371, %v1370
      %v1429 = vpack.c.b16 %v1373, %v1372
      %v1430 = vpack.c.b16 %v1375, %v1374
      %v1431 = vpack.c.b16 %v1377, %v1376
      %v1432 = vpack.c.b16 %v1379, %v1378
      %v1433 = vpack.c.b16 %v1381, %v1380
      %v1434 = vpack.c.b16 %v1383, %v1382
      %v1435 = vpack.c.b16 %v1385, %v1384
      %v1436 = vpack.c.b16 %v1387, %v1386
      %v1437 = vpack.c.b16 %v1389, %v1388
      %v1438 = vpack.c.b16 %v1391, %v1390
      %v1439 = vpack.c.b16 %v1393, %v1392
      %v1440 = vpack.c.b16 %v1395, %v1394
      %v1441 = vpack.c.b16 %v1397, %v1396
      %v1442 = vpack.c.b16 %v1399, %v1398
      %v1443 = vpack.c.b16 %v1401, %v1400
      %v1444 = vpack.c.b16 %v1403, %v1402
      %v1445 = vpack.c.b16 %v1405, %v1404
      %1486 = vmatpush.bf16.msra.mxu0 %v1413
      %1487 = vmatpush.bf16.msra.mxu0 %v1412
      %1488 = vmatpush.bf16.msra.mxu0 %v1411
      %1489 = vmatpush.bf16.msra.mxu0 %v1410
      %1490 = vmatpush.bf16.msra.mxu0 %v1409
      %1491 = vmatpush.bf16.msra.mxu0 %v1408
      %1492 = vmatpush.bf16.msra.mxu0 %v1407
      %1493 = vmatpush.bf16.msra.mxu0 %v1406
      %1494 = vmatmul.bf16.gmra.mxu0 %v268
      %v1495 = vpop.f32.mrf.mxu0
      %v1496 = vadd.f32 %v1207, %v1495
      %v1497 = vpop.f32.mrf.mxu0
      %v1498 = vadd.f32 %v1209, %v1497
      %1499 = vmatmul.bf16.gmra.mxu0 %v269
      %v1500 = vpop.f32.mrf.mxu0
      %v1501 = vadd.f32 %v1212, %v1500
      %v1502 = vpop.f32.mrf.mxu0
      %v1503 = vadd.f32 %v1214, %v1502
      %1504 = vmatmul.bf16.gmra.mxu0 %v270
      %v1505 = vpop.f32.mrf.mxu0
      %v1506 = vadd.f32 %v1217, %v1505
      %v1507 = vpop.f32.mrf.mxu0
      %v1508 = vadd.f32 %v1219, %v1507
      %1509 = vmatmul.bf16.gmra.mxu0 %v271
      %v1510 = vpop.f32.mrf.mxu0
      %v1511 = vadd.f32 %v1222, %v1510
      %v1512 = vpop.f32.mrf.mxu0
      %v1513 = vadd.f32 %v1224, %v1512
      %1514 = vmatmul.bf16.gmra.mxu0 %v272
      %v1515 = vpop.f32.mrf.mxu0
      %v1516 = vadd.f32 %v1227, %v1515
      %v1517 = vpop.f32.mrf.mxu0
      %v1518 = vadd.f32 %v1229, %v1517
      %1519 = vmatmul.bf16.gmra.mxu0 %v273
      %v1520 = vpop.f32.mrf.mxu0
      %v1521 = vadd.f32 %v1232, %v1520
      %v1522 = vpop.f32.mrf.mxu0
      %v1523 = vadd.f32 %v1234, %v1522
      %1524 = vmatmul.bf16.gmra.mxu0 %v274
      %v1525 = vpop.f32.mrf.mxu0
      %v1526 = vadd.f32 %v1237, %v1525
      %v1527 = vpop.f32.mrf.mxu0
      %v1528 = vadd.f32 %v1239, %v1527
      %1529 = vmatmul.bf16.gmra.mxu0 %v275
      %v1530 = vpop.f32.mrf.mxu0
      %v1531 = vadd.f32 %v1242, %v1530
      %v1532 = vpop.f32.mrf.mxu0
      %v1533 = vadd.f32 %v1244, %v1532
      %1534 = vdwg.mxu0
      %1535 = vmatpush.bf16.msra.mxu0 %v1421
      %1536 = vmatpush.bf16.msra.mxu0 %v1420
      %1537 = vmatpush.bf16.msra.mxu0 %v1419
      %1538 = vmatpush.bf16.msra.mxu0 %v1418
      %1539 = vmatpush.bf16.msra.mxu0 %v1417
      %1540 = vmatpush.bf16.msra.mxu0 %v1416
      %1541 = vmatpush.bf16.msra.mxu0 %v1415
      %1542 = vmatpush.bf16.msra.mxu0 %v1414
      %1543 = vmatmul.bf16.gmra.mxu0 %v320
      %v1544 = vpop.f32.mrf.mxu0
      %v1545 = vadd.f32 %v1496, %v1544
      %v1546 = vpop.f32.mrf.mxu0
      %v1547 = vadd.f32 %v1498, %v1546
      %1548 = vmatmul.bf16.gmra.mxu0 %v332
      %v1549 = vpop.f32.mrf.mxu0
      %v1550 = vadd.f32 %v1501, %v1549
      %v1551 = vpop.f32.mrf.mxu0
      %v1552 = vadd.f32 %v1503, %v1551
      %1553 = vmatmul.bf16.gmra.mxu0 %v344
      %v1554 = vpop.f32.mrf.mxu0
      %v1555 = vadd.f32 %v1506, %v1554
      %v1556 = vpop.f32.mrf.mxu0
      %v1557 = vadd.f32 %v1508, %v1556
      %1558 = vmatmul.bf16.gmra.mxu0 %v356
      %v1559 = vpop.f32.mrf.mxu0
      %v1560 = vadd.f32 %v1511, %v1559
      %v1561 = vpop.f32.mrf.mxu0
      %v1562 = vadd.f32 %v1513, %v1561
      %1563 = vmatmul.bf16.gmra.mxu0 %v368
      %v1564 = vpop.f32.mrf.mxu0
      %v1565 = vadd.f32 %v1516, %v1564
      %v1566 = vpop.f32.mrf.mxu0
      %v1567 = vadd.f32 %v1518, %v1566
      %1568 = vmatmul.bf16.gmra.mxu0 %v380
      %v1569 = vpop.f32.mrf.mxu0
      %v1570 = vadd.f32 %v1521, %v1569
      %v1571 = vpop.f32.mrf.mxu0
      %v1572 = vadd.f32 %v1523, %v1571
      %1573 = vmatmul.bf16.gmra.mxu0 %v392
      %v1574 = vpop.f32.mrf.mxu0
      %v1575 = vadd.f32 %v1526, %v1574
      %v1576 = vpop.f32.mrf.mxu0
      %v1577 = vadd.f32 %v1528, %v1576
      %1578 = vmatmul.bf16.gmra.mxu0 %v404
      %v1579 = vpop.f32.mrf.mxu0
      %v1580 = vadd.f32 %v1531, %v1579
      %v1581 = vpop.f32.mrf.mxu0
      %v1582 = vadd.f32 %v1533, %v1581
      %1583 = vdwg.mxu0
      %1584 = vmatpush.bf16.msra.mxu0 %v1429
      %1585 = vmatpush.bf16.msra.mxu0 %v1428
      %1586 = vmatpush.bf16.msra.mxu0 %v1427
      %1587 = vmatpush.bf16.msra.mxu0 %v1426
      %1588 = vmatpush.bf16.msra.mxu0 %v1425
      %1589 = vmatpush.bf16.msra.mxu0 %v1424
      %1590 = vmatpush.bf16.msra.mxu0 %v1423
      %1591 = vmatpush.bf16.msra.mxu0 %v1422
      %1592 = vmatmul.bf16.gmra.mxu0 %v416
      %v1593 = vpop.f32.mrf.mxu0
      %v1594 = vadd.f32 %v1545, %v1593
      %v1595 = vpop.f32.mrf.mxu0
      %v1596 = vadd.f32 %v1547, %v1595
      %1597 = vmatmul.bf16.gmra.mxu0 %v419
      %v1598 = vpop.f32.mrf.mxu0
      %v1599 = vadd.f32 %v1550, %v1598
      %v1600 = vpop.f32.mrf.mxu0
      %v1601 = vadd.f32 %v1552, %v1600
      %1602 = vmatmul.bf16.gmra.mxu0 %v422
      %v1603 = vpop.f32.mrf.mxu0
      %v1604 = vadd.f32 %v1555, %v1603
      %v1605 = vpop.f32.mrf.mxu0
      %v1606 = vadd.f32 %v1557, %v1605
      %1607 = vmatmul.bf16.gmra.mxu0 %v425
      %v1608 = vpop.f32.mrf.mxu0
      %v1609 = vadd.f32 %v1560, %v1608
      %v1610 = vpop.f32.mrf.mxu0
      %v1611 = vadd.f32 %v1562, %v1610
      %1612 = vmatmul.bf16.gmra.mxu0 %v428
      %v1613 = vpop.f32.mrf.mxu0
      %v1614 = vadd.f32 %v1565, %v1613
      %v1615 = vpop.f32.mrf.mxu0
      %v1616 = vadd.f32 %v1567, %v1615
      %1617 = vmatmul.bf16.gmra.mxu0 %v431
      %v1618 = vpop.f32.mrf.mxu0
      %v1619 = vadd.f32 %v1570, %v1618
      %v1620 = vpop.f32.mrf.mxu0
      %v1621 = vadd.f32 %v1572, %v1620
      %1622 = vmatmul.bf16.gmra.mxu0 %v434
      %v1623 = vpop.f32.mrf.mxu0
      %v1624 = vadd.f32 %v1575, %v1623
      %v1625 = vpop.f32.mrf.mxu0
      %v1626 = vadd.f32 %v1577, %v1625
      %1627 = vmatmul.bf16.gmra.mxu0 %v437
      %v1628 = vpop.f32.mrf.mxu0
      %v1629 = vadd.f32 %v1580, %v1628
      %v1630 = vpop.f32.mrf.mxu0
      %v1631 = vadd.f32 %v1582, %v1630
      %1632 = vdwg.mxu0
      %1633 = vmatpush.bf16.msra.mxu0 %v1437
      %1634 = vmatpush.bf16.msra.mxu0 %v1436
      %1635 = vmatpush.bf16.msra.mxu0 %v1435
      %1636 = vmatpush.bf16.msra.mxu0 %v1434
      %1637 = vmatpush.bf16.msra.mxu0 %v1433
      %1638 = vmatpush.bf16.msra.mxu0 %v1432
      %1639 = vmatpush.bf16.msra.mxu0 %v1431
      %1640 = vmatpush.bf16.msra.mxu0 %v1430
      %1641 = vmatmul.bf16.gmra.mxu0 %v455
      %v1642 = vpop.f32.mrf.mxu0
      %v1643 = vadd.f32 %v1594, %v1642
      %v1644 = vpop.f32.mrf.mxu0
      %v1645 = vadd.f32 %v1596, %v1644
      %1646 = vmatmul.bf16.gmra.mxu0 %v464
      %v1647 = vpop.f32.mrf.mxu0
      %v1648 = vadd.f32 %v1599, %v1647
      %v1649 = vpop.f32.mrf.mxu0
      %v1650 = vadd.f32 %v1601, %v1649
      %1651 = vmatmul.bf16.gmra.mxu0 %v473
      %v1652 = vpop.f32.mrf.mxu0
      %v1653 = vadd.f32 %v1604, %v1652
      %v1654 = vpop.f32.mrf.mxu0
      %v1655 = vadd.f32 %v1606, %v1654
      %1656 = vmatmul.bf16.gmra.mxu0 %v482
      %v1657 = vpop.f32.mrf.mxu0
      %v1658 = vadd.f32 %v1609, %v1657
      %v1659 = vpop.f32.mrf.mxu0
      %v1660 = vadd.f32 %v1611, %v1659
      %1661 = vmatmul.bf16.gmra.mxu0 %v491
      %v1662 = vpop.f32.mrf.mxu0
      %v1663 = vadd.f32 %v1614, %v1662
      %v1664 = vpop.f32.mrf.mxu0
      %v1665 = vadd.f32 %v1616, %v1664
      %1666 = vmatmul.bf16.gmra.mxu0 %v500
      %v1667 = vpop.f32.mrf.mxu0
      %v1668 = vadd.f32 %v1619, %v1667
      %v1669 = vpop.f32.mrf.mxu0
      %v1670 = vadd.f32 %v1621, %v1669
      %1671 = vmatmul.bf16.gmra.mxu0 %v509
      %v1672 = vpop.f32.mrf.mxu0
      %v1673 = vadd.f32 %v1624, %v1672
      %v1674 = vpop.f32.mrf.mxu0
      %v1675 = vadd.f32 %v1626, %v1674
      %1676 = vmatmul.bf16.gmra.mxu0 %v518
      %v1677 = vpop.f32.mrf.mxu0
      %v1678 = vadd.f32 %v1629, %v1677
      %v1679 = vpop.f32.mrf.mxu0
      %v1680 = vadd.f32 %v1631, %v1679
      %1681 = vdwg.mxu0
      %1682 = vmatpush.bf16.msra.mxu0 %v1445
      %1683 = vmatpush.bf16.msra.mxu0 %v1444
      %1684 = vmatpush.bf16.msra.mxu0 %v1443
      %1685 = vmatpush.bf16.msra.mxu0 %v1442
      %1686 = vmatpush.bf16.msra.mxu0 %v1441
      %1687 = vmatpush.bf16.msra.mxu0 %v1440
      %1688 = vmatpush.bf16.msra.mxu0 %v1439
      %1689 = vmatpush.bf16.msra.mxu0 %v1438
      %1690 = vmatmul.bf16.gmra.mxu0 %v530
      %v1691 = vpop.f32.mrf.mxu0
      %v1692 = vadd.f32 %v1643, %v1691
      %v1693 = vpop.f32.mrf.mxu0
      %v1694 = vadd.f32 %v1645, %v1693
      %1695 = vmatmul.bf16.gmra.mxu0 %v533
      %v1696 = vpop.f32.mrf.mxu0
      %v1697 = vadd.f32 %v1648, %v1696
      %v1698 = vpop.f32.mrf.mxu0
      %v1699 = vadd.f32 %v1650, %v1698
      %1700 = vmatmul.bf16.gmra.mxu0 %v536
      %v1701 = vpop.f32.mrf.mxu0
      %v1702 = vadd.f32 %v1653, %v1701
      %v1703 = vpop.f32.mrf.mxu0
      %v1704 = vadd.f32 %v1655, %v1703
      %1705 = vmatmul.bf16.gmra.mxu0 %v539
      %v1706 = vpop.f32.mrf.mxu0
      %v1707 = vadd.f32 %v1658, %v1706
      %v1708 = vpop.f32.mrf.mxu0
      %v1709 = vadd.f32 %v1660, %v1708
      %1710 = vmatmul.bf16.gmra.mxu0 %v542
      %v1711 = vpop.f32.mrf.mxu0
      %v1712 = vadd.f32 %v1663, %v1711
      %v1713 = vpop.f32.mrf.mxu0
      %v1714 = vadd.f32 %v1665, %v1713
      %1715 = vmatmul.bf16.gmra.mxu0 %v545
      %v1716 = vpop.f32.mrf.mxu0
      %v1717 = vadd.f32 %v1668, %v1716
      %v1718 = vpop.f32.mrf.mxu0
      %v1719 = vadd.f32 %v1670, %v1718
      %1720 = vmatmul.bf16.gmra.mxu0 %v548
      %v1721 = vpop.f32.mrf.mxu0
      %v1722 = vadd.f32 %v1673, %v1721
      %v1723 = vpop.f32.mrf.mxu0
      %v1724 = vadd.f32 %v1675, %v1723
      %1725 = vmatmul.bf16.gmra.mxu0 %v551
      %v1726 = vpop.f32.mrf.mxu0
      %v1727 = vadd.f32 %v1678, %v1726
      %v1728 = vpop.f32.mrf.mxu0
      %v1729 = vadd.f32 %v1680, %v1728
      %1730 = vdwg.mxu0
      %v1733 = vunpack.c.l.b16 %v227
      %v1734 = vunpack.c.l.b16 %v228
      %v1735 = vpack.c.b16 %v1734, %v1733
      %v1738 = vunpack.c.l.b16 %v229
      %v1739 = vpack.c.b16 %v1738, %v1738
      %v1741 = vshrl.u32 %v1735, 16
      %v1743 = vshll.u32 %v1735, 16
      %v1745 = vrot.slane %v1743, 1
      %v1746 = vor.u32 %v1741, %v1745
      %v1748 = vshll.u32 %v1739, 16
      %v1750 = vrot.slane %v1748, 1
      %v1751 = vsel %vm308, %v1746, %v1750
      %v1753 = vrot.slane %v1735, 1
      %v1754 = vrot.slane %v1739, 1
      %v1755 = vsel %vm413, %v1753, %v1754
      %v1757 = vrot.slane %v1741, 1
      %v1758 = vrot.slane %v1743, 2
      %v1759 = vor.u32 %v1757, %v1758
      %v1760 = vshrl.u32 %v1739, 16
      %v1762 = vrot.slane %v1760, 1
      %v1763 = vrot.slane %v1748, 2
      %v1764 = vor.u32 %v1762, %v1763
      %v1765 = vsel %vm446, %v1759, %v1764
      %v1767 = vrot.slane %v1735, 2
      %v1768 = vrot.slane %v1739, 2
      %v1769 = vsel %vm527, %v1767, %v1768
      %s1771 = scalar_lea.vmem %s1, 640
      %v1772 = vld [vmem:[%s1771] sm:$0xf]
      %v1773 = vld [vmem:[%s1771 + $0x4] sm:$0xf]
      %v1774 = vld [vmem:[%s1771 + $0x8] sm:$0xf]
      %v1775 = vld [vmem:[%s1771 + $0xc] sm:$0xf]
      %v1776 = vld [vmem:[%s1771 + $0x10] sm:$0xf]
      %v1777 = vld [vmem:[%s1771 + $0x14] sm:$0xf]
      %v1778 = vld [vmem:[%s1771 + $0x18] sm:$0xf]
      %v1779 = vld [vmem:[%s1771 + $0x1c] sm:$0xf]
      %v1780 = vld [vmem:[%s1771 + $0x20] sm:$0xf]
      %v1781 = vld [vmem:[%s1771 + $0x24] sm:$0xf]
      %v1782 = vld [vmem:[%s1771 + $0x28] sm:$0xf]
      %v1783 = vld [vmem:[%s1771 + $0x2c] sm:$0xf]
      %v1784 = vld [vmem:[%s1771 + $0x30] sm:$0xf]
      %v1785 = vld [vmem:[%s1771 + $0x34] sm:$0xf]
      %v1786 = vld [vmem:[%s1771 + $0x38] sm:$0xf]
      %v1787 = vld [vmem:[%s1771 + $0x3c] sm:$0xf]
      %v1788 = vld [vmem:[%s1771 + $0x40] sm:$0xf]
      %v1789 = vld [vmem:[%s1771 + $0x44] sm:$0xf]
      %v1790 = vld [vmem:[%s1771 + $0x48] sm:$0xf]
      %v1791 = vld [vmem:[%s1771 + $0x4c] sm:$0xf]
      %v1792 = vld [vmem:[%s1771 + $0x50] sm:$0xf]
      %v1793 = vld [vmem:[%s1771 + $0x54] sm:$0xf]
      %v1794 = vld [vmem:[%s1771 + $0x58] sm:$0xf]
      %v1795 = vld [vmem:[%s1771 + $0x5c] sm:$0xf]
      %v1796 = vld [vmem:[%s1771 + $0x60] sm:$0xf]
      %v1797 = vld [vmem:[%s1771 + $0x64] sm:$0xf]
      %v1798 = vld [vmem:[%s1771 + $0x68] sm:$0xf]
      %v1799 = vld [vmem:[%s1771 + $0x6c] sm:$0xf]
      %v1800 = vld [vmem:[%s1771 + $0x70] sm:$0xf]
      %v1801 = vld [vmem:[%s1771 + $0x74] sm:$0xf]
      %v1802 = vld [vmem:[%s1771 + $0x78] sm:$0xf]
      %v1803 = vld [vmem:[%s1771 + $0x7c] sm:$0xf]
      %v1804 = vld [vmem:[%s1771 + $0x80] sm:$0xf]
      %v1805 = vld [vmem:[%s1771 + $0x84] sm:$0xf]
      %v1806 = vld [vmem:[%s1771 + $0x88] sm:$0xf]
      %v1807 = vld [vmem:[%s1771 + $0x8c] sm:$0xf]
      %v1808 = vld [vmem:[%s1771 + $0x90] sm:$0xf]
      %v1809 = vld [vmem:[%s1771 + $0x94] sm:$0xf]
      %v1810 = vld [vmem:[%s1771 + $0x98] sm:$0xf]
      %v1811 = vld [vmem:[%s1771 + $0x9c] sm:$0xf]
      %v1812 = vld [vmem:[%s1771 + $0xa0] sm:$0xf]
      %v1813 = vld [vmem:[%s1771 + $0xa4] sm:$0xf]
      %v1814 = vld [vmem:[%s1771 + $0xa8] sm:$0xf]
      %v1815 = vld [vmem:[%s1771 + $0xac] sm:$0xf]
      %v1816 = vld [vmem:[%s1771 + $0xb0] sm:$0xf]
      %v1817 = vld [vmem:[%s1771 + $0xb4] sm:$0xf]
      %v1818 = vld [vmem:[%s1771 + $0xb8] sm:$0xf]
      %v1819 = vld [vmem:[%s1771 + $0xbc] sm:$0xf]
      %v1820 = vld [vmem:[%s1771 + $0xc0] sm:$0xf]
      %v1821 = vld [vmem:[%s1771 + $0xc4] sm:$0xf]
      %v1822 = vld [vmem:[%s1771 + $0xc8] sm:$0xf]
      %v1823 = vld [vmem:[%s1771 + $0xcc] sm:$0xf]
      %v1824 = vld [vmem:[%s1771 + $0xd0] sm:$0xf]
      %v1825 = vld [vmem:[%s1771 + $0xd4] sm:$0xf]
      %v1826 = vld [vmem:[%s1771 + $0xd8] sm:$0xf]
      %v1827 = vld [vmem:[%s1771 + $0xdc] sm:$0xf]
      %v1828 = vld [vmem:[%s1771 + $0xe0] sm:$0xf]
      %v1829 = vld [vmem:[%s1771 + $0xe4] sm:$0xf]
      %v1830 = vld [vmem:[%s1771 + $0xe8] sm:$0xf]
      %v1831 = vld [vmem:[%s1771 + $0xec] sm:$0xf]
      %v1832 = vld [vmem:[%s1771 + $0xf0] sm:$0xf]
      %v1833 = vld [vmem:[%s1771 + $0xf4] sm:$0xf]
      %v1834 = vld [vmem:[%s1771 + $0xf8] sm:$0xf]
      %v1835 = vld [vmem:[%s1771 + $0xfc] sm:$0xf]
      %v1836 = vld [vmem:[%s1771 + $0x100] sm:$0xf]
      %v1837 = vld [vmem:[%s1771 + $0x104] sm:$0xf]
      %v1838 = vld [vmem:[%s1771 + $0x108] sm:$0xf]
      %v1839 = vld [vmem:[%s1771 + $0x10c] sm:$0xf]
      %v1840 = vld [vmem:[%s1771 + $0x110] sm:$0xf]
      %v1841 = vld [vmem:[%s1771 + $0x114] sm:$0xf]
      %v1842 = vld [vmem:[%s1771 + $0x118] sm:$0xf]
      %v1843 = vld [vmem:[%s1771 + $0x11c] sm:$0xf]
      %v1844 = vld [vmem:[%s1771 + $0x120] sm:$0xf]
      %v1845 = vld [vmem:[%s1771 + $0x124] sm:$0xf]
      %v1846 = vld [vmem:[%s1771 + $0x128] sm:$0xf]
      %v1847 = vld [vmem:[%s1771 + $0x12c] sm:$0xf]
      %v1848 = vld [vmem:[%s1771 + $0x130] sm:$0xf]
      %v1849 = vld [vmem:[%s1771 + $0x134] sm:$0xf]
      %v1850 = vld [vmem:[%s1771 + $0x138] sm:$0xf]
      %v1851 = vld [vmem:[%s1771 + $0x13c] sm:$0xf]
      %v1932 = vunpack.c.l.b16 %v1772
      %v1933 = vunpack.c.l.b16 %v1773
      %v1934 = vunpack.c.l.b16 %v1774
      %v1935 = vunpack.c.l.b16 %v1775
      %v1936 = vunpack.c.l.b16 %v1776
      %v1937 = vunpack.c.l.b16 %v1777
      %v1938 = vunpack.c.l.b16 %v1778
      %v1939 = vunpack.c.l.b16 %v1779
      %v1940 = vunpack.c.l.b16 %v1780
      %v1941 = vunpack.c.l.b16 %v1781
      %v1942 = vunpack.c.l.b16 %v1782
      %v1943 = vunpack.c.l.b16 %v1783
      %v1944 = vunpack.c.l.b16 %v1784
      %v1945 = vunpack.c.l.b16 %v1785
      %v1946 = vunpack.c.l.b16 %v1786
      %v1947 = vunpack.c.l.b16 %v1787
      %v1948 = vunpack.c.l.b16 %v1788
      %v1949 = vunpack.c.l.b16 %v1789
      %v1950 = vunpack.c.l.b16 %v1790
      %v1951 = vunpack.c.l.b16 %v1791
      %v1952 = vunpack.c.l.b16 %v1792
      %v1953 = vunpack.c.l.b16 %v1793
      %v1954 = vunpack.c.l.b16 %v1794
      %v1955 = vunpack.c.l.b16 %v1795
      %v1956 = vunpack.c.l.b16 %v1796
      %v1957 = vunpack.c.l.b16 %v1797
      %v1958 = vunpack.c.l.b16 %v1798
      %v1959 = vunpack.c.l.b16 %v1799
      %v1960 = vunpack.c.l.b16 %v1800
      %v1961 = vunpack.c.l.b16 %v1801
      %v1962 = vunpack.c.l.b16 %v1802
      %v1963 = vunpack.c.l.b16 %v1803
      %v1964 = vunpack.c.l.b16 %v1804
      %v1965 = vunpack.c.l.b16 %v1805
      %v1966 = vunpack.c.l.b16 %v1806
      %v1967 = vunpack.c.l.b16 %v1807
      %v1968 = vunpack.c.l.b16 %v1808
      %v1969 = vunpack.c.l.b16 %v1809
      %v1970 = vunpack.c.l.b16 %v1810
      %v1971 = vunpack.c.l.b16 %v1811
      %v1972 = vunpack.c.l.b16 %v1812
      %v1973 = vunpack.c.l.b16 %v1813
      %v1974 = vunpack.c.l.b16 %v1814
      %v1975 = vunpack.c.l.b16 %v1815
      %v1976 = vunpack.c.l.b16 %v1816
      %v1977 = vunpack.c.l.b16 %v1817
      %v1978 = vunpack.c.l.b16 %v1818
      %v1979 = vunpack.c.l.b16 %v1819
      %v1980 = vunpack.c.l.b16 %v1820
      %v1981 = vunpack.c.l.b16 %v1821
      %v1982 = vunpack.c.l.b16 %v1822
      %v1983 = vunpack.c.l.b16 %v1823
      %v1984 = vunpack.c.l.b16 %v1824
      %v1985 = vunpack.c.l.b16 %v1825
      %v1986 = vunpack.c.l.b16 %v1826
      %v1987 = vunpack.c.l.b16 %v1827
      %v1988 = vunpack.c.l.b16 %v1828
      %v1989 = vunpack.c.l.b16 %v1829
      %v1990 = vunpack.c.l.b16 %v1830
      %v1991 = vunpack.c.l.b16 %v1831
      %v1992 = vunpack.c.l.b16 %v1832
      %v1993 = vunpack.c.l.b16 %v1833
      %v1994 = vunpack.c.l.b16 %v1834
      %v1995 = vunpack.c.l.b16 %v1835
      %v1996 = vunpack.c.l.b16 %v1836
      %v1997 = vunpack.c.l.b16 %v1837
      %v1998 = vunpack.c.l.b16 %v1838
      %v1999 = vunpack.c.l.b16 %v1839
      %v2000 = vunpack.c.l.b16 %v1840
      %v2001 = vunpack.c.l.b16 %v1841
      %v2002 = vunpack.c.l.b16 %v1842
      %v2003 = vunpack.c.l.b16 %v1843
      %v2004 = vunpack.c.l.b16 %v1844
      %v2005 = vunpack.c.l.b16 %v1845
      %v2006 = vunpack.c.l.b16 %v1846
      %v2007 = vunpack.c.l.b16 %v1847
      %v2008 = vunpack.c.l.b16 %v1848
      %v2009 = vunpack.c.l.b16 %v1849
      %v2010 = vunpack.c.l.b16 %v1850
      %v2011 = vunpack.c.l.b16 %v1851
      %v2012 = vpack.c.b16 %v1933, %v1932
      %v2013 = vpack.c.b16 %v1935, %v1934
      %v2014 = vpack.c.b16 %v1937, %v1936
      %v2015 = vpack.c.b16 %v1939, %v1938
      %v2016 = vpack.c.b16 %v1941, %v1940
      %v2017 = vpack.c.b16 %v1943, %v1942
      %v2018 = vpack.c.b16 %v1945, %v1944
      %v2019 = vpack.c.b16 %v1947, %v1946
      %v2020 = vpack.c.b16 %v1949, %v1948
      %v2021 = vpack.c.b16 %v1951, %v1950
      %v2022 = vpack.c.b16 %v1953, %v1952
      %v2023 = vpack.c.b16 %v1955, %v1954
      %v2024 = vpack.c.b16 %v1957, %v1956
      %v2025 = vpack.c.b16 %v1959, %v1958
      %v2026 = vpack.c.b16 %v1961, %v1960
      %v2027 = vpack.c.b16 %v1963, %v1962
      %v2028 = vpack.c.b16 %v1965, %v1964
      %v2029 = vpack.c.b16 %v1967, %v1966
      %v2030 = vpack.c.b16 %v1969, %v1968
      %v2031 = vpack.c.b16 %v1971, %v1970
      %v2032 = vpack.c.b16 %v1973, %v1972
      %v2033 = vpack.c.b16 %v1975, %v1974
      %v2034 = vpack.c.b16 %v1977, %v1976
      %v2035 = vpack.c.b16 %v1979, %v1978
      %v2036 = vpack.c.b16 %v1981, %v1980
      %v2037 = vpack.c.b16 %v1983, %v1982
      %v2038 = vpack.c.b16 %v1985, %v1984
      %v2039 = vpack.c.b16 %v1987, %v1986
      %v2040 = vpack.c.b16 %v1989, %v1988
      %v2041 = vpack.c.b16 %v1991, %v1990
      %v2042 = vpack.c.b16 %v1993, %v1992
      %v2043 = vpack.c.b16 %v1995, %v1994
      %v2044 = vpack.c.b16 %v1997, %v1996
      %v2045 = vpack.c.b16 %v1999, %v1998
      %v2046 = vpack.c.b16 %v2001, %v2000
      %v2047 = vpack.c.b16 %v2003, %v2002
      %v2048 = vpack.c.b16 %v2005, %v2004
      %v2049 = vpack.c.b16 %v2007, %v2006
      %v2050 = vpack.c.b16 %v2009, %v2008
      %v2051 = vpack.c.b16 %v2011, %v2010
      %2092 = vmatpush.bf16.msra.mxu0 %v2019
      %2093 = vmatpush.bf16.msra.mxu0 %v2018
      %2094 = vmatpush.bf16.msra.mxu0 %v2017
      %2095 = vmatpush.bf16.msra.mxu0 %v2016
      %2096 = vmatpush.bf16.msra.mxu0 %v2015
      %2097 = vmatpush.bf16.msra.mxu0 %v2014
      %2098 = vmatpush.bf16.msra.mxu0 %v2013
      %2099 = vmatpush.bf16.msra.mxu0 %v2012
      %2100 = vmatmul.bf16.gmra.mxu0 %v270
      %v2101 = vpop.f32.mrf.mxu0
      %v2102 = vadd.f32 0.0, %v2101
      %v2103 = vpop.f32.mrf.mxu0
      %v2104 = vadd.f32 0.0, %v2103
      %2105 = vmatmul.bf16.gmra.mxu0 %v271
      %v2106 = vpop.f32.mrf.mxu0
      %v2107 = vadd.f32 0.0, %v2106
      %v2108 = vpop.f32.mrf.mxu0
      %v2109 = vadd.f32 0.0, %v2108
      %2110 = vmatmul.bf16.gmra.mxu0 %v272
      %v2111 = vpop.f32.mrf.mxu0
      %v2112 = vadd.f32 0.0, %v2111
      %v2113 = vpop.f32.mrf.mxu0
      %v2114 = vadd.f32 0.0, %v2113
      %2115 = vmatmul.bf16.gmra.mxu0 %v273
      %v2116 = vpop.f32.mrf.mxu0
      %v2117 = vadd.f32 0.0, %v2116
      %v2118 = vpop.f32.mrf.mxu0
      %v2119 = vadd.f32 0.0, %v2118
      %2120 = vmatmul.bf16.gmra.mxu0 %v274
      %v2121 = vpop.f32.mrf.mxu0
      %v2122 = vadd.f32 0.0, %v2121
      %v2123 = vpop.f32.mrf.mxu0
      %v2124 = vadd.f32 0.0, %v2123
      %2125 = vmatmul.bf16.gmra.mxu0 %v275
      %v2126 = vpop.f32.mrf.mxu0
      %v2127 = vadd.f32 0.0, %v2126
      %v2128 = vpop.f32.mrf.mxu0
      %v2129 = vadd.f32 0.0, %v2128
      %2130 = vmatmul.bf16.gmra.mxu0 %v644
      %v2131 = vpop.f32.mrf.mxu0
      %v2132 = vadd.f32 0.0, %v2131
      %v2133 = vpop.f32.mrf.mxu0
      %v2134 = vadd.f32 0.0, %v2133
      %2135 = vmatmul.bf16.gmra.mxu0 %v1735
      %v2136 = vpop.f32.mrf.mxu0
      %v2137 = vadd.f32 0.0, %v2136
      %v2138 = vpop.f32.mrf.mxu0
      %v2139 = vadd.f32 0.0, %v2138
      %2140 = vdwg.mxu0
      %2141 = vmatpush.bf16.msra.mxu0 %v2027
      %2142 = vmatpush.bf16.msra.mxu0 %v2026
      %2143 = vmatpush.bf16.msra.mxu0 %v2025
      %2144 = vmatpush.bf16.msra.mxu0 %v2024
      %2145 = vmatpush.bf16.msra.mxu0 %v2023
      %2146 = vmatpush.bf16.msra.mxu0 %v2022
      %2147 = vmatpush.bf16.msra.mxu0 %v2021
      %2148 = vmatpush.bf16.msra.mxu0 %v2020
      %2149 = vmatmul.bf16.gmra.mxu0 %v344
      %v2150 = vpop.f32.mrf.mxu0
      %v2151 = vadd.f32 %v2102, %v2150
      %v2152 = vpop.f32.mrf.mxu0
      %v2153 = vadd.f32 %v2104, %v2152
      %2154 = vmatmul.bf16.gmra.mxu0 %v356
      %v2155 = vpop.f32.mrf.mxu0
      %v2156 = vadd.f32 %v2107, %v2155
      %v2157 = vpop.f32.mrf.mxu0
      %v2158 = vadd.f32 %v2109, %v2157
      %2159 = vmatmul.bf16.gmra.mxu0 %v368
      %v2160 = vpop.f32.mrf.mxu0
      %v2161 = vadd.f32 %v2112, %v2160
      %v2162 = vpop.f32.mrf.mxu0
      %v2163 = vadd.f32 %v2114, %v2162
      %2164 = vmatmul.bf16.gmra.mxu0 %v380
      %v2165 = vpop.f32.mrf.mxu0
      %v2166 = vadd.f32 %v2117, %v2165
      %v2167 = vpop.f32.mrf.mxu0
      %v2168 = vadd.f32 %v2119, %v2167
      %2169 = vmatmul.bf16.gmra.mxu0 %v392
      %v2170 = vpop.f32.mrf.mxu0
      %v2171 = vadd.f32 %v2122, %v2170
      %v2172 = vpop.f32.mrf.mxu0
      %v2173 = vadd.f32 %v2124, %v2172
      %2174 = vmatmul.bf16.gmra.mxu0 %v404
      %v2175 = vpop.f32.mrf.mxu0
      %v2176 = vadd.f32 %v2127, %v2175
      %v2177 = vpop.f32.mrf.mxu0
      %v2178 = vadd.f32 %v2129, %v2177
      %2179 = vmatmul.bf16.gmra.mxu0 %v660
      %v2180 = vpop.f32.mrf.mxu0
      %v2181 = vadd.f32 %v2132, %v2180
      %v2182 = vpop.f32.mrf.mxu0
      %v2183 = vadd.f32 %v2134, %v2182
      %2184 = vmatmul.bf16.gmra.mxu0 %v1751
      %v2185 = vpop.f32.mrf.mxu0
      %v2186 = vadd.f32 %v2137, %v2185
      %v2187 = vpop.f32.mrf.mxu0
      %v2188 = vadd.f32 %v2139, %v2187
      %2189 = vdwg.mxu0
      %2190 = vmatpush.bf16.msra.mxu0 %v2035
      %2191 = vmatpush.bf16.msra.mxu0 %v2034
      %2192 = vmatpush.bf16.msra.mxu0 %v2033
      %2193 = vmatpush.bf16.msra.mxu0 %v2032
      %2194 = vmatpush.bf16.msra.mxu0 %v2031
      %2195 = vmatpush.bf16.msra.mxu0 %v2030
      %2196 = vmatpush.bf16.msra.mxu0 %v2029
      %2197 = vmatpush.bf16.msra.mxu0 %v2028
      %2198 = vmatmul.bf16.gmra.mxu0 %v422
      %v2199 = vpop.f32.mrf.mxu0
      %v2200 = vadd.f32 %v2151, %v2199
      %v2201 = vpop.f32.mrf.mxu0
      %v2202 = vadd.f32 %v2153, %v2201
      %2203 = vmatmul.bf16.gmra.mxu0 %v425
      %v2204 = vpop.f32.mrf.mxu0
      %v2205 = vadd.f32 %v2156, %v2204
      %v2206 = vpop.f32.mrf.mxu0
      %v2207 = vadd.f32 %v2158, %v2206
      %2208 = vmatmul.bf16.gmra.mxu0 %v428
      %v2209 = vpop.f32.mrf.mxu0
      %v2210 = vadd.f32 %v2161, %v2209
      %v2211 = vpop.f32.mrf.mxu0
      %v2212 = vadd.f32 %v2163, %v2211
      %2213 = vmatmul.bf16.gmra.mxu0 %v431
      %v2214 = vpop.f32.mrf.mxu0
      %v2215 = vadd.f32 %v2166, %v2214
      %v2216 = vpop.f32.mrf.mxu0
      %v2217 = vadd.f32 %v2168, %v2216
      %2218 = vmatmul.bf16.gmra.mxu0 %v434
      %v2219 = vpop.f32.mrf.mxu0
      %v2220 = vadd.f32 %v2171, %v2219
      %v2221 = vpop.f32.mrf.mxu0
      %v2222 = vadd.f32 %v2173, %v2221
      %2223 = vmatmul.bf16.gmra.mxu0 %v437
      %v2224 = vpop.f32.mrf.mxu0
      %v2225 = vadd.f32 %v2176, %v2224
      %v2226 = vpop.f32.mrf.mxu0
      %v2227 = vadd.f32 %v2178, %v2226
      %2228 = vmatmul.bf16.gmra.mxu0 %v664
      %v2229 = vpop.f32.mrf.mxu0
      %v2230 = vadd.f32 %v2181, %v2229
      %v2231 = vpop.f32.mrf.mxu0
      %v2232 = vadd.f32 %v2183, %v2231
      %2233 = vmatmul.bf16.gmra.mxu0 %v1755
      %v2234 = vpop.f32.mrf.mxu0
      %v2235 = vadd.f32 %v2186, %v2234
      %v2236 = vpop.f32.mrf.mxu0
      %v2237 = vadd.f32 %v2188, %v2236
      %2238 = vdwg.mxu0
      %2239 = vmatpush.bf16.msra.mxu0 %v2043
      %2240 = vmatpush.bf16.msra.mxu0 %v2042
      %2241 = vmatpush.bf16.msra.mxu0 %v2041
      %2242 = vmatpush.bf16.msra.mxu0 %v2040
      %2243 = vmatpush.bf16.msra.mxu0 %v2039
      %2244 = vmatpush.bf16.msra.mxu0 %v2038
      %2245 = vmatpush.bf16.msra.mxu0 %v2037
      %2246 = vmatpush.bf16.msra.mxu0 %v2036
      %2247 = vmatmul.bf16.gmra.mxu0 %v473
      %v2248 = vpop.f32.mrf.mxu0
      %v2249 = vadd.f32 %v2200, %v2248
      %v2250 = vpop.f32.mrf.mxu0
      %v2251 = vadd.f32 %v2202, %v2250
      %2252 = vmatmul.bf16.gmra.mxu0 %v482
      %v2253 = vpop.f32.mrf.mxu0
      %v2254 = vadd.f32 %v2205, %v2253
      %v2255 = vpop.f32.mrf.mxu0
      %v2256 = vadd.f32 %v2207, %v2255
      %2257 = vmatmul.bf16.gmra.mxu0 %v491
      %v2258 = vpop.f32.mrf.mxu0
      %v2259 = vadd.f32 %v2210, %v2258
      %v2260 = vpop.f32.mrf.mxu0
      %v2261 = vadd.f32 %v2212, %v2260
      %2262 = vmatmul.bf16.gmra.mxu0 %v500
      %v2263 = vpop.f32.mrf.mxu0
      %v2264 = vadd.f32 %v2215, %v2263
      %v2265 = vpop.f32.mrf.mxu0
      %v2266 = vadd.f32 %v2217, %v2265
      %2267 = vmatmul.bf16.gmra.mxu0 %v509
      %v2268 = vpop.f32.mrf.mxu0
      %v2269 = vadd.f32 %v2220, %v2268
      %v2270 = vpop.f32.mrf.mxu0
      %v2271 = vadd.f32 %v2222, %v2270
      %2272 = vmatmul.bf16.gmra.mxu0 %v518
      %v2273 = vpop.f32.mrf.mxu0
      %v2274 = vadd.f32 %v2225, %v2273
      %v2275 = vpop.f32.mrf.mxu0
      %v2276 = vadd.f32 %v2227, %v2275
      %2277 = vmatmul.bf16.gmra.mxu0 %v674
      %v2278 = vpop.f32.mrf.mxu0
      %v2279 = vadd.f32 %v2230, %v2278
      %v2280 = vpop.f32.mrf.mxu0
      %v2281 = vadd.f32 %v2232, %v2280
      %2282 = vmatmul.bf16.gmra.mxu0 %v1765
      %v2283 = vpop.f32.mrf.mxu0
      %v2284 = vadd.f32 %v2235, %v2283
      %v2285 = vpop.f32.mrf.mxu0
      %v2286 = vadd.f32 %v2237, %v2285
      %2287 = vdwg.mxu0
      %2288 = vmatpush.bf16.msra.mxu0 %v2051
      %2289 = vmatpush.bf16.msra.mxu0 %v2050
      %2290 = vmatpush.bf16.msra.mxu0 %v2049
      %2291 = vmatpush.bf16.msra.mxu0 %v2048
      %2292 = vmatpush.bf16.msra.mxu0 %v2047
      %2293 = vmatpush.bf16.msra.mxu0 %v2046
      %2294 = vmatpush.bf16.msra.mxu0 %v2045
      %2295 = vmatpush.bf16.msra.mxu0 %v2044
      %2296 = vmatmul.bf16.gmra.mxu0 %v536
      %v2297 = vpop.f32.mrf.mxu0
      %v2298 = vadd.f32 %v2249, %v2297
      %v2299 = vpop.f32.mrf.mxu0
      %v2300 = vadd.f32 %v2251, %v2299
      %2301 = vmatmul.bf16.gmra.mxu0 %v539
      %v2302 = vpop.f32.mrf.mxu0
      %v2303 = vadd.f32 %v2254, %v2302
      %v2304 = vpop.f32.mrf.mxu0
      %v2305 = vadd.f32 %v2256, %v2304
      %2306 = vmatmul.bf16.gmra.mxu0 %v542
      %v2307 = vpop.f32.mrf.mxu0
      %v2308 = vadd.f32 %v2259, %v2307
      %v2309 = vpop.f32.mrf.mxu0
      %v2310 = vadd.f32 %v2261, %v2309
      %2311 = vmatmul.bf16.gmra.mxu0 %v545
      %v2312 = vpop.f32.mrf.mxu0
      %v2313 = vadd.f32 %v2264, %v2312
      %v2314 = vpop.f32.mrf.mxu0
      %v2315 = vadd.f32 %v2266, %v2314
      %2316 = vmatmul.bf16.gmra.mxu0 %v548
      %v2317 = vpop.f32.mrf.mxu0
      %v2318 = vadd.f32 %v2269, %v2317
      %v2319 = vpop.f32.mrf.mxu0
      %v2320 = vadd.f32 %v2271, %v2319
      %2321 = vmatmul.bf16.gmra.mxu0 %v551
      %v2322 = vpop.f32.mrf.mxu0
      %v2323 = vadd.f32 %v2274, %v2322
      %v2324 = vpop.f32.mrf.mxu0
      %v2325 = vadd.f32 %v2276, %v2324
      %2326 = vmatmul.bf16.gmra.mxu0 %v678
      %v2327 = vpop.f32.mrf.mxu0
      %v2328 = vadd.f32 %v2279, %v2327
      %v2329 = vpop.f32.mrf.mxu0
      %v2330 = vadd.f32 %v2281, %v2329
      %2331 = vmatmul.bf16.gmra.mxu0 %v1769
      %v2332 = vpop.f32.mrf.mxu0
      %v2333 = vadd.f32 %v2284, %v2332
      %v2334 = vpop.f32.mrf.mxu0
      %v2335 = vadd.f32 %v2286, %v2334
      %2336 = vdwg.mxu0
      %v2337 = vadd.f32 %v1692, %v2298
      %v2338 = vadd.f32 %v1694, %v2300
      %v2339 = vadd.f32 %v1697, %v2303
      %v2340 = vadd.f32 %v1699, %v2305
      %v2341 = vadd.f32 %v1702, %v2308
      %v2342 = vadd.f32 %v1704, %v2310
      %v2343 = vadd.f32 %v1707, %v2313
      %v2344 = vadd.f32 %v1709, %v2315
      %v2345 = vadd.f32 %v1712, %v2318
      %v2346 = vadd.f32 %v1714, %v2320
      %v2347 = vadd.f32 %v1717, %v2323
      %v2348 = vadd.f32 %v1719, %v2325
      %v2349 = vadd.f32 %v1722, %v2328
      %v2350 = vadd.f32 %v1724, %v2330
      %v2351 = vadd.f32 %v1727, %v2333
      %v2352 = vadd.f32 %v1729, %v2335
      %v2355 = vunpack.c.l.b16 %v230
      %v2356 = vunpack.c.l.b16 %v231
      %v2357 = vpack.c.b16 %v2356, %v2355
      %v2360 = vunpack.c.l.b16 %v232
      %v2361 = vpack.c.b16 %v2360, %v2360
      %v2363 = vshrl.u32 %v2357, 16
      %v2365 = vshll.u32 %v2357, 16
      %v2367 = vrot.slane %v2365, 1
      %v2368 = vor.u32 %v2363, %v2367
      %v2370 = vshll.u32 %v2361, 16
      %v2372 = vrot.slane %v2370, 1
      %v2373 = vsel %vm308, %v2368, %v2372
      %v2375 = vrot.slane %v2357, 1
      %v2376 = vrot.slane %v2361, 1
      %v2377 = vsel %vm413, %v2375, %v2376
      %v2379 = vrot.slane %v2363, 1
      %v2380 = vrot.slane %v2365, 2
      %v2381 = vor.u32 %v2379, %v2380
      %v2382 = vshrl.u32 %v2361, 16
      %v2384 = vrot.slane %v2382, 1
      %v2385 = vrot.slane %v2370, 2
      %v2386 = vor.u32 %v2384, %v2385
      %v2387 = vsel %vm446, %v2381, %v2386
      %v2389 = vrot.slane %v2357, 2
      %v2390 = vrot.slane %v2361, 2
      %v2391 = vsel %vm527, %v2389, %v2390
      %s2393 = scalar_lea.vmem %s1, 960
      %v2394 = vld [vmem:[%s2393] sm:$0xf]
      %v2395 = vld [vmem:[%s2393 + $0x4] sm:$0xf]
      %v2396 = vld [vmem:[%s2393 + $0x8] sm:$0xf]
      %v2397 = vld [vmem:[%s2393 + $0xc] sm:$0xf]
      %v2398 = vld [vmem:[%s2393 + $0x10] sm:$0xf]
      %v2399 = vld [vmem:[%s2393 + $0x14] sm:$0xf]
      %v2400 = vld [vmem:[%s2393 + $0x18] sm:$0xf]
      %v2401 = vld [vmem:[%s2393 + $0x1c] sm:$0xf]
      %v2402 = vld [vmem:[%s2393 + $0x20] sm:$0xf]
      %v2403 = vld [vmem:[%s2393 + $0x24] sm:$0xf]
      %v2404 = vld [vmem:[%s2393 + $0x28] sm:$0xf]
      %v2405 = vld [vmem:[%s2393 + $0x2c] sm:$0xf]
      %v2406 = vld [vmem:[%s2393 + $0x30] sm:$0xf]
      %v2407 = vld [vmem:[%s2393 + $0x34] sm:$0xf]
      %v2408 = vld [vmem:[%s2393 + $0x38] sm:$0xf]
      %v2409 = vld [vmem:[%s2393 + $0x3c] sm:$0xf]
      %v2410 = vld [vmem:[%s2393 + $0x40] sm:$0xf]
      %v2411 = vld [vmem:[%s2393 + $0x44] sm:$0xf]
      %v2412 = vld [vmem:[%s2393 + $0x48] sm:$0xf]
      %v2413 = vld [vmem:[%s2393 + $0x4c] sm:$0xf]
      %v2414 = vld [vmem:[%s2393 + $0x50] sm:$0xf]
      %v2415 = vld [vmem:[%s2393 + $0x54] sm:$0xf]
      %v2416 = vld [vmem:[%s2393 + $0x58] sm:$0xf]
      %v2417 = vld [vmem:[%s2393 + $0x5c] sm:$0xf]
      %v2418 = vld [vmem:[%s2393 + $0x60] sm:$0xf]
      %v2419 = vld [vmem:[%s2393 + $0x64] sm:$0xf]
      %v2420 = vld [vmem:[%s2393 + $0x68] sm:$0xf]
      %v2421 = vld [vmem:[%s2393 + $0x6c] sm:$0xf]
      %v2422 = vld [vmem:[%s2393 + $0x70] sm:$0xf]
      %v2423 = vld [vmem:[%s2393 + $0x74] sm:$0xf]
      %v2424 = vld [vmem:[%s2393 + $0x78] sm:$0xf]
      %v2425 = vld [vmem:[%s2393 + $0x7c] sm:$0xf]
      %v2426 = vld [vmem:[%s2393 + $0x80] sm:$0xf]
      %v2427 = vld [vmem:[%s2393 + $0x84] sm:$0xf]
      %v2428 = vld [vmem:[%s2393 + $0x88] sm:$0xf]
      %v2429 = vld [vmem:[%s2393 + $0x8c] sm:$0xf]
      %v2430 = vld [vmem:[%s2393 + $0x90] sm:$0xf]
      %v2431 = vld [vmem:[%s2393 + $0x94] sm:$0xf]
      %v2432 = vld [vmem:[%s2393 + $0x98] sm:$0xf]
      %v2433 = vld [vmem:[%s2393 + $0x9c] sm:$0xf]
      %v2434 = vld [vmem:[%s2393 + $0xa0] sm:$0xf]
      %v2435 = vld [vmem:[%s2393 + $0xa4] sm:$0xf]
      %v2436 = vld [vmem:[%s2393 + $0xa8] sm:$0xf]
      %v2437 = vld [vmem:[%s2393 + $0xac] sm:$0xf]
      %v2438 = vld [vmem:[%s2393 + $0xb0] sm:$0xf]
      %v2439 = vld [vmem:[%s2393 + $0xb4] sm:$0xf]
      %v2440 = vld [vmem:[%s2393 + $0xb8] sm:$0xf]
      %v2441 = vld [vmem:[%s2393 + $0xbc] sm:$0xf]
      %v2442 = vld [vmem:[%s2393 + $0xc0] sm:$0xf]
      %v2443 = vld [vmem:[%s2393 + $0xc4] sm:$0xf]
      %v2444 = vld [vmem:[%s2393 + $0xc8] sm:$0xf]
      %v2445 = vld [vmem:[%s2393 + $0xcc] sm:$0xf]
      %v2446 = vld [vmem:[%s2393 + $0xd0] sm:$0xf]
      %v2447 = vld [vmem:[%s2393 + $0xd4] sm:$0xf]
      %v2448 = vld [vmem:[%s2393 + $0xd8] sm:$0xf]
      %v2449 = vld [vmem:[%s2393 + $0xdc] sm:$0xf]
      %v2450 = vld [vmem:[%s2393 + $0xe0] sm:$0xf]
      %v2451 = vld [vmem:[%s2393 + $0xe4] sm:$0xf]
      %v2452 = vld [vmem:[%s2393 + $0xe8] sm:$0xf]
      %v2453 = vld [vmem:[%s2393 + $0xec] sm:$0xf]
      %v2454 = vld [vmem:[%s2393 + $0xf0] sm:$0xf]
      %v2455 = vld [vmem:[%s2393 + $0xf4] sm:$0xf]
      %v2456 = vld [vmem:[%s2393 + $0xf8] sm:$0xf]
      %v2457 = vld [vmem:[%s2393 + $0xfc] sm:$0xf]
      %v2458 = vld [vmem:[%s2393 + $0x100] sm:$0xf]
      %v2459 = vld [vmem:[%s2393 + $0x104] sm:$0xf]
      %v2460 = vld [vmem:[%s2393 + $0x108] sm:$0xf]
      %v2461 = vld [vmem:[%s2393 + $0x10c] sm:$0xf]
      %v2462 = vld [vmem:[%s2393 + $0x110] sm:$0xf]
      %v2463 = vld [vmem:[%s2393 + $0x114] sm:$0xf]
      %v2464 = vld [vmem:[%s2393 + $0x118] sm:$0xf]
      %v2465 = vld [vmem:[%s2393 + $0x11c] sm:$0xf]
      %v2466 = vld [vmem:[%s2393 + $0x120] sm:$0xf]
      %v2467 = vld [vmem:[%s2393 + $0x124] sm:$0xf]
      %v2468 = vld [vmem:[%s2393 + $0x128] sm:$0xf]
      %v2469 = vld [vmem:[%s2393 + $0x12c] sm:$0xf]
      %v2470 = vld [vmem:[%s2393 + $0x130] sm:$0xf]
      %v2471 = vld [vmem:[%s2393 + $0x134] sm:$0xf]
      %v2472 = vld [vmem:[%s2393 + $0x138] sm:$0xf]
      %v2473 = vld [vmem:[%s2393 + $0x13c] sm:$0xf]
      %v2554 = vunpack.c.l.b16 %v2394
      %v2555 = vunpack.c.l.b16 %v2395
      %v2556 = vunpack.c.l.b16 %v2396
      %v2557 = vunpack.c.l.b16 %v2397
      %v2558 = vunpack.c.l.b16 %v2398
      %v2559 = vunpack.c.l.b16 %v2399
      %v2560 = vunpack.c.l.b16 %v2400
      %v2561 = vunpack.c.l.b16 %v2401
      %v2562 = vunpack.c.l.b16 %v2402
      %v2563 = vunpack.c.l.b16 %v2403
      %v2564 = vunpack.c.l.b16 %v2404
      %v2565 = vunpack.c.l.b16 %v2405
      %v2566 = vunpack.c.l.b16 %v2406
      %v2567 = vunpack.c.l.b16 %v2407
      %v2568 = vunpack.c.l.b16 %v2408
      %v2569 = vunpack.c.l.b16 %v2409
      %v2570 = vunpack.c.l.b16 %v2410
      %v2571 = vunpack.c.l.b16 %v2411
      %v2572 = vunpack.c.l.b16 %v2412
      %v2573 = vunpack.c.l.b16 %v2413
      %v2574 = vunpack.c.l.b16 %v2414
      %v2575 = vunpack.c.l.b16 %v2415
      %v2576 = vunpack.c.l.b16 %v2416
      %v2577 = vunpack.c.l.b16 %v2417
      %v2578 = vunpack.c.l.b16 %v2418
      %v2579 = vunpack.c.l.b16 %v2419
      %v2580 = vunpack.c.l.b16 %v2420
      %v2581 = vunpack.c.l.b16 %v2421
      %v2582 = vunpack.c.l.b16 %v2422
      %v2583 = vunpack.c.l.b16 %v2423
      %v2584 = vunpack.c.l.b16 %v2424
      %v2585 = vunpack.c.l.b16 %v2425
      %v2586 = vunpack.c.l.b16 %v2426
      %v2587 = vunpack.c.l.b16 %v2427
      %v2588 = vunpack.c.l.b16 %v2428
      %v2589 = vunpack.c.l.b16 %v2429
      %v2590 = vunpack.c.l.b16 %v2430
      %v2591 = vunpack.c.l.b16 %v2431
      %v2592 = vunpack.c.l.b16 %v2432
      %v2593 = vunpack.c.l.b16 %v2433
      %v2594 = vunpack.c.l.b16 %v2434
      %v2595 = vunpack.c.l.b16 %v2435
      %v2596 = vunpack.c.l.b16 %v2436
      %v2597 = vunpack.c.l.b16 %v2437
      %v2598 = vunpack.c.l.b16 %v2438
      %v2599 = vunpack.c.l.b16 %v2439
      %v2600 = vunpack.c.l.b16 %v2440
      %v2601 = vunpack.c.l.b16 %v2441
      %v2602 = vunpack.c.l.b16 %v2442
      %v2603 = vunpack.c.l.b16 %v2443
      %v2604 = vunpack.c.l.b16 %v2444
      %v2605 = vunpack.c.l.b16 %v2445
      %v2606 = vunpack.c.l.b16 %v2446
      %v2607 = vunpack.c.l.b16 %v2447
      %v2608 = vunpack.c.l.b16 %v2448
      %v2609 = vunpack.c.l.b16 %v2449
      %v2610 = vunpack.c.l.b16 %v2450
      %v2611 = vunpack.c.l.b16 %v2451
      %v2612 = vunpack.c.l.b16 %v2452
      %v2613 = vunpack.c.l.b16 %v2453
      %v2614 = vunpack.c.l.b16 %v2454
      %v2615 = vunpack.c.l.b16 %v2455
      %v2616 = vunpack.c.l.b16 %v2456
      %v2617 = vunpack.c.l.b16 %v2457
      %v2618 = vunpack.c.l.b16 %v2458
      %v2619 = vunpack.c.l.b16 %v2459
      %v2620 = vunpack.c.l.b16 %v2460
      %v2621 = vunpack.c.l.b16 %v2461
      %v2622 = vunpack.c.l.b16 %v2462
      %v2623 = vunpack.c.l.b16 %v2463
      %v2624 = vunpack.c.l.b16 %v2464
      %v2625 = vunpack.c.l.b16 %v2465
      %v2626 = vunpack.c.l.b16 %v2466
      %v2627 = vunpack.c.l.b16 %v2467
      %v2628 = vunpack.c.l.b16 %v2468
      %v2629 = vunpack.c.l.b16 %v2469
      %v2630 = vunpack.c.l.b16 %v2470
      %v2631 = vunpack.c.l.b16 %v2471
      %v2632 = vunpack.c.l.b16 %v2472
      %v2633 = vunpack.c.l.b16 %v2473
      %v2634 = vpack.c.b16 %v2555, %v2554
      %v2635 = vpack.c.b16 %v2557, %v2556
      %v2636 = vpack.c.b16 %v2559, %v2558
      %v2637 = vpack.c.b16 %v2561, %v2560
      %v2638 = vpack.c.b16 %v2563, %v2562
      %v2639 = vpack.c.b16 %v2565, %v2564
      %v2640 = vpack.c.b16 %v2567, %v2566
      %v2641 = vpack.c.b16 %v2569, %v2568
      %v2642 = vpack.c.b16 %v2571, %v2570
      %v2643 = vpack.c.b16 %v2573, %v2572
      %v2644 = vpack.c.b16 %v2575, %v2574
      %v2645 = vpack.c.b16 %v2577, %v2576
      %v2646 = vpack.c.b16 %v2579, %v2578
      %v2647 = vpack.c.b16 %v2581, %v2580
      %v2648 = vpack.c.b16 %v2583, %v2582
      %v2649 = vpack.c.b16 %v2585, %v2584
      %v2650 = vpack.c.b16 %v2587, %v2586
      %v2651 = vpack.c.b16 %v2589, %v2588
      %v2652 = vpack.c.b16 %v2591, %v2590
      %v2653 = vpack.c.b16 %v2593, %v2592
      %v2654 = vpack.c.b16 %v2595, %v2594
      %v2655 = vpack.c.b16 %v2597, %v2596
      %v2656 = vpack.c.b16 %v2599, %v2598
      %v2657 = vpack.c.b16 %v2601, %v2600
      %v2658 = vpack.c.b16 %v2603, %v2602
      %v2659 = vpack.c.b16 %v2605, %v2604
      %v2660 = vpack.c.b16 %v2607, %v2606
      %v2661 = vpack.c.b16 %v2609, %v2608
      %v2662 = vpack.c.b16 %v2611, %v2610
      %v2663 = vpack.c.b16 %v2613, %v2612
      %v2664 = vpack.c.b16 %v2615, %v2614
      %v2665 = vpack.c.b16 %v2617, %v2616
      %v2666 = vpack.c.b16 %v2619, %v2618
      %v2667 = vpack.c.b16 %v2621, %v2620
      %v2668 = vpack.c.b16 %v2623, %v2622
      %v2669 = vpack.c.b16 %v2625, %v2624
      %v2670 = vpack.c.b16 %v2627, %v2626
      %v2671 = vpack.c.b16 %v2629, %v2628
      %v2672 = vpack.c.b16 %v2631, %v2630
      %v2673 = vpack.c.b16 %v2633, %v2632
      %2714 = vmatpush.bf16.msra.mxu0 %v2641
      %2715 = vmatpush.bf16.msra.mxu0 %v2640
      %2716 = vmatpush.bf16.msra.mxu0 %v2639
      %2717 = vmatpush.bf16.msra.mxu0 %v2638
      %2718 = vmatpush.bf16.msra.mxu0 %v2637
      %2719 = vmatpush.bf16.msra.mxu0 %v2636
      %2720 = vmatpush.bf16.msra.mxu0 %v2635
      %2721 = vmatpush.bf16.msra.mxu0 %v2634
      %2722 = vmatmul.bf16.gmra.mxu0 %v271
      %v2723 = vpop.f32.mrf.mxu0
      %v2724 = vadd.f32 0.0, %v2723
      %v2725 = vpop.f32.mrf.mxu0
      %v2726 = vadd.f32 0.0, %v2725
      %2727 = vmatmul.bf16.gmra.mxu0 %v272
      %v2728 = vpop.f32.mrf.mxu0
      %v2729 = vadd.f32 0.0, %v2728
      %v2730 = vpop.f32.mrf.mxu0
      %v2731 = vadd.f32 0.0, %v2730
      %2732 = vmatmul.bf16.gmra.mxu0 %v273
      %v2733 = vpop.f32.mrf.mxu0
      %v2734 = vadd.f32 0.0, %v2733
      %v2735 = vpop.f32.mrf.mxu0
      %v2736 = vadd.f32 0.0, %v2735
      %2737 = vmatmul.bf16.gmra.mxu0 %v274
      %v2738 = vpop.f32.mrf.mxu0
      %v2739 = vadd.f32 0.0, %v2738
      %v2740 = vpop.f32.mrf.mxu0
      %v2741 = vadd.f32 0.0, %v2740
      %2742 = vmatmul.bf16.gmra.mxu0 %v275
      %v2743 = vpop.f32.mrf.mxu0
      %v2744 = vadd.f32 0.0, %v2743
      %v2745 = vpop.f32.mrf.mxu0
      %v2746 = vadd.f32 0.0, %v2745
      %2747 = vmatmul.bf16.gmra.mxu0 %v644
      %v2748 = vpop.f32.mrf.mxu0
      %v2749 = vadd.f32 0.0, %v2748
      %v2750 = vpop.f32.mrf.mxu0
      %v2751 = vadd.f32 0.0, %v2750
      %2752 = vmatmul.bf16.gmra.mxu0 %v1735
      %v2753 = vpop.f32.mrf.mxu0
      %v2754 = vadd.f32 0.0, %v2753
      %v2755 = vpop.f32.mrf.mxu0
      %v2756 = vadd.f32 0.0, %v2755
      %2757 = vmatmul.bf16.gmra.mxu0 %v2357
      %v2758 = vpop.f32.mrf.mxu0
      %v2759 = vadd.f32 0.0, %v2758
      %v2760 = vpop.f32.mrf.mxu0
      %v2761 = vadd.f32 0.0, %v2760
      %2762 = vdwg.mxu0
      %2763 = vmatpush.bf16.msra.mxu0 %v2649
      %2764 = vmatpush.bf16.msra.mxu0 %v2648
      %2765 = vmatpush.bf16.msra.mxu0 %v2647
      %2766 = vmatpush.bf16.msra.mxu0 %v2646
      %2767 = vmatpush.bf16.msra.mxu0 %v2645
      %2768 = vmatpush.bf16.msra.mxu0 %v2644
      %2769 = vmatpush.bf16.msra.mxu0 %v2643
      %2770 = vmatpush.bf16.msra.mxu0 %v2642
      %2771 = vmatmul.bf16.gmra.mxu0 %v356
      %v2772 = vpop.f32.mrf.mxu0
      %v2773 = vadd.f32 %v2724, %v2772
      %v2774 = vpop.f32.mrf.mxu0
      %v2775 = vadd.f32 %v2726, %v2774
      %2776 = vmatmul.bf16.gmra.mxu0 %v368
      %v2777 = vpop.f32.mrf.mxu0
      %v2778 = vadd.f32 %v2729, %v2777
      %v2779 = vpop.f32.mrf.mxu0
      %v2780 = vadd.f32 %v2731, %v2779
      %2781 = vmatmul.bf16.gmra.mxu0 %v380
      %v2782 = vpop.f32.mrf.mxu0
      %v2783 = vadd.f32 %v2734, %v2782
      %v2784 = vpop.f32.mrf.mxu0
      %v2785 = vadd.f32 %v2736, %v2784
      %2786 = vmatmul.bf16.gmra.mxu0 %v392
      %v2787 = vpop.f32.mrf.mxu0
      %v2788 = vadd.f32 %v2739, %v2787
      %v2789 = vpop.f32.mrf.mxu0
      %v2790 = vadd.f32 %v2741, %v2789
      %2791 = vmatmul.bf16.gmra.mxu0 %v404
      %v2792 = vpop.f32.mrf.mxu0
      %v2793 = vadd.f32 %v2744, %v2792
      %v2794 = vpop.f32.mrf.mxu0
      %v2795 = vadd.f32 %v2746, %v2794
      %2796 = vmatmul.bf16.gmra.mxu0 %v660
      %v2797 = vpop.f32.mrf.mxu0
      %v2798 = vadd.f32 %v2749, %v2797
      %v2799 = vpop.f32.mrf.mxu0
      %v2800 = vadd.f32 %v2751, %v2799
      %2801 = vmatmul.bf16.gmra.mxu0 %v1751
      %v2802 = vpop.f32.mrf.mxu0
      %v2803 = vadd.f32 %v2754, %v2802
      %v2804 = vpop.f32.mrf.mxu0
      %v2805 = vadd.f32 %v2756, %v2804
      %2806 = vmatmul.bf16.gmra.mxu0 %v2373
      %v2807 = vpop.f32.mrf.mxu0
      %v2808 = vadd.f32 %v2759, %v2807
      %v2809 = vpop.f32.mrf.mxu0
      %v2810 = vadd.f32 %v2761, %v2809
      %2811 = vdwg.mxu0
      %2812 = vmatpush.bf16.msra.mxu0 %v2657
      %2813 = vmatpush.bf16.msra.mxu0 %v2656
      %2814 = vmatpush.bf16.msra.mxu0 %v2655
      %2815 = vmatpush.bf16.msra.mxu0 %v2654
      %2816 = vmatpush.bf16.msra.mxu0 %v2653
      %2817 = vmatpush.bf16.msra.mxu0 %v2652
      %2818 = vmatpush.bf16.msra.mxu0 %v2651
      %2819 = vmatpush.bf16.msra.mxu0 %v2650
      %2820 = vmatmul.bf16.gmra.mxu0 %v425
      %v2821 = vpop.f32.mrf.mxu0
      %v2822 = vadd.f32 %v2773, %v2821
      %v2823 = vpop.f32.mrf.mxu0
      %v2824 = vadd.f32 %v2775, %v2823
      %2825 = vmatmul.bf16.gmra.mxu0 %v428
      %v2826 = vpop.f32.mrf.mxu0
      %v2827 = vadd.f32 %v2778, %v2826
      %v2828 = vpop.f32.mrf.mxu0
      %v2829 = vadd.f32 %v2780, %v2828
      %2830 = vmatmul.bf16.gmra.mxu0 %v431
      %v2831 = vpop.f32.mrf.mxu0
      %v2832 = vadd.f32 %v2783, %v2831
      %v2833 = vpop.f32.mrf.mxu0
      %v2834 = vadd.f32 %v2785, %v2833
      %2835 = vmatmul.bf16.gmra.mxu0 %v434
      %v2836 = vpop.f32.mrf.mxu0
      %v2837 = vadd.f32 %v2788, %v2836
      %v2838 = vpop.f32.mrf.mxu0
      %v2839 = vadd.f32 %v2790, %v2838
      %2840 = vmatmul.bf16.gmra.mxu0 %v437
      %v2841 = vpop.f32.mrf.mxu0
      %v2842 = vadd.f32 %v2793, %v2841
      %v2843 = vpop.f32.mrf.mxu0
      %v2844 = vadd.f32 %v2795, %v2843
      %2845 = vmatmul.bf16.gmra.mxu0 %v664
      %v2846 = vpop.f32.mrf.mxu0
      %v2847 = vadd.f32 %v2798, %v2846
      %v2848 = vpop.f32.mrf.mxu0
      %v2849 = vadd.f32 %v2800, %v2848
      %2850 = vmatmul.bf16.gmra.mxu0 %v1755
      %v2851 = vpop.f32.mrf.mxu0
      %v2852 = vadd.f32 %v2803, %v2851
      %v2853 = vpop.f32.mrf.mxu0
      %v2854 = vadd.f32 %v2805, %v2853
      %2855 = vmatmul.bf16.gmra.mxu0 %v2377
      %v2856 = vpop.f32.mrf.mxu0
      %v2857 = vadd.f32 %v2808, %v2856
      %v2858 = vpop.f32.mrf.mxu0
      %v2859 = vadd.f32 %v2810, %v2858
      %2860 = vdwg.mxu0
      %2861 = vmatpush.bf16.msra.mxu0 %v2665
      %2862 = vmatpush.bf16.msra.mxu0 %v2664
      %2863 = vmatpush.bf16.msra.mxu0 %v2663
      %2864 = vmatpush.bf16.msra.mxu0 %v2662
      %2865 = vmatpush.bf16.msra.mxu0 %v2661
      %2866 = vmatpush.bf16.msra.mxu0 %v2660
      %2867 = vmatpush.bf16.msra.mxu0 %v2659
      %2868 = vmatpush.bf16.msra.mxu0 %v2658
      %2869 = vmatmul.bf16.gmra.mxu0 %v482
      %v2870 = vpop.f32.mrf.mxu0
      %v2871 = vadd.f32 %v2822, %v2870
      %v2872 = vpop.f32.mrf.mxu0
      %v2873 = vadd.f32 %v2824, %v2872
      %2874 = vmatmul.bf16.gmra.mxu0 %v491
      %v2875 = vpop.f32.mrf.mxu0
      %v2876 = vadd.f32 %v2827, %v2875
      %v2877 = vpop.f32.mrf.mxu0
      %v2878 = vadd.f32 %v2829, %v2877
      %2879 = vmatmul.bf16.gmra.mxu0 %v500
      %v2880 = vpop.f32.mrf.mxu0
      %v2881 = vadd.f32 %v2832, %v2880
      %v2882 = vpop.f32.mrf.mxu0
      %v2883 = vadd.f32 %v2834, %v2882
      %2884 = vmatmul.bf16.gmra.mxu0 %v509
      %v2885 = vpop.f32.mrf.mxu0
      %v2886 = vadd.f32 %v2837, %v2885
      %v2887 = vpop.f32.mrf.mxu0
      %v2888 = vadd.f32 %v2839, %v2887
      %2889 = vmatmul.bf16.gmra.mxu0 %v518
      %v2890 = vpop.f32.mrf.mxu0
      %v2891 = vadd.f32 %v2842, %v2890
      %v2892 = vpop.f32.mrf.mxu0
      %v2893 = vadd.f32 %v2844, %v2892
      %2894 = vmatmul.bf16.gmra.mxu0 %v674
      %v2895 = vpop.f32.mrf.mxu0
      %v2896 = vadd.f32 %v2847, %v2895
      %v2897 = vpop.f32.mrf.mxu0
      %v2898 = vadd.f32 %v2849, %v2897
      %2899 = vmatmul.bf16.gmra.mxu0 %v1765
      %v2900 = vpop.f32.mrf.mxu0
      %v2901 = vadd.f32 %v2852, %v2900
      %v2902 = vpop.f32.mrf.mxu0
      %v2903 = vadd.f32 %v2854, %v2902
      %2904 = vmatmul.bf16.gmra.mxu0 %v2387
      %v2905 = vpop.f32.mrf.mxu0
      %v2906 = vadd.f32 %v2857, %v2905
      %v2907 = vpop.f32.mrf.mxu0
      %v2908 = vadd.f32 %v2859, %v2907
      %2909 = vdwg.mxu0
      %2910 = vmatpush.bf16.msra.mxu0 %v2673
      %2911 = vmatpush.bf16.msra.mxu0 %v2672
      %2912 = vmatpush.bf16.msra.mxu0 %v2671
      %2913 = vmatpush.bf16.msra.mxu0 %v2670
      %2914 = vmatpush.bf16.msra.mxu0 %v2669
      %2915 = vmatpush.bf16.msra.mxu0 %v2668
      %2916 = vmatpush.bf16.msra.mxu0 %v2667
      %2917 = vmatpush.bf16.msra.mxu0 %v2666
      %2918 = vmatmul.bf16.gmra.mxu0 %v539
      %v2919 = vpop.f32.mrf.mxu0
      %v2920 = vadd.f32 %v2871, %v2919
      %v2921 = vpop.f32.mrf.mxu0
      %v2922 = vadd.f32 %v2873, %v2921
      %2923 = vmatmul.bf16.gmra.mxu0 %v542
      %v2924 = vpop.f32.mrf.mxu0
      %v2925 = vadd.f32 %v2876, %v2924
      %v2926 = vpop.f32.mrf.mxu0
      %v2927 = vadd.f32 %v2878, %v2926
      %2928 = vmatmul.bf16.gmra.mxu0 %v545
      %v2929 = vpop.f32.mrf.mxu0
      %v2930 = vadd.f32 %v2881, %v2929
      %v2931 = vpop.f32.mrf.mxu0
      %v2932 = vadd.f32 %v2883, %v2931
      %2933 = vmatmul.bf16.gmra.mxu0 %v548
      %v2934 = vpop.f32.mrf.mxu0
      %v2935 = vadd.f32 %v2886, %v2934
      %v2936 = vpop.f32.mrf.mxu0
      %v2937 = vadd.f32 %v2888, %v2936
      %2938 = vmatmul.bf16.gmra.mxu0 %v551
      %v2939 = vpop.f32.mrf.mxu0
      %v2940 = vadd.f32 %v2891, %v2939
      %v2941 = vpop.f32.mrf.mxu0
      %v2942 = vadd.f32 %v2893, %v2941
      %2943 = vmatmul.bf16.gmra.mxu0 %v678
      %v2944 = vpop.f32.mrf.mxu0
      %v2945 = vadd.f32 %v2896, %v2944
      %v2946 = vpop.f32.mrf.mxu0
      %v2947 = vadd.f32 %v2898, %v2946
      %2948 = vmatmul.bf16.gmra.mxu0 %v1769
      %v2949 = vpop.f32.mrf.mxu0
      %v2950 = vadd.f32 %v2901, %v2949
      %v2951 = vpop.f32.mrf.mxu0
      %v2952 = vadd.f32 %v2903, %v2951
      %2953 = vmatmul.bf16.gmra.mxu0 %v2391
      %v2954 = vpop.f32.mrf.mxu0
      %v2955 = vadd.f32 %v2906, %v2954
      %v2956 = vpop.f32.mrf.mxu0
      %v2957 = vadd.f32 %v2908, %v2956
      %2958 = vdwg.mxu0
      %v2959 = vadd.f32 %v2337, %v2920
      %v2960 = vadd.f32 %v2338, %v2922
      %v2961 = vadd.f32 %v2339, %v2925
      %v2962 = vadd.f32 %v2340, %v2927
      %v2963 = vadd.f32 %v2341, %v2930
      %v2964 = vadd.f32 %v2342, %v2932
      %v2965 = vadd.f32 %v2343, %v2935
      %v2966 = vadd.f32 %v2344, %v2937
      %v2967 = vadd.f32 %v2345, %v2940
      %v2968 = vadd.f32 %v2346, %v2942
      %v2969 = vadd.f32 %v2347, %v2945
      %v2970 = vadd.f32 %v2348, %v2947
      %v2971 = vadd.f32 %v2349, %v2950
      %v2972 = vadd.f32 %v2350, %v2952
      %v2973 = vadd.f32 %v2351, %v2955
      %v2974 = vadd.f32 %v2352, %v2957
      %v2977 = vunpack.c.l.b16 %v233
      %v2978 = vunpack.c.l.b16 %v234
      %v2979 = vpack.c.b16 %v2978, %v2977
      %v2982 = vunpack.c.l.b16 %v235
      %v2983 = vpack.c.b16 %v2982, %v2982
      %v2985 = vshrl.u32 %v2979, 16
      %v2987 = vshll.u32 %v2979, 16
      %v2989 = vrot.slane %v2987, 1
      %v2990 = vor.u32 %v2985, %v2989
      %v2992 = vshll.u32 %v2983, 16
      %v2994 = vrot.slane %v2992, 1
      %v2995 = vsel %vm308, %v2990, %v2994
      %v2997 = vrot.slane %v2979, 1
      %v2998 = vrot.slane %v2983, 1
      %v2999 = vsel %vm413, %v2997, %v2998
      %v3001 = vrot.slane %v2985, 1
      %v3002 = vrot.slane %v2987, 2
      %v3003 = vor.u32 %v3001, %v3002
      %v3004 = vshrl.u32 %v2983, 16
      %v3006 = vrot.slane %v3004, 1
      %v3007 = vrot.slane %v2992, 2
      %v3008 = vor.u32 %v3006, %v3007
      %v3009 = vsel %vm446, %v3003, %v3008
      %v3011 = vrot.slane %v2979, 2
      %v3012 = vrot.slane %v2983, 2
      %v3013 = vsel %vm527, %v3011, %v3012
      %s3015 = scalar_lea.vmem %s1, 1280
      %v3016 = vld [vmem:[%s3015] sm:$0xf]
      %v3017 = vld [vmem:[%s3015 + $0x4] sm:$0xf]
      %v3018 = vld [vmem:[%s3015 + $0x8] sm:$0xf]
      %v3019 = vld [vmem:[%s3015 + $0xc] sm:$0xf]
      %v3020 = vld [vmem:[%s3015 + $0x10] sm:$0xf]
      %v3021 = vld [vmem:[%s3015 + $0x14] sm:$0xf]
      %v3022 = vld [vmem:[%s3015 + $0x18] sm:$0xf]
      %v3023 = vld [vmem:[%s3015 + $0x1c] sm:$0xf]
      %v3024 = vld [vmem:[%s3015 + $0x20] sm:$0xf]
      %v3025 = vld [vmem:[%s3015 + $0x24] sm:$0xf]
      %v3026 = vld [vmem:[%s3015 + $0x28] sm:$0xf]
      %v3027 = vld [vmem:[%s3015 + $0x2c] sm:$0xf]
      %v3028 = vld [vmem:[%s3015 + $0x30] sm:$0xf]
      %v3029 = vld [vmem:[%s3015 + $0x34] sm:$0xf]
      %v3030 = vld [vmem:[%s3015 + $0x38] sm:$0xf]
      %v3031 = vld [vmem:[%s3015 + $0x3c] sm:$0xf]
      %v3032 = vld [vmem:[%s3015 + $0x40] sm:$0xf]
      %v3033 = vld [vmem:[%s3015 + $0x44] sm:$0xf]
      %v3034 = vld [vmem:[%s3015 + $0x48] sm:$0xf]
      %v3035 = vld [vmem:[%s3015 + $0x4c] sm:$0xf]
      %v3036 = vld [vmem:[%s3015 + $0x50] sm:$0xf]
      %v3037 = vld [vmem:[%s3015 + $0x54] sm:$0xf]
      %v3038 = vld [vmem:[%s3015 + $0x58] sm:$0xf]
      %v3039 = vld [vmem:[%s3015 + $0x5c] sm:$0xf]
      %v3040 = vld [vmem:[%s3015 + $0x60] sm:$0xf]
      %v3041 = vld [vmem:[%s3015 + $0x64] sm:$0xf]
      %v3042 = vld [vmem:[%s3015 + $0x68] sm:$0xf]
      %v3043 = vld [vmem:[%s3015 + $0x6c] sm:$0xf]
      %v3044 = vld [vmem:[%s3015 + $0x70] sm:$0xf]
      %v3045 = vld [vmem:[%s3015 + $0x74] sm:$0xf]
      %v3046 = vld [vmem:[%s3015 + $0x78] sm:$0xf]
      %v3047 = vld [vmem:[%s3015 + $0x7c] sm:$0xf]
      %v3048 = vld [vmem:[%s3015 + $0x80] sm:$0xf]
      %v3049 = vld [vmem:[%s3015 + $0x84] sm:$0xf]
      %v3050 = vld [vmem:[%s3015 + $0x88] sm:$0xf]
      %v3051 = vld [vmem:[%s3015 + $0x8c] sm:$0xf]
      %v3052 = vld [vmem:[%s3015 + $0x90] sm:$0xf]
      %v3053 = vld [vmem:[%s3015 + $0x94] sm:$0xf]
      %v3054 = vld [vmem:[%s3015 + $0x98] sm:$0xf]
      %v3055 = vld [vmem:[%s3015 + $0x9c] sm:$0xf]
      %v3056 = vld [vmem:[%s3015 + $0xa0] sm:$0xf]
      %v3057 = vld [vmem:[%s3015 + $0xa4] sm:$0xf]
      %v3058 = vld [vmem:[%s3015 + $0xa8] sm:$0xf]
      %v3059 = vld [vmem:[%s3015 + $0xac] sm:$0xf]
      %v3060 = vld [vmem:[%s3015 + $0xb0] sm:$0xf]
      %v3061 = vld [vmem:[%s3015 + $0xb4] sm:$0xf]
      %v3062 = vld [vmem:[%s3015 + $0xb8] sm:$0xf]
      %v3063 = vld [vmem:[%s3015 + $0xbc] sm:$0xf]
      %v3064 = vld [vmem:[%s3015 + $0xc0] sm:$0xf]
      %v3065 = vld [vmem:[%s3015 + $0xc4] sm:$0xf]
      %v3066 = vld [vmem:[%s3015 + $0xc8] sm:$0xf]
      %v3067 = vld [vmem:[%s3015 + $0xcc] sm:$0xf]
      %v3068 = vld [vmem:[%s3015 + $0xd0] sm:$0xf]
      %v3069 = vld [vmem:[%s3015 + $0xd4] sm:$0xf]
      %v3070 = vld [vmem:[%s3015 + $0xd8] sm:$0xf]
      %v3071 = vld [vmem:[%s3015 + $0xdc] sm:$0xf]
      %v3072 = vld [vmem:[%s3015 + $0xe0] sm:$0xf]
      %v3073 = vld [vmem:[%s3015 + $0xe4] sm:$0xf]
      %v3074 = vld [vmem:[%s3015 + $0xe8] sm:$0xf]
      %v3075 = vld [vmem:[%s3015 + $0xec] sm:$0xf]
      %v3076 = vld [vmem:[%s3015 + $0xf0] sm:$0xf]
      %v3077 = vld [vmem:[%s3015 + $0xf4] sm:$0xf]
      %v3078 = vld [vmem:[%s3015 + $0xf8] sm:$0xf]
      %v3079 = vld [vmem:[%s3015 + $0xfc] sm:$0xf]
      %v3080 = vld [vmem:[%s3015 + $0x100] sm:$0xf]
      %v3081 = vld [vmem:[%s3015 + $0x104] sm:$0xf]
      %v3082 = vld [vmem:[%s3015 + $0x108] sm:$0xf]
      %v3083 = vld [vmem:[%s3015 + $0x10c] sm:$0xf]
      %v3084 = vld [vmem:[%s3015 + $0x110] sm:$0xf]
      %v3085 = vld [vmem:[%s3015 + $0x114] sm:$0xf]
      %v3086 = vld [vmem:[%s3015 + $0x118] sm:$0xf]
      %v3087 = vld [vmem:[%s3015 + $0x11c] sm:$0xf]
      %v3088 = vld [vmem:[%s3015 + $0x120] sm:$0xf]
      %v3089 = vld [vmem:[%s3015 + $0x124] sm:$0xf]
      %v3090 = vld [vmem:[%s3015 + $0x128] sm:$0xf]
      %v3091 = vld [vmem:[%s3015 + $0x12c] sm:$0xf]
      %v3092 = vld [vmem:[%s3015 + $0x130] sm:$0xf]
      %v3093 = vld [vmem:[%s3015 + $0x134] sm:$0xf]
      %v3094 = vld [vmem:[%s3015 + $0x138] sm:$0xf]
      %v3095 = vld [vmem:[%s3015 + $0x13c] sm:$0xf]
      %v3176 = vunpack.c.l.b16 %v3016
      %v3177 = vunpack.c.l.b16 %v3017
      %v3178 = vunpack.c.l.b16 %v3018
      %v3179 = vunpack.c.l.b16 %v3019
      %v3180 = vunpack.c.l.b16 %v3020
      %v3181 = vunpack.c.l.b16 %v3021
      %v3182 = vunpack.c.l.b16 %v3022
      %v3183 = vunpack.c.l.b16 %v3023
      %v3184 = vunpack.c.l.b16 %v3024
      %v3185 = vunpack.c.l.b16 %v3025
      %v3186 = vunpack.c.l.b16 %v3026
      %v3187 = vunpack.c.l.b16 %v3027
      %v3188 = vunpack.c.l.b16 %v3028
      %v3189 = vunpack.c.l.b16 %v3029
      %v3190 = vunpack.c.l.b16 %v3030
      %v3191 = vunpack.c.l.b16 %v3031
      %v3192 = vunpack.c.l.b16 %v3032
      %v3193 = vunpack.c.l.b16 %v3033
      %v3194 = vunpack.c.l.b16 %v3034
      %v3195 = vunpack.c.l.b16 %v3035
      %v3196 = vunpack.c.l.b16 %v3036
      %v3197 = vunpack.c.l.b16 %v3037
      %v3198 = vunpack.c.l.b16 %v3038
      %v3199 = vunpack.c.l.b16 %v3039
      %v3200 = vunpack.c.l.b16 %v3040
      %v3201 = vunpack.c.l.b16 %v3041
      %v3202 = vunpack.c.l.b16 %v3042
      %v3203 = vunpack.c.l.b16 %v3043
      %v3204 = vunpack.c.l.b16 %v3044
      %v3205 = vunpack.c.l.b16 %v3045
      %v3206 = vunpack.c.l.b16 %v3046
      %v3207 = vunpack.c.l.b16 %v3047
      %v3208 = vunpack.c.l.b16 %v3048
      %v3209 = vunpack.c.l.b16 %v3049
      %v3210 = vunpack.c.l.b16 %v3050
      %v3211 = vunpack.c.l.b16 %v3051
      %v3212 = vunpack.c.l.b16 %v3052
      %v3213 = vunpack.c.l.b16 %v3053
      %v3214 = vunpack.c.l.b16 %v3054
      %v3215 = vunpack.c.l.b16 %v3055
      %v3216 = vunpack.c.l.b16 %v3056
      %v3217 = vunpack.c.l.b16 %v3057
      %v3218 = vunpack.c.l.b16 %v3058
      %v3219 = vunpack.c.l.b16 %v3059
      %v3220 = vunpack.c.l.b16 %v3060
      %v3221 = vunpack.c.l.b16 %v3061
      %v3222 = vunpack.c.l.b16 %v3062
      %v3223 = vunpack.c.l.b16 %v3063
      %v3224 = vunpack.c.l.b16 %v3064
      %v3225 = vunpack.c.l.b16 %v3065
      %v3226 = vunpack.c.l.b16 %v3066
      %v3227 = vunpack.c.l.b16 %v3067
      %v3228 = vunpack.c.l.b16 %v3068
      %v3229 = vunpack.c.l.b16 %v3069
      %v3230 = vunpack.c.l.b16 %v3070
      %v3231 = vunpack.c.l.b16 %v3071
      %v3232 = vunpack.c.l.b16 %v3072
      %v3233 = vunpack.c.l.b16 %v3073
      %v3234 = vunpack.c.l.b16 %v3074
      %v3235 = vunpack.c.l.b16 %v3075
      %v3236 = vunpack.c.l.b16 %v3076
      %v3237 = vunpack.c.l.b16 %v3077
      %v3238 = vunpack.c.l.b16 %v3078
      %v3239 = vunpack.c.l.b16 %v3079
      %v3240 = vunpack.c.l.b16 %v3080
      %v3241 = vunpack.c.l.b16 %v3081
      %v3242 = vunpack.c.l.b16 %v3082
      %v3243 = vunpack.c.l.b16 %v3083
      %v3244 = vunpack.c.l.b16 %v3084
      %v3245 = vunpack.c.l.b16 %v3085
      %v3246 = vunpack.c.l.b16 %v3086
      %v3247 = vunpack.c.l.b16 %v3087
      %v3248 = vunpack.c.l.b16 %v3088
      %v3249 = vunpack.c.l.b16 %v3089
      %v3250 = vunpack.c.l.b16 %v3090
      %v3251 = vunpack.c.l.b16 %v3091
      %v3252 = vunpack.c.l.b16 %v3092
      %v3253 = vunpack.c.l.b16 %v3093
      %v3254 = vunpack.c.l.b16 %v3094
      %v3255 = vunpack.c.l.b16 %v3095
      %v3256 = vpack.c.b16 %v3177, %v3176
      %v3257 = vpack.c.b16 %v3179, %v3178
      %v3258 = vpack.c.b16 %v3181, %v3180
      %v3259 = vpack.c.b16 %v3183, %v3182
      %v3260 = vpack.c.b16 %v3185, %v3184
      %v3261 = vpack.c.b16 %v3187, %v3186
      %v3262 = vpack.c.b16 %v3189, %v3188
      %v3263 = vpack.c.b16 %v3191, %v3190
      %v3264 = vpack.c.b16 %v3193, %v3192
      %v3265 = vpack.c.b16 %v3195, %v3194
      %v3266 = vpack.c.b16 %v3197, %v3196
      %v3267 = vpack.c.b16 %v3199, %v3198
      %v3268 = vpack.c.b16 %v3201, %v3200
      %v3269 = vpack.c.b16 %v3203, %v3202
      %v3270 = vpack.c.b16 %v3205, %v3204
      %v3271 = vpack.c.b16 %v3207, %v3206
      %v3272 = vpack.c.b16 %v3209, %v3208
      %v3273 = vpack.c.b16 %v3211, %v3210
      %v3274 = vpack.c.b16 %v3213, %v3212
      %v3275 = vpack.c.b16 %v3215, %v3214
      %v3276 = vpack.c.b16 %v3217, %v3216
      %v3277 = vpack.c.b16 %v3219, %v3218
      %v3278 = vpack.c.b16 %v3221, %v3220
      %v3279 = vpack.c.b16 %v3223, %v3222
      %v3280 = vpack.c.b16 %v3225, %v3224
      %v3281 = vpack.c.b16 %v3227, %v3226
      %v3282 = vpack.c.b16 %v3229, %v3228
      %v3283 = vpack.c.b16 %v3231, %v3230
      %v3284 = vpack.c.b16 %v3233, %v3232
      %v3285 = vpack.c.b16 %v3235, %v3234
      %v3286 = vpack.c.b16 %v3237, %v3236
      %v3287 = vpack.c.b16 %v3239, %v3238
      %v3288 = vpack.c.b16 %v3241, %v3240
      %v3289 = vpack.c.b16 %v3243, %v3242
      %v3290 = vpack.c.b16 %v3245, %v3244
      %v3291 = vpack.c.b16 %v3247, %v3246
      %v3292 = vpack.c.b16 %v3249, %v3248
      %v3293 = vpack.c.b16 %v3251, %v3250
      %v3294 = vpack.c.b16 %v3253, %v3252
      %v3295 = vpack.c.b16 %v3255, %v3254
      %3336 = vmatpush.bf16.msra.mxu0 %v3263
      %3337 = vmatpush.bf16.msra.mxu0 %v3262
      %3338 = vmatpush.bf16.msra.mxu0 %v3261
      %3339 = vmatpush.bf16.msra.mxu0 %v3260
      %3340 = vmatpush.bf16.msra.mxu0 %v3259
      %3341 = vmatpush.bf16.msra.mxu0 %v3258
      %3342 = vmatpush.bf16.msra.mxu0 %v3257
      %3343 = vmatpush.bf16.msra.mxu0 %v3256
      %3344 = vmatmul.bf16.gmra.mxu0 %v272
      %v3345 = vpop.f32.mrf.mxu0
      %v3346 = vadd.f32 0.0, %v3345
      %v3347 = vpop.f32.mrf.mxu0
      %v3348 = vadd.f32 0.0, %v3347
      %3349 = vmatmul.bf16.gmra.mxu0 %v273
      %v3350 = vpop.f32.mrf.mxu0
      %v3351 = vadd.f32 0.0, %v3350
      %v3352 = vpop.f32.mrf.mxu0
      %v3353 = vadd.f32 0.0, %v3352
      %3354 = vmatmul.bf16.gmra.mxu0 %v274
      %v3355 = vpop.f32.mrf.mxu0
      %v3356 = vadd.f32 0.0, %v3355
      %v3357 = vpop.f32.mrf.mxu0
      %v3358 = vadd.f32 0.0, %v3357
      %3359 = vmatmul.bf16.gmra.mxu0 %v275
      %v3360 = vpop.f32.mrf.mxu0
      %v3361 = vadd.f32 0.0, %v3360
      %v3362 = vpop.f32.mrf.mxu0
      %v3363 = vadd.f32 0.0, %v3362
      %3364 = vmatmul.bf16.gmra.mxu0 %v644
      %v3365 = vpop.f32.mrf.mxu0
      %v3366 = vadd.f32 0.0, %v3365
      %v3367 = vpop.f32.mrf.mxu0
      %v3368 = vadd.f32 0.0, %v3367
      %3369 = vmatmul.bf16.gmra.mxu0 %v1735
      %v3370 = vpop.f32.mrf.mxu0
      %v3371 = vadd.f32 0.0, %v3370
      %v3372 = vpop.f32.mrf.mxu0
      %v3373 = vadd.f32 0.0, %v3372
      %3374 = vmatmul.bf16.gmra.mxu0 %v2357
      %v3375 = vpop.f32.mrf.mxu0
      %v3376 = vadd.f32 0.0, %v3375
      %v3377 = vpop.f32.mrf.mxu0
      %v3378 = vadd.f32 0.0, %v3377
      %3379 = vmatmul.bf16.gmra.mxu0 %v2979
      %v3380 = vpop.f32.mrf.mxu0
      %v3381 = vadd.f32 0.0, %v3380
      %v3382 = vpop.f32.mrf.mxu0
      %v3383 = vadd.f32 0.0, %v3382
      %3384 = vdwg.mxu0
      %3385 = vmatpush.bf16.msra.mxu0 %v3271
      %3386 = vmatpush.bf16.msra.mxu0 %v3270
      %3387 = vmatpush.bf16.msra.mxu0 %v3269
      %3388 = vmatpush.bf16.msra.mxu0 %v3268
      %3389 = vmatpush.bf16.msra.mxu0 %v3267
      %3390 = vmatpush.bf16.msra.mxu0 %v3266
      %3391 = vmatpush.bf16.msra.mxu0 %v3265
      %3392 = vmatpush.bf16.msra.mxu0 %v3264
      %3393 = vmatmul.bf16.gmra.mxu0 %v368
      %v3394 = vpop.f32.mrf.mxu0
      %v3395 = vadd.f32 %v3346, %v3394
      %v3396 = vpop.f32.mrf.mxu0
      %v3397 = vadd.f32 %v3348, %v3396
      %3398 = vmatmul.bf16.gmra.mxu0 %v380
      %v3399 = vpop.f32.mrf.mxu0
      %v3400 = vadd.f32 %v3351, %v3399
      %v3401 = vpop.f32.mrf.mxu0
      %v3402 = vadd.f32 %v3353, %v3401
      %3403 = vmatmul.bf16.gmra.mxu0 %v392
      %v3404 = vpop.f32.mrf.mxu0
      %v3405 = vadd.f32 %v3356, %v3404
      %v3406 = vpop.f32.mrf.mxu0
      %v3407 = vadd.f32 %v3358, %v3406
      %3408 = vmatmul.bf16.gmra.mxu0 %v404
      %v3409 = vpop.f32.mrf.mxu0
      %v3410 = vadd.f32 %v3361, %v3409
      %v3411 = vpop.f32.mrf.mxu0
      %v3412 = vadd.f32 %v3363, %v3411
      %3413 = vmatmul.bf16.gmra.mxu0 %v660
      %v3414 = vpop.f32.mrf.mxu0
      %v3415 = vadd.f32 %v3366, %v3414
      %v3416 = vpop.f32.mrf.mxu0
      %v3417 = vadd.f32 %v3368, %v3416
      %3418 = vmatmul.bf16.gmra.mxu0 %v1751
      %v3419 = vpop.f32.mrf.mxu0
      %v3420 = vadd.f32 %v3371, %v3419
      %v3421 = vpop.f32.mrf.mxu0
      %v3422 = vadd.f32 %v3373, %v3421
      %3423 = vmatmul.bf16.gmra.mxu0 %v2373
      %v3424 = vpop.f32.mrf.mxu0
      %v3425 = vadd.f32 %v3376, %v3424
      %v3426 = vpop.f32.mrf.mxu0
      %v3427 = vadd.f32 %v3378, %v3426
      %3428 = vmatmul.bf16.gmra.mxu0 %v2995
      %v3429 = vpop.f32.mrf.mxu0
      %v3430 = vadd.f32 %v3381, %v3429
      %v3431 = vpop.f32.mrf.mxu0
      %v3432 = vadd.f32 %v3383, %v3431
      %3433 = vdwg.mxu0
      %3434 = vmatpush.bf16.msra.mxu0 %v3279
      %3435 = vmatpush.bf16.msra.mxu0 %v3278
      %3436 = vmatpush.bf16.msra.mxu0 %v3277
      %3437 = vmatpush.bf16.msra.mxu0 %v3276
      %3438 = vmatpush.bf16.msra.mxu0 %v3275
      %3439 = vmatpush.bf16.msra.mxu0 %v3274
      %3440 = vmatpush.bf16.msra.mxu0 %v3273
      %3441 = vmatpush.bf16.msra.mxu0 %v3272
      %3442 = vmatmul.bf16.gmra.mxu0 %v428
      %v3443 = vpop.f32.mrf.mxu0
      %v3444 = vadd.f32 %v3395, %v3443
      %v3445 = vpop.f32.mrf.mxu0
      %v3446 = vadd.f32 %v3397, %v3445
      %3447 = vmatmul.bf16.gmra.mxu0 %v431
      %v3448 = vpop.f32.mrf.mxu0
      %v3449 = vadd.f32 %v3400, %v3448
      %v3450 = vpop.f32.mrf.mxu0
      %v3451 = vadd.f32 %v3402, %v3450
      %3452 = vmatmul.bf16.gmra.mxu0 %v434
      %v3453 = vpop.f32.mrf.mxu0
      %v3454 = vadd.f32 %v3405, %v3453
      %v3455 = vpop.f32.mrf.mxu0
      %v3456 = vadd.f32 %v3407, %v3455
      %3457 = vmatmul.bf16.gmra.mxu0 %v437
      %v3458 = vpop.f32.mrf.mxu0
      %v3459 = vadd.f32 %v3410, %v3458
      %v3460 = vpop.f32.mrf.mxu0
      %v3461 = vadd.f32 %v3412, %v3460
      %3462 = vmatmul.bf16.gmra.mxu0 %v664
      %v3463 = vpop.f32.mrf.mxu0
      %v3464 = vadd.f32 %v3415, %v3463
      %v3465 = vpop.f32.mrf.mxu0
      %v3466 = vadd.f32 %v3417, %v3465
      %3467 = vmatmul.bf16.gmra.mxu0 %v1755
      %v3468 = vpop.f32.mrf.mxu0
      %v3469 = vadd.f32 %v3420, %v3468
      %v3470 = vpop.f32.mrf.mxu0
      %v3471 = vadd.f32 %v3422, %v3470
      %3472 = vmatmul.bf16.gmra.mxu0 %v2377
      %v3473 = vpop.f32.mrf.mxu0
      %v3474 = vadd.f32 %v3425, %v3473
      %v3475 = vpop.f32.mrf.mxu0
      %v3476 = vadd.f32 %v3427, %v3475
      %3477 = vmatmul.bf16.gmra.mxu0 %v2999
      %v3478 = vpop.f32.mrf.mxu0
      %v3479 = vadd.f32 %v3430, %v3478
      %v3480 = vpop.f32.mrf.mxu0
      %v3481 = vadd.f32 %v3432, %v3480
      %3482 = vdwg.mxu0
      %3483 = vmatpush.bf16.msra.mxu0 %v3287
      %3484 = vmatpush.bf16.msra.mxu0 %v3286
      %3485 = vmatpush.bf16.msra.mxu0 %v3285
      %3486 = vmatpush.bf16.msra.mxu0 %v3284
      %3487 = vmatpush.bf16.msra.mxu0 %v3283
      %3488 = vmatpush.bf16.msra.mxu0 %v3282
      %3489 = vmatpush.bf16.msra.mxu0 %v3281
      %3490 = vmatpush.bf16.msra.mxu0 %v3280
      %3491 = vmatmul.bf16.gmra.mxu0 %v491
      %v3492 = vpop.f32.mrf.mxu0
      %v3493 = vadd.f32 %v3444, %v3492
      %v3494 = vpop.f32.mrf.mxu0
      %v3495 = vadd.f32 %v3446, %v3494
      %3496 = vmatmul.bf16.gmra.mxu0 %v500
      %v3497 = vpop.f32.mrf.mxu0
      %v3498 = vadd.f32 %v3449, %v3497
      %v3499 = vpop.f32.mrf.mxu0
      %v3500 = vadd.f32 %v3451, %v3499
      %3501 = vmatmul.bf16.gmra.mxu0 %v509
      %v3502 = vpop.f32.mrf.mxu0
      %v3503 = vadd.f32 %v3454, %v3502
      %v3504 = vpop.f32.mrf.mxu0
      %v3505 = vadd.f32 %v3456, %v3504
      %3506 = vmatmul.bf16.gmra.mxu0 %v518
      %v3507 = vpop.f32.mrf.mxu0
      %v3508 = vadd.f32 %v3459, %v3507
      %v3509 = vpop.f32.mrf.mxu0
      %v3510 = vadd.f32 %v3461, %v3509
      %3511 = vmatmul.bf16.gmra.mxu0 %v674
      %v3512 = vpop.f32.mrf.mxu0
      %v3513 = vadd.f32 %v3464, %v3512
      %v3514 = vpop.f32.mrf.mxu0
      %v3515 = vadd.f32 %v3466, %v3514
      %3516 = vmatmul.bf16.gmra.mxu0 %v1765
      %v3517 = vpop.f32.mrf.mxu0
      %v3518 = vadd.f32 %v3469, %v3517
      %v3519 = vpop.f32.mrf.mxu0
      %v3520 = vadd.f32 %v3471, %v3519
      %3521 = vmatmul.bf16.gmra.mxu0 %v2387
      %v3522 = vpop.f32.mrf.mxu0
      %v3523 = vadd.f32 %v3474, %v3522
      %v3524 = vpop.f32.mrf.mxu0
      %v3525 = vadd.f32 %v3476, %v3524
      %3526 = vmatmul.bf16.gmra.mxu0 %v3009
      %v3527 = vpop.f32.mrf.mxu0
      %v3528 = vadd.f32 %v3479, %v3527
      %v3529 = vpop.f32.mrf.mxu0
      %v3530 = vadd.f32 %v3481, %v3529
      %3531 = vdwg.mxu0
      %3532 = vmatpush.bf16.msra.mxu0 %v3295
      %3533 = vmatpush.bf16.msra.mxu0 %v3294
      %3534 = vmatpush.bf16.msra.mxu0 %v3293
      %3535 = vmatpush.bf16.msra.mxu0 %v3292
      %3536 = vmatpush.bf16.msra.mxu0 %v3291
      %3537 = vmatpush.bf16.msra.mxu0 %v3290
      %3538 = vmatpush.bf16.msra.mxu0 %v3289
      %3539 = vmatpush.bf16.msra.mxu0 %v3288
      %3540 = vmatmul.bf16.gmra.mxu0 %v542
      %v3541 = vpop.f32.mrf.mxu0
      %v3542 = vadd.f32 %v3493, %v3541
      %v3543 = vpop.f32.mrf.mxu0
      %v3544 = vadd.f32 %v3495, %v3543
      %3545 = vmatmul.bf16.gmra.mxu0 %v545
      %v3546 = vpop.f32.mrf.mxu0
      %v3547 = vadd.f32 %v3498, %v3546
      %v3548 = vpop.f32.mrf.mxu0
      %v3549 = vadd.f32 %v3500, %v3548
      %3550 = vmatmul.bf16.gmra.mxu0 %v548
      %v3551 = vpop.f32.mrf.mxu0
      %v3552 = vadd.f32 %v3503, %v3551
      %v3553 = vpop.f32.mrf.mxu0
      %v3554 = vadd.f32 %v3505, %v3553
      %3555 = vmatmul.bf16.gmra.mxu0 %v551
      %v3556 = vpop.f32.mrf.mxu0
      %v3557 = vadd.f32 %v3508, %v3556
      %v3558 = vpop.f32.mrf.mxu0
      %v3559 = vadd.f32 %v3510, %v3558
      %3560 = vmatmul.bf16.gmra.mxu0 %v678
      %v3561 = vpop.f32.mrf.mxu0
      %v3562 = vadd.f32 %v3513, %v3561
      %v3563 = vpop.f32.mrf.mxu0
      %v3564 = vadd.f32 %v3515, %v3563
      %3565 = vmatmul.bf16.gmra.mxu0 %v1769
      %v3566 = vpop.f32.mrf.mxu0
      %v3567 = vadd.f32 %v3518, %v3566
      %v3568 = vpop.f32.mrf.mxu0
      %v3569 = vadd.f32 %v3520, %v3568
      %3570 = vmatmul.bf16.gmra.mxu0 %v2391
      %v3571 = vpop.f32.mrf.mxu0
      %v3572 = vadd.f32 %v3523, %v3571
      %v3573 = vpop.f32.mrf.mxu0
      %v3574 = vadd.f32 %v3525, %v3573
      %3575 = vmatmul.bf16.gmra.mxu0 %v3013
      %v3576 = vpop.f32.mrf.mxu0
      %v3577 = vadd.f32 %v3528, %v3576
      %v3578 = vpop.f32.mrf.mxu0
      %v3579 = vadd.f32 %v3530, %v3578
      %3580 = vdwg.mxu0
      %v3581 = vadd.f32 %v2959, %v3542
      %v3582 = vadd.f32 %v2960, %v3544
      %v3583 = vadd.f32 %v2961, %v3547
      %v3584 = vadd.f32 %v2962, %v3549
      %v3585 = vadd.f32 %v2963, %v3552
      %v3586 = vadd.f32 %v2964, %v3554
      %v3587 = vadd.f32 %v2965, %v3557
      %v3588 = vadd.f32 %v2966, %v3559
      %v3589 = vadd.f32 %v2967, %v3562
      %v3590 = vadd.f32 %v2968, %v3564
      %v3591 = vadd.f32 %v2969, %v3567
      %v3592 = vadd.f32 %v2970, %v3569
      %v3593 = vadd.f32 %v2971, %v3572
      %v3594 = vadd.f32 %v2972, %v3574
      %v3595 = vadd.f32 %v2973, %v3577
      %v3596 = vadd.f32 %v2974, %v3579
      %v3597 = vld [vmem:[%s2] sm:$0x1]
      %v3599 = vperm.slane %v3597, 0
      %v3601 = vadd.f32 %v3581, %v3599
      %v3602 = vadd.f32 %v3582, %v3599
      %v3603 = vadd.f32 %v3583, %v3599
      %v3604 = vadd.f32 %v3584, %v3599
      %v3605 = vadd.f32 %v3585, %v3599
      %v3606 = vadd.f32 %v3586, %v3599
      %v3607 = vadd.f32 %v3587, %v3599
      %v3608 = vadd.f32 %v3588, %v3599
      %v3609 = vadd.f32 %v3589, %v3599
      %v3610 = vadd.f32 %v3590, %v3599
      %v3611 = vadd.f32 %v3591, %v3599
      %v3612 = vadd.f32 %v3592, %v3599
      %v3613 = vadd.f32 %v3593, %v3599
      %v3614 = vadd.f32 %v3594, %v3599
      %v3615 = vadd.f32 %v3595, %v3599
      %v3616 = vadd.f32 %v3596, %v3599
      %v3617 = vmax.f32 %v3601, 0.0
      %v3618 = vmax.f32 %v3602, 0.0
      %v3619 = vmax.f32 %v3603, 0.0
      %v3620 = vmax.f32 %v3604, 0.0
      %v3621 = vmax.f32 %v3605, 0.0
      %v3622 = vmax.f32 %v3606, 0.0
      %v3623 = vmax.f32 %v3607, 0.0
      %v3624 = vmax.f32 %v3608, 0.0
      %v3625 = vmax.f32 %v3609, 0.0
      %v3626 = vmax.f32 %v3610, 0.0
      %v3627 = vmax.f32 %v3611, 0.0
      %v3628 = vmax.f32 %v3612, 0.0
      %v3629 = vmax.f32 %v3613, 0.0
      %v3630 = vmax.f32 %v3614, 0.0
      %v3631 = vmax.f32 %v3615, 0.0
      %v3632 = vmax.f32 %v3616, 0.0
      %v3633 = vpack.c.bf16 %v3617, %v3617
      %v3634 = vpack.c.bf16 %v3618, %v3618
      %v3635 = vpack.c.bf16 %v3619, %v3619
      %v3636 = vpack.c.bf16 %v3620, %v3620
      %v3637 = vpack.c.bf16 %v3621, %v3621
      %v3638 = vpack.c.bf16 %v3622, %v3622
      %v3639 = vpack.c.bf16 %v3623, %v3623
      %v3640 = vpack.c.bf16 %v3624, %v3624
      %v3641 = vpack.c.bf16 %v3625, %v3625
      %v3642 = vpack.c.bf16 %v3626, %v3626
      %v3643 = vpack.c.bf16 %v3627, %v3627
      %v3644 = vpack.c.bf16 %v3628, %v3628
      %v3645 = vpack.c.bf16 %v3629, %v3629
      %v3646 = vpack.c.bf16 %v3630, %v3630
      %v3647 = vpack.c.bf16 %v3631, %v3631
      %v3648 = vpack.c.bf16 %v3632, %v3632
      %3649 = vst [vmem:[%s194] sm:$0xf] %v3633
      %3650 = vst [vmem:[%s194 + $0x4] sm:$0xf] %v3634
      %3651 = vst [vmem:[%s194 + $0x8] sm:$0xf] %v3635
      %3652 = vst [vmem:[%s194 + $0xc] sm:$0xf] %v3636
      %3653 = vst [vmem:[%s194 + $0x10] sm:$0xf] %v3637
      %3654 = vst [vmem:[%s194 + $0x14] sm:$0xf] %v3638
      %3655 = vst [vmem:[%s194 + $0x18] sm:$0xf] %v3639
      %3656 = vst [vmem:[%s194 + $0x1c] sm:$0xf] %v3640
      %3657 = vst [vmem:[%s194 + $0x20] sm:$0xf] %v3641
      %3658 = vst [vmem:[%s194 + $0x24] sm:$0xf] %v3642
      %3659 = vst [vmem:[%s194 + $0x28] sm:$0xf] %v3643
      %3660 = vst [vmem:[%s194 + $0x2c] sm:$0xf] %v3644
      %3661 = vst [vmem:[%s194 + $0x30] sm:$0xf] %v3645
      %3662 = vst [vmem:[%s194 + $0x34] sm:$0xf] %v3646
      %3663 = vst [vmem:[%s194 + $0x38] sm:$0xf] %v3647
      %3664 = vst [vmem:[%s194 + $0x3c] sm:$0xf] %v3648
      %s3665 = smul.u32 8, %s19
      %p3666 = scmp.lt.s32.totalorder %s18, 1
      %s3667 = scalar_select %p3666, %s18, 1
      %p3668 = scmp.lt.s32.totalorder %s3665, 15
      %s3669 = scalar_select %p3668, %s3665, 15
      %s3670 = smul.addr %s3669, 2
      %s3671 = smul.addr %s3667, 32
      %s3672 = sadd.s32 %s3670, %s3671
      %s3673 = smul.addr %s3672, 4
      %s3674 = scalar_lea.vmem %s3, %s3673
      // Predicated region
      $region33: #{head_hunter_forward.6} parent=31 // pred_check
        %p3675 = pneg %p114
      $region34: #{head_hunter_forward.6} parent=31 // pred_check_branch
        %3677 = sbr.rel (%p3675) target = $region36
      $region35: #{head_hunter_forward.6} parent=31 // pred_region
        %s3678 = smul.u32 8, %s19
      $region36: #{head_hunter_forward.6} parent=31 // pred_fallthru
        _
    $region32: #{head_hunter_forward.6} parent=5 // pred_fallthru
      _
    %p3679 = scmp.le.s32.totalorder 2, %s9
    // Predicated region
    $region37: #{head_hunter_forward.6} parent=5 // pred_check
      %p3680 = pneg %p3679
    $region38: #{head_hunter_forward.6} parent=5 // pred_check_branch
      %3682 = sbr.rel (%p3680) target = $region40
    $region39: #{head_hunter_forward.6} parent=5 // pred_region
      %s3683 = ssub.s32 %s9, 2
      // Predicated region
      $region41: #{head_hunter_forward.6} parent=39 // pred_check
        %p3684 = pneg %p120
      $region42: #{head_hunter_forward.6} parent=39 // pred_check_branch
        %3686 = sbr.rel (%p3684) target = $region44
      $region43: #{head_hunter_forward.6} parent=39 // pred_region
        %s3687 = smul.u32 8, %s21
        %p3688 = scmp.lt.s32.totalorder %s20, 1
        %s3689 = scalar_select %p3688, %s20, 1
        %p3690 = scmp.lt.s32.totalorder %s3687, 15
        %s3691 = scalar_select %p3690, %s3687, 15
        %s3692 = smul.addr %s3691, 2
        %s3693 = smul.addr %s3689, 32
        %s3694 = sadd.s32 %s3692, %s3693
        %s3695 = smul.addr %s3694, 4
        %s3696 = scalar_lea.vmem %s3, %s3695
      $region44: #{head_hunter_forward.6} parent=39 // pred_fallthru
        _
    $region40: #{head_hunter_forward.6} parent=5 // pred_fallthru
      _
  $region6: #{head_hunter_forward.6} parent=0 // loop_footer
    %s13 = sadd.s32 1, %s9
  $region7: #{head_hunter_forward.6} parent=0 // loop_footer_branch
    %8 = sbr.rel target = $region3
  $region8: #{head_hunter_forward.6} parent=0 // loop_exit
    _

// kernel: head_hunter_forward.9
$region0: #{head_hunter_forward.9}
  #allocation0 [shape = 'u32[]', space=smem, size = 0x4, offset = 0x4, fixed_abs, tag = 'smem constant byte address 0x4 - core index']
  #allocation1 [shape = 'u32[72,128]{1,0:T(1,128)}', space=vmem, size = 0x9000, scoped, tag = 'internal scratch']
  %s0 = inlined_call_operand.vmem [shape: f32[2,2,32], index: 0, kind: input, shape index: {}]
  %s1 = inlined_call_operand.vmem [shape: f32[1,32], index: 1, kind: input, shape index: {}]
  %s2 = inlined_call_operand.vmem [shape: f32[32,3], index: 2, kind: input, shape index: {}]
  %s3 = inlined_call_operand.vmem [shape: f32[1,3], index: 3, kind: input, shape index: {}]
  %s4 = inlined_call_operand.hbm [shape: f32[2,3], index: 4, kind: output, shape index: {}]
  %s5 = sld [smem:[#allocation0]]
  $region26: #{head_hunter_forward.9} parent=0
    _
  %s7 = ssub.s32 1, %s5
  %s8 = scalar_select 0, %s7, %s5
  $region1: #{head_hunter_forward.9} parent=0
    #allocation2 [shape = 'u8[1024]{0}', space=vmem, size = 0x400, scoped, tag = 'output window, operand 0, single buffered']
    #allocation3 [shape = 's32[1]{0}', space=sflag, size = 0x4, scoped, tag = 'scoped memory for head_hunter_forward.9']
    %9 = vsyncpa [#allocation3], 0
    // Predicated region
    $region2: #{head_hunter_forward.9} parent=1 // pred_check
      _
    $region3: #{head_hunter_forward.9} parent=1 // pred_check_branch
      %11 = sbr.rel (0) target = $region5
    $region4: #{head_hunter_forward.9} parent=1 // pred_region
      _
    $region5: #{head_hunter_forward.9} parent=1 // pred_fallthru
      _
    // Predicated region
    $region6: #{head_hunter_forward.9} parent=1 // pred_check
      _
    $region7: #{head_hunter_forward.9} parent=1 // pred_check_branch
      %13 = sbr.rel (0) target = $region9
    $region8: #{head_hunter_forward.9} parent=1 // pred_region
      _
    $region9: #{head_hunter_forward.9} parent=1 // pred_fallthru
      _
    // Predicated region
    $region10: #{head_hunter_forward.9} parent=1 // pred_check
      _
    $region11: #{head_hunter_forward.9} parent=1 // pred_check_branch
      %15 = sbr.rel (0) target = $region13
    $region12: #{head_hunter_forward.9} parent=1 // pred_region
      _
    $region13: #{head_hunter_forward.9} parent=1 // pred_fallthru
      _
    // Predicated region
    $region14: #{head_hunter_forward.9} parent=1 // pred_check
      _
    $region15: #{head_hunter_forward.9} parent=1 // pred_check_branch
      %17 = sbr.rel (0) target = $region17
    $region16: #{head_hunter_forward.9} parent=1 // pred_region
      _
    $region17: #{head_hunter_forward.9} parent=1 // pred_fallthru
      _
    %v18 = vld [vmem:[%s0] sm:$0x3]
    %v19 = vld [vmem:[%s0 + $0x2] sm:$0x3]
    %vm20 = vcmask 254976
    %v21 = vsel %vm20, %v18, 0.0
    %v22 = vsel %vm20, %v19, 0.0
    %v23 = vadd.f32 %v21, %v22
    %v24 = vld [vmem:[%s1] sm:$0x1]
    %v26 = vperm.slane %v24, 0
    %v28 = vadd.f32 %v23, %v26
    %v29 = vtanh.pop %v28
    %v30 = vld [vmem:[%s2] sm:$0xff]
    %v31 = vld [vmem:[%s2 + $0x8] sm:$0xff]
    %v32 = vld [vmem:[%s2 + $0x10] sm:$0xff]
    %v33 = vld [vmem:[%s2 + $0x18] sm:$0xff]
    %v34 = vld [vmem:[%s3] sm:$0x1]
    %v36 = vperm.slane %v34, 0
    %vm38 = vcmask 261120
    %v40 = vsel %vm38, %v29, 0
    %42 = vmatpush.msra.mxu0 0.0
    %43 = vmatpush.msra.mxu0 0.0
    %44 = vmatpush.msra.mxu0 0.0
    %45 = vmatpush.msra.mxu0 0.0
    %46 = vmatpush.msra.mxu0 0.0
    %47 = vmatpush.msra.mxu0 0.0
    %48 = vmatpush.msra.mxu0 0.0
    %49 = vmatpush.msra.mxu0 0.0
    %50 = vmatpush.msra.mxu0 0.0
    %51 = vmatpush.msra.mxu0 0.0
    %52 = vmatpush.msra.mxu0 0.0
    %53 = vmatpush.msra.mxu0 0.0
    %54 = vmatpush.msra.mxu0 %v33
    %55 = vmatpush.msra.mxu0 %v32
    %56 = vmatpush.msra.mxu0 %v31
    %57 = vmatpush.msra.mxu0 %v30
    %58 = vmatmul.f32.gmra.mxu0 %v40
    %v59 = vpop.f32.mrf.mxu0
    %v60 = vadd.f32 %v36, %v59
    %61 = vdwg.mxu0
    %v62 = vtanh.pop %v60
    %vm63 = vcmask 17408
    %64 = vst.msk [vmem:[#allocation2] sm:$0x3] %vm63, %v62
    // Predicated region
    $region18: #{head_hunter_forward.9} parent=1 // pred_check
      _
    $region19: #{head_hunter_forward.9} parent=1 // pred_check_branch
      %66 = sbr.rel (0) target = $region21
    $region20: #{head_hunter_forward.9} parent=1 // pred_region
      %68 = vsyncadd [#allocation3], 0
      %s70 = sshll.u32 [#allocation2], 4
      %s71 = int_to_ptr.vmem [resolvable:$true] %s70
      %s72 = sshll.u32 %s4, 4
      %s73 = int_to_ptr.hbm [resolvable:$true] %s72
      %75 = dma.vmem_to_hbm [thread:$0]  %s71, 32, %s73, [#allocation3]
    $region21: #{head_hunter_forward.9} parent=1 // pred_fallthru
      _
    // Predicated region
    $region22: #{head_hunter_forward.9} parent=1 // pred_check
      _
    $region23: #{head_hunter_forward.9} parent=1 // pred_check_branch
      %77 = sbr.rel (0) target = $region25
    $region24: #{head_hunter_forward.9} parent=1 // pred_region
      %79 = dma.done [#allocation3], 32
    $region25: #{head_hunter_forward.9} parent=1 // pred_fallthru
      _
    %80 = vsyncpa [#allocation3], 1

</llo_original>
